<compile_context>
chip_gen: v7x
topology: tpu7x:2x2x1
jax: 0.10.0
libtpu: 0.0.40
codegen_flags: <defaults>
</compile_context>

<pallas_src>
import math
import functools

import jax
import jax.numpy as jnp
from jax import lax
from jax.experimental import pallas as pl
from jax.experimental.pallas import tpu as pltpu


# ----------------------------------------------------------------------------- kernel
def _flash_attn_kernel(q_ref, k_ref, v_ref, o_ref,
                       q_sc, m_sc, l_sc, acc_sc,
                       *, scale, num_heads, head_dim):
    """Online-softmax attention over one batch slab with heads packed along lanes.

    grid = (B, n_q_tiles, n_kv_tiles); kv axis is the innermost reduction
    ("arbitrary") axis — the output block index is constant across it.
    q_ref: (1, tq, H*D), k_ref/v_ref: (1, tk, H*D), o_ref: (1, tq, H*D)
    Scratch: q_sc (H, tq, D) scaled q (compute dtype), m/l (H, tq, 1) f32,
             acc_sc (H, tq, D) f32.
    """
    H, D = num_heads, head_dim
    kv = pl.program_id(2)

    @pl.when(kv == 0)
    def _init():
        m_sc[...] = jnp.full_like(m_sc, -jnp.inf)
        l_sc[...] = jnp.zeros_like(l_sc)
        acc_sc[...] = jnp.zeros_like(acc_sc)
        # Scale q once per q tile (not once per kv step); keep compute dtype for MXU.
        q = q_ref[0]                                        # (tq, H*D), lane-dense load
        for h in range(H):
            q_sc[h] = q[:, h * D:(h + 1) * D] * scale       # (tq, D)

    k = k_ref[0]                                            # (tk, H*D), compute dtype
    v = v_ref[0]

    # TODO(synk): for large head counts (16-32) switch this static unroll to a
    # lax.fori_loop over heads (pl.ds lane slices) to bound vreg live ranges.
    for h in range(H):                                      # static unroll (H small)
        q_h = q_sc[h]                                       # (tq, D), already scaled
        k_h = k[:, h * D:(h + 1) * D]                       # (tk, D)
        v_h = v[:, h * D:(h + 1) * D]                       # (tk, D)

        # QK^T on the MXU: contract last dims (no transposed copy of k),
        # bf16 operands, f32 accumulation.
        s = lax.dot_general(q_h, k_h, (((1,), (1,)), ((), ())),
                            preferred_element_type=jnp.float32)        # (tq, tk) f32

        m_prev = m_sc[h]                                    # (tq, 1)
        m_new = jnp.maximum(m_prev, s.max(axis=-1, keepdims=True))
        alpha = jnp.exp(m_prev - m_new)                     # f32 (v5e-safe)
        p = jnp.exp(s - m_new)                              # (tq, tk) f32

        l_sc[h] = alpha * l_sc[h] + p.sum(axis=-1, keepdims=True)
        pv = lax.dot_general(p.astype(v_h.dtype), v_h, (((1,), (0,)), ((), ())),
                             preferred_element_type=jnp.float32)       # (tq, D)
        acc_sc[h] = alpha * acc_sc[h] + pv
        m_sc[h] = m_new

    @pl.when(kv == pl.num_programs(2) - 1)
    def _epilogue():
        # Build the full (tq, H*D) slab and store it with one dense, lane-full write
        # instead of H masked 32-lane stores.  Done once per q tile.
        slabs = []
        for h in range(H):
            inv_l = pl.reciprocal(l_sc[h], approx=True)     # EUP slot, ~free
            slabs.append(acc_sc[h] * inv_l)
        o_ref[0] = jnp.concatenate(slabs, axis=-1).astype(o_ref.dtype)


# ------------------------------------------------------------------------ tile helpers
def _pick_tile(s, cap, aligns=(256, 128, 8)):
    """Largest divisor of s that is <= cap, preferring MXU-friendly alignment."""
    if s <= cap:
        return s
    for align in aligns:
        t = (min(cap, s) // align) * align
        while t >= align:
            if s % t == 0:
                return t
            t -= align
    # TODO(synk): ragged sequence lengths with no aligned divisor need in-kernel
    # q/kv tail masking (and a -inf guard on m); not required for this module's shapes.
    return s


def _vmem_capacity_bytes():
    try:
        return int(pltpu.get_tpu_info().vmem_capacity_bytes)
    except Exception:
        return 64 * 1024 * 1024  # conservative: assume v7x (64 MiB per TensorCore)


def _vmem_bytes_estimate(tq, tk, hd, num_heads, head_dim, in_bytes, out_bytes):
    """Double-buffered blocks + scratch, with m/l last-dim padding (1 -> 128 lanes)."""
    blocks = 2 * (tq * hd * in_bytes           # q block (double-buffered)
                  + 2 * tk * hd * in_bytes     # k + v blocks
                  + tq * hd * out_bytes)       # out block
    scratch = (num_heads * tq * head_dim * in_bytes        # scaled q
               + num_heads * tq * head_dim * 4             # f32 accumulator
               + 2 * num_heads * tq * 128 * 4)             # m + l, lane-padded
    return blocks + scratch


# --------------------------------------------------------------------- packed attention
def _flash_attention_packed(q, k, v, *, num_heads, head_dim, out_dtype,
                            tq_cap=None, tk_cap=None):
    """q, k, v: (B, S, H*D) -> (B, S, H*D) scaled-dot-product attention per head."""
    B, S, HD = q.shape
    assert HD == num_heads * head_dim

    vmem_cap = _vmem_capacity_bytes()
    if vmem_cap >= 100 * 1024 * 1024:          # v5e / v6e: 128 MiB physical VMEM
        vmem_limit = 100 * 1024 * 1024
        default_tk_cap = 1024
    else:                                      # v7x: 64 MiB physical VMEM
        vmem_limit = 44 * 1024 * 1024
        default_tk_cap = 512
    tq_cap = 256 if tq_cap is None else tq_cap
    tk_cap = default_tk_cap if tk_cap is None else tk_cap

    tq = _pick_tile(S, tq_cap, aligns=(128, 8))
    tk = _pick_tile(S, tk_cap, aligns=(256, 128, 8))

    # v7x has 2 TensorCores: make sure the parallel axes (B, S//tq) expose >= 2 steps.
    while B * (S // tq) < 2 and tq % 16 == 0 and S % (tq // 2) == 0:
        tq //= 2

    # Keep blocks + scratch within the scoped VMEM budget; shrink tk first (tq
    # amortizes per-tile init/epilogue and K/V reuse).
    in_bytes = jnp.dtype(q.dtype).itemsize
    out_bytes = jnp.dtype(out_dtype).itemsize
    budget = int(0.75 * vmem_limit)
    while _vmem_bytes_estimate(tq, tk, HD, num_heads, head_dim,
                               in_bytes, out_bytes) > budget:
        new_tk = _pick_tile(S, tk // 2, aligns=(256, 128, 8))
        if new_tk >= tk:
            break
        tk = new_tk

    scale = 1.0 / math.sqrt(head_dim)
    grid = (B, S // tq, S // tk)

    kernel = functools.partial(_flash_attn_kernel, scale=scale,
                               num_heads=num_heads, head_dim=head_dim)

    return pl.pallas_call(
        kernel,
        out_shape=jax.ShapeDtypeStruct((B, S, HD), out_dtype),
        grid_spec=pltpu.PrefetchScalarGridSpec(
            num_scalar_prefetch=0,
            grid=grid,
            in_specs=[
                pl.BlockSpec((1, tq, HD), lambda b, i, j: (b, i, 0)),  # q
                pl.BlockSpec((1, tk, HD), lambda b, i, j: (b, j, 0)),  # k
                pl.BlockSpec((1, tk, HD), lambda b, i, j: (b, j, 0)),  # v
            ],
            out_specs=pl.BlockSpec((1, tq, HD), lambda b, i, j: (b, i, 0)),
            scratch_shapes=[
                pltpu.VMEM((num_heads, tq, head_dim), q.dtype),      # scaled q slices
                pltpu.VMEM((num_heads, tq, 1), jnp.float32),         # running max m
                pltpu.VMEM((num_heads, tq, 1), jnp.float32),         # running sum l
                pltpu.VMEM((num_heads, tq, head_dim), jnp.float32),  # accumulator
            ],
        ),
        compiler_params=pltpu.CompilerParams(
            dimension_semantics=("parallel", "parallel", "arbitrary"),
            vmem_limit_bytes=vmem_limit,
        ),
    )(q, k, v)


# -------------------------------------------------------------------- local attention
def local_attention(query, key, value, *, tq_cap=None, tk_cap=None):
    """Scaled dot-product attention on layout [bs, seq, heads, head_dim].

    No transposes: heads are packed onto the lane axis via a free trailing reshape
    (H*D lane-dense blocks).  f32 inputs are cast to bf16 for the MXU; stats and the
    accumulator stay f32 inside the kernel; output is returned in the input dtype.
    """
    B, S, H, D = query.shape
    compute_dtype = jnp.bfloat16 if query.dtype == jnp.float32 else query.dtype
    # TODO(synk): int8 (v6e) / fp8-e4m3 (v7x) K/V quantization would further cut MXU
    # push cost at small D; not applied here to keep reference-level accuracy.
    q = query.reshape(B, S, H * D).astype(compute_dtype)
    k = key.reshape(B, S, H * D).astype(compute_dtype)
    v = value.reshape(B, S, H * D).astype(compute_dtype)
    o = _flash_attention_packed(q, k, v, num_heads=H, head_dim=D,
                                out_dtype=query.dtype,
                                tq_cap=tq_cap, tk_cap=tk_cap)
    return o.reshape(B, S, H, D)


# ------------------------------------------------------------------ DistributedAttention
class DistributedAttention:
    """JAX port. With pg=None (the default after __init__), forward == local_attn."""

    def __init__(self, local_attn):
        self.local_attn = local_attn
        self.pg = None
        self.stream = None

    def set_context_parallel_group(self, group, stream):
        self.pg = group
        self.stream = stream

    def __call__(self, query, key, value, *args, **kwargs):
        if self.pg is None:
            return self.local_attn(query, key, value, *args, **kwargs)
        # pg_size < 2 also falls back to local attention in the reference module.
        # TODO(synk): multi-device A2A context-parallel path (needs remote DMA mesh).
        return self.local_attn(query, key, value, *args, **kwargs)


# ---------------------------------------------------------------------------- reference
def _reference_attention(query, key, value, compute_dtype=jnp.bfloat16):
    """f32 reference on bf16-rounded inputs (matches the kernel's MXU operand dtype)."""
    B, S, H, D = query.shape
    scale = 1.0 / math.sqrt(D)
    qf = query.astype(compute_dtype).astype(jnp.float32)
    kf = key.astype(compute_dtype).astype(jnp.float32)
    vf = value.astype(compute_dtype).astype(jnp.float32)
    logits = jnp.einsum("bqhd,bkhd->bhqk", qf, kf) * scale
    probs = jax.nn.softmax(logits, axis=-1)
    out = jnp.einsum("bhqk,bkhd->bqhd", probs, vf)
    return out.astype(query.dtype)


# -------------------------------------------------------------------------------- main
if __name__ == "__main__":
    B, S, H, D = 2, 256, 4, 32   # [batch, seq, heads, head_dim]; H*D = 128 lane-dense

    key0 = jax.random.PRNGKey(0)
    kq, kk, kv = jax.random.split(key0, 3)
    query = jax.random.normal(kq, (B, S, H, D), dtype=jnp.float32)
    keyt = jax.random.normal(kk, (B, S, H, D), dtype=jnp.float32)
    value = jax.random.normal(kv, (B, S, H, D), dtype=jnp.float32)

    attn = DistributedAttention(local_attention)
    out = jax.block_until_ready(attn(query, keyt, value))

    ref = _reference_attention(query, keyt, value)
    assert out.shape == (B, S, H, D)
    assert jnp.allclose(out, ref, atol=2e-2, rtol=2e-2), (
        f"max abs diff {jnp.max(jnp.abs(out - ref))}"
    )

    # Also exercise the multi-q-tile / multi-kv-step online-softmax accumulator path.
    out_tiled = jax.block_until_ready(
        local_attention(query, keyt, value, tq_cap=128, tk_cap=128))
    assert jnp.allclose(out_tiled, ref, atol=2e-2, rtol=2e-2), (
        f"max abs diff {jnp.max(jnp.abs(out_tiled - ref))}"
    )

    print("KERNEL_OK")
</pallas_src>

<mosaic_0001>
module attributes {stable_mosaic.version = 11 : i64} {
  func.func @_flash_attn_kernel(%arg0: i32, %arg1: i32, %arg2: i32, %arg3: memref<1x256x128xbf16, #tpu.memory_space<vmem>>, %arg4: memref<1x256x128xbf16, #tpu.memory_space<vmem>>, %arg5: memref<1x256x128xbf16, #tpu.memory_space<vmem>>, %arg6: memref<1x256x128xf32, #tpu.memory_space<vmem>>, %arg7: memref<4x256x32xbf16, #tpu.memory_space<vmem>>, %arg8: memref<4x256x1xf32, #tpu.memory_space<vmem>>, %arg9: memref<4x256x1xf32, #tpu.memory_space<vmem>>, %arg10: memref<4x256x32xf32, #tpu.memory_space<vmem>>) attributes {dimension_semantics = [#tpu.dimension_semantics<parallel>, #tpu.dimension_semantics<parallel>, #tpu.dimension_semantics<arbitrary>], iteration_bounds = array<i64: 2, 1, 1>, scalar_prefetch = 0 : i64, scratch_operands = 4 : i64, tpu.core_type = #tpu.core_type<tc>, window_params = [{transform_indices = @transform_0, window_bounds = array<i64: 1, 256, 128>}, {transform_indices = @transform_1, window_bounds = array<i64: 1, 256, 128>}, {transform_indices = @transform_2, window_bounds = array<i64: 1, 256, 128>}, {transform_indices = @transform_3, window_bounds = array<i64: 1, 256, 128>}]} {
    %c0_i32 = arith.constant 0 : i32
    %0 = arith.cmpi eq, %arg2, %c0_i32 : i32
    %1 = arith.extui %0 : i1 to i32
    %c0_i32_0 = arith.constant 0 : i32
    %2 = arith.cmpi ne, %1, %c0_i32_0 : i32
    scf.if %2 {
      %cst_104 = arith.constant 0xFF800000 : f32
      %158 = vector.broadcast %cst_104 : f32 to vector<4x256x1xf32>
      %c0_105 = arith.constant 0 : index
      %c0_106 = arith.constant 0 : index
      %c0_107 = arith.constant 0 : index
      %159 = vector.load %arg8[%c0_105, %c0_106, %c0_107] : memref<4x256x1xf32, #tpu.memory_space<vmem>>, vector<4x256x1xf32>
      tpu.vector_store %arg8[%c0_105, %c0_106, %c0_107], %158 {strides = array<i32>} : memref<4x256x1xf32, #tpu.memory_space<vmem>>, vector<4x256x1xf32>,
      %cst_108 = arith.constant 0.000000e+00 : f32
      %160 = vector.broadcast %cst_108 : f32 to vector<4x256x1xf32>
      %c0_109 = arith.constant 0 : index
      %c0_110 = arith.constant 0 : index
      %c0_111 = arith.constant 0 : index
      %161 = vector.load %arg9[%c0_109, %c0_110, %c0_111] : memref<4x256x1xf32, #tpu.memory_space<vmem>>, vector<4x256x1xf32>
      tpu.vector_store %arg9[%c0_109, %c0_110, %c0_111], %160 {strides = array<i32>} : memref<4x256x1xf32, #tpu.memory_space<vmem>>, vector<4x256x1xf32>,
      %cst_112 = arith.constant 0.000000e+00 : f32
      %162 = vector.broadcast %cst_112 : f32 to vector<4x256x32xf32>
      %c0_113 = arith.constant 0 : index
      %c0_114 = arith.constant 0 : index
      %c0_115 = arith.constant 0 : index
      %163 = vector.load %arg10[%c0_113, %c0_114, %c0_115] : memref<4x256x32xf32, #tpu.memory_space<vmem>>, vector<4x256x32xf32>
      tpu.vector_store %arg10[%c0_113, %c0_114, %c0_115], %162 {strides = array<i32>} : memref<4x256x32xf32, #tpu.memory_space<vmem>>, vector<4x256x32xf32>,
      %c0_116 = arith.constant 0 : index
      %c0_117 = arith.constant 0 : index
      %c0_118 = arith.constant 0 : index
      %164 = vector.load %arg3[%c0_116, %c0_117, %c0_118] : memref<1x256x128xbf16, #tpu.memory_space<vmem>>, vector<1x256x128xbf16>
      %165 = vector.shape_cast %164 : vector<1x256x128xbf16> to vector<256x128xbf16>
      %166 = vector.extract_strided_slice %165 {offsets = [0, 0], sizes = [256, 32], strides = [1, 1]} : vector<256x128xbf16> to vector<256x32xbf16>
      %cst_119 = arith.constant 1.767580e-01 : bf16
      %167 = vector.broadcast %cst_119 : bf16 to vector<256x32xbf16>
      %168 = arith.mulf %166, %167 : vector<256x32xbf16>
      %c0_120 = arith.constant 0 : index
      %c0_121 = arith.constant 0 : index
      %c0_122 = arith.constant 0 : index
      %169 = vector.load %arg7[%c0_120, %c0_121, %c0_122] : memref<4x256x32xbf16, #tpu.memory_space<vmem>>, vector<1x256x32xbf16>
      %170 = vector.shape_cast %169 : vector<1x256x32xbf16> to vector<256x32xbf16>
      %171 = vector.shape_cast %168 : vector<256x32xbf16> to vector<1x256x32xbf16>
      tpu.vector_store %arg7[%c0_120, %c0_121, %c0_122], %171 {strides = array<i32>} : memref<4x256x32xbf16, #tpu.memory_space<vmem>>, vector<1x256x32xbf16>,
      %172 = vector.extract_strided_slice %165 {offsets = [0, 32], sizes = [256, 32], strides = [1, 1]} : vector<256x128xbf16> to vector<256x32xbf16>
      %cst_123 = arith.constant 1.767580e-01 : bf16
      %173 = vector.broadcast %cst_123 : bf16 to vector<256x32xbf16>
      %174 = arith.mulf %172, %173 : vector<256x32xbf16>
      %c1_124 = arith.constant 1 : index
      %c0_125 = arith.constant 0 : index
      %c0_126 = arith.constant 0 : index
      %175 = vector.load %arg7[%c1_124, %c0_125, %c0_126] : memref<4x256x32xbf16, #tpu.memory_space<vmem>>, vector<1x256x32xbf16>
      %176 = vector.shape_cast %175 : vector<1x256x32xbf16> to vector<256x32xbf16>
      %177 = vector.shape_cast %174 : vector<256x32xbf16> to vector<1x256x32xbf16>
      tpu.vector_store %arg7[%c1_124, %c0_125, %c0_126], %177 {strides = array<i32>} : memref<4x256x32xbf16, #tpu.memory_space<vmem>>, vector<1x256x32xbf16>,
      %178 = vector.extract_strided_slice %165 {offsets = [0, 64], sizes = [256, 32], strides = [1, 1]} : vector<256x128xbf16> to vector<256x32xbf16>
      %cst_127 = arith.constant 1.767580e-01 : bf16
      %179 = vector.broadcast %cst_127 : bf16 to vector<256x32xbf16>
      %180 = arith.mulf %178, %179 : vector<256x32xbf16>
      %c2_128 = arith.constant 2 : index
      %c0_129 = arith.constant 0 : index
      %c0_130 = arith.constant 0 : index
      %181 = vector.load %arg7[%c2_128, %c0_129, %c0_130] : memref<4x256x32xbf16, #tpu.memory_space<vmem>>, vector<1x256x32xbf16>
      %182 = vector.shape_cast %181 : vector<1x256x32xbf16> to vector<256x32xbf16>
      %183 = vector.shape_cast %180 : vector<256x32xbf16> to vector<1x256x32xbf16>
      tpu.vector_store %arg7[%c2_128, %c0_129, %c0_130], %183 {strides = array<i32>} : memref<4x256x32xbf16, #tpu.memory_space<vmem>>, vector<1x256x32xbf16>,
      %184 = vector.extract_strided_slice %165 {offsets = [0, 96], sizes = [256, 32], strides = [1, 1]} : vector<256x128xbf16> to vector<256x32xbf16>
      %cst_131 = arith.constant 1.767580e-01 : bf16
      %185 = vector.broadcast %cst_131 : bf16 to vector<256x32xbf16>
      %186 = arith.mulf %184, %185 : vector<256x32xbf16>
      %c3_132 = arith.constant 3 : index
      %c0_133 = arith.constant 0 : index
      %c0_134 = arith.constant 0 : index
      %187 = vector.load %arg7[%c3_132, %c0_133, %c0_134] : memref<4x256x32xbf16, #tpu.memory_space<vmem>>, vector<1x256x32xbf16>
      %188 = vector.shape_cast %187 : vector<1x256x32xbf16> to vector<256x32xbf16>
      %189 = vector.shape_cast %186 : vector<256x32xbf16> to vector<1x256x32xbf16>
      tpu.vector_store %arg7[%c3_132, %c0_133, %c0_134], %189 {strides = array<i32>} : memref<4x256x32xbf16, #tpu.memory_space<vmem>>, vector<1x256x32xbf16>,
    } else {
    }
    %c0 = arith.constant 0 : index
    %c0_1 = arith.constant 0 : index
    %c0_2 = arith.constant 0 : index
    %3 = vector.load %arg4[%c0, %c0_1, %c0_2] : memref<1x256x128xbf16, #tpu.memory_space<vmem>>, vector<1x256x128xbf16>
    %4 = vector.shape_cast %3 : vector<1x256x128xbf16> to vector<256x128xbf16>
    %c0_3 = arith.constant 0 : index
    %c0_4 = arith.constant 0 : index
    %c0_5 = arith.constant 0 : index
    %5 = vector.load %arg5[%c0_3, %c0_4, %c0_5] : memref<1x256x128xbf16, #tpu.memory_space<vmem>>, vector<1x256x128xbf16>
    %6 = vector.shape_cast %5 : vector<1x256x128xbf16> to vector<256x128xbf16>
    %c0_6 = arith.constant 0 : index
    %c0_7 = arith.constant 0 : index
    %c0_8 = arith.constant 0 : index
    %7 = vector.load %arg7[%c0_6, %c0_7, %c0_8] : memref<4x256x32xbf16, #tpu.memory_space<vmem>>, vector<1x256x32xbf16>
    %8 = vector.shape_cast %7 : vector<1x256x32xbf16> to vector<256x32xbf16>
    %9 = vector.extract_strided_slice %4 {offsets = [0, 0], sizes = [256, 32], strides = [1, 1]} : vector<256x128xbf16> to vector<256x32xbf16>
    %10 = vector.extract_strided_slice %6 {offsets = [0, 0], sizes = [256, 32], strides = [1, 1]} : vector<256x128xbf16> to vector<256x32xbf16>
    %cst = arith.constant dense<0.000000e+00> : vector<256x256xf32>
    %11 = tpu.matmul %8, %9, %cst {dimension_numbers = #tpu.dot_dimension_numbers<[1], [1], [0], [0], [0, 0, 1, 0], [], []>} : vector<256x32xbf16>, vector<256x32xbf16>, vector<256x256xf32> -> vector<256x256xf32>
    %c0_9 = arith.constant 0 : index
    %c0_10 = arith.constant 0 : index
    %c0_11 = arith.constant 0 : index
    %12 = vector.load %arg8[%c0_9, %c0_10, %c0_11] : memref<4x256x1xf32, #tpu.memory_space<vmem>>, vector<1x256x1xf32>
    %13 = vector.shape_cast %12 : vector<1x256x1xf32> to vector<256x1xf32>
    %cst_12 = arith.constant dense<0xFF800000> : vector<256xf32>
    %14 = vector.multi_reduction <maximumf>, %11, %cst_12 [1] : vector<256x256xf32> to vector<256xf32>
    %15 = vector.shape_cast %14 : vector<256xf32> to vector<256x1xf32>
    %16 = arith.maximumf %13, %15 : vector<256x1xf32>
    %17 = arith.subf %13, %16 : vector<256x1xf32>
    %18 = math.exp %17 : vector<256x1xf32>
    %19 = vector.broadcast %16 : vector<256x1xf32> to vector<256x256xf32>
    %20 = arith.subf %11, %19 : vector<256x256xf32>
    %21 = math.exp %20 : vector<256x256xf32>
    %c0_13 = arith.constant 0 : index
    %c0_14 = arith.constant 0 : index
    %c0_15 = arith.constant 0 : index
    %22 = vector.load %arg9[%c0_13, %c0_14, %c0_15] : memref<4x256x1xf32, #tpu.memory_space<vmem>>, vector<1x256x1xf32>
    %23 = vector.shape_cast %22 : vector<1x256x1xf32> to vector<256x1xf32>
    %24 = arith.mulf %18, %23 : vector<256x1xf32>
    %cst_16 = arith.constant dense<0.000000e+00> : vector<256xf32>
    %25 = vector.multi_reduction <add>, %21, %cst_16 [1] : vector<256x256xf32> to vector<256xf32>
    %26 = vector.shape_cast %25 : vector<256xf32> to vector<256x1xf32>
    %27 = arith.addf %24, %26 : vector<256x1xf32>
    %c0_17 = arith.constant 0 : index
    %c0_18 = arith.constant 0 : index
    %c0_19 = arith.constant 0 : index
    %28 = vector.load %arg9[%c0_17, %c0_18, %c0_19] : memref<4x256x1xf32, #tpu.memory_space<vmem>>, vector<1x256x1xf32>
    %29 = vector.shape_cast %28 : vector<1x256x1xf32> to vector<256x1xf32>
    %30 = vector.shape_cast %27 : vector<256x1xf32> to vector<1x256x1xf32>
    tpu.vector_store %arg9[%c0_17, %c0_18, %c0_19], %30 {strides = array<i32>} : memref<4x256x1xf32, #tpu.memory_space<vmem>>, vector<1x256x1xf32>,
    %31 = arith.truncf %21 : vector<256x256xf32> to vector<256x256xbf16>
    %cst_20 = arith.constant dense<0.000000e+00> : vector<256x32xf32>
    %32 = tpu.matmul %31, %10, %cst_20 {dimension_numbers = #tpu.dot_dimension_numbers<[1], [0], [0], [1], [0, 0, 1, 1], [], []>} : vector<256x256xbf16>, vector<256x32xbf16>, vector<256x32xf32> -> vector<256x32xf32>
    %c0_21 = arith.constant 0 : index
    %c0_22 = arith.constant 0 : index
    %c0_23 = arith.constant 0 : index
    %33 = vector.load %arg10[%c0_21, %c0_22, %c0_23] : memref<4x256x32xf32, #tpu.memory_space<vmem>>, vector<1x256x32xf32>
    %34 = vector.shape_cast %33 : vector<1x256x32xf32> to vector<256x32xf32>
    %35 = vector.broadcast %18 : vector<256x1xf32> to vector<256x32xf32>
    %36 = arith.mulf %35, %34 : vector<256x32xf32>
    %37 = arith.addf %36, %32 : vector<256x32xf32>
    %c0_24 = arith.constant 0 : index
    %c0_25 = arith.constant 0 : index
    %c0_26 = arith.constant 0 : index
    %38 = vector.load %arg10[%c0_24, %c0_25, %c0_26] : memref<4x256x32xf32, #tpu.memory_space<vmem>>, vector<1x256x32xf32>
    %39 = vector.shape_cast %38 : vector<1x256x32xf32> to vector<256x32xf32>
    %40 = vector.shape_cast %37 : vector<256x32xf32> to vector<1x256x32xf32>
    tpu.vector_store %arg10[%c0_24, %c0_25, %c0_26], %40 {strides = array<i32>} : memref<4x256x32xf32, #tpu.memory_space<vmem>>, vector<1x256x32xf32>,
    %c0_27 = arith.constant 0 : index
    %c0_28 = arith.constant 0 : index
    %c0_29 = arith.constant 0 : index
    %41 = vector.load %arg8[%c0_27, %c0_28, %c0_29] : memref<4x256x1xf32, #tpu.memory_space<vmem>>, vector<1x256x1xf32>
    %42 = vector.shape_cast %41 : vector<1x256x1xf32> to vector<256x1xf32>
    %43 = vector.shape_cast %16 : vector<256x1xf32> to vector<1x256x1xf32>
    tpu.vector_store %arg8[%c0_27, %c0_28, %c0_29], %43 {strides = array<i32>} : memref<4x256x1xf32, #tpu.memory_space<vmem>>, vector<1x256x1xf32>,
    %c1 = arith.constant 1 : index
    %c0_30 = arith.constant 0 : index
    %c0_31 = arith.constant 0 : index
    %44 = vector.load %arg7[%c1, %c0_30, %c0_31] : memref<4x256x32xbf16, #tpu.memory_space<vmem>>, vector<1x256x32xbf16>
    %45 = vector.shape_cast %44 : vector<1x256x32xbf16> to vector<256x32xbf16>
    %46 = vector.extract_strided_slice %4 {offsets = [0, 32], sizes = [256, 32], strides = [1, 1]} : vector<256x128xbf16> to vector<256x32xbf16>
    %47 = vector.extract_strided_slice %6 {offsets = [0, 32], sizes = [256, 32], strides = [1, 1]} : vector<256x128xbf16> to vector<256x32xbf16>
    %cst_32 = arith.constant dense<0.000000e+00> : vector<256x256xf32>
    %48 = tpu.matmul %45, %46, %cst_32 {dimension_numbers = #tpu.dot_dimension_numbers<[1], [1], [0], [0], [0, 0, 1, 0], [], []>} : vector<256x32xbf16>, vector<256x32xbf16>, vector<256x256xf32> -> vector<256x256xf32>
    %c1_33 = arith.constant 1 : index
    %c0_34 = arith.constant 0 : index
    %c0_35 = arith.constant 0 : index
    %49 = vector.load %arg8[%c1_33, %c0_34, %c0_35] : memref<4x256x1xf32, #tpu.memory_space<vmem>>, vector<1x256x1xf32>
    %50 = vector.shape_cast %49 : vector<1x256x1xf32> to vector<256x1xf32>
    %cst_36 = arith.constant dense<0xFF800000> : vector<256xf32>
    %51 = vector.multi_reduction <maximumf>, %48, %cst_36 [1] : vector<256x256xf32> to vector<256xf32>
    %52 = vector.shape_cast %51 : vector<256xf32> to vector<256x1xf32>
    %53 = arith.maximumf %50, %52 : vector<256x1xf32>
    %54 = arith.subf %50, %53 : vector<256x1xf32>
    %55 = math.exp %54 : vector<256x1xf32>
    %56 = vector.broadcast %53 : vector<256x1xf32> to vector<256x256xf32>
    %57 = arith.subf %48, %56 : vector<256x256xf32>
    %58 = math.exp %57 : vector<256x256xf32>
    %c1_37 = arith.constant 1 : index
    %c0_38 = arith.constant 0 : index
    %c0_39 = arith.constant 0 : index
    %59 = vector.load %arg9[%c1_37, %c0_38, %c0_39] : memref<4x256x1xf32, #tpu.memory_space<vmem>>, vector<1x256x1xf32>
    %60 = vector.shape_cast %59 : vector<1x256x1xf32> to vector<256x1xf32>
    %61 = arith.mulf %55, %60 : vector<256x1xf32>
    %cst_40 = arith.constant dense<0.000000e+00> : vector<256xf32>
    %62 = vector.multi_reduction <add>, %58, %cst_40 [1] : vector<256x256xf32> to vector<256xf32>
    %63 = vector.shape_cast %62 : vector<256xf32> to vector<256x1xf32>
    %64 = arith.addf %61, %63 : vector<256x1xf32>
    %c1_41 = arith.constant 1 : index
    %c0_42 = arith.constant 0 : index
    %c0_43 = arith.constant 0 : index
    %65 = vector.load %arg9[%c1_41, %c0_42, %c0_43] : memref<4x256x1xf32, #tpu.memory_space<vmem>>, vector<1x256x1xf32>
    %66 = vector.shape_cast %65 : vector<1x256x1xf32> to vector<256x1xf32>
    %67 = vector.shape_cast %64 : vector<256x1xf32> to vector<1x256x1xf32>
    tpu.vector_store %arg9[%c1_41, %c0_42, %c0_43], %67 {strides = array<i32>} : memref<4x256x1xf32, #tpu.memory_space<vmem>>, vector<1x256x1xf32>,
    %68 = arith.truncf %58 : vector<256x256xf32> to vector<256x256xbf16>
    %cst_44 = arith.constant dense<0.000000e+00> : vector<256x32xf32>
    %69 = tpu.matmul %68, %47, %cst_44 {dimension_numbers = #tpu.dot_dimension_numbers<[1], [0], [0], [1], [0, 0, 1, 1], [], []>} : vector<256x256xbf16>, vector<256x32xbf16>, vector<256x32xf32> -> vector<256x32xf32>
    %c1_45 = arith.constant 1 : index
    %c0_46 = arith.constant 0 : index
    %c0_47 = arith.constant 0 : index
    %70 = vector.load %arg10[%c1_45, %c0_46, %c0_47] : memref<4x256x32xf32, #tpu.memory_space<vmem>>, vector<1x256x32xf32>
    %71 = vector.shape_cast %70 : vector<1x256x32xf32> to vector<256x32xf32>
    %72 = vector.broadcast %55 : vector<256x1xf32> to vector<256x32xf32>
    %73 = arith.mulf %72, %71 : vector<256x32xf32>
    %74 = arith.addf %73, %69 : vector<256x32xf32>
    %c1_48 = arith.constant 1 : index
    %c0_49 = arith.constant 0 : index
    %c0_50 = arith.constant 0 : index
    %75 = vector.load %arg10[%c1_48, %c0_49, %c0_50] : memref<4x256x32xf32, #tpu.memory_space<vmem>>, vector<1x256x32xf32>
    %76 = vector.shape_cast %75 : vector<1x256x32xf32> to vector<256x32xf32>
    %77 = vector.shape_cast %74 : vector<256x32xf32> to vector<1x256x32xf32>
    tpu.vector_store %arg10[%c1_48, %c0_49, %c0_50], %77 {strides = array<i32>} : memref<4x256x32xf32, #tpu.memory_space<vmem>>, vector<1x256x32xf32>,
    %c1_51 = arith.constant 1 : index
    %c0_52 = arith.constant 0 : index
    %c0_53 = arith.constant 0 : index
    %78 = vector.load %arg8[%c1_51, %c0_52, %c0_53] : memref<4x256x1xf32, #tpu.memory_space<vmem>>, vector<1x256x1xf32>
    %79 = vector.shape_cast %78 : vector<1x256x1xf32> to vector<256x1xf32>
    %80 = vector.shape_cast %53 : vector<256x1xf32> to vector<1x256x1xf32>
    tpu.vector_store %arg8[%c1_51, %c0_52, %c0_53], %80 {strides = array<i32>} : memref<4x256x1xf32, #tpu.memory_space<vmem>>, vector<1x256x1xf32>,
    %c2 = arith.constant 2 : index
    %c0_54 = arith.constant 0 : index
    %c0_55 = arith.constant 0 : index
    %81 = vector.load %arg7[%c2, %c0_54, %c0_55] : memref<4x256x32xbf16, #tpu.memory_space<vmem>>, vector<1x256x32xbf16>
    %82 = vector.shape_cast %81 : vector<1x256x32xbf16> to vector<256x32xbf16>
    %83 = vector.extract_strided_slice %4 {offsets = [0, 64], sizes = [256, 32], strides = [1, 1]} : vector<256x128xbf16> to vector<256x32xbf16>
    %84 = vector.extract_strided_slice %6 {offsets = [0, 64], sizes = [256, 32], strides = [1, 1]} : vector<256x128xbf16> to vector<256x32xbf16>
    %cst_56 = arith.constant dense<0.000000e+00> : vector<256x256xf32>
    %85 = tpu.matmul %82, %83, %cst_56 {dimension_numbers = #tpu.dot_dimension_numbers<[1], [1], [0], [0], [0, 0, 1, 0], [], []>} : vector<256x32xbf16>, vector<256x32xbf16>, vector<256x256xf32> -> vector<256x256xf32>
    %c2_57 = arith.constant 2 : index
    %c0_58 = arith.constant 0 : index
    %c0_59 = arith.constant 0 : index
    %86 = vector.load %arg8[%c2_57, %c0_58, %c0_59] : memref<4x256x1xf32, #tpu.memory_space<vmem>>, vector<1x256x1xf32>
    %87 = vector.shape_cast %86 : vector<1x256x1xf32> to vector<256x1xf32>
    %cst_60 = arith.constant dense<0xFF800000> : vector<256xf32>
    %88 = vector.multi_reduction <maximumf>, %85, %cst_60 [1] : vector<256x256xf32> to vector<256xf32>
    %89 = vector.shape_cast %88 : vector<256xf32> to vector<256x1xf32>
    %90 = arith.maximumf %87, %89 : vector<256x1xf32>
    %91 = arith.subf %87, %90 : vector<256x1xf32>
    %92 = math.exp %91 : vector<256x1xf32>
    %93 = vector.broadcast %90 : vector<256x1xf32> to vector<256x256xf32>
    %94 = arith.subf %85, %93 : vector<256x256xf32>
    %95 = math.exp %94 : vector<256x256xf32>
    %c2_61 = arith.constant 2 : index
    %c0_62 = arith.constant 0 : index
    %c0_63 = arith.constant 0 : index
    %96 = vector.load %arg9[%c2_61, %c0_62, %c0_63] : memref<4x256x1xf32, #tpu.memory_space<vmem>>, vector<1x256x1xf32>
    %97 = vector.shape_cast %96 : vector<1x256x1xf32> to vector<256x1xf32>
    %98 = arith.mulf %92, %97 : vector<256x1xf32>
    %cst_64 = arith.constant dense<0.000000e+00> : vector<256xf32>
    %99 = vector.multi_reduction <add>, %95, %cst_64 [1] : vector<256x256xf32> to vector<256xf32>
    %100 = vector.shape_cast %99 : vector<256xf32> to vector<256x1xf32>
    %101 = arith.addf %98, %100 : vector<256x1xf32>
    %c2_65 = arith.constant 2 : index
    %c0_66 = arith.constant 0 : index
    %c0_67 = arith.constant 0 : index
    %102 = vector.load %arg9[%c2_65, %c0_66, %c0_67] : memref<4x256x1xf32, #tpu.memory_space<vmem>>, vector<1x256x1xf32>
    %103 = vector.shape_cast %102 : vector<1x256x1xf32> to vector<256x1xf32>
    %104 = vector.shape_cast %101 : vector<256x1xf32> to vector<1x256x1xf32>
    tpu.vector_store %arg9[%c2_65, %c0_66, %c0_67], %104 {strides = array<i32>} : memref<4x256x1xf32, #tpu.memory_space<vmem>>, vector<1x256x1xf32>,
    %105 = arith.truncf %95 : vector<256x256xf32> to vector<256x256xbf16>
    %cst_68 = arith.constant dense<0.000000e+00> : vector<256x32xf32>
    %106 = tpu.matmul %105, %84, %cst_68 {dimension_numbers = #tpu.dot_dimension_numbers<[1], [0], [0], [1], [0, 0, 1, 1], [], []>} : vector<256x256xbf16>, vector<256x32xbf16>, vector<256x32xf32> -> vector<256x32xf32>
    %c2_69 = arith.constant 2 : index
    %c0_70 = arith.constant 0 : index
    %c0_71 = arith.constant 0 : index
    %107 = vector.load %arg10[%c2_69, %c0_70, %c0_71] : memref<4x256x32xf32, #tpu.memory_space<vmem>>, vector<1x256x32xf32>
    %108 = vector.shape_cast %107 : vector<1x256x32xf32> to vector<256x32xf32>
    %109 = vector.broadcast %92 : vector<256x1xf32> to vector<256x32xf32>
    %110 = arith.mulf %109, %108 : vector<256x32xf32>
    %111 = arith.addf %110, %106 : vector<256x32xf32>
    %c2_72 = arith.constant 2 : index
    %c0_73 = arith.constant 0 : index
    %c0_74 = arith.constant 0 : index
    %112 = vector.load %arg10[%c2_72, %c0_73, %c0_74] : memref<4x256x32xf32, #tpu.memory_space<vmem>>, vector<1x256x32xf32>
    %113 = vector.shape_cast %112 : vector<1x256x32xf32> to vector<256x32xf32>
    %114 = vector.shape_cast %111 : vector<256x32xf32> to vector<1x256x32xf32>
    tpu.vector_store %arg10[%c2_72, %c0_73, %c0_74], %114 {strides = array<i32>} : memref<4x256x32xf32, #tpu.memory_space<vmem>>, vector<1x256x32xf32>,
    %c2_75 = arith.constant 2 : index
    %c0_76 = arith.constant 0 : index
    %c0_77 = arith.constant 0 : index
    %115 = vector.load %arg8[%c2_75, %c0_76, %c0_77] : memref<4x256x1xf32, #tpu.memory_space<vmem>>, vector<1x256x1xf32>
    %116 = vector.shape_cast %115 : vector<1x256x1xf32> to vector<256x1xf32>
    %117 = vector.shape_cast %90 : vector<256x1xf32> to vector<1x256x1xf32>
    tpu.vector_store %arg8[%c2_75, %c0_76, %c0_77], %117 {strides = array<i32>} : memref<4x256x1xf32, #tpu.memory_space<vmem>>, vector<1x256x1xf32>,
    %c3 = arith.constant 3 : index
    %c0_78 = arith.constant 0 : index
    %c0_79 = arith.constant 0 : index
    %118 = vector.load %arg7[%c3, %c0_78, %c0_79] : memref<4x256x32xbf16, #tpu.memory_space<vmem>>, vector<1x256x32xbf16>
    %119 = vector.shape_cast %118 : vector<1x256x32xbf16> to vector<256x32xbf16>
    %120 = vector.extract_strided_slice %4 {offsets = [0, 96], sizes = [256, 32], strides = [1, 1]} : vector<256x128xbf16> to vector<256x32xbf16>
    %121 = vector.extract_strided_slice %6 {offsets = [0, 96], sizes = [256, 32], strides = [1, 1]} : vector<256x128xbf16> to vector<256x32xbf16>
    %cst_80 = arith.constant dense<0.000000e+00> : vector<256x256xf32>
    %122 = tpu.matmul %119, %120, %cst_80 {dimension_numbers = #tpu.dot_dimension_numbers<[1], [1], [0], [0], [0, 0, 1, 0], [], []>} : vector<256x32xbf16>, vector<256x32xbf16>, vector<256x256xf32> -> vector<256x256xf32>
    %c3_81 = arith.constant 3 : index
    %c0_82 = arith.constant 0 : index
    %c0_83 = arith.constant 0 : index
    %123 = vector.load %arg8[%c3_81, %c0_82, %c0_83] : memref<4x256x1xf32, #tpu.memory_space<vmem>>, vector<1x256x1xf32>
    %124 = vector.shape_cast %123 : vector<1x256x1xf32> to vector<256x1xf32>
    %cst_84 = arith.constant dense<0xFF800000> : vector<256xf32>
    %125 = vector.multi_reduction <maximumf>, %122, %cst_84 [1] : vector<256x256xf32> to vector<256xf32>
    %126 = vector.shape_cast %125 : vector<256xf32> to vector<256x1xf32>
    %127 = arith.maximumf %124, %126 : vector<256x1xf32>
    %128 = arith.subf %124, %127 : vector<256x1xf32>
    %129 = math.exp %128 : vector<256x1xf32>
    %130 = vector.broadcast %127 : vector<256x1xf32> to vector<256x256xf32>
    %131 = arith.subf %122, %130 : vector<256x256xf32>
    %132 = math.exp %131 : vector<256x256xf32>
    %c3_85 = arith.constant 3 : index
    %c0_86 = arith.constant 0 : index
    %c0_87 = arith.constant 0 : index
    %133 = vector.load %arg9[%c3_85, %c0_86, %c0_87] : memref<4x256x1xf32, #tpu.memory_space<vmem>>, vector<1x256x1xf32>
    %134 = vector.shape_cast %133 : vector<1x256x1xf32> to vector<256x1xf32>
    %135 = arith.mulf %129, %134 : vector<256x1xf32>
    %cst_88 = arith.constant dense<0.000000e+00> : vector<256xf32>
    %136 = vector.multi_reduction <add>, %132, %cst_88 [1] : vector<256x256xf32> to vector<256xf32>
    %137 = vector.shape_cast %136 : vector<256xf32> to vector<256x1xf32>
    %138 = arith.addf %135, %137 : vector<256x1xf32>
    %c3_89 = arith.constant 3 : index
    %c0_90 = arith.constant 0 : index
    %c0_91 = arith.constant 0 : index
    %139 = vector.load %arg9[%c3_89, %c0_90, %c0_91] : memref<4x256x1xf32, #tpu.memory_space<vmem>>, vector<1x256x1xf32>
    %140 = vector.shape_cast %139 : vector<1x256x1xf32> to vector<256x1xf32>
    %141 = vector.shape_cast %138 : vector<256x1xf32> to vector<1x256x1xf32>
    tpu.vector_store %arg9[%c3_89, %c0_90, %c0_91], %141 {strides = array<i32>} : memref<4x256x1xf32, #tpu.memory_space<vmem>>, vector<1x256x1xf32>,
    %142 = arith.truncf %132 : vector<256x256xf32> to vector<256x256xbf16>
    %cst_92 = arith.constant dense<0.000000e+00> : vector<256x32xf32>
    %143 = tpu.matmul %142, %121, %cst_92 {dimension_numbers = #tpu.dot_dimension_numbers<[1], [0], [0], [1], [0, 0, 1, 1], [], []>} : vector<256x256xbf16>, vector<256x32xbf16>, vector<256x32xf32> -> vector<256x32xf32>
    %c3_93 = arith.constant 3 : index
    %c0_94 = arith.constant 0 : index
    %c0_95 = arith.constant 0 : index
    %144 = vector.load %arg10[%c3_93, %c0_94, %c0_95] : memref<4x256x32xf32, #tpu.memory_space<vmem>>, vector<1x256x32xf32>
    %145 = vector.shape_cast %144 : vector<1x256x32xf32> to vector<256x32xf32>
    %146 = vector.broadcast %129 : vector<256x1xf32> to vector<256x32xf32>
    %147 = arith.mulf %146, %145 : vector<256x32xf32>
    %148 = arith.addf %147, %143 : vector<256x32xf32>
    %c3_96 = arith.constant 3 : index
    %c0_97 = arith.constant 0 : index
    %c0_98 = arith.constant 0 : index
    %149 = vector.load %arg10[%c3_96, %c0_97, %c0_98] : memref<4x256x32xf32, #tpu.memory_space<vmem>>, vector<1x256x32xf32>
    %150 = vector.shape_cast %149 : vector<1x256x32xf32> to vector<256x32xf32>
    %151 = vector.shape_cast %148 : vector<256x32xf32> to vector<1x256x32xf32>
    tpu.vector_store %arg10[%c3_96, %c0_97, %c0_98], %151 {strides = array<i32>} : memref<4x256x32xf32, #tpu.memory_space<vmem>>, vector<1x256x32xf32>,
    %c3_99 = arith.constant 3 : index
    %c0_100 = arith.constant 0 : index
    %c0_101 = arith.constant 0 : index
    %152 = vector.load %arg8[%c3_99, %c0_100, %c0_101] : memref<4x256x1xf32, #tpu.memory_space<vmem>>, vector<1x256x1xf32>
    %153 = vector.shape_cast %152 : vector<1x256x1xf32> to vector<256x1xf32>
    %154 = vector.shape_cast %127 : vector<256x1xf32> to vector<1x256x1xf32>
    tpu.vector_store %arg8[%c3_99, %c0_100, %c0_101], %154 {strides = array<i32>} : memref<4x256x1xf32, #tpu.memory_space<vmem>>, vector<1x256x1xf32>,
    %c0_i32_102 = arith.constant 0 : i32
    %155 = arith.cmpi eq, %arg2, %c0_i32_102 : i32
    %156 = arith.extui %155 : i1 to i32
    %c0_i32_103 = arith.constant 0 : i32
    %157 = arith.cmpi ne, %156, %c0_i32_103 : i32
    scf.if %157 {
      %c0_104 = arith.constant 0 : index
      %c0_105 = arith.constant 0 : index
      %c0_106 = arith.constant 0 : index
      %158 = vector.load %arg9[%c0_104, %c0_105, %c0_106] : memref<4x256x1xf32, #tpu.memory_space<vmem>>, vector<1x256x1xf32>
      %159 = vector.shape_cast %158 : vector<1x256x1xf32> to vector<256x1xf32>
      %160 = tpu.reciprocal %159 {approx = true} : vector<256x1xf32> -> vector<256x1xf32>
      %c0_107 = arith.constant 0 : index
      %c0_108 = arith.constant 0 : index
      %c0_109 = arith.constant 0 : index
      %161 = vector.load %arg10[%c0_107, %c0_108, %c0_109] : memref<4x256x32xf32, #tpu.memory_space<vmem>>, vector<1x256x32xf32>
      %162 = vector.shape_cast %161 : vector<1x256x32xf32> to vector<256x32xf32>
      %163 = vector.broadcast %160 : vector<256x1xf32> to vector<256x32xf32>
      %164 = arith.mulf %162, %163 : vector<256x32xf32>
      %c1_110 = arith.constant 1 : index
      %c0_111 = arith.constant 0 : index
      %c0_112 = arith.constant 0 : index
      %165 = vector.load %arg9[%c1_110, %c0_111, %c0_112] : memref<4x256x1xf32, #tpu.memory_space<vmem>>, vector<1x256x1xf32>
      %166 = vector.shape_cast %165 : vector<1x256x1xf32> to vector<256x1xf32>
      %167 = tpu.reciprocal %166 {approx = true} : vector<256x1xf32> -> vector<256x1xf32>
      %c1_113 = arith.constant 1 : index
      %c0_114 = arith.constant 0 : index
      %c0_115 = arith.constant 0 : index
      %168 = vector.load %arg10[%c1_113, %c0_114, %c0_115] : memref<4x256x32xf32, #tpu.memory_space<vmem>>, vector<1x256x32xf32>
      %169 = vector.shape_cast %168 : vector<1x256x32xf32> to vector<256x32xf32>
      %170 = vector.broadcast %167 : vector<256x1xf32> to vector<256x32xf32>
      %171 = arith.mulf %169, %170 : vector<256x32xf32>
      %c2_116 = arith.constant 2 : index
      %c0_117 = arith.constant 0 : index
      %c0_118 = arith.constant 0 : index
      %172 = vector.load %arg9[%c2_116, %c0_117, %c0_118] : memref<4x256x1xf32, #tpu.memory_space<vmem>>, vector<1x256x1xf32>
      %173 = vector.shape_cast %172 : vector<1x256x1xf32> to vector<256x1xf32>
      %174 = tpu.reciprocal %173 {approx = true} : vector<256x1xf32> -> vector<256x1xf32>
      %c2_119 = arith.constant 2 : index
      %c0_120 = arith.constant 0 : index
      %c0_121 = arith.constant 0 : index
      %175 = vector.load %arg10[%c2_119, %c0_120, %c0_121] : memref<4x256x32xf32, #tpu.memory_space<vmem>>, vector<1x256x32xf32>
      %176 = vector.shape_cast %175 : vector<1x256x32xf32> to vector<256x32xf32>
      %177 = vector.broadcast %174 : vector<256x1xf32> to vector<256x32xf32>
      %178 = arith.mulf %176, %177 : vector<256x32xf32>
      %c3_122 = arith.constant 3 : index
      %c0_123 = arith.constant 0 : index
      %c0_124 = arith.constant 0 : index
      %179 = vector.load %arg9[%c3_122, %c0_123, %c0_124] : memref<4x256x1xf32, #tpu.memory_space<vmem>>, vector<1x256x1xf32>
      %180 = vector.shape_cast %179 : vector<1x256x1xf32> to vector<256x1xf32>
      %181 = tpu.reciprocal %180 {approx = true} : vector<256x1xf32> -> vector<256x1xf32>
      %c3_125 = arith.constant 3 : index
      %c0_126 = arith.constant 0 : index
      %c0_127 = arith.constant 0 : index
      %182 = vector.load %arg10[%c3_125, %c0_126, %c0_127] : memref<4x256x32xf32, #tpu.memory_space<vmem>>, vector<1x256x32xf32>
      %183 = vector.shape_cast %182 : vector<1x256x32xf32> to vector<256x32xf32>
      %184 = vector.broadcast %181 : vector<256x1xf32> to vector<256x32xf32>
      %185 = arith.mulf %183, %184 : vector<256x32xf32>
      %186 = tpu.concatenate %164, %171, %178, %185 in 1 : vector<256x32xf32>, vector<256x32xf32>, vector<256x32xf32>, vector<256x32xf32> -> vector<256x128xf32>
      %c0_128 = arith.constant 0 : index
      %c0_129 = arith.constant 0 : index
      %c0_130 = arith.constant 0 : index
      %187 = vector.load %arg6[%c0_128, %c0_129, %c0_130] : memref<1x256x128xf32, #tpu.memory_space<vmem>>, vector<1x256x128xf32>
      %188 = vector.shape_cast %187 : vector<1x256x128xf32> to vector<256x128xf32>
      %189 = vector.shape_cast %186 : vector<256x128xf32> to vector<1x256x128xf32>
      tpu.vector_store %arg6[%c0_128, %c0_129, %c0_130], %189 {strides = array<i32>} : memref<1x256x128xf32, #tpu.memory_space<vmem>>, vector<1x256x128xf32>,
    } else {
    }
    return
  }
  func.func @transform_0(%arg0: i32, %arg1: i32, %arg2: i32) -> (i32, i32, i32) {
    %c0_i32 = arith.constant 0 : i32
    %c0_i32_0 = arith.constant 0 : i32
    return %arg0, %arg1, %c0_i32 : i32, i32, i32
  }
  func.func @transform_1(%arg0: i32, %arg1: i32, %arg2: i32) -> (i32, i32, i32) {
    %c0_i32 = arith.constant 0 : i32
    %c0_i32_0 = arith.constant 0 : i32
    return %arg0, %arg2, %c0_i32 : i32, i32, i32
  }
  func.func @transform_2(%arg0: i32, %arg1: i32, %arg2: i32) -> (i32, i32, i32) {
    %c0_i32 = arith.constant 0 : i32
    %c0_i32_0 = arith.constant 0 : i32
    return %arg0, %arg2, %c0_i32 : i32, i32, i32
  }
  func.func @transform_3(%arg0: i32, %arg1: i32, %arg2: i32) -> (i32, i32, i32) {
    %c0_i32 = arith.constant 0 : i32
    %c0_i32_0 = arith.constant 0 : i32
    return %arg0, %arg1, %c0_i32 : i32, i32, i32
  }
}

</mosaic_0001>

<llo_original>
// kernel: tpu_custom_call.1
$region0: #{tpu_custom_call.1}
  #allocation0 [shape = 'u32[]', space=smem, size = 0x4, offset = 0x4, fixed_abs, tag = 'smem constant byte address 0x4 - core index']
  #allocation1 [shape = 'u32[144,128]{1,0:T(1,128)}', space=vmem, size = 0x12000, scoped, tag = 'internal scratch']
  #allocation2 [shape = 'bf16[4,256,32]{2,1,0:T(16,128)(2,1)}', space=vmem, size = 0x40000, scoped, tag = 'scratch operand']
  #allocation3 [shape = 'f32[4,256,1]{2,1,0:T(8,128)}', space=vmem, size = 0x80000, scoped, tag = 'scratch operand']
  #allocation4 [shape = 'f32[4,256,1]{2,1,0:T(8,128)}', space=vmem, size = 0x80000, scoped, tag = 'scratch operand']
  #allocation5 [shape = 'f32[4,256,32]{2,1,0:T(8,128)}', space=vmem, size = 0x80000, scoped, tag = 'scratch operand']
  %s0 = inlined_call_operand.hbm [shape: bf16[2,256,128], index: 0, kind: input, shape index: {}]
  %s1 = inlined_call_operand.hbm [shape: bf16[2,256,128], index: 1, kind: input, shape index: {}]
  %s2 = inlined_call_operand.hbm [shape: bf16[2,256,128], index: 2, kind: input, shape index: {}]
  %s3 = inlined_call_operand.hbm [shape: f32[2,256,128], index: 3, kind: output, shape index: {}]
  %s4 = sld [smem:[#allocation0]]
  $region65: #{tpu_custom_call.1} parent=0
    _
  %s6 = ssub.s32 1, %s4
  %s7 = scalar_select 0, %s6, %s4
  $region1: #{tpu_custom_call.1} parent=0
    #allocation6 [shape = 'u8[131072]{0}', space=vmem, size = 0x20000, scoped, tag = 'input window, operand 0']
    #allocation7 [shape = 's32[2]{0}', space=sflag, size = 0x8, scoped, tag = 'scoped memory for tpu_custom_call.1']
    #allocation8 [shape = 's32[2]{0}', space=sflag, size = 0x8, scoped, tag = 'scoped memory for tpu_custom_call.1']
    #allocation9 [shape = 'u8[131072]{0}', space=vmem, size = 0x20000, scoped, tag = 'input window, operand 1']
    #allocation10 [shape = 's32[2]{0}', space=sflag, size = 0x8, scoped, tag = 'scoped memory for tpu_custom_call.1']
    #allocation11 [shape = 'u8[131072]{0}', space=vmem, size = 0x20000, scoped, tag = 'input window, operand 2']
    #allocation12 [shape = 'u8[262144]{0}', space=vmem, size = 0x40000, scoped, tag = 'output window, operand 0']
    %8 = vsyncpa [#allocation7], 0
    %s9 = scalar_lea.sflag [#allocation7], 1
    %10 = vsyncpa %s9, 0
    %11 = vsyncpa [#allocation10], 0
    %s12 = scalar_lea.sflag [#allocation10], 1
    %13 = vsyncpa %s12, 0
    %14 = vsyncpa [#allocation8], 0
    %s15 = scalar_lea.sflag [#allocation8], 1
    %16 = vsyncpa %s15, 0
    loop: start=0, step=1, limit=4
    $region2: #{tpu_custom_call.1} parent=1 // loop_pre_header
      _
    $region3: #{tpu_custom_call.1} parent=1 // loop_header
      %s18 = sphi 0, %s22
      %p19 = scmp.ge.s32.totalorder %s18, 4
      %s25 = sphi 0, %s44
      %s26 = sphi 0, %s40
      %s27 = sphi 0, %s36
      %s28 = sphi 0, %s25
      %s29 = sphi 0, %s26
      %s30 = sphi 0, %s27
      %s31 = sphi 0, %s28
      %s32 = sphi 0, %s29
      %s33 = sphi 0, %s30
      %s49 = sphi 0, %s51
      %s52 = sphi 0, %s49
      %s53 = sphi 0, %s52
      %s69 = sphi 0, %s53
      %s77 = sphi 0, %s79
      %s80 = sphi 0, %s77
      %s81 = sphi 0, %s80
      %s97 = sphi 0, %s81
      %s105 = sphi 0, %s107
      %s108 = sphi 0, %s105
      %s109 = sphi 0, %s108
      %s125 = sphi 0, %s109
      %s133 = sphi 0, %s135
      %s136 = sphi 0, %s133
      %s137 = sphi 0, %s136
      %s153 = sphi 0, %s137
    $region4: #{tpu_custom_call.1} parent=1 // loop_header_branch
      %21 = sbr.rel (%p19) target = $region8
    $region5: #{tpu_custom_call.1} parent=1 // loop_body
      %s23 = ssub.s32 %s18, 1
      %s24 = ssub.s32 %s18, 2
      %s34 = sadd.s32 1, %s27
      %p35 = scmp.ge.s32.totalorder %s34, 1
      %s36 = scalar_select %p35, 0, %s34
      %s37 = sadd.s32 1, %s26
      %s38 = scalar_select %p35, %s37, %s26
      %p39 = scmp.ge.s32.totalorder %s38, 1
      %s40 = scalar_select %p39, 0, %s38
      %s41 = sadd.s32 1, %s25
      %s42 = scalar_select %p39, %s41, %s25
      %p43 = scmp.ge.s32.totalorder %s42, 2
      %s44 = scalar_select %p43, 0, %s42
      %s45 = ssub.s32 %s25, %s44
      %s46 = ssub.s32 %s26, %s40
      %s47 = sor.u32 %s45, %s46
      %p48 = scmp.eq.s32.totalorder %s47, 0
      %s50 = sadd.s32 %s49, 1
      %s51 = scalar_select %p48, %s49, %s50
      %p54 = pneg %p48
      %p55 = scmp.eq.s32.totalorder %s18, 1
      %p56 = por %p54, %p55
      %p57 = scmp.ne.s32.totalorder %s49, %s52
      %p58 = scmp.eq.s32.totalorder %s18, 0
      %p59 = por %p57, %p58
      %p60 = scmp.ne.s32.totalorder %s49, %s52
      %p61 = scmp.eq.s32.totalorder %s23, 1
      %p62 = por %p60, %p61
      %p63 = scmp.ne.s32.totalorder %s52, %s53
      %p64 = scmp.eq.s32.totalorder %s23, 0
      %p65 = por %p63, %p64
      %p66 = scmp.ne.s32.totalorder %s52, %s53
      %p67 = scmp.eq.s32.totalorder %s24, 1
      %p68 = por %p66, %p67
      %p70 = scmp.ne.s32.totalorder %s53, %s69
      %p71 = scmp.eq.s32.totalorder %s24, 0
      %p72 = por %p70, %p71
      %s73 = ssub.s32 %s25, %s44
      %s74 = ssub.s32 %s27, %s36
      %s75 = sor.u32 %s73, %s74
      %p76 = scmp.eq.s32.totalorder %s75, 0
      %s78 = sadd.s32 %s77, 1
      %s79 = scalar_select %p76, %s77, %s78
      %p82 = pneg %p76
      %p83 = scmp.eq.s32.totalorder %s18, 1
      %p84 = por %p82, %p83
      %p85 = scmp.ne.s32.totalorder %s77, %s80
      %p86 = scmp.eq.s32.totalorder %s18, 0
      %p87 = por %p85, %p86
      %p88 = scmp.ne.s32.totalorder %s77, %s80
      %p89 = scmp.eq.s32.totalorder %s23, 1
      %p90 = por %p88, %p89
      %p91 = scmp.ne.s32.totalorder %s80, %s81
      %p92 = scmp.eq.s32.totalorder %s23, 0
      %p93 = por %p91, %p92
      %p94 = scmp.ne.s32.totalorder %s80, %s81
      %p95 = scmp.eq.s32.totalorder %s24, 1
      %p96 = por %p94, %p95
      %p98 = scmp.ne.s32.totalorder %s81, %s97
      %p99 = scmp.eq.s32.totalorder %s24, 0
      %p100 = por %p98, %p99
      %s101 = ssub.s32 %s25, %s44
      %s102 = ssub.s32 %s27, %s36
      %s103 = sor.u32 %s101, %s102
      %p104 = scmp.eq.s32.totalorder %s103, 0
      %s106 = sadd.s32 %s105, 1
      %s107 = scalar_select %p104, %s105, %s106
      %p110 = pneg %p104
      %p111 = scmp.eq.s32.totalorder %s18, 1
      %p112 = por %p110, %p111
      %p113 = scmp.ne.s32.totalorder %s105, %s108
      %p114 = scmp.eq.s32.totalorder %s18, 0
      %p115 = por %p113, %p114
      %p116 = scmp.ne.s32.totalorder %s105, %s108
      %p117 = scmp.eq.s32.totalorder %s23, 1
      %p118 = por %p116, %p117
      %p119 = scmp.ne.s32.totalorder %s108, %s109
      %p120 = scmp.eq.s32.totalorder %s23, 0
      %p121 = por %p119, %p120
      %p122 = scmp.ne.s32.totalorder %s108, %s109
      %p123 = scmp.eq.s32.totalorder %s24, 1
      %p124 = por %p122, %p123
      %p126 = scmp.ne.s32.totalorder %s109, %s125
      %p127 = scmp.eq.s32.totalorder %s24, 0
      %p128 = por %p126, %p127
      %s129 = ssub.s32 %s25, %s44
      %s130 = ssub.s32 %s26, %s40
      %s131 = sor.u32 %s129, %s130
      %p132 = scmp.eq.s32.totalorder %s131, 0
      %s134 = sadd.s32 %s133, 1
      %s135 = scalar_select %p132, %s133, %s134
      %p138 = pneg %p132
      %p139 = scmp.eq.s32.totalorder %s18, 1
      %p140 = por %p138, %p139
      %p141 = scmp.ne.s32.totalorder %s133, %s136
      %p142 = scmp.eq.s32.totalorder %s18, 0
      %p143 = por %p141, %p142
      %p144 = scmp.ne.s32.totalorder %s133, %s136
      %p145 = scmp.eq.s32.totalorder %s23, 1
      %p146 = por %p144, %p145
      %p147 = scmp.ne.s32.totalorder %s136, %s137
      %p148 = scmp.eq.s32.totalorder %s23, 0
      %p149 = por %p147, %p148
      %p150 = scmp.ne.s32.totalorder %s136, %s137
      %p151 = scmp.eq.s32.totalorder %s24, 1
      %p152 = por %p150, %p151
      %p154 = scmp.ne.s32.totalorder %s137, %s153
      %p155 = scmp.eq.s32.totalorder %s24, 0
      %p156 = por %p154, %p155
      %p157 = scmp.le.s32.totalorder 1, %s18
      %p158 = scmp.lt.s32.totalorder %s18, 3
      %p159 = pnand %p157, %p158
      %p160 = pneg %p159
      // Predicated region
      $region9: #{tpu_custom_call.1} parent=5 // pred_check
        _
      $region10: #{tpu_custom_call.1} parent=5 // pred_check_branch
        %162 = sbr.rel (%p159) target = $region12
      $region11: #{tpu_custom_call.1} parent=5 // pred_region
        %s163 = ssub.s32 %s18, 1
      $region12: #{tpu_custom_call.1} parent=5 // pred_fallthru
        _
      %p164 = scmp.lt.s32.totalorder %s18, 2
      // Predicated region
      $region13: #{tpu_custom_call.1} parent=5 // pred_check
        %p165 = pneg %p164
      $region14: #{tpu_custom_call.1} parent=5 // pred_check_branch
        %167 = sbr.rel (%p165) target = $region16
      $region15: #{tpu_custom_call.1} parent=5 // pred_region
        // Predicated region
        $region17: #{tpu_custom_call.1} parent=15 // pred_check
          %p168 = pneg %p59
        $region18: #{tpu_custom_call.1} parent=15 // pred_check_branch
          %170 = sbr.rel (%p168) target = $region20
        $region19: #{tpu_custom_call.1} parent=15 // pred_region
          %s171 = sand.u32 %s49, 1
          %s172 = scalar_lea.sflag [#allocation7], %s171
          %s173 = sand.u32 %s49, 1
          %s174 = smul.addr %s173, 128
          %s175 = scalar_lea.vmem [#allocation6], %s174
          %s176 = smul.u32 32, %s26
          %s178 = ssub.s32 2048, 2048
          %179 = vsyncadd %s172, %s178
          %s180 = smul.addr %s25, 32
          %s181 = sadd.s32 %s176, %s180
          %s182 = smul.addr %s181, 64
          %s183 = scalar_lea.hbm %s0, %s182
          %s184 = sshll.u32 %s175, 4
          %s185 = int_to_ptr.vmem [resolvable:$true] %s184
          %190 = dma.hbm_to_vmem [thread:$0]  %s183, 2048, %s185, %s172, 64, 64, 4
        $region20: #{tpu_custom_call.1} parent=15 // pred_fallthru
          _
        // Predicated region
        $region21: #{tpu_custom_call.1} parent=15 // pred_check
          %p191 = pneg %p87
        $region22: #{tpu_custom_call.1} parent=15 // pred_check_branch
          %193 = sbr.rel (%p191) target = $region24
        $region23: #{tpu_custom_call.1} parent=15 // pred_region
          %s194 = sand.u32 %s18, 1
          %s195 = scalar_lea.sflag [#allocation10], %s194
          %s196 = sand.u32 %s77, 1
          %s197 = smul.addr %s196, 128
          %s198 = scalar_lea.vmem [#allocation9], %s197
          %s199 = smul.u32 32, %s27
          %s201 = ssub.s32 2048, 2048
          %202 = vsyncadd %s195, %s201
          %s203 = smul.addr %s25, 32
          %s204 = sadd.s32 %s199, %s203
          %s205 = smul.addr %s204, 64
          %s206 = scalar_lea.hbm %s1, %s205
          %s207 = sshll.u32 %s198, 4
          %s208 = int_to_ptr.vmem [resolvable:$true] %s207
          %213 = dma.hbm_to_vmem [thread:$0]  %s206, 2048, %s208, %s195, 64, 64, 4
        $region24: #{tpu_custom_call.1} parent=15 // pred_fallthru
          _
        // Predicated region
        $region25: #{tpu_custom_call.1} parent=15 // pred_check
          %p214 = pneg %p115
        $region26: #{tpu_custom_call.1} parent=15 // pred_check_branch
          %216 = sbr.rel (%p214) target = $region28
        $region27: #{tpu_custom_call.1} parent=15 // pred_region
          %s217 = sand.u32 %s18, 1
          %s218 = scalar_lea.sflag [#allocation10], %s217
          %s219 = sand.u32 %s105, 1
          %s220 = smul.addr %s219, 128
          %s221 = scalar_lea.vmem [#allocation11], %s220
          %s222 = smul.u32 32, %s27
          %s224 = ssub.s32 2048, 2048
          %225 = vsyncadd %s218, %s224
          %s226 = smul.addr %s25, 32
          %s227 = sadd.s32 %s222, %s226
          %s228 = smul.addr %s227, 64
          %s229 = scalar_lea.hbm %s2, %s228
          %s230 = sshll.u32 %s221, 4
          %s231 = int_to_ptr.vmem [resolvable:$true] %s230
          %236 = dma.hbm_to_vmem [thread:$0]  %s229, 2048, %s231, %s218, 64, 64, 4
        $region28: #{tpu_custom_call.1} parent=15 // pred_fallthru
          _
      $region16: #{tpu_custom_call.1} parent=5 // pred_fallthru
        _
      %p237 = scmp.le.s32.totalorder 1, %s18
      %p238 = scmp.lt.s32.totalorder %s18, 3
      %p239 = pnand %p237, %p238
      %p240 = pneg %p239
      // Predicated region
      $region29: #{tpu_custom_call.1} parent=5 // pred_check
        _
      $region30: #{tpu_custom_call.1} parent=5 // pred_check_branch
        %242 = sbr.rel (%p239) target = $region32
      $region31: #{tpu_custom_call.1} parent=5 // pred_region
        %s243 = ssub.s32 %s18, 1
        %s244 = sand.u32 %s52, 1
        %s245 = scalar_lea.sflag [#allocation7], %s244
        %s246 = sand.u32 %s52, 1
        %s247 = smul.addr %s246, 128
        %s248 = scalar_lea.vmem [#allocation6], %s247
        // Predicated region
        $region33: #{tpu_custom_call.1} parent=31 // pred_check
          %p249 = pneg %p65
        $region34: #{tpu_custom_call.1} parent=31 // pred_check_branch
          %251 = sbr.rel (%p249) target = $region36
        $region35: #{tpu_custom_call.1} parent=31 // pred_region
          %252 = dma.done %s245, 2048
        $region36: #{tpu_custom_call.1} parent=31 // pred_fallthru
          _
        %s253 = sand.u32 %s23, 1
        %s254 = scalar_lea.sflag [#allocation10], %s253
        %s255 = sand.u32 %s80, 1
        %s256 = smul.addr %s255, 128
        %s257 = scalar_lea.vmem [#allocation9], %s256
        // Predicated region
        $region37: #{tpu_custom_call.1} parent=31 // pred_check
          %p258 = pneg %p93
        $region38: #{tpu_custom_call.1} parent=31 // pred_check_branch
          %260 = sbr.rel (%p258) target = $region40
        $region39: #{tpu_custom_call.1} parent=31 // pred_region
          %261 = dma.done %s254, 2048
        $region40: #{tpu_custom_call.1} parent=31 // pred_fallthru
          _
        %s262 = sand.u32 %s23, 1
        %s263 = scalar_lea.sflag [#allocation10], %s262
        %s264 = sand.u32 %s108, 1
        %s265 = smul.addr %s264, 128
        %s266 = scalar_lea.vmem [#allocation11], %s265
        // Predicated region
        $region41: #{tpu_custom_call.1} parent=31 // pred_check
          %p267 = pneg %p121
        $region42: #{tpu_custom_call.1} parent=31 // pred_check_branch
          %269 = sbr.rel (%p267) target = $region44
        $region43: #{tpu_custom_call.1} parent=31 // pred_region
          %270 = dma.done %s263, 2048
        $region44: #{tpu_custom_call.1} parent=31 // pred_fallthru
          _
        %s271 = sand.u32 %s52, 1
        %s272 = scalar_lea.sflag [#allocation7], %s271
        %s273 = sand.u32 %s52, 1
        %s274 = smul.addr %s273, 128
        %s275 = scalar_lea.vmem [#allocation6], %s274
        %p276 = pneg %p65
        %p277 = pneg %p62
        %s278 = sand.u32 %s23, 1
        %s279 = scalar_lea.sflag [#allocation10], %s278
        %s280 = sand.u32 %s80, 1
        %s281 = smul.addr %s280, 128
        %s282 = scalar_lea.vmem [#allocation9], %s281
        %p283 = pneg %p93
        %p284 = pneg %p90
        %s285 = sand.u32 %s23, 1
        %s286 = scalar_lea.sflag [#allocation10], %s285
        %s287 = sand.u32 %s108, 1
        %s288 = smul.addr %s287, 128
        %s289 = scalar_lea.vmem [#allocation11], %s288
        %p290 = pneg %p121
        %p291 = pneg %p118
        %p292 = pneg %p149
        %p293 = pneg %p146
        %s294 = sand.u32 %s136, 1
        %s295 = scalar_lea.sflag [#allocation8], %s294
        %s296 = sand.u32 %s136, 1
        %s297 = smul.addr %s296, 256
        %s298 = scalar_lea.vmem [#allocation12], %s297
        %s299 = smul.u32 32, %s29
        %s300 = smul.u32 32, %s30
        %s301 = smul.u32 32, %s30
        %s302 = smul.u32 32, %s29
        %p305 = scmp.eq.s32.totalorder %s30, 0
        // Predicated region
        $region45: #{tpu_custom_call.1} parent=31 // pred_check
          %p306 = pneg %p305
        $region46: #{tpu_custom_call.1} parent=31 // pred_check_branch
          %308 = sbr.rel (%p306) target = $region48
        $region47: #{tpu_custom_call.1} parent=31 // pred_region
          %vm309 = vcmask 7168
          %310 = vst.msk [vmem:[#allocation3] sm:$0xff] %vm309, -inf
          %311 = vst.msk [vmem:[#allocation3 + $0x8] sm:$0xff] %vm309, -inf
          %312 = vst.msk [vmem:[#allocation3 + $0x10] sm:$0xff] %vm309, -inf
          %313 = vst.msk [vmem:[#allocation3 + $0x18] sm:$0xff] %vm309, -inf
          %314 = vst.msk [vmem:[#allocation3 + $0x20] sm:$0xff] %vm309, -inf
          %315 = vst.msk [vmem:[#allocation3 + $0x28] sm:$0xff] %vm309, -inf
          %316 = vst.msk [vmem:[#allocation3 + $0x30] sm:$0xff] %vm309, -inf
          %317 = vst.msk [vmem:[#allocation3 + $0x38] sm:$0xff] %vm309, -inf
          %318 = vst.msk [vmem:[#allocation3 + $0x40] sm:$0xff] %vm309, -inf
          %319 = vst.msk [vmem:[#allocation3 + $0x48] sm:$0xff] %vm309, -inf
          %320 = vst.msk [vmem:[#allocation3 + $0x50] sm:$0xff] %vm309, -inf
          %321 = vst.msk [vmem:[#allocation3 + $0x58] sm:$0xff] %vm309, -inf
          %322 = vst.msk [vmem:[#allocation3 + $0x60] sm:$0xff] %vm309, -inf
          %323 = vst.msk [vmem:[#allocation3 + $0x68] sm:$0xff] %vm309, -inf
          %324 = vst.msk [vmem:[#allocation3 + $0x70] sm:$0xff] %vm309, -inf
          %325 = vst.msk [vmem:[#allocation3 + $0x78] sm:$0xff] %vm309, -inf
          %326 = vst.msk [vmem:[#allocation3 + $0x80] sm:$0xff] %vm309, -inf
          %327 = vst.msk [vmem:[#allocation3 + $0x88] sm:$0xff] %vm309, -inf
          %328 = vst.msk [vmem:[#allocation3 + $0x90] sm:$0xff] %vm309, -inf
          %329 = vst.msk [vmem:[#allocation3 + $0x98] sm:$0xff] %vm309, -inf
          %330 = vst.msk [vmem:[#allocation3 + $0xa0] sm:$0xff] %vm309, -inf
          %331 = vst.msk [vmem:[#allocation3 + $0xa8] sm:$0xff] %vm309, -inf
          %332 = vst.msk [vmem:[#allocation3 + $0xb0] sm:$0xff] %vm309, -inf
          %333 = vst.msk [vmem:[#allocation3 + $0xb8] sm:$0xff] %vm309, -inf
          %334 = vst.msk [vmem:[#allocation3 + $0xc0] sm:$0xff] %vm309, -inf
          %335 = vst.msk [vmem:[#allocation3 + $0xc8] sm:$0xff] %vm309, -inf
          %336 = vst.msk [vmem:[#allocation3 + $0xd0] sm:$0xff] %vm309, -inf
          %337 = vst.msk [vmem:[#allocation3 + $0xd8] sm:$0xff] %vm309, -inf
          %338 = vst.msk [vmem:[#allocation3 + $0xe0] sm:$0xff] %vm309, -inf
          %339 = vst.msk [vmem:[#allocation3 + $0xe8] sm:$0xff] %vm309, -inf
          %340 = vst.msk [vmem:[#allocation3 + $0xf0] sm:$0xff] %vm309, -inf
          %341 = vst.msk [vmem:[#allocation3 + $0xf8] sm:$0xff] %vm309, -inf
          %342 = vst.msk [vmem:[#allocation3 + $0x100] sm:$0xff] %vm309, -inf
          %343 = vst.msk [vmem:[#allocation3 + $0x108] sm:$0xff] %vm309, -inf
          %344 = vst.msk [vmem:[#allocation3 + $0x110] sm:$0xff] %vm309, -inf
          %345 = vst.msk [vmem:[#allocation3 + $0x118] sm:$0xff] %vm309, -inf
          %346 = vst.msk [vmem:[#allocation3 + $0x120] sm:$0xff] %vm309, -inf
          %347 = vst.msk [vmem:[#allocation3 + $0x128] sm:$0xff] %vm309, -inf
          %348 = vst.msk [vmem:[#allocation3 + $0x130] sm:$0xff] %vm309, -inf
          %349 = vst.msk [vmem:[#allocation3 + $0x138] sm:$0xff] %vm309, -inf
          %350 = vst.msk [vmem:[#allocation3 + $0x140] sm:$0xff] %vm309, -inf
          %351 = vst.msk [vmem:[#allocation3 + $0x148] sm:$0xff] %vm309, -inf
          %352 = vst.msk [vmem:[#allocation3 + $0x150] sm:$0xff] %vm309, -inf
          %353 = vst.msk [vmem:[#allocation3 + $0x158] sm:$0xff] %vm309, -inf
          %354 = vst.msk [vmem:[#allocation3 + $0x160] sm:$0xff] %vm309, -inf
          %355 = vst.msk [vmem:[#allocation3 + $0x168] sm:$0xff] %vm309, -inf
          %356 = vst.msk [vmem:[#allocation3 + $0x170] sm:$0xff] %vm309, -inf
          %357 = vst.msk [vmem:[#allocation3 + $0x178] sm:$0xff] %vm309, -inf
          %358 = vst.msk [vmem:[#allocation3 + $0x180] sm:$0xff] %vm309, -inf
          %359 = vst.msk [vmem:[#allocation3 + $0x188] sm:$0xff] %vm309, -inf
          %360 = vst.msk [vmem:[#allocation3 + $0x190] sm:$0xff] %vm309, -inf
          %361 = vst.msk [vmem:[#allocation3 + $0x198] sm:$0xff] %vm309, -inf
          %362 = vst.msk [vmem:[#allocation3 + $0x1a0] sm:$0xff] %vm309, -inf
          %363 = vst.msk [vmem:[#allocation3 + $0x1a8] sm:$0xff] %vm309, -inf
          %364 = vst.msk [vmem:[#allocation3 + $0x1b0] sm:$0xff] %vm309, -inf
          %365 = vst.msk [vmem:[#allocation3 + $0x1b8] sm:$0xff] %vm309, -inf
          %366 = vst.msk [vmem:[#allocation3 + $0x1c0] sm:$0xff] %vm309, -inf
          %367 = vst.msk [vmem:[#allocation3 + $0x1c8] sm:$0xff] %vm309, -inf
          %368 = vst.msk [vmem:[#allocation3 + $0x1d0] sm:$0xff] %vm309, -inf
          %369 = vst.msk [vmem:[#allocation3 + $0x1d8] sm:$0xff] %vm309, -inf
          %370 = vst.msk [vmem:[#allocation3 + $0x1e0] sm:$0xff] %vm309, -inf
          %371 = vst.msk [vmem:[#allocation3 + $0x1e8] sm:$0xff] %vm309, -inf
          %372 = vst.msk [vmem:[#allocation3 + $0x1f0] sm:$0xff] %vm309, -inf
          %373 = vst.msk [vmem:[#allocation3 + $0x1f8] sm:$0xff] %vm309, -inf
          %374 = vst.msk [vmem:[#allocation3 + $0x200] sm:$0xff] %vm309, -inf
          %375 = vst.msk [vmem:[#allocation3 + $0x208] sm:$0xff] %vm309, -inf
          %376 = vst.msk [vmem:[#allocation3 + $0x210] sm:$0xff] %vm309, -inf
          %377 = vst.msk [vmem:[#allocation3 + $0x218] sm:$0xff] %vm309, -inf
          %378 = vst.msk [vmem:[#allocation3 + $0x220] sm:$0xff] %vm309, -inf
          %379 = vst.msk [vmem:[#allocation3 + $0x228] sm:$0xff] %vm309, -inf
          %380 = vst.msk [vmem:[#allocation3 + $0x230] sm:$0xff] %vm309, -inf
          %381 = vst.msk [vmem:[#allocation3 + $0x238] sm:$0xff] %vm309, -inf
          %382 = vst.msk [vmem:[#allocation3 + $0x240] sm:$0xff] %vm309, -inf
          %383 = vst.msk [vmem:[#allocation3 + $0x248] sm:$0xff] %vm309, -inf
          %384 = vst.msk [vmem:[#allocation3 + $0x250] sm:$0xff] %vm309, -inf
          %385 = vst.msk [vmem:[#allocation3 + $0x258] sm:$0xff] %vm309, -inf
          %386 = vst.msk [vmem:[#allocation3 + $0x260] sm:$0xff] %vm309, -inf
          %387 = vst.msk [vmem:[#allocation3 + $0x268] sm:$0xff] %vm309, -inf
          %388 = vst.msk [vmem:[#allocation3 + $0x270] sm:$0xff] %vm309, -inf
          %389 = vst.msk [vmem:[#allocation3 + $0x278] sm:$0xff] %vm309, -inf
          %390 = vst.msk [vmem:[#allocation3 + $0x280] sm:$0xff] %vm309, -inf
          %391 = vst.msk [vmem:[#allocation3 + $0x288] sm:$0xff] %vm309, -inf
          %392 = vst.msk [vmem:[#allocation3 + $0x290] sm:$0xff] %vm309, -inf
          %393 = vst.msk [vmem:[#allocation3 + $0x298] sm:$0xff] %vm309, -inf
          %394 = vst.msk [vmem:[#allocation3 + $0x2a0] sm:$0xff] %vm309, -inf
          %395 = vst.msk [vmem:[#allocation3 + $0x2a8] sm:$0xff] %vm309, -inf
          %396 = vst.msk [vmem:[#allocation3 + $0x2b0] sm:$0xff] %vm309, -inf
          %397 = vst.msk [vmem:[#allocation3 + $0x2b8] sm:$0xff] %vm309, -inf
          %398 = vst.msk [vmem:[#allocation3 + $0x2c0] sm:$0xff] %vm309, -inf
          %399 = vst.msk [vmem:[#allocation3 + $0x2c8] sm:$0xff] %vm309, -inf
          %400 = vst.msk [vmem:[#allocation3 + $0x2d0] sm:$0xff] %vm309, -inf
          %401 = vst.msk [vmem:[#allocation3 + $0x2d8] sm:$0xff] %vm309, -inf
          %402 = vst.msk [vmem:[#allocation3 + $0x2e0] sm:$0xff] %vm309, -inf
          %403 = vst.msk [vmem:[#allocation3 + $0x2e8] sm:$0xff] %vm309, -inf
          %404 = vst.msk [vmem:[#allocation3 + $0x2f0] sm:$0xff] %vm309, -inf
          %405 = vst.msk [vmem:[#allocation3 + $0x2f8] sm:$0xff] %vm309, -inf
          %406 = vst.msk [vmem:[#allocation3 + $0x300] sm:$0xff] %vm309, -inf
          %407 = vst.msk [vmem:[#allocation3 + $0x308] sm:$0xff] %vm309, -inf
          %408 = vst.msk [vmem:[#allocation3 + $0x310] sm:$0xff] %vm309, -inf
          %409 = vst.msk [vmem:[#allocation3 + $0x318] sm:$0xff] %vm309, -inf
          %410 = vst.msk [vmem:[#allocation3 + $0x320] sm:$0xff] %vm309, -inf
          %411 = vst.msk [vmem:[#allocation3 + $0x328] sm:$0xff] %vm309, -inf
          %412 = vst.msk [vmem:[#allocation3 + $0x330] sm:$0xff] %vm309, -inf
          %413 = vst.msk [vmem:[#allocation3 + $0x338] sm:$0xff] %vm309, -inf
          %414 = vst.msk [vmem:[#allocation3 + $0x340] sm:$0xff] %vm309, -inf
          %415 = vst.msk [vmem:[#allocation3 + $0x348] sm:$0xff] %vm309, -inf
          %416 = vst.msk [vmem:[#allocation3 + $0x350] sm:$0xff] %vm309, -inf
          %417 = vst.msk [vmem:[#allocation3 + $0x358] sm:$0xff] %vm309, -inf
          %418 = vst.msk [vmem:[#allocation3 + $0x360] sm:$0xff] %vm309, -inf
          %419 = vst.msk [vmem:[#allocation3 + $0x368] sm:$0xff] %vm309, -inf
          %420 = vst.msk [vmem:[#allocation3 + $0x370] sm:$0xff] %vm309, -inf
          %421 = vst.msk [vmem:[#allocation3 + $0x378] sm:$0xff] %vm309, -inf
          %422 = vst.msk [vmem:[#allocation3 + $0x380] sm:$0xff] %vm309, -inf
          %423 = vst.msk [vmem:[#allocation3 + $0x388] sm:$0xff] %vm309, -inf
          %424 = vst.msk [vmem:[#allocation3 + $0x390] sm:$0xff] %vm309, -inf
          %425 = vst.msk [vmem:[#allocation3 + $0x398] sm:$0xff] %vm309, -inf
          %426 = vst.msk [vmem:[#allocation3 + $0x3a0] sm:$0xff] %vm309, -inf
          %427 = vst.msk [vmem:[#allocation3 + $0x3a8] sm:$0xff] %vm309, -inf
          %428 = vst.msk [vmem:[#allocation3 + $0x3b0] sm:$0xff] %vm309, -inf
          %429 = vst.msk [vmem:[#allocation3 + $0x3b8] sm:$0xff] %vm309, -inf
          %430 = vst.msk [vmem:[#allocation3 + $0x3c0] sm:$0xff] %vm309, -inf
          %431 = vst.msk [vmem:[#allocation3 + $0x3c8] sm:$0xff] %vm309, -inf
          %432 = vst.msk [vmem:[#allocation3 + $0x3d0] sm:$0xff] %vm309, -inf
          %433 = vst.msk [vmem:[#allocation3 + $0x3d8] sm:$0xff] %vm309, -inf
          %434 = vst.msk [vmem:[#allocation3 + $0x3e0] sm:$0xff] %vm309, -inf
          %435 = vst.msk [vmem:[#allocation3 + $0x3e8] sm:$0xff] %vm309, -inf
          %436 = vst.msk [vmem:[#allocation3 + $0x3f0] sm:$0xff] %vm309, -inf
          %437 = vst.msk [vmem:[#allocation3 + $0x3f8] sm:$0xff] %vm309, -inf
          %438 = vst.msk [vmem:[#allocation4] sm:$0xff] %vm309, 0.0
          %439 = vst.msk [vmem:[#allocation4 + $0x8] sm:$0xff] %vm309, 0.0
          %440 = vst.msk [vmem:[#allocation4 + $0x10] sm:$0xff] %vm309, 0.0
          %441 = vst.msk [vmem:[#allocation4 + $0x18] sm:$0xff] %vm309, 0.0
          %442 = vst.msk [vmem:[#allocation4 + $0x20] sm:$0xff] %vm309, 0.0
          %443 = vst.msk [vmem:[#allocation4 + $0x28] sm:$0xff] %vm309, 0.0
          %444 = vst.msk [vmem:[#allocation4 + $0x30] sm:$0xff] %vm309, 0.0
          %445 = vst.msk [vmem:[#allocation4 + $0x38] sm:$0xff] %vm309, 0.0
          %446 = vst.msk [vmem:[#allocation4 + $0x40] sm:$0xff] %vm309, 0.0
          %447 = vst.msk [vmem:[#allocation4 + $0x48] sm:$0xff] %vm309, 0.0
          %448 = vst.msk [vmem:[#allocation4 + $0x50] sm:$0xff] %vm309, 0.0
          %449 = vst.msk [vmem:[#allocation4 + $0x58] sm:$0xff] %vm309, 0.0
          %450 = vst.msk [vmem:[#allocation4 + $0x60] sm:$0xff] %vm309, 0.0
          %451 = vst.msk [vmem:[#allocation4 + $0x68] sm:$0xff] %vm309, 0.0
          %452 = vst.msk [vmem:[#allocation4 + $0x70] sm:$0xff] %vm309, 0.0
          %453 = vst.msk [vmem:[#allocation4 + $0x78] sm:$0xff] %vm309, 0.0
          %454 = vst.msk [vmem:[#allocation4 + $0x80] sm:$0xff] %vm309, 0.0
          %455 = vst.msk [vmem:[#allocation4 + $0x88] sm:$0xff] %vm309, 0.0
          %456 = vst.msk [vmem:[#allocation4 + $0x90] sm:$0xff] %vm309, 0.0
          %457 = vst.msk [vmem:[#allocation4 + $0x98] sm:$0xff] %vm309, 0.0
          %458 = vst.msk [vmem:[#allocation4 + $0xa0] sm:$0xff] %vm309, 0.0
          %459 = vst.msk [vmem:[#allocation4 + $0xa8] sm:$0xff] %vm309, 0.0
          %460 = vst.msk [vmem:[#allocation4 + $0xb0] sm:$0xff] %vm309, 0.0
          %461 = vst.msk [vmem:[#allocation4 + $0xb8] sm:$0xff] %vm309, 0.0
          %462 = vst.msk [vmem:[#allocation4 + $0xc0] sm:$0xff] %vm309, 0.0
          %463 = vst.msk [vmem:[#allocation4 + $0xc8] sm:$0xff] %vm309, 0.0
          %464 = vst.msk [vmem:[#allocation4 + $0xd0] sm:$0xff] %vm309, 0.0
          %465 = vst.msk [vmem:[#allocation4 + $0xd8] sm:$0xff] %vm309, 0.0
          %466 = vst.msk [vmem:[#allocation4 + $0xe0] sm:$0xff] %vm309, 0.0
          %467 = vst.msk [vmem:[#allocation4 + $0xe8] sm:$0xff] %vm309, 0.0
          %468 = vst.msk [vmem:[#allocation4 + $0xf0] sm:$0xff] %vm309, 0.0
          %469 = vst.msk [vmem:[#allocation4 + $0xf8] sm:$0xff] %vm309, 0.0
          %470 = vst.msk [vmem:[#allocation4 + $0x100] sm:$0xff] %vm309, 0.0
          %471 = vst.msk [vmem:[#allocation4 + $0x108] sm:$0xff] %vm309, 0.0
          %472 = vst.msk [vmem:[#allocation4 + $0x110] sm:$0xff] %vm309, 0.0
          %473 = vst.msk [vmem:[#allocation4 + $0x118] sm:$0xff] %vm309, 0.0
          %474 = vst.msk [vmem:[#allocation4 + $0x120] sm:$0xff] %vm309, 0.0
          %475 = vst.msk [vmem:[#allocation4 + $0x128] sm:$0xff] %vm309, 0.0
          %476 = vst.msk [vmem:[#allocation4 + $0x130] sm:$0xff] %vm309, 0.0
          %477 = vst.msk [vmem:[#allocation4 + $0x138] sm:$0xff] %vm309, 0.0
          %478 = vst.msk [vmem:[#allocation4 + $0x140] sm:$0xff] %vm309, 0.0
          %479 = vst.msk [vmem:[#allocation4 + $0x148] sm:$0xff] %vm309, 0.0
          %480 = vst.msk [vmem:[#allocation4 + $0x150] sm:$0xff] %vm309, 0.0
          %481 = vst.msk [vmem:[#allocation4 + $0x158] sm:$0xff] %vm309, 0.0
          %482 = vst.msk [vmem:[#allocation4 + $0x160] sm:$0xff] %vm309, 0.0
          %483 = vst.msk [vmem:[#allocation4 + $0x168] sm:$0xff] %vm309, 0.0
          %484 = vst.msk [vmem:[#allocation4 + $0x170] sm:$0xff] %vm309, 0.0
          %485 = vst.msk [vmem:[#allocation4 + $0x178] sm:$0xff] %vm309, 0.0
          %486 = vst.msk [vmem:[#allocation4 + $0x180] sm:$0xff] %vm309, 0.0
          %487 = vst.msk [vmem:[#allocation4 + $0x188] sm:$0xff] %vm309, 0.0
          %488 = vst.msk [vmem:[#allocation4 + $0x190] sm:$0xff] %vm309, 0.0
          %489 = vst.msk [vmem:[#allocation4 + $0x198] sm:$0xff] %vm309, 0.0
          %490 = vst.msk [vmem:[#allocation4 + $0x1a0] sm:$0xff] %vm309, 0.0
          %491 = vst.msk [vmem:[#allocation4 + $0x1a8] sm:$0xff] %vm309, 0.0
          %492 = vst.msk [vmem:[#allocation4 + $0x1b0] sm:$0xff] %vm309, 0.0
          %493 = vst.msk [vmem:[#allocation4 + $0x1b8] sm:$0xff] %vm309, 0.0
          %494 = vst.msk [vmem:[#allocation4 + $0x1c0] sm:$0xff] %vm309, 0.0
          %495 = vst.msk [vmem:[#allocation4 + $0x1c8] sm:$0xff] %vm309, 0.0
          %496 = vst.msk [vmem:[#allocation4 + $0x1d0] sm:$0xff] %vm309, 0.0
          %497 = vst.msk [vmem:[#allocation4 + $0x1d8] sm:$0xff] %vm309, 0.0
          %498 = vst.msk [vmem:[#allocation4 + $0x1e0] sm:$0xff] %vm309, 0.0
          %499 = vst.msk [vmem:[#allocation4 + $0x1e8] sm:$0xff] %vm309, 0.0
          %500 = vst.msk [vmem:[#allocation4 + $0x1f0] sm:$0xff] %vm309, 0.0
          %501 = vst.msk [vmem:[#allocation4 + $0x1f8] sm:$0xff] %vm309, 0.0
          %502 = vst.msk [vmem:[#allocation4 + $0x200] sm:$0xff] %vm309, 0.0
          %503 = vst.msk [vmem:[#allocation4 + $0x208] sm:$0xff] %vm309, 0.0
          %504 = vst.msk [vmem:[#allocation4 + $0x210] sm:$0xff] %vm309, 0.0
          %505 = vst.msk [vmem:[#allocation4 + $0x218] sm:$0xff] %vm309, 0.0
          %506 = vst.msk [vmem:[#allocation4 + $0x220] sm:$0xff] %vm309, 0.0
          %507 = vst.msk [vmem:[#allocation4 + $0x228] sm:$0xff] %vm309, 0.0
          %508 = vst.msk [vmem:[#allocation4 + $0x230] sm:$0xff] %vm309, 0.0
          %509 = vst.msk [vmem:[#allocation4 + $0x238] sm:$0xff] %vm309, 0.0
          %510 = vst.msk [vmem:[#allocation4 + $0x240] sm:$0xff] %vm309, 0.0
          %511 = vst.msk [vmem:[#allocation4 + $0x248] sm:$0xff] %vm309, 0.0
          %512 = vst.msk [vmem:[#allocation4 + $0x250] sm:$0xff] %vm309, 0.0
          %513 = vst.msk [vmem:[#allocation4 + $0x258] sm:$0xff] %vm309, 0.0
          %514 = vst.msk [vmem:[#allocation4 + $0x260] sm:$0xff] %vm309, 0.0
          %515 = vst.msk [vmem:[#allocation4 + $0x268] sm:$0xff] %vm309, 0.0
          %516 = vst.msk [vmem:[#allocation4 + $0x270] sm:$0xff] %vm309, 0.0
          %517 = vst.msk [vmem:[#allocation4 + $0x278] sm:$0xff] %vm309, 0.0
          %518 = vst.msk [vmem:[#allocation4 + $0x280] sm:$0xff] %vm309, 0.0
          %519 = vst.msk [vmem:[#allocation4 + $0x288] sm:$0xff] %vm309, 0.0
          %520 = vst.msk [vmem:[#allocation4 + $0x290] sm:$0xff] %vm309, 0.0
          %521 = vst.msk [vmem:[#allocation4 + $0x298] sm:$0xff] %vm309, 0.0
          %522 = vst.msk [vmem:[#allocation4 + $0x2a0] sm:$0xff] %vm309, 0.0
          %523 = vst.msk [vmem:[#allocation4 + $0x2a8] sm:$0xff] %vm309, 0.0
          %524 = vst.msk [vmem:[#allocation4 + $0x2b0] sm:$0xff] %vm309, 0.0
          %525 = vst.msk [vmem:[#allocation4 + $0x2b8] sm:$0xff] %vm309, 0.0
          %526 = vst.msk [vmem:[#allocation4 + $0x2c0] sm:$0xff] %vm309, 0.0
          %527 = vst.msk [vmem:[#allocation4 + $0x2c8] sm:$0xff] %vm309, 0.0
          %528 = vst.msk [vmem:[#allocation4 + $0x2d0] sm:$0xff] %vm309, 0.0
          %529 = vst.msk [vmem:[#allocation4 + $0x2d8] sm:$0xff] %vm309, 0.0
          %530 = vst.msk [vmem:[#allocation4 + $0x2e0] sm:$0xff] %vm309, 0.0
          %531 = vst.msk [vmem:[#allocation4 + $0x2e8] sm:$0xff] %vm309, 0.0
          %532 = vst.msk [vmem:[#allocation4 + $0x2f0] sm:$0xff] %vm309, 0.0
          %533 = vst.msk [vmem:[#allocation4 + $0x2f8] sm:$0xff] %vm309, 0.0
          %534 = vst.msk [vmem:[#allocation4 + $0x300] sm:$0xff] %vm309, 0.0
          %535 = vst.msk [vmem:[#allocation4 + $0x308] sm:$0xff] %vm309, 0.0
          %536 = vst.msk [vmem:[#allocation4 + $0x310] sm:$0xff] %vm309, 0.0
          %537 = vst.msk [vmem:[#allocation4 + $0x318] sm:$0xff] %vm309, 0.0
          %538 = vst.msk [vmem:[#allocation4 + $0x320] sm:$0xff] %vm309, 0.0
          %539 = vst.msk [vmem:[#allocation4 + $0x328] sm:$0xff] %vm309, 0.0
          %540 = vst.msk [vmem:[#allocation4 + $0x330] sm:$0xff] %vm309, 0.0
          %541 = vst.msk [vmem:[#allocation4 + $0x338] sm:$0xff] %vm309, 0.0
          %542 = vst.msk [vmem:[#allocation4 + $0x340] sm:$0xff] %vm309, 0.0
          %543 = vst.msk [vmem:[#allocation4 + $0x348] sm:$0xff] %vm309, 0.0
          %544 = vst.msk [vmem:[#allocation4 + $0x350] sm:$0xff] %vm309, 0.0
          %545 = vst.msk [vmem:[#allocation4 + $0x358] sm:$0xff] %vm309, 0.0
          %546 = vst.msk [vmem:[#allocation4 + $0x360] sm:$0xff] %vm309, 0.0
          %547 = vst.msk [vmem:[#allocation4 + $0x368] sm:$0xff] %vm309, 0.0
          %548 = vst.msk [vmem:[#allocation4 + $0x370] sm:$0xff] %vm309, 0.0
          %549 = vst.msk [vmem:[#allocation4 + $0x378] sm:$0xff] %vm309, 0.0
          %550 = vst.msk [vmem:[#allocation4 + $0x380] sm:$0xff] %vm309, 0.0
          %551 = vst.msk [vmem:[#allocation4 + $0x388] sm:$0xff] %vm309, 0.0
          %552 = vst.msk [vmem:[#allocation4 + $0x390] sm:$0xff] %vm309, 0.0
          %553 = vst.msk [vmem:[#allocation4 + $0x398] sm:$0xff] %vm309, 0.0
          %554 = vst.msk [vmem:[#allocation4 + $0x3a0] sm:$0xff] %vm309, 0.0
          %555 = vst.msk [vmem:[#allocation4 + $0x3a8] sm:$0xff] %vm309, 0.0
          %556 = vst.msk [vmem:[#allocation4 + $0x3b0] sm:$0xff] %vm309, 0.0
          %557 = vst.msk [vmem:[#allocation4 + $0x3b8] sm:$0xff] %vm309, 0.0
          %558 = vst.msk [vmem:[#allocation4 + $0x3c0] sm:$0xff] %vm309, 0.0
          %559 = vst.msk [vmem:[#allocation4 + $0x3c8] sm:$0xff] %vm309, 0.0
          %560 = vst.msk [vmem:[#allocation4 + $0x3d0] sm:$0xff] %vm309, 0.0
          %561 = vst.msk [vmem:[#allocation4 + $0x3d8] sm:$0xff] %vm309, 0.0
          %562 = vst.msk [vmem:[#allocation4 + $0x3e0] sm:$0xff] %vm309, 0.0
          %563 = vst.msk [vmem:[#allocation4 + $0x3e8] sm:$0xff] %vm309, 0.0
          %564 = vst.msk [vmem:[#allocation4 + $0x3f0] sm:$0xff] %vm309, 0.0
          %565 = vst.msk [vmem:[#allocation4 + $0x3f8] sm:$0xff] %vm309, 0.0
          %vm566 = vcmask 261120
          %567 = vst.msk [vmem:[#allocation5] sm:$0xff] %vm566, 0.0
          %568 = vst.msk [vmem:[#allocation5 + $0x8] sm:$0xff] %vm566, 0.0
          %569 = vst.msk [vmem:[#allocation5 + $0x10] sm:$0xff] %vm566, 0.0
          %570 = vst.msk [vmem:[#allocation5 + $0x18] sm:$0xff] %vm566, 0.0
          %571 = vst.msk [vmem:[#allocation5 + $0x20] sm:$0xff] %vm566, 0.0
          %572 = vst.msk [vmem:[#allocation5 + $0x28] sm:$0xff] %vm566, 0.0
          %573 = vst.msk [vmem:[#allocation5 + $0x30] sm:$0xff] %vm566, 0.0
          %574 = vst.msk [vmem:[#allocation5 + $0x38] sm:$0xff] %vm566, 0.0
          %575 = vst.msk [vmem:[#allocation5 + $0x40] sm:$0xff] %vm566, 0.0
          %576 = vst.msk [vmem:[#allocation5 + $0x48] sm:$0xff] %vm566, 0.0
          %577 = vst.msk [vmem:[#allocation5 + $0x50] sm:$0xff] %vm566, 0.0
          %578 = vst.msk [vmem:[#allocation5 + $0x58] sm:$0xff] %vm566, 0.0
          %579 = vst.msk [vmem:[#allocation5 + $0x60] sm:$0xff] %vm566, 0.0
          %580 = vst.msk [vmem:[#allocation5 + $0x68] sm:$0xff] %vm566, 0.0
          %581 = vst.msk [vmem:[#allocation5 + $0x70] sm:$0xff] %vm566, 0.0
          %582 = vst.msk [vmem:[#allocation5 + $0x78] sm:$0xff] %vm566, 0.0
          %583 = vst.msk [vmem:[#allocation5 + $0x80] sm:$0xff] %vm566, 0.0
          %584 = vst.msk [vmem:[#allocation5 + $0x88] sm:$0xff] %vm566, 0.0
          %585 = vst.msk [vmem:[#allocation5 + $0x90] sm:$0xff] %vm566, 0.0
          %586 = vst.msk [vmem:[#allocation5 + $0x98] sm:$0xff] %vm566, 0.0
          %587 = vst.msk [vmem:[#allocation5 + $0xa0] sm:$0xff] %vm566, 0.0
          %588 = vst.msk [vmem:[#allocation5 + $0xa8] sm:$0xff] %vm566, 0.0
          %589 = vst.msk [vmem:[#allocation5 + $0xb0] sm:$0xff] %vm566, 0.0
          %590 = vst.msk [vmem:[#allocation5 + $0xb8] sm:$0xff] %vm566, 0.0
          %591 = vst.msk [vmem:[#allocation5 + $0xc0] sm:$0xff] %vm566, 0.0
          %592 = vst.msk [vmem:[#allocation5 + $0xc8] sm:$0xff] %vm566, 0.0
          %593 = vst.msk [vmem:[#allocation5 + $0xd0] sm:$0xff] %vm566, 0.0
          %594 = vst.msk [vmem:[#allocation5 + $0xd8] sm:$0xff] %vm566, 0.0
          %595 = vst.msk [vmem:[#allocation5 + $0xe0] sm:$0xff] %vm566, 0.0
          %596 = vst.msk [vmem:[#allocation5 + $0xe8] sm:$0xff] %vm566, 0.0
          %597 = vst.msk [vmem:[#allocation5 + $0xf0] sm:$0xff] %vm566, 0.0
          %598 = vst.msk [vmem:[#allocation5 + $0xf8] sm:$0xff] %vm566, 0.0
          %599 = vst.msk [vmem:[#allocation5 + $0x100] sm:$0xff] %vm566, 0.0
          %600 = vst.msk [vmem:[#allocation5 + $0x108] sm:$0xff] %vm566, 0.0
          %601 = vst.msk [vmem:[#allocation5 + $0x110] sm:$0xff] %vm566, 0.0
          %602 = vst.msk [vmem:[#allocation5 + $0x118] sm:$0xff] %vm566, 0.0
          %603 = vst.msk [vmem:[#allocation5 + $0x120] sm:$0xff] %vm566, 0.0
          %604 = vst.msk [vmem:[#allocation5 + $0x128] sm:$0xff] %vm566, 0.0
          %605 = vst.msk [vmem:[#allocation5 + $0x130] sm:$0xff] %vm566, 0.0
          %606 = vst.msk [vmem:[#allocation5 + $0x138] sm:$0xff] %vm566, 0.0
          %607 = vst.msk [vmem:[#allocation5 + $0x140] sm:$0xff] %vm566, 0.0
          %608 = vst.msk [vmem:[#allocation5 + $0x148] sm:$0xff] %vm566, 0.0
          %609 = vst.msk [vmem:[#allocation5 + $0x150] sm:$0xff] %vm566, 0.0
          %610 = vst.msk [vmem:[#allocation5 + $0x158] sm:$0xff] %vm566, 0.0
          %611 = vst.msk [vmem:[#allocation5 + $0x160] sm:$0xff] %vm566, 0.0
          %612 = vst.msk [vmem:[#allocation5 + $0x168] sm:$0xff] %vm566, 0.0
          %613 = vst.msk [vmem:[#allocation5 + $0x170] sm:$0xff] %vm566, 0.0
          %614 = vst.msk [vmem:[#allocation5 + $0x178] sm:$0xff] %vm566, 0.0
          %615 = vst.msk [vmem:[#allocation5 + $0x180] sm:$0xff] %vm566, 0.0
          %616 = vst.msk [vmem:[#allocation5 + $0x188] sm:$0xff] %vm566, 0.0
          %617 = vst.msk [vmem:[#allocation5 + $0x190] sm:$0xff] %vm566, 0.0
          %618 = vst.msk [vmem:[#allocation5 + $0x198] sm:$0xff] %vm566, 0.0
          %619 = vst.msk [vmem:[#allocation5 + $0x1a0] sm:$0xff] %vm566, 0.0
          %620 = vst.msk [vmem:[#allocation5 + $0x1a8] sm:$0xff] %vm566, 0.0
          %621 = vst.msk [vmem:[#allocation5 + $0x1b0] sm:$0xff] %vm566, 0.0
          %622 = vst.msk [vmem:[#allocation5 + $0x1b8] sm:$0xff] %vm566, 0.0
          %623 = vst.msk [vmem:[#allocation5 + $0x1c0] sm:$0xff] %vm566, 0.0
          %624 = vst.msk [vmem:[#allocation5 + $0x1c8] sm:$0xff] %vm566, 0.0
          %625 = vst.msk [vmem:[#allocation5 + $0x1d0] sm:$0xff] %vm566, 0.0
          %626 = vst.msk [vmem:[#allocation5 + $0x1d8] sm:$0xff] %vm566, 0.0
          %627 = vst.msk [vmem:[#allocation5 + $0x1e0] sm:$0xff] %vm566, 0.0
          %628 = vst.msk [vmem:[#allocation5 + $0x1e8] sm:$0xff] %vm566, 0.0
          %629 = vst.msk [vmem:[#allocation5 + $0x1f0] sm:$0xff] %vm566, 0.0
          %630 = vst.msk [vmem:[#allocation5 + $0x1f8] sm:$0xff] %vm566, 0.0
          %631 = vst.msk [vmem:[#allocation5 + $0x200] sm:$0xff] %vm566, 0.0
          %632 = vst.msk [vmem:[#allocation5 + $0x208] sm:$0xff] %vm566, 0.0
          %633 = vst.msk [vmem:[#allocation5 + $0x210] sm:$0xff] %vm566, 0.0
          %634 = vst.msk [vmem:[#allocation5 + $0x218] sm:$0xff] %vm566, 0.0
          %635 = vst.msk [vmem:[#allocation5 + $0x220] sm:$0xff] %vm566, 0.0
          %636 = vst.msk [vmem:[#allocation5 + $0x228] sm:$0xff] %vm566, 0.0
          %637 = vst.msk [vmem:[#allocation5 + $0x230] sm:$0xff] %vm566, 0.0
          %638 = vst.msk [vmem:[#allocation5 + $0x238] sm:$0xff] %vm566, 0.0
          %639 = vst.msk [vmem:[#allocation5 + $0x240] sm:$0xff] %vm566, 0.0
          %640 = vst.msk [vmem:[#allocation5 + $0x248] sm:$0xff] %vm566, 0.0
          %641 = vst.msk [vmem:[#allocation5 + $0x250] sm:$0xff] %vm566, 0.0
          %642 = vst.msk [vmem:[#allocation5 + $0x258] sm:$0xff] %vm566, 0.0
          %643 = vst.msk [vmem:[#allocation5 + $0x260] sm:$0xff] %vm566, 0.0
          %644 = vst.msk [vmem:[#allocation5 + $0x268] sm:$0xff] %vm566, 0.0
          %645 = vst.msk [vmem:[#allocation5 + $0x270] sm:$0xff] %vm566, 0.0
          %646 = vst.msk [vmem:[#allocation5 + $0x278] sm:$0xff] %vm566, 0.0
          %647 = vst.msk [vmem:[#allocation5 + $0x280] sm:$0xff] %vm566, 0.0
          %648 = vst.msk [vmem:[#allocation5 + $0x288] sm:$0xff] %vm566, 0.0
          %649 = vst.msk [vmem:[#allocation5 + $0x290] sm:$0xff] %vm566, 0.0
          %650 = vst.msk [vmem:[#allocation5 + $0x298] sm:$0xff] %vm566, 0.0
          %651 = vst.msk [vmem:[#allocation5 + $0x2a0] sm:$0xff] %vm566, 0.0
          %652 = vst.msk [vmem:[#allocation5 + $0x2a8] sm:$0xff] %vm566, 0.0
          %653 = vst.msk [vmem:[#allocation5 + $0x2b0] sm:$0xff] %vm566, 0.0
          %654 = vst.msk [vmem:[#allocation5 + $0x2b8] sm:$0xff] %vm566, 0.0
          %655 = vst.msk [vmem:[#allocation5 + $0x2c0] sm:$0xff] %vm566, 0.0
          %656 = vst.msk [vmem:[#allocation5 + $0x2c8] sm:$0xff] %vm566, 0.0
          %657 = vst.msk [vmem:[#allocation5 + $0x2d0] sm:$0xff] %vm566, 0.0
          %658 = vst.msk [vmem:[#allocation5 + $0x2d8] sm:$0xff] %vm566, 0.0
          %659 = vst.msk [vmem:[#allocation5 + $0x2e0] sm:$0xff] %vm566, 0.0
          %660 = vst.msk [vmem:[#allocation5 + $0x2e8] sm:$0xff] %vm566, 0.0
          %661 = vst.msk [vmem:[#allocation5 + $0x2f0] sm:$0xff] %vm566, 0.0
          %662 = vst.msk [vmem:[#allocation5 + $0x2f8] sm:$0xff] %vm566, 0.0
          %663 = vst.msk [vmem:[#allocation5 + $0x300] sm:$0xff] %vm566, 0.0
          %664 = vst.msk [vmem:[#allocation5 + $0x308] sm:$0xff] %vm566, 0.0
          %665 = vst.msk [vmem:[#allocation5 + $0x310] sm:$0xff] %vm566, 0.0
          %666 = vst.msk [vmem:[#allocation5 + $0x318] sm:$0xff] %vm566, 0.0
          %667 = vst.msk [vmem:[#allocation5 + $0x320] sm:$0xff] %vm566, 0.0
          %668 = vst.msk [vmem:[#allocation5 + $0x328] sm:$0xff] %vm566, 0.0
          %669 = vst.msk [vmem:[#allocation5 + $0x330] sm:$0xff] %vm566, 0.0
          %670 = vst.msk [vmem:[#allocation5 + $0x338] sm:$0xff] %vm566, 0.0
          %671 = vst.msk [vmem:[#allocation5 + $0x340] sm:$0xff] %vm566, 0.0
          %672 = vst.msk [vmem:[#allocation5 + $0x348] sm:$0xff] %vm566, 0.0
          %673 = vst.msk [vmem:[#allocation5 + $0x350] sm:$0xff] %vm566, 0.0
          %674 = vst.msk [vmem:[#allocation5 + $0x358] sm:$0xff] %vm566, 0.0
          %675 = vst.msk [vmem:[#allocation5 + $0x360] sm:$0xff] %vm566, 0.0
          %676 = vst.msk [vmem:[#allocation5 + $0x368] sm:$0xff] %vm566, 0.0
          %677 = vst.msk [vmem:[#allocation5 + $0x370] sm:$0xff] %vm566, 0.0
          %678 = vst.msk [vmem:[#allocation5 + $0x378] sm:$0xff] %vm566, 0.0
          %679 = vst.msk [vmem:[#allocation5 + $0x380] sm:$0xff] %vm566, 0.0
          %680 = vst.msk [vmem:[#allocation5 + $0x388] sm:$0xff] %vm566, 0.0
          %681 = vst.msk [vmem:[#allocation5 + $0x390] sm:$0xff] %vm566, 0.0
          %682 = vst.msk [vmem:[#allocation5 + $0x398] sm:$0xff] %vm566, 0.0
          %683 = vst.msk [vmem:[#allocation5 + $0x3a0] sm:$0xff] %vm566, 0.0
          %684 = vst.msk [vmem:[#allocation5 + $0x3a8] sm:$0xff] %vm566, 0.0
          %685 = vst.msk [vmem:[#allocation5 + $0x3b0] sm:$0xff] %vm566, 0.0
          %686 = vst.msk [vmem:[#allocation5 + $0x3b8] sm:$0xff] %vm566, 0.0
          %687 = vst.msk [vmem:[#allocation5 + $0x3c0] sm:$0xff] %vm566, 0.0
          %688 = vst.msk [vmem:[#allocation5 + $0x3c8] sm:$0xff] %vm566, 0.0
          %689 = vst.msk [vmem:[#allocation5 + $0x3d0] sm:$0xff] %vm566, 0.0
          %690 = vst.msk [vmem:[#allocation5 + $0x3d8] sm:$0xff] %vm566, 0.0
          %691 = vst.msk [vmem:[#allocation5 + $0x3e0] sm:$0xff] %vm566, 0.0
          %692 = vst.msk [vmem:[#allocation5 + $0x3e8] sm:$0xff] %vm566, 0.0
          %693 = vst.msk [vmem:[#allocation5 + $0x3f0] sm:$0xff] %vm566, 0.0
          %694 = vst.msk [vmem:[#allocation5 + $0x3f8] sm:$0xff] %vm566, 0.0
          %v695 = vld [vmem:[%s248] sm:$0xf]
          %v696 = vld [vmem:[%s248 + $0x4] sm:$0xf]
          %v697 = vld [vmem:[%s248 + $0x8] sm:$0xf]
          %v698 = vld [vmem:[%s248 + $0xc] sm:$0xf]
          %v699 = vld [vmem:[%s248 + $0x10] sm:$0xf]
          %v700 = vld [vmem:[%s248 + $0x14] sm:$0xf]
          %v701 = vld [vmem:[%s248 + $0x18] sm:$0xf]
          %v702 = vld [vmem:[%s248 + $0x1c] sm:$0xf]
          %v703 = vld [vmem:[%s248 + $0x20] sm:$0xf]
          %v704 = vld [vmem:[%s248 + $0x24] sm:$0xf]
          %v705 = vld [vmem:[%s248 + $0x28] sm:$0xf]
          %v706 = vld [vmem:[%s248 + $0x2c] sm:$0xf]
          %v707 = vld [vmem:[%s248 + $0x30] sm:$0xf]
          %v708 = vld [vmem:[%s248 + $0x34] sm:$0xf]
          %v709 = vld [vmem:[%s248 + $0x38] sm:$0xf]
          %v710 = vld [vmem:[%s248 + $0x3c] sm:$0xf]
          %v711 = vld [vmem:[%s248 + $0x40] sm:$0xf]
          %v712 = vld [vmem:[%s248 + $0x44] sm:$0xf]
          %v713 = vld [vmem:[%s248 + $0x48] sm:$0xf]
          %v714 = vld [vmem:[%s248 + $0x4c] sm:$0xf]
          %v715 = vld [vmem:[%s248 + $0x50] sm:$0xf]
          %v716 = vld [vmem:[%s248 + $0x54] sm:$0xf]
          %v717 = vld [vmem:[%s248 + $0x58] sm:$0xf]
          %v718 = vld [vmem:[%s248 + $0x5c] sm:$0xf]
          %v719 = vld [vmem:[%s248 + $0x60] sm:$0xf]
          %v720 = vld [vmem:[%s248 + $0x64] sm:$0xf]
          %v721 = vld [vmem:[%s248 + $0x68] sm:$0xf]
          %v722 = vld [vmem:[%s248 + $0x6c] sm:$0xf]
          %v723 = vld [vmem:[%s248 + $0x70] sm:$0xf]
          %v724 = vld [vmem:[%s248 + $0x74] sm:$0xf]
          %v725 = vld [vmem:[%s248 + $0x78] sm:$0xf]
          %v726 = vld [vmem:[%s248 + $0x7c] sm:$0xf]
          %v727 = vmul.bf16 %v695, 1043676725
          %v728 = vmul.bf16 %v696, 1043676725
          %v729 = vmul.bf16 %v697, 1043676725
          %v730 = vmul.bf16 %v698, 1043676725
          %v731 = vmul.bf16 %v699, 1043676725
          %v732 = vmul.bf16 %v700, 1043676725
          %v733 = vmul.bf16 %v701, 1043676725
          %v734 = vmul.bf16 %v702, 1043676725
          %v735 = vmul.bf16 %v703, 1043676725
          %v736 = vmul.bf16 %v704, 1043676725
          %v737 = vmul.bf16 %v705, 1043676725
          %v738 = vmul.bf16 %v706, 1043676725
          %v739 = vmul.bf16 %v707, 1043676725
          %v740 = vmul.bf16 %v708, 1043676725
          %v741 = vmul.bf16 %v709, 1043676725
          %v742 = vmul.bf16 %v710, 1043676725
          %v743 = vmul.bf16 %v711, 1043676725
          %v744 = vmul.bf16 %v712, 1043676725
          %v745 = vmul.bf16 %v713, 1043676725
          %v746 = vmul.bf16 %v714, 1043676725
          %v747 = vmul.bf16 %v715, 1043676725
          %v748 = vmul.bf16 %v716, 1043676725
          %v749 = vmul.bf16 %v717, 1043676725
          %v750 = vmul.bf16 %v718, 1043676725
          %v751 = vmul.bf16 %v719, 1043676725
          %v752 = vmul.bf16 %v720, 1043676725
          %v753 = vmul.bf16 %v721, 1043676725
          %v754 = vmul.bf16 %v722, 1043676725
          %v755 = vmul.bf16 %v723, 1043676725
          %v756 = vmul.bf16 %v724, 1043676725
          %v757 = vmul.bf16 %v725, 1043676725
          %v758 = vmul.bf16 %v726, 1043676725
          %v791 = vunpack.c.l.b16 %v727
          %v792 = vunpack.c.l.b16 %v728
          %v793 = vunpack.c.l.b16 %v729
          %v794 = vunpack.c.l.b16 %v730
          %v795 = vunpack.c.l.b16 %v731
          %v796 = vunpack.c.l.b16 %v732
          %v797 = vunpack.c.l.b16 %v733
          %v798 = vunpack.c.l.b16 %v734
          %v799 = vunpack.c.l.b16 %v735
          %v800 = vunpack.c.l.b16 %v736
          %v801 = vunpack.c.l.b16 %v737
          %v802 = vunpack.c.l.b16 %v738
          %v803 = vunpack.c.l.b16 %v739
          %v804 = vunpack.c.l.b16 %v740
          %v805 = vunpack.c.l.b16 %v741
          %v806 = vunpack.c.l.b16 %v742
          %v807 = vunpack.c.l.b16 %v743
          %v808 = vunpack.c.l.b16 %v744
          %v809 = vunpack.c.l.b16 %v745
          %v810 = vunpack.c.l.b16 %v746
          %v811 = vunpack.c.l.b16 %v747
          %v812 = vunpack.c.l.b16 %v748
          %v813 = vunpack.c.l.b16 %v749
          %v814 = vunpack.c.l.b16 %v750
          %v815 = vunpack.c.l.b16 %v751
          %v816 = vunpack.c.l.b16 %v752
          %v817 = vunpack.c.l.b16 %v753
          %v818 = vunpack.c.l.b16 %v754
          %v819 = vunpack.c.l.b16 %v755
          %v820 = vunpack.c.l.b16 %v756
          %v821 = vunpack.c.l.b16 %v757
          %v822 = vunpack.c.l.b16 %v758
          %v823 = vpack.c.b16 %v792, %v791
          %v824 = vpack.c.b16 %v794, %v793
          %v825 = vpack.c.b16 %v796, %v795
          %v826 = vpack.c.b16 %v798, %v797
          %v827 = vpack.c.b16 %v800, %v799
          %v828 = vpack.c.b16 %v802, %v801
          %v829 = vpack.c.b16 %v804, %v803
          %v830 = vpack.c.b16 %v806, %v805
          %v831 = vpack.c.b16 %v808, %v807
          %v832 = vpack.c.b16 %v810, %v809
          %v833 = vpack.c.b16 %v812, %v811
          %v834 = vpack.c.b16 %v814, %v813
          %v835 = vpack.c.b16 %v816, %v815
          %v836 = vpack.c.b16 %v818, %v817
          %v837 = vpack.c.b16 %v820, %v819
          %v838 = vpack.c.b16 %v822, %v821
          %855 = vst.msk [vmem:[#allocation2] sm:$0xff] %vm566, %v823
          %856 = vst.msk [vmem:[#allocation2 + $0x8] sm:$0xff] %vm566, %v824
          %857 = vst.msk [vmem:[#allocation2 + $0x10] sm:$0xff] %vm566, %v825
          %858 = vst.msk [vmem:[#allocation2 + $0x18] sm:$0xff] %vm566, %v826
          %859 = vst.msk [vmem:[#allocation2 + $0x20] sm:$0xff] %vm566, %v827
          %860 = vst.msk [vmem:[#allocation2 + $0x28] sm:$0xff] %vm566, %v828
          %861 = vst.msk [vmem:[#allocation2 + $0x30] sm:$0xff] %vm566, %v829
          %862 = vst.msk [vmem:[#allocation2 + $0x38] sm:$0xff] %vm566, %v830
          %863 = vst.msk [vmem:[#allocation2 + $0x40] sm:$0xff] %vm566, %v831
          %864 = vst.msk [vmem:[#allocation2 + $0x48] sm:$0xff] %vm566, %v832
          %865 = vst.msk [vmem:[#allocation2 + $0x50] sm:$0xff] %vm566, %v833
          %866 = vst.msk [vmem:[#allocation2 + $0x58] sm:$0xff] %vm566, %v834
          %867 = vst.msk [vmem:[#allocation2 + $0x60] sm:$0xff] %vm566, %v835
          %868 = vst.msk [vmem:[#allocation2 + $0x68] sm:$0xff] %vm566, %v836
          %869 = vst.msk [vmem:[#allocation2 + $0x70] sm:$0xff] %vm566, %v837
          %870 = vst.msk [vmem:[#allocation2 + $0x78] sm:$0xff] %vm566, %v838
          %871 = vrot.lane.b32.xlu0 %v823, 96
          %v872 = vpop.permute.xlu0 %871
          %873 = vrot.lane.b32.xlu0 %v824, 96
          %v874 = vpop.permute.xlu0 %873
          %875 = vrot.lane.b32.xlu0 %v825, 96
          %v876 = vpop.permute.xlu0 %875
          %877 = vrot.lane.b32.xlu0 %v826, 96
          %v878 = vpop.permute.xlu0 %877
          %879 = vrot.lane.b32.xlu0 %v827, 96
          %v880 = vpop.permute.xlu0 %879
          %881 = vrot.lane.b32.xlu0 %v828, 96
          %v882 = vpop.permute.xlu0 %881
          %883 = vrot.lane.b32.xlu0 %v829, 96
          %v884 = vpop.permute.xlu0 %883
          %885 = vrot.lane.b32.xlu0 %v830, 96
          %v886 = vpop.permute.xlu0 %885
          %887 = vrot.lane.b32.xlu0 %v831, 96
          %v888 = vpop.permute.xlu0 %887
          %889 = vrot.lane.b32.xlu0 %v832, 96
          %v890 = vpop.permute.xlu0 %889
          %891 = vrot.lane.b32.xlu0 %v833, 96
          %v892 = vpop.permute.xlu0 %891
          %893 = vrot.lane.b32.xlu0 %v834, 96
          %v894 = vpop.permute.xlu0 %893
          %895 = vrot.lane.b32.xlu0 %v835, 96
          %v896 = vpop.permute.xlu0 %895
          %897 = vrot.lane.b32.xlu0 %v836, 96
          %v898 = vpop.permute.xlu0 %897
          %899 = vrot.lane.b32.xlu0 %v837, 96
          %v900 = vpop.permute.xlu0 %899
          %901 = vrot.lane.b32.xlu0 %v838, 96
          %v902 = vpop.permute.xlu0 %901
          %s919 = scalar_lea.vmem [#allocation2], 128
          %920 = vst.msk [vmem:[%s919] sm:$0xff] %vm566, %v872
          %921 = vst.msk [vmem:[%s919 + $0x8] sm:$0xff] %vm566, %v874
          %922 = vst.msk [vmem:[%s919 + $0x10] sm:$0xff] %vm566, %v876
          %923 = vst.msk [vmem:[%s919 + $0x18] sm:$0xff] %vm566, %v878
          %924 = vst.msk [vmem:[%s919 + $0x20] sm:$0xff] %vm566, %v880
          %925 = vst.msk [vmem:[%s919 + $0x28] sm:$0xff] %vm566, %v882
          %926 = vst.msk [vmem:[%s919 + $0x30] sm:$0xff] %vm566, %v884
          %927 = vst.msk [vmem:[%s919 + $0x38] sm:$0xff] %vm566, %v886
          %928 = vst.msk [vmem:[%s919 + $0x40] sm:$0xff] %vm566, %v888
          %929 = vst.msk [vmem:[%s919 + $0x48] sm:$0xff] %vm566, %v890
          %930 = vst.msk [vmem:[%s919 + $0x50] sm:$0xff] %vm566, %v892
          %931 = vst.msk [vmem:[%s919 + $0x58] sm:$0xff] %vm566, %v894
          %932 = vst.msk [vmem:[%s919 + $0x60] sm:$0xff] %vm566, %v896
          %933 = vst.msk [vmem:[%s919 + $0x68] sm:$0xff] %vm566, %v898
          %934 = vst.msk [vmem:[%s919 + $0x70] sm:$0xff] %vm566, %v900
          %935 = vst.msk [vmem:[%s919 + $0x78] sm:$0xff] %vm566, %v902
          %936 = vrot.lane.b32.xlu0 %v823, 64
          %v937 = vpop.permute.xlu0 %936
          %938 = vrot.lane.b32.xlu0 %v824, 64
          %v939 = vpop.permute.xlu0 %938
          %940 = vrot.lane.b32.xlu0 %v825, 64
          %v941 = vpop.permute.xlu0 %940
          %942 = vrot.lane.b32.xlu0 %v826, 64
          %v943 = vpop.permute.xlu0 %942
          %944 = vrot.lane.b32.xlu0 %v827, 64
          %v945 = vpop.permute.xlu0 %944
          %946 = vrot.lane.b32.xlu0 %v828, 64
          %v947 = vpop.permute.xlu0 %946
          %948 = vrot.lane.b32.xlu0 %v829, 64
          %v949 = vpop.permute.xlu0 %948
          %950 = vrot.lane.b32.xlu0 %v830, 64
          %v951 = vpop.permute.xlu0 %950
          %952 = vrot.lane.b32.xlu0 %v831, 64
          %v953 = vpop.permute.xlu0 %952
          %954 = vrot.lane.b32.xlu0 %v832, 64
          %v955 = vpop.permute.xlu0 %954
          %956 = vrot.lane.b32.xlu0 %v833, 64
          %v957 = vpop.permute.xlu0 %956
          %958 = vrot.lane.b32.xlu0 %v834, 64
          %v959 = vpop.permute.xlu0 %958
          %960 = vrot.lane.b32.xlu0 %v835, 64
          %v961 = vpop.permute.xlu0 %960
          %962 = vrot.lane.b32.xlu0 %v836, 64
          %v963 = vpop.permute.xlu0 %962
          %964 = vrot.lane.b32.xlu0 %v837, 64
          %v965 = vpop.permute.xlu0 %964
          %966 = vrot.lane.b32.xlu0 %v838, 64
          %v967 = vpop.permute.xlu0 %966
          %s984 = scalar_lea.vmem [#allocation2], 256
          %985 = vst.msk [vmem:[%s984] sm:$0xff] %vm566, %v937
          %986 = vst.msk [vmem:[%s984 + $0x8] sm:$0xff] %vm566, %v939
          %987 = vst.msk [vmem:[%s984 + $0x10] sm:$0xff] %vm566, %v941
          %988 = vst.msk [vmem:[%s984 + $0x18] sm:$0xff] %vm566, %v943
          %989 = vst.msk [vmem:[%s984 + $0x20] sm:$0xff] %vm566, %v945
          %990 = vst.msk [vmem:[%s984 + $0x28] sm:$0xff] %vm566, %v947
          %991 = vst.msk [vmem:[%s984 + $0x30] sm:$0xff] %vm566, %v949
          %992 = vst.msk [vmem:[%s984 + $0x38] sm:$0xff] %vm566, %v951
          %993 = vst.msk [vmem:[%s984 + $0x40] sm:$0xff] %vm566, %v953
          %994 = vst.msk [vmem:[%s984 + $0x48] sm:$0xff] %vm566, %v955
          %995 = vst.msk [vmem:[%s984 + $0x50] sm:$0xff] %vm566, %v957
          %996 = vst.msk [vmem:[%s984 + $0x58] sm:$0xff] %vm566, %v959
          %997 = vst.msk [vmem:[%s984 + $0x60] sm:$0xff] %vm566, %v961
          %998 = vst.msk [vmem:[%s984 + $0x68] sm:$0xff] %vm566, %v963
          %999 = vst.msk [vmem:[%s984 + $0x70] sm:$0xff] %vm566, %v965
          %1000 = vst.msk [vmem:[%s984 + $0x78] sm:$0xff] %vm566, %v967
          %1001 = vrot.lane.b32.xlu0 %v823, 32
          %v1002 = vpop.permute.xlu0 %1001
          %1003 = vrot.lane.b32.xlu0 %v824, 32
          %v1004 = vpop.permute.xlu0 %1003
          %1005 = vrot.lane.b32.xlu0 %v825, 32
          %v1006 = vpop.permute.xlu0 %1005
          %1007 = vrot.lane.b32.xlu0 %v826, 32
          %v1008 = vpop.permute.xlu0 %1007
          %1009 = vrot.lane.b32.xlu0 %v827, 32
          %v1010 = vpop.permute.xlu0 %1009
          %1011 = vrot.lane.b32.xlu0 %v828, 32
          %v1012 = vpop.permute.xlu0 %1011
          %1013 = vrot.lane.b32.xlu0 %v829, 32
          %v1014 = vpop.permute.xlu0 %1013
          %1015 = vrot.lane.b32.xlu0 %v830, 32
          %v1016 = vpop.permute.xlu0 %1015
          %1017 = vrot.lane.b32.xlu0 %v831, 32
          %v1018 = vpop.permute.xlu0 %1017
          %1019 = vrot.lane.b32.xlu0 %v832, 32
          %v1020 = vpop.permute.xlu0 %1019
          %1021 = vrot.lane.b32.xlu0 %v833, 32
          %v1022 = vpop.permute.xlu0 %1021
          %1023 = vrot.lane.b32.xlu0 %v834, 32
          %v1024 = vpop.permute.xlu0 %1023
          %1025 = vrot.lane.b32.xlu0 %v835, 32
          %v1026 = vpop.permute.xlu0 %1025
          %1027 = vrot.lane.b32.xlu0 %v836, 32
          %v1028 = vpop.permute.xlu0 %1027
          %1029 = vrot.lane.b32.xlu0 %v837, 32
          %v1030 = vpop.permute.xlu0 %1029
          %1031 = vrot.lane.b32.xlu0 %v838, 32
          %v1032 = vpop.permute.xlu0 %1031
          %s1049 = scalar_lea.vmem [#allocation2], 384
          %1050 = vst.msk [vmem:[%s1049] sm:$0xff] %vm566, %v1002
          %1051 = vst.msk [vmem:[%s1049 + $0x8] sm:$0xff] %vm566, %v1004
          %1052 = vst.msk [vmem:[%s1049 + $0x10] sm:$0xff] %vm566, %v1006
          %1053 = vst.msk [vmem:[%s1049 + $0x18] sm:$0xff] %vm566, %v1008
          %1054 = vst.msk [vmem:[%s1049 + $0x20] sm:$0xff] %vm566, %v1010
          %1055 = vst.msk [vmem:[%s1049 + $0x28] sm:$0xff] %vm566, %v1012
          %1056 = vst.msk [vmem:[%s1049 + $0x30] sm:$0xff] %vm566, %v1014
          %1057 = vst.msk [vmem:[%s1049 + $0x38] sm:$0xff] %vm566, %v1016
          %1058 = vst.msk [vmem:[%s1049 + $0x40] sm:$0xff] %vm566, %v1018
          %1059 = vst.msk [vmem:[%s1049 + $0x48] sm:$0xff] %vm566, %v1020
          %1060 = vst.msk [vmem:[%s1049 + $0x50] sm:$0xff] %vm566, %v1022
          %1061 = vst.msk [vmem:[%s1049 + $0x58] sm:$0xff] %vm566, %v1024
          %1062 = vst.msk [vmem:[%s1049 + $0x60] sm:$0xff] %vm566, %v1026
          %1063 = vst.msk [vmem:[%s1049 + $0x68] sm:$0xff] %vm566, %v1028
          %1064 = vst.msk [vmem:[%s1049 + $0x70] sm:$0xff] %vm566, %v1030
          %1065 = vst.msk [vmem:[%s1049 + $0x78] sm:$0xff] %vm566, %v1032
        $region48: #{tpu_custom_call.1} parent=31 // pred_fallthru
          _
        %v1066 = vld [vmem:[%s257] sm:$0xf]
        %v1067 = vld [vmem:[%s257 + $0x4] sm:$0xf]
        %v1068 = vld [vmem:[%s257 + $0x8] sm:$0xf]
        %v1069 = vld [vmem:[%s257 + $0xc] sm:$0xf]
        %v1070 = vld [vmem:[%s257 + $0x10] sm:$0xf]
        %v1071 = vld [vmem:[%s257 + $0x14] sm:$0xf]
        %v1072 = vld [vmem:[%s257 + $0x18] sm:$0xf]
        %v1073 = vld [vmem:[%s257 + $0x1c] sm:$0xf]
        %v1074 = vld [vmem:[%s257 + $0x20] sm:$0xf]
        %v1075 = vld [vmem:[%s257 + $0x24] sm:$0xf]
        %v1076 = vld [vmem:[%s257 + $0x28] sm:$0xf]
        %v1077 = vld [vmem:[%s257 + $0x2c] sm:$0xf]
        %v1078 = vld [vmem:[%s257 + $0x30] sm:$0xf]
        %v1079 = vld [vmem:[%s257 + $0x34] sm:$0xf]
        %v1080 = vld [vmem:[%s257 + $0x38] sm:$0xf]
        %v1081 = vld [vmem:[%s257 + $0x3c] sm:$0xf]
        %v1082 = vld [vmem:[%s257 + $0x40] sm:$0xf]
        %v1083 = vld [vmem:[%s257 + $0x44] sm:$0xf]
        %v1084 = vld [vmem:[%s257 + $0x48] sm:$0xf]
        %v1085 = vld [vmem:[%s257 + $0x4c] sm:$0xf]
        %v1086 = vld [vmem:[%s257 + $0x50] sm:$0xf]
        %v1087 = vld [vmem:[%s257 + $0x54] sm:$0xf]
        %v1088 = vld [vmem:[%s257 + $0x58] sm:$0xf]
        %v1089 = vld [vmem:[%s257 + $0x5c] sm:$0xf]
        %v1090 = vld [vmem:[%s257 + $0x60] sm:$0xf]
        %v1091 = vld [vmem:[%s257 + $0x64] sm:$0xf]
        %v1092 = vld [vmem:[%s257 + $0x68] sm:$0xf]
        %v1093 = vld [vmem:[%s257 + $0x6c] sm:$0xf]
        %v1094 = vld [vmem:[%s257 + $0x70] sm:$0xf]
        %v1095 = vld [vmem:[%s257 + $0x74] sm:$0xf]
        %v1096 = vld [vmem:[%s257 + $0x78] sm:$0xf]
        %v1097 = vld [vmem:[%s257 + $0x7c] sm:$0xf]
        %v1098 = vld [vmem:[%s266] sm:$0xf]
        %v1099 = vld [vmem:[%s266 + $0x4] sm:$0xf]
        %v1100 = vld [vmem:[%s266 + $0x8] sm:$0xf]
        %v1101 = vld [vmem:[%s266 + $0xc] sm:$0xf]
        %v1102 = vld [vmem:[%s266 + $0x10] sm:$0xf]
        %v1103 = vld [vmem:[%s266 + $0x14] sm:$0xf]
        %v1104 = vld [vmem:[%s266 + $0x18] sm:$0xf]
        %v1105 = vld [vmem:[%s266 + $0x1c] sm:$0xf]
        %v1106 = vld [vmem:[%s266 + $0x20] sm:$0xf]
        %v1107 = vld [vmem:[%s266 + $0x24] sm:$0xf]
        %v1108 = vld [vmem:[%s266 + $0x28] sm:$0xf]
        %v1109 = vld [vmem:[%s266 + $0x2c] sm:$0xf]
        %v1110 = vld [vmem:[%s266 + $0x30] sm:$0xf]
        %v1111 = vld [vmem:[%s266 + $0x34] sm:$0xf]
        %v1112 = vld [vmem:[%s266 + $0x38] sm:$0xf]
        %v1113 = vld [vmem:[%s266 + $0x3c] sm:$0xf]
        %v1114 = vld [vmem:[%s266 + $0x40] sm:$0xf]
        %v1115 = vld [vmem:[%s266 + $0x44] sm:$0xf]
        %v1116 = vld [vmem:[%s266 + $0x48] sm:$0xf]
        %v1117 = vld [vmem:[%s266 + $0x4c] sm:$0xf]
        %v1118 = vld [vmem:[%s266 + $0x50] sm:$0xf]
        %v1119 = vld [vmem:[%s266 + $0x54] sm:$0xf]
        %v1120 = vld [vmem:[%s266 + $0x58] sm:$0xf]
        %v1121 = vld [vmem:[%s266 + $0x5c] sm:$0xf]
        %v1122 = vld [vmem:[%s266 + $0x60] sm:$0xf]
        %v1123 = vld [vmem:[%s266 + $0x64] sm:$0xf]
        %v1124 = vld [vmem:[%s266 + $0x68] sm:$0xf]
        %v1125 = vld [vmem:[%s266 + $0x6c] sm:$0xf]
        %v1126 = vld [vmem:[%s266 + $0x70] sm:$0xf]
        %v1127 = vld [vmem:[%s266 + $0x74] sm:$0xf]
        %v1128 = vld [vmem:[%s266 + $0x78] sm:$0xf]
        %v1129 = vld [vmem:[%s266 + $0x7c] sm:$0xf]
        %v1130 = vld [vmem:[#allocation2] sm:$0xff]
        %v1131 = vld [vmem:[#allocation2 + $0x8] sm:$0xff]
        %v1132 = vld [vmem:[#allocation2 + $0x10] sm:$0xff]
        %v1133 = vld [vmem:[#allocation2 + $0x18] sm:$0xff]
        %v1134 = vld [vmem:[#allocation2 + $0x20] sm:$0xff]
        %v1135 = vld [vmem:[#allocation2 + $0x28] sm:$0xff]
        %v1136 = vld [vmem:[#allocation2 + $0x30] sm:$0xff]
        %v1137 = vld [vmem:[#allocation2 + $0x38] sm:$0xff]
        %v1138 = vld [vmem:[#allocation2 + $0x40] sm:$0xff]
        %v1139 = vld [vmem:[#allocation2 + $0x48] sm:$0xff]
        %v1140 = vld [vmem:[#allocation2 + $0x50] sm:$0xff]
        %v1141 = vld [vmem:[#allocation2 + $0x58] sm:$0xff]
        %v1142 = vld [vmem:[#allocation2 + $0x60] sm:$0xff]
        %v1143 = vld [vmem:[#allocation2 + $0x68] sm:$0xff]
        %v1144 = vld [vmem:[#allocation2 + $0x70] sm:$0xff]
        %v1145 = vld [vmem:[#allocation2 + $0x78] sm:$0xff]
        %v1178 = vunpack.c.l.b16 %v1066
        %v1179 = vunpack.c.l.b16 %v1067
        %v1180 = vunpack.c.l.b16 %v1068
        %v1181 = vunpack.c.l.b16 %v1069
        %v1182 = vunpack.c.l.b16 %v1070
        %v1183 = vunpack.c.l.b16 %v1071
        %v1184 = vunpack.c.l.b16 %v1072
        %v1185 = vunpack.c.l.b16 %v1073
        %v1186 = vunpack.c.l.b16 %v1074
        %v1187 = vunpack.c.l.b16 %v1075
        %v1188 = vunpack.c.l.b16 %v1076
        %v1189 = vunpack.c.l.b16 %v1077
        %v1190 = vunpack.c.l.b16 %v1078
        %v1191 = vunpack.c.l.b16 %v1079
        %v1192 = vunpack.c.l.b16 %v1080
        %v1193 = vunpack.c.l.b16 %v1081
        %v1194 = vunpack.c.l.b16 %v1082
        %v1195 = vunpack.c.l.b16 %v1083
        %v1196 = vunpack.c.l.b16 %v1084
        %v1197 = vunpack.c.l.b16 %v1085
        %v1198 = vunpack.c.l.b16 %v1086
        %v1199 = vunpack.c.l.b16 %v1087
        %v1200 = vunpack.c.l.b16 %v1088
        %v1201 = vunpack.c.l.b16 %v1089
        %v1202 = vunpack.c.l.b16 %v1090
        %v1203 = vunpack.c.l.b16 %v1091
        %v1204 = vunpack.c.l.b16 %v1092
        %v1205 = vunpack.c.l.b16 %v1093
        %v1206 = vunpack.c.l.b16 %v1094
        %v1207 = vunpack.c.l.b16 %v1095
        %v1208 = vunpack.c.l.b16 %v1096
        %v1209 = vunpack.c.l.b16 %v1097
        %v1210 = vpack.c.b16 %v1179, %v1178
        %v1211 = vpack.c.b16 %v1181, %v1180
        %v1212 = vpack.c.b16 %v1183, %v1182
        %v1213 = vpack.c.b16 %v1185, %v1184
        %v1214 = vpack.c.b16 %v1187, %v1186
        %v1215 = vpack.c.b16 %v1189, %v1188
        %v1216 = vpack.c.b16 %v1191, %v1190
        %v1217 = vpack.c.b16 %v1193, %v1192
        %v1218 = vpack.c.b16 %v1195, %v1194
        %v1219 = vpack.c.b16 %v1197, %v1196
        %v1220 = vpack.c.b16 %v1199, %v1198
        %v1221 = vpack.c.b16 %v1201, %v1200
        %v1222 = vpack.c.b16 %v1203, %v1202
        %v1223 = vpack.c.b16 %v1205, %v1204
        %v1224 = vpack.c.b16 %v1207, %v1206
        %v1225 = vpack.c.b16 %v1209, %v1208
        %vm1226 = vcmask 261120
        %v1228 = vsel %vm1226, %v1130, 0
        %v1231 = vsel %vm1226, %v1131, 0
        %v1234 = vsel %vm1226, %v1132, 0
        %v1237 = vsel %vm1226, %v1133, 0
        %v1240 = vsel %vm1226, %v1134, 0
        %v1243 = vsel %vm1226, %v1135, 0
        %v1246 = vsel %vm1226, %v1136, 0
        %v1249 = vsel %vm1226, %v1137, 0
        %v1252 = vsel %vm1226, %v1138, 0
        %v1255 = vsel %vm1226, %v1139, 0
        %v1258 = vsel %vm1226, %v1140, 0
        %v1261 = vsel %vm1226, %v1141, 0
        %v1264 = vsel %vm1226, %v1142, 0
        %v1267 = vsel %vm1226, %v1143, 0
        %v1270 = vsel %vm1226, %v1144, 0
        %v1273 = vsel %vm1226, %v1145, 0
        %v1276 = vsel %vm1226, %v1210, 0
        %v1279 = vsel %vm1226, %v1211, 0
        %v1282 = vsel %vm1226, %v1212, 0
        %v1285 = vsel %vm1226, %v1213, 0
        %v1288 = vsel %vm1226, %v1214, 0
        %v1291 = vsel %vm1226, %v1215, 0
        %v1294 = vsel %vm1226, %v1216, 0
        %v1297 = vsel %vm1226, %v1217, 0
        %v1300 = vsel %vm1226, %v1218, 0
        %v1303 = vsel %vm1226, %v1219, 0
        %v1306 = vsel %vm1226, %v1220, 0
        %v1309 = vsel %vm1226, %v1221, 0
        %v1312 = vsel %vm1226, %v1222, 0
        %v1315 = vsel %vm1226, %v1223, 0
        %v1318 = vsel %vm1226, %v1224, 0
        %v1321 = vsel %vm1226, %v1225, 0
        %1323 = vmatprep.subr.bf16.mxu0 0
        %1324 = vmatpush1.bf16.xpose.msra.mxu0 %v1276
        %1325 = vmatprep.subr.bf16.mxu0 0
        %1326 = vmatpush1.bf16.xpose.msra.mxu0 %v1279
        %1327 = vmatprep.subr.bf16.mxu0 0
        %1328 = vmatpush1.bf16.xpose.msra.mxu0 %v1282
        %1329 = vmatprep.subr.bf16.mxu0 0
        %1330 = vmatpush1.bf16.xpose.msra.mxu0 %v1285
        %1331 = vmatprep.subr.bf16.mxu0 0
        %1332 = vmatpush1.bf16.xpose.msra.mxu0 %v1288
        %1333 = vmatprep.subr.bf16.mxu0 0
        %1334 = vmatpush1.bf16.xpose.msra.mxu0 %v1291
        %1335 = vmatprep.subr.bf16.mxu0 0
        %1336 = vmatpush1.bf16.xpose.msra.mxu0 %v1294
        %1337 = vmatprep.subr.bf16.mxu0 0
        %1338 = vmatpush1.bf16.xpose.msra.mxu0 %v1297
        %1339 = vmatprep.subr.bf16.mxu0 0
        %1340 = vmatpush1.bf16.xpose.msra.mxu0 %v1300
        %1341 = vmatprep.subr.bf16.mxu0 0
        %1342 = vmatpush1.bf16.xpose.msra.mxu0 %v1303
        %1343 = vmatprep.subr.bf16.mxu0 0
        %1344 = vmatpush1.bf16.xpose.msra.mxu0 %v1306
        %1345 = vmatprep.subr.bf16.mxu0 0
        %1346 = vmatpush1.bf16.xpose.msra.mxu0 %v1309
        %1347 = vmatprep.subr.bf16.mxu0 0
        %1348 = vmatpush1.bf16.xpose.msra.mxu0 %v1312
        %1349 = vmatprep.subr.bf16.mxu0 0
        %1350 = vmatpush1.bf16.xpose.msra.mxu0 %v1315
        %1351 = vmatprep.subr.bf16.mxu0 0
        %1352 = vmatpush1.bf16.xpose.msra.mxu0 %v1318
        %1353 = vmatprep.subr.bf16.mxu0 0
        %1354 = vmatpush1.bf16.xpose.msra.mxu0 %v1321
        %1355 = vmatprep.mubr.bf16.mxu0 0
        %1356 = vmatmul.mubr.bf16.gmra.mrb[0].mxu0 %v1228
        %v1357 = vpop.f32.mrb[0].mxu0
        %v1358 = vadd.f32 0.0, %v1357
        %v1359 = vpop.f32.mrb[0].mxu0
        %v1360 = vadd.f32 0.0, %v1359
        %v1361 = vpop.f32.mrb[0].mxu0
        %v1362 = vadd.f32 0.0, %v1361
        %v1363 = vpop.f32.mrb[0].mxu0
        %v1364 = vadd.f32 0.0, %v1363
        %1365 = vmatprep.mubr.bf16.mxu0 0
        %1366 = vmatmul.mubr.bf16.gmra.mrb[0].mxu0 %v1231
        %v1367 = vpop.f32.mrb[0].mxu0
        %v1368 = vadd.f32 0.0, %v1367
        %v1369 = vpop.f32.mrb[0].mxu0
        %v1370 = vadd.f32 0.0, %v1369
        %v1371 = vpop.f32.mrb[0].mxu0
        %v1372 = vadd.f32 0.0, %v1371
        %v1373 = vpop.f32.mrb[0].mxu0
        %v1374 = vadd.f32 0.0, %v1373
        %1375 = vmatprep.mubr.bf16.mxu0 0
        %1376 = vmatmul.mubr.bf16.gmra.mrb[0].mxu0 %v1234
        %v1377 = vpop.f32.mrb[0].mxu0
        %v1378 = vadd.f32 0.0, %v1377
        %v1379 = vpop.f32.mrb[0].mxu0
        %v1380 = vadd.f32 0.0, %v1379
        %v1381 = vpop.f32.mrb[0].mxu0
        %v1382 = vadd.f32 0.0, %v1381
        %v1383 = vpop.f32.mrb[0].mxu0
        %v1384 = vadd.f32 0.0, %v1383
        %1385 = vmatprep.mubr.bf16.mxu0 0
        %1386 = vmatmul.mubr.bf16.gmra.mrb[0].mxu0 %v1237
        %v1387 = vpop.f32.mrb[0].mxu0
        %v1388 = vadd.f32 0.0, %v1387
        %v1389 = vpop.f32.mrb[0].mxu0
        %v1390 = vadd.f32 0.0, %v1389
        %v1391 = vpop.f32.mrb[0].mxu0
        %v1392 = vadd.f32 0.0, %v1391
        %v1393 = vpop.f32.mrb[0].mxu0
        %v1394 = vadd.f32 0.0, %v1393
        %1395 = vmatprep.mubr.bf16.mxu0 0
        %1396 = vmatmul.mubr.bf16.gmra.mrb[0].mxu0 %v1240
        %v1397 = vpop.f32.mrb[0].mxu0
        %v1398 = vadd.f32 0.0, %v1397
        %v1399 = vpop.f32.mrb[0].mxu0
        %v1400 = vadd.f32 0.0, %v1399
        %v1401 = vpop.f32.mrb[0].mxu0
        %v1402 = vadd.f32 0.0, %v1401
        %v1403 = vpop.f32.mrb[0].mxu0
        %v1404 = vadd.f32 0.0, %v1403
        %1405 = vmatprep.mubr.bf16.mxu0 0
        %1406 = vmatmul.mubr.bf16.gmra.mrb[0].mxu0 %v1243
        %v1407 = vpop.f32.mrb[0].mxu0
        %v1408 = vadd.f32 0.0, %v1407
        %v1409 = vpop.f32.mrb[0].mxu0
        %v1410 = vadd.f32 0.0, %v1409
        %v1411 = vpop.f32.mrb[0].mxu0
        %v1412 = vadd.f32 0.0, %v1411
        %v1413 = vpop.f32.mrb[0].mxu0
        %v1414 = vadd.f32 0.0, %v1413
        %1415 = vmatprep.mubr.bf16.mxu0 0
        %1416 = vmatmul.mubr.bf16.gmra.mrb[0].mxu0 %v1246
        %v1417 = vpop.f32.mrb[0].mxu0
        %v1418 = vadd.f32 0.0, %v1417
        %v1419 = vpop.f32.mrb[0].mxu0
        %v1420 = vadd.f32 0.0, %v1419
        %v1421 = vpop.f32.mrb[0].mxu0
        %v1422 = vadd.f32 0.0, %v1421
        %v1423 = vpop.f32.mrb[0].mxu0
        %v1424 = vadd.f32 0.0, %v1423
        %1425 = vmatprep.mubr.bf16.mxu0 0
        %1426 = vmatmul.mubr.bf16.gmra.mrb[0].mxu0 %v1249
        %v1427 = vpop.f32.mrb[0].mxu0
        %v1428 = vadd.f32 0.0, %v1427
        %v1429 = vpop.f32.mrb[0].mxu0
        %v1430 = vadd.f32 0.0, %v1429
        %v1431 = vpop.f32.mrb[0].mxu0
        %v1432 = vadd.f32 0.0, %v1431
        %v1433 = vpop.f32.mrb[0].mxu0
        %v1434 = vadd.f32 0.0, %v1433
        %1435 = vmatprep.mubr.bf16.mxu0 0
        %1436 = vmatmul.mubr.bf16.gmra.mrb[0].mxu0 %v1252
        %v1437 = vpop.f32.mrb[0].mxu0
        %v1438 = vadd.f32 0.0, %v1437
        %v1439 = vpop.f32.mrb[0].mxu0
        %v1440 = vadd.f32 0.0, %v1439
        %v1441 = vpop.f32.mrb[0].mxu0
        %v1442 = vadd.f32 0.0, %v1441
        %v1443 = vpop.f32.mrb[0].mxu0
        %v1444 = vadd.f32 0.0, %v1443
        %1445 = vmatprep.mubr.bf16.mxu0 0
        %1446 = vmatmul.mubr.bf16.gmra.mrb[0].mxu0 %v1255
        %v1447 = vpop.f32.mrb[0].mxu0
        %v1448 = vadd.f32 0.0, %v1447
        %v1449 = vpop.f32.mrb[0].mxu0
        %v1450 = vadd.f32 0.0, %v1449
        %v1451 = vpop.f32.mrb[0].mxu0
        %v1452 = vadd.f32 0.0, %v1451
        %v1453 = vpop.f32.mrb[0].mxu0
        %v1454 = vadd.f32 0.0, %v1453
        %1455 = vmatprep.mubr.bf16.mxu0 0
        %1456 = vmatmul.mubr.bf16.gmra.mrb[0].mxu0 %v1258
        %v1457 = vpop.f32.mrb[0].mxu0
        %v1458 = vadd.f32 0.0, %v1457
        %v1459 = vpop.f32.mrb[0].mxu0
        %v1460 = vadd.f32 0.0, %v1459
        %v1461 = vpop.f32.mrb[0].mxu0
        %v1462 = vadd.f32 0.0, %v1461
        %v1463 = vpop.f32.mrb[0].mxu0
        %v1464 = vadd.f32 0.0, %v1463
        %1465 = vmatprep.mubr.bf16.mxu0 0
        %1466 = vmatmul.mubr.bf16.gmra.mrb[0].mxu0 %v1261
        %v1467 = vpop.f32.mrb[0].mxu0
        %v1468 = vadd.f32 0.0, %v1467
        %v1469 = vpop.f32.mrb[0].mxu0
        %v1470 = vadd.f32 0.0, %v1469
        %v1471 = vpop.f32.mrb[0].mxu0
        %v1472 = vadd.f32 0.0, %v1471
        %v1473 = vpop.f32.mrb[0].mxu0
        %v1474 = vadd.f32 0.0, %v1473
        %1475 = vmatprep.mubr.bf16.mxu0 0
        %1476 = vmatmul.mubr.bf16.gmra.mrb[0].mxu0 %v1264
        %v1477 = vpop.f32.mrb[0].mxu0
        %v1478 = vadd.f32 0.0, %v1477
        %v1479 = vpop.f32.mrb[0].mxu0
        %v1480 = vadd.f32 0.0, %v1479
        %v1481 = vpop.f32.mrb[0].mxu0
        %v1482 = vadd.f32 0.0, %v1481
        %v1483 = vpop.f32.mrb[0].mxu0
        %v1484 = vadd.f32 0.0, %v1483
        %1485 = vmatprep.mubr.bf16.mxu0 0
        %1486 = vmatmul.mubr.bf16.gmra.mrb[0].mxu0 %v1267
        %v1487 = vpop.f32.mrb[0].mxu0
        %v1488 = vadd.f32 0.0, %v1487
        %v1489 = vpop.f32.mrb[0].mxu0
        %v1490 = vadd.f32 0.0, %v1489
        %v1491 = vpop.f32.mrb[0].mxu0
        %v1492 = vadd.f32 0.0, %v1491
        %v1493 = vpop.f32.mrb[0].mxu0
        %v1494 = vadd.f32 0.0, %v1493
        %1495 = vmatprep.mubr.bf16.mxu0 0
        %1496 = vmatmul.mubr.bf16.gmra.mrb[0].mxu0 %v1270
        %v1497 = vpop.f32.mrb[0].mxu0
        %v1498 = vadd.f32 0.0, %v1497
        %v1499 = vpop.f32.mrb[0].mxu0
        %v1500 = vadd.f32 0.0, %v1499
        %v1501 = vpop.f32.mrb[0].mxu0
        %v1502 = vadd.f32 0.0, %v1501
        %v1503 = vpop.f32.mrb[0].mxu0
        %v1504 = vadd.f32 0.0, %v1503
        %1505 = vmatprep.mubr.bf16.mxu0 0
        %1506 = vmatmul.mubr.bf16.gmra.mrb[0].mxu0 %v1273
        %v1507 = vpop.f32.mrb[0].mxu0
        %v1508 = vadd.f32 0.0, %v1507
        %v1509 = vpop.f32.mrb[0].mxu0
        %v1510 = vadd.f32 0.0, %v1509
        %v1511 = vpop.f32.mrb[0].mxu0
        %v1512 = vadd.f32 0.0, %v1511
        %v1513 = vpop.f32.mrb[0].mxu0
        %v1514 = vadd.f32 0.0, %v1513
        %1515 = vdwg.mxu0
        %v1516 = vld [vmem:[#allocation3] sm:$0xff]
        %v1517 = vld [vmem:[#allocation3 + $0x8] sm:$0xff]
        %v1518 = vld [vmem:[#allocation3 + $0x10] sm:$0xff]
        %v1519 = vld [vmem:[#allocation3 + $0x18] sm:$0xff]
        %v1520 = vld [vmem:[#allocation3 + $0x20] sm:$0xff]
        %v1521 = vld [vmem:[#allocation3 + $0x28] sm:$0xff]
        %v1522 = vld [vmem:[#allocation3 + $0x30] sm:$0xff]
        %v1523 = vld [vmem:[#allocation3 + $0x38] sm:$0xff]
        %v1524 = vld [vmem:[#allocation3 + $0x40] sm:$0xff]
        %v1525 = vld [vmem:[#allocation3 + $0x48] sm:$0xff]
        %v1526 = vld [vmem:[#allocation3 + $0x50] sm:$0xff]
        %v1527 = vld [vmem:[#allocation3 + $0x58] sm:$0xff]
        %v1528 = vld [vmem:[#allocation3 + $0x60] sm:$0xff]
        %v1529 = vld [vmem:[#allocation3 + $0x68] sm:$0xff]
        %v1530 = vld [vmem:[#allocation3 + $0x70] sm:$0xff]
        %v1531 = vld [vmem:[#allocation3 + $0x78] sm:$0xff]
        %v1532 = vld [vmem:[#allocation3 + $0x80] sm:$0xff]
        %v1533 = vld [vmem:[#allocation3 + $0x88] sm:$0xff]
        %v1534 = vld [vmem:[#allocation3 + $0x90] sm:$0xff]
        %v1535 = vld [vmem:[#allocation3 + $0x98] sm:$0xff]
        %v1536 = vld [vmem:[#allocation3 + $0xa0] sm:$0xff]
        %v1537 = vld [vmem:[#allocation3 + $0xa8] sm:$0xff]
        %v1538 = vld [vmem:[#allocation3 + $0xb0] sm:$0xff]
        %v1539 = vld [vmem:[#allocation3 + $0xb8] sm:$0xff]
        %v1540 = vld [vmem:[#allocation3 + $0xc0] sm:$0xff]
        %v1541 = vld [vmem:[#allocation3 + $0xc8] sm:$0xff]
        %v1542 = vld [vmem:[#allocation3 + $0xd0] sm:$0xff]
        %v1543 = vld [vmem:[#allocation3 + $0xd8] sm:$0xff]
        %v1544 = vld [vmem:[#allocation3 + $0xe0] sm:$0xff]
        %v1545 = vld [vmem:[#allocation3 + $0xe8] sm:$0xff]
        %v1546 = vld [vmem:[#allocation3 + $0xf0] sm:$0xff]
        %v1547 = vld [vmem:[#allocation3 + $0xf8] sm:$0xff]
        %v1548 = vmax.f32 %v1358, %v1360
        %1549 = vmax.xlane.f32.xlu0 %v1548
        %v1550 = vpop.xlane.xlu0 %1549
        %v1551 = vmax.f32 %v1362, %v1364
        %1552 = vmax.xlane.f32.xlu0 %v1551
        %v1553 = vpop.xlane.xlu0 %1552
        %v1554 = vmax.f32 %v1368, %v1370
        %1555 = vmax.xlane.f32.xlu0 %v1554
        %v1556 = vpop.xlane.xlu0 %1555
        %v1557 = vmax.f32 %v1372, %v1374
        %1558 = vmax.xlane.f32.xlu0 %v1557
        %v1559 = vpop.xlane.xlu0 %1558
        %v1560 = vmax.f32 %v1378, %v1380
        %1561 = vmax.xlane.f32.xlu0 %v1560
        %v1562 = vpop.xlane.xlu0 %1561
        %v1563 = vmax.f32 %v1382, %v1384
        %1564 = vmax.xlane.f32.xlu0 %v1563
        %v1565 = vpop.xlane.xlu0 %1564
        %v1566 = vmax.f32 %v1388, %v1390
        %1567 = vmax.xlane.f32.xlu0 %v1566
        %v1568 = vpop.xlane.xlu0 %1567
        %v1569 = vmax.f32 %v1392, %v1394
        %1570 = vmax.xlane.f32.xlu0 %v1569
        %v1571 = vpop.xlane.xlu0 %1570
        %v1572 = vmax.f32 %v1398, %v1400
        %1573 = vmax.xlane.f32.xlu0 %v1572
        %v1574 = vpop.xlane.xlu0 %1573
        %v1575 = vmax.f32 %v1402, %v1404
        %1576 = vmax.xlane.f32.xlu0 %v1575
        %v1577 = vpop.xlane.xlu0 %1576
        %v1578 = vmax.f32 %v1408, %v1410
        %1579 = vmax.xlane.f32.xlu0 %v1578
        %v1580 = vpop.xlane.xlu0 %1579
        %v1581 = vmax.f32 %v1412, %v1414
        %1582 = vmax.xlane.f32.xlu0 %v1581
        %v1583 = vpop.xlane.xlu0 %1582
        %v1584 = vmax.f32 %v1418, %v1420
        %1585 = vmax.xlane.f32.xlu0 %v1584
        %v1586 = vpop.xlane.xlu0 %1585
        %v1587 = vmax.f32 %v1422, %v1424
        %1588 = vmax.xlane.f32.xlu0 %v1587
        %v1589 = vpop.xlane.xlu0 %1588
        %v1590 = vmax.f32 %v1428, %v1430
        %1591 = vmax.xlane.f32.xlu0 %v1590
        %v1592 = vpop.xlane.xlu0 %1591
        %v1593 = vmax.f32 %v1432, %v1434
        %1594 = vmax.xlane.f32.xlu0 %v1593
        %v1595 = vpop.xlane.xlu0 %1594
        %v1596 = vmax.f32 %v1438, %v1440
        %1597 = vmax.xlane.f32.xlu0 %v1596
        %v1598 = vpop.xlane.xlu0 %1597
        %v1599 = vmax.f32 %v1442, %v1444
        %1600 = vmax.xlane.f32.xlu0 %v1599
        %v1601 = vpop.xlane.xlu0 %1600
        %v1602 = vmax.f32 %v1448, %v1450
        %1603 = vmax.xlane.f32.xlu0 %v1602
        %v1604 = vpop.xlane.xlu0 %1603
        %v1605 = vmax.f32 %v1452, %v1454
        %1606 = vmax.xlane.f32.xlu0 %v1605
        %v1607 = vpop.xlane.xlu0 %1606
        %v1608 = vmax.f32 %v1458, %v1460
        %1609 = vmax.xlane.f32.xlu0 %v1608
        %v1610 = vpop.xlane.xlu0 %1609
        %v1611 = vmax.f32 %v1462, %v1464
        %1612 = vmax.xlane.f32.xlu0 %v1611
        %v1613 = vpop.xlane.xlu0 %1612
        %v1614 = vmax.f32 %v1468, %v1470
        %1615 = vmax.xlane.f32.xlu0 %v1614
        %v1616 = vpop.xlane.xlu0 %1615
        %v1617 = vmax.f32 %v1472, %v1474
        %1618 = vmax.xlane.f32.xlu0 %v1617
        %v1619 = vpop.xlane.xlu0 %1618
        %v1620 = vmax.f32 %v1478, %v1480
        %1621 = vmax.xlane.f32.xlu0 %v1620
        %v1622 = vpop.xlane.xlu0 %1621
        %v1623 = vmax.f32 %v1482, %v1484
        %1624 = vmax.xlane.f32.xlu0 %v1623
        %v1625 = vpop.xlane.xlu0 %1624
        %v1626 = vmax.f32 %v1488, %v1490
        %1627 = vmax.xlane.f32.xlu0 %v1626
        %v1628 = vpop.xlane.xlu0 %1627
        %v1629 = vmax.f32 %v1492, %v1494
        %1630 = vmax.xlane.f32.xlu0 %v1629
        %v1631 = vpop.xlane.xlu0 %1630
        %v1632 = vmax.f32 %v1498, %v1500
        %1633 = vmax.xlane.f32.xlu0 %v1632
        %v1634 = vpop.xlane.xlu0 %1633
        %v1635 = vmax.f32 %v1502, %v1504
        %1636 = vmax.xlane.f32.xlu0 %v1635
        %v1637 = vpop.xlane.xlu0 %1636
        %v1638 = vmax.f32 %v1508, %v1510
        %1639 = vmax.xlane.f32.xlu0 %v1638
        %v1640 = vpop.xlane.xlu0 %1639
        %v1641 = vmax.f32 %v1512, %v1514
        %1642 = vmax.xlane.f32.xlu0 %v1641
        %v1643 = vpop.xlane.xlu0 %1642
        %v1644 = vmax.f32 %v1516, %v1550
        %v1645 = vmax.f32 %v1517, %v1553
        %v1646 = vmax.f32 %v1518, %v1556
        %v1647 = vmax.f32 %v1519, %v1559
        %v1648 = vmax.f32 %v1520, %v1562
        %v1649 = vmax.f32 %v1521, %v1565
        %v1650 = vmax.f32 %v1522, %v1568
        %v1651 = vmax.f32 %v1523, %v1571
        %v1652 = vmax.f32 %v1524, %v1574
        %v1653 = vmax.f32 %v1525, %v1577
        %v1654 = vmax.f32 %v1526, %v1580
        %v1655 = vmax.f32 %v1527, %v1583
        %v1656 = vmax.f32 %v1528, %v1586
        %v1657 = vmax.f32 %v1529, %v1589
        %v1658 = vmax.f32 %v1530, %v1592
        %v1659 = vmax.f32 %v1531, %v1595
        %v1660 = vmax.f32 %v1532, %v1598
        %v1661 = vmax.f32 %v1533, %v1601
        %v1662 = vmax.f32 %v1534, %v1604
        %v1663 = vmax.f32 %v1535, %v1607
        %v1664 = vmax.f32 %v1536, %v1610
        %v1665 = vmax.f32 %v1537, %v1613
        %v1666 = vmax.f32 %v1538, %v1616
        %v1667 = vmax.f32 %v1539, %v1619
        %v1668 = vmax.f32 %v1540, %v1622
        %v1669 = vmax.f32 %v1541, %v1625
        %v1670 = vmax.f32 %v1542, %v1628
        %v1671 = vmax.f32 %v1543, %v1631
        %v1672 = vmax.f32 %v1544, %v1634
        %v1673 = vmax.f32 %v1545, %v1637
        %v1674 = vmax.f32 %v1546, %v1640
        %v1675 = vmax.f32 %v1547, %v1643
        %v1676 = vsub.f32 %v1516, %v1644
        %v1677 = vsub.f32 %v1517, %v1645
        %v1678 = vsub.f32 %v1518, %v1646
        %v1679 = vsub.f32 %v1519, %v1647
        %v1680 = vsub.f32 %v1520, %v1648
        %v1681 = vsub.f32 %v1521, %v1649
        %v1682 = vsub.f32 %v1522, %v1650
        %v1683 = vsub.f32 %v1523, %v1651
        %v1684 = vsub.f32 %v1524, %v1652
        %v1685 = vsub.f32 %v1525, %v1653
        %v1686 = vsub.f32 %v1526, %v1654
        %v1687 = vsub.f32 %v1527, %v1655
        %v1688 = vsub.f32 %v1528, %v1656
        %v1689 = vsub.f32 %v1529, %v1657
        %v1690 = vsub.f32 %v1530, %v1658
        %v1691 = vsub.f32 %v1531, %v1659
        %v1692 = vsub.f32 %v1532, %v1660
        %v1693 = vsub.f32 %v1533, %v1661
        %v1694 = vsub.f32 %v1534, %v1662
        %v1695 = vsub.f32 %v1535, %v1663
        %v1696 = vsub.f32 %v1536, %v1664
        %v1697 = vsub.f32 %v1537, %v1665
        %v1698 = vsub.f32 %v1538, %v1666
        %v1699 = vsub.f32 %v1539, %v1667
        %v1700 = vsub.f32 %v1540, %v1668
        %v1701 = vsub.f32 %v1541, %v1669
        %v1702 = vsub.f32 %v1542, %v1670
        %v1703 = vsub.f32 %v1543, %v1671
        %v1704 = vsub.f32 %v1544, %v1672
        %v1705 = vsub.f32 %v1545, %v1673
        %v1706 = vsub.f32 %v1546, %v1674
        %v1707 = vsub.f32 %v1547, %v1675
        %v1708 = vmul.f32 %v1676, 1.442695
        %v1709 = vpow.pop %v1708
        %v1710 = vmul.f32 %v1677, 1.442695
        %v1711 = vpow.pop %v1710
        %v1712 = vmul.f32 %v1678, 1.442695
        %v1713 = vpow.pop %v1712
        %v1714 = vmul.f32 %v1679, 1.442695
        %v1715 = vpow.pop %v1714
        %v1716 = vmul.f32 %v1680, 1.442695
        %v1717 = vpow.pop %v1716
        %v1718 = vmul.f32 %v1681, 1.442695
        %v1719 = vpow.pop %v1718
        %v1720 = vmul.f32 %v1682, 1.442695
        %v1721 = vpow.pop %v1720
        %v1722 = vmul.f32 %v1683, 1.442695
        %v1723 = vpow.pop %v1722
        %v1724 = vmul.f32 %v1684, 1.442695
        %v1725 = vpow.pop %v1724
        %v1726 = vmul.f32 %v1685, 1.442695
        %v1727 = vpow.pop %v1726
        %v1728 = vmul.f32 %v1686, 1.442695
        %v1729 = vpow.pop %v1728
        %v1730 = vmul.f32 %v1687, 1.442695
        %v1731 = vpow.pop %v1730
        %v1732 = vmul.f32 %v1688, 1.442695
        %v1733 = vpow.pop %v1732
        %v1734 = vmul.f32 %v1689, 1.442695
        %v1735 = vpow.pop %v1734
        %v1736 = vmul.f32 %v1690, 1.442695
        %v1737 = vpow.pop %v1736
        %v1738 = vmul.f32 %v1691, 1.442695
        %v1739 = vpow.pop %v1738
        %v1740 = vmul.f32 %v1692, 1.442695
        %v1741 = vpow.pop %v1740
        %v1742 = vmul.f32 %v1693, 1.442695
        %v1743 = vpow.pop %v1742
        %v1744 = vmul.f32 %v1694, 1.442695
        %v1745 = vpow.pop %v1744
        %v1746 = vmul.f32 %v1695, 1.442695
        %v1747 = vpow.pop %v1746
        %v1748 = vmul.f32 %v1696, 1.442695
        %v1749 = vpow.pop %v1748
        %v1750 = vmul.f32 %v1697, 1.442695
        %v1751 = vpow.pop %v1750
        %v1752 = vmul.f32 %v1698, 1.442695
        %v1753 = vpow.pop %v1752
        %v1754 = vmul.f32 %v1699, 1.442695
        %v1755 = vpow.pop %v1754
        %v1756 = vmul.f32 %v1700, 1.442695
        %v1757 = vpow.pop %v1756
        %v1758 = vmul.f32 %v1701, 1.442695
        %v1759 = vpow.pop %v1758
        %v1760 = vmul.f32 %v1702, 1.442695
        %v1761 = vpow.pop %v1760
        %v1762 = vmul.f32 %v1703, 1.442695
        %v1763 = vpow.pop %v1762
        %v1764 = vmul.f32 %v1704, 1.442695
        %v1765 = vpow.pop %v1764
        %v1766 = vmul.f32 %v1705, 1.442695
        %v1767 = vpow.pop %v1766
        %v1768 = vmul.f32 %v1706, 1.442695
        %v1769 = vpow.pop %v1768
        %v1770 = vmul.f32 %v1707, 1.442695
        %v1771 = vpow.pop %v1770
        %1773 = vset.pattern.permute.xlu0 0
        %1774 = vperm.xlu0 %1773, %v1644
        %v1775 = vpop.permute.xlu0 %1774
        %1778 = vset.pattern.permute.xlu0 0
        %1779 = vperm.xlu0 %1778, %v1645
        %v1780 = vpop.permute.xlu0 %1779
        %1783 = vset.pattern.permute.xlu0 0
        %1784 = vperm.xlu0 %1783, %v1646
        %v1785 = vpop.permute.xlu0 %1784
        %1788 = vset.pattern.permute.xlu0 0
        %1789 = vperm.xlu0 %1788, %v1647
        %v1790 = vpop.permute.xlu0 %1789
        %1793 = vset.pattern.permute.xlu0 0
        %1794 = vperm.xlu0 %1793, %v1648
        %v1795 = vpop.permute.xlu0 %1794
        %1798 = vset.pattern.permute.xlu0 0
        %1799 = vperm.xlu0 %1798, %v1649
        %v1800 = vpop.permute.xlu0 %1799
        %1803 = vset.pattern.permute.xlu0 0
        %1804 = vperm.xlu0 %1803, %v1650
        %v1805 = vpop.permute.xlu0 %1804
        %1808 = vset.pattern.permute.xlu0 0
        %1809 = vperm.xlu0 %1808, %v1651
        %v1810 = vpop.permute.xlu0 %1809
        %1813 = vset.pattern.permute.xlu0 0
        %1814 = vperm.xlu0 %1813, %v1652
        %v1815 = vpop.permute.xlu0 %1814
        %1818 = vset.pattern.permute.xlu0 0
        %1819 = vperm.xlu0 %1818, %v1653
        %v1820 = vpop.permute.xlu0 %1819
        %1823 = vset.pattern.permute.xlu0 0
        %1824 = vperm.xlu0 %1823, %v1654
        %v1825 = vpop.permute.xlu0 %1824
        %1828 = vset.pattern.permute.xlu0 0
        %1829 = vperm.xlu0 %1828, %v1655
        %v1830 = vpop.permute.xlu0 %1829
        %1833 = vset.pattern.permute.xlu0 0
        %1834 = vperm.xlu0 %1833, %v1656
        %v1835 = vpop.permute.xlu0 %1834
        %1838 = vset.pattern.permute.xlu0 0
        %1839 = vperm.xlu0 %1838, %v1657
        %v1840 = vpop.permute.xlu0 %1839
        %1843 = vset.pattern.permute.xlu0 0
        %1844 = vperm.xlu0 %1843, %v1658
        %v1845 = vpop.permute.xlu0 %1844
        %1848 = vset.pattern.permute.xlu0 0
        %1849 = vperm.xlu0 %1848, %v1659
        %v1850 = vpop.permute.xlu0 %1849
        %1853 = vset.pattern.permute.xlu0 0
        %1854 = vperm.xlu0 %1853, %v1660
        %v1855 = vpop.permute.xlu0 %1854
        %1858 = vset.pattern.permute.xlu0 0
        %1859 = vperm.xlu0 %1858, %v1661
        %v1860 = vpop.permute.xlu0 %1859
        %1863 = vset.pattern.permute.xlu0 0
        %1864 = vperm.xlu0 %1863, %v1662
        %v1865 = vpop.permute.xlu0 %1864
        %1868 = vset.pattern.permute.xlu0 0
        %1869 = vperm.xlu0 %1868, %v1663
        %v1870 = vpop.permute.xlu0 %1869
        %1873 = vset.pattern.permute.xlu0 0
        %1874 = vperm.xlu0 %1873, %v1664
        %v1875 = vpop.permute.xlu0 %1874
        %1878 = vset.pattern.permute.xlu0 0
        %1879 = vperm.xlu0 %1878, %v1665
        %v1880 = vpop.permute.xlu0 %1879
        %1883 = vset.pattern.permute.xlu0 0
        %1884 = vperm.xlu0 %1883, %v1666
        %v1885 = vpop.permute.xlu0 %1884
        %1888 = vset.pattern.permute.xlu0 0
        %1889 = vperm.xlu0 %1888, %v1667
        %v1890 = vpop.permute.xlu0 %1889
        %1893 = vset.pattern.permute.xlu0 0
        %1894 = vperm.xlu0 %1893, %v1668
        %v1895 = vpop.permute.xlu0 %1894
        %1898 = vset.pattern.permute.xlu0 0
        %1899 = vperm.xlu0 %1898, %v1669
        %v1900 = vpop.permute.xlu0 %1899
        %1903 = vset.pattern.permute.xlu0 0
        %1904 = vperm.xlu0 %1903, %v1670
        %v1905 = vpop.permute.xlu0 %1904
        %1908 = vset.pattern.permute.xlu0 0
        %1909 = vperm.xlu0 %1908, %v1671
        %v1910 = vpop.permute.xlu0 %1909
        %1913 = vset.pattern.permute.xlu0 0
        %1914 = vperm.xlu0 %1913, %v1672
        %v1915 = vpop.permute.xlu0 %1914
        %1918 = vset.pattern.permute.xlu0 0
        %1919 = vperm.xlu0 %1918, %v1673
        %v1920 = vpop.permute.xlu0 %1919
        %1923 = vset.pattern.permute.xlu0 0
        %1924 = vperm.xlu0 %1923, %v1674
        %v1925 = vpop.permute.xlu0 %1924
        %1928 = vset.pattern.permute.xlu0 0
        %1929 = vperm.xlu0 %1928, %v1675
        %v1930 = vpop.permute.xlu0 %1929
        %v1932 = vsub.f32 %v1358, %v1775
        %v1933 = vsub.f32 %v1360, %v1775
        %v1934 = vsub.f32 %v1362, %v1780
        %v1935 = vsub.f32 %v1364, %v1780
        %v1936 = vsub.f32 %v1368, %v1785
        %v1937 = vsub.f32 %v1370, %v1785
        %v1938 = vsub.f32 %v1372, %v1790
        %v1939 = vsub.f32 %v1374, %v1790
        %v1940 = vsub.f32 %v1378, %v1795
        %v1941 = vsub.f32 %v1380, %v1795
        %v1942 = vsub.f32 %v1382, %v1800
        %v1943 = vsub.f32 %v1384, %v1800
        %v1944 = vsub.f32 %v1388, %v1805
        %v1945 = vsub.f32 %v1390, %v1805
        %v1946 = vsub.f32 %v1392, %v1810
        %v1947 = vsub.f32 %v1394, %v1810
        %v1948 = vsub.f32 %v1398, %v1815
        %v1949 = vsub.f32 %v1400, %v1815
        %v1950 = vsub.f32 %v1402, %v1820
        %v1951 = vsub.f32 %v1404, %v1820
        %v1952 = vsub.f32 %v1408, %v1825
        %v1953 = vsub.f32 %v1410, %v1825
        %v1954 = vsub.f32 %v1412, %v1830
        %v1955 = vsub.f32 %v1414, %v1830
        %v1956 = vsub.f32 %v1418, %v1835
        %v1957 = vsub.f32 %v1420, %v1835
        %v1958 = vsub.f32 %v1422, %v1840
        %v1959 = vsub.f32 %v1424, %v1840
        %v1960 = vsub.f32 %v1428, %v1845
        %v1961 = vsub.f32 %v1430, %v1845
        %v1962 = vsub.f32 %v1432, %v1850
        %v1963 = vsub.f32 %v1434, %v1850
        %v1964 = vsub.f32 %v1438, %v1855
        %v1965 = vsub.f32 %v1440, %v1855
        %v1966 = vsub.f32 %v1442, %v1860
        %v1967 = vsub.f32 %v1444, %v1860
        %v1968 = vsub.f32 %v1448, %v1865
        %v1969 = vsub.f32 %v1450, %v1865
        %v1970 = vsub.f32 %v1452, %v1870
        %v1971 = vsub.f32 %v1454, %v1870
        %v1972 = vsub.f32 %v1458, %v1875
        %v1973 = vsub.f32 %v1460, %v1875
        %v1974 = vsub.f32 %v1462, %v1880
        %v1975 = vsub.f32 %v1464, %v1880
        %v1976 = vsub.f32 %v1468, %v1885
        %v1977 = vsub.f32 %v1470, %v1885
        %v1978 = vsub.f32 %v1472, %v1890
        %v1979 = vsub.f32 %v1474, %v1890
        %v1980 = vsub.f32 %v1478, %v1895
        %v1981 = vsub.f32 %v1480, %v1895
        %v1982 = vsub.f32 %v1482, %v1900
        %v1983 = vsub.f32 %v1484, %v1900
        %v1984 = vsub.f32 %v1488, %v1905
        %v1985 = vsub.f32 %v1490, %v1905
        %v1986 = vsub.f32 %v1492, %v1910
        %v1987 = vsub.f32 %v1494, %v1910
        %v1988 = vsub.f32 %v1498, %v1915
        %v1989 = vsub.f32 %v1500, %v1915
        %v1990 = vsub.f32 %v1502, %v1920
        %v1991 = vsub.f32 %v1504, %v1920
        %v1992 = vsub.f32 %v1508, %v1925
        %v1993 = vsub.f32 %v1510, %v1925
        %v1994 = vsub.f32 %v1512, %v1930
        %v1995 = vsub.f32 %v1514, %v1930
        %v1996 = vmul.f32 %v1932, 1.442695
        %v1997 = vpow.pop %v1996
        %v1998 = vmul.f32 %v1933, 1.442695
        %v1999 = vpow.pop %v1998
        %v2000 = vmul.f32 %v1934, 1.442695
        %v2001 = vpow.pop %v2000
        %v2002 = vmul.f32 %v1935, 1.442695
        %v2003 = vpow.pop %v2002
        %v2004 = vmul.f32 %v1936, 1.442695
        %v2005 = vpow.pop %v2004
        %v2006 = vmul.f32 %v1937, 1.442695
        %v2007 = vpow.pop %v2006
        %v2008 = vmul.f32 %v1938, 1.442695
        %v2009 = vpow.pop %v2008
        %v2010 = vmul.f32 %v1939, 1.442695
        %v2011 = vpow.pop %v2010
        %v2012 = vmul.f32 %v1940, 1.442695
        %v2013 = vpow.pop %v2012
        %v2014 = vmul.f32 %v1941, 1.442695
        %v2015 = vpow.pop %v2014
        %v2016 = vmul.f32 %v1942, 1.442695
        %v2017 = vpow.pop %v2016
        %v2018 = vmul.f32 %v1943, 1.442695
        %v2019 = vpow.pop %v2018
        %v2020 = vmul.f32 %v1944, 1.442695
        %v2021 = vpow.pop %v2020
        %v2022 = vmul.f32 %v1945, 1.442695
        %v2023 = vpow.pop %v2022
        %v2024 = vmul.f32 %v1946, 1.442695
        %v2025 = vpow.pop %v2024
        %v2026 = vmul.f32 %v1947, 1.442695
        %v2027 = vpow.pop %v2026
        %v2028 = vmul.f32 %v1948, 1.442695
        %v2029 = vpow.pop %v2028
        %v2030 = vmul.f32 %v1949, 1.442695
        %v2031 = vpow.pop %v2030
        %v2032 = vmul.f32 %v1950, 1.442695
        %v2033 = vpow.pop %v2032
        %v2034 = vmul.f32 %v1951, 1.442695
        %v2035 = vpow.pop %v2034
        %v2036 = vmul.f32 %v1952, 1.442695
        %v2037 = vpow.pop %v2036
        %v2038 = vmul.f32 %v1953, 1.442695
        %v2039 = vpow.pop %v2038
        %v2040 = vmul.f32 %v1954, 1.442695
        %v2041 = vpow.pop %v2040
        %v2042 = vmul.f32 %v1955, 1.442695
        %v2043 = vpow.pop %v2042
        %v2044 = vmul.f32 %v1956, 1.442695
        %v2045 = vpow.pop %v2044
        %v2046 = vmul.f32 %v1957, 1.442695
        %v2047 = vpow.pop %v2046
        %v2048 = vmul.f32 %v1958, 1.442695
        %v2049 = vpow.pop %v2048
        %v2050 = vmul.f32 %v1959, 1.442695
        %v2051 = vpow.pop %v2050
        %v2052 = vmul.f32 %v1960, 1.442695
        %v2053 = vpow.pop %v2052
        %v2054 = vmul.f32 %v1961, 1.442695
        %v2055 = vpow.pop %v2054
        %v2056 = vmul.f32 %v1962, 1.442695
        %v2057 = vpow.pop %v2056
        %v2058 = vmul.f32 %v1963, 1.442695
        %v2059 = vpow.pop %v2058
        %v2060 = vmul.f32 %v1964, 1.442695
        %v2061 = vpow.pop %v2060
        %v2062 = vmul.f32 %v1965, 1.442695
        %v2063 = vpow.pop %v2062
        %v2064 = vmul.f32 %v1966, 1.442695
        %v2065 = vpow.pop %v2064
        %v2066 = vmul.f32 %v1967, 1.442695
        %v2067 = vpow.pop %v2066
        %v2068 = vmul.f32 %v1968, 1.442695
        %v2069 = vpow.pop %v2068
        %v2070 = vmul.f32 %v1969, 1.442695
        %v2071 = vpow.pop %v2070
        %v2072 = vmul.f32 %v1970, 1.442695
        %v2073 = vpow.pop %v2072
        %v2074 = vmul.f32 %v1971, 1.442695
        %v2075 = vpow.pop %v2074
        %v2076 = vmul.f32 %v1972, 1.442695
        %v2077 = vpow.pop %v2076
        %v2078 = vmul.f32 %v1973, 1.442695
        %v2079 = vpow.pop %v2078
        %v2080 = vmul.f32 %v1974, 1.442695
        %v2081 = vpow.pop %v2080
        %v2082 = vmul.f32 %v1975, 1.442695
        %v2083 = vpow.pop %v2082
        %v2084 = vmul.f32 %v1976, 1.442695
        %v2085 = vpow.pop %v2084
        %v2086 = vmul.f32 %v1977, 1.442695
        %v2087 = vpow.pop %v2086
        %v2088 = vmul.f32 %v1978, 1.442695
        %v2089 = vpow.pop %v2088
        %v2090 = vmul.f32 %v1979, 1.442695
        %v2091 = vpow.pop %v2090
        %v2092 = vmul.f32 %v1980, 1.442695
        %v2093 = vpow.pop %v2092
        %v2094 = vmul.f32 %v1981, 1.442695
        %v2095 = vpow.pop %v2094
        %v2096 = vmul.f32 %v1982, 1.442695
        %v2097 = vpow.pop %v2096
        %v2098 = vmul.f32 %v1983, 1.442695
        %v2099 = vpow.pop %v2098
        %v2100 = vmul.f32 %v1984, 1.442695
        %v2101 = vpow.pop %v2100
        %v2102 = vmul.f32 %v1985, 1.442695
        %v2103 = vpow.pop %v2102
        %v2104 = vmul.f32 %v1986, 1.442695
        %v2105 = vpow.pop %v2104
        %v2106 = vmul.f32 %v1987, 1.442695
        %v2107 = vpow.pop %v2106
        %v2108 = vmul.f32 %v1988, 1.442695
        %v2109 = vpow.pop %v2108
        %v2110 = vmul.f32 %v1989, 1.442695
        %v2111 = vpow.pop %v2110
        %v2112 = vmul.f32 %v1990, 1.442695
        %v2113 = vpow.pop %v2112
        %v2114 = vmul.f32 %v1991, 1.442695
        %v2115 = vpow.pop %v2114
        %v2116 = vmul.f32 %v1992, 1.442695
        %v2117 = vpow.pop %v2116
        %v2118 = vmul.f32 %v1993, 1.442695
        %v2119 = vpow.pop %v2118
        %v2120 = vmul.f32 %v1994, 1.442695
        %v2121 = vpow.pop %v2120
        %v2122 = vmul.f32 %v1995, 1.442695
        %v2123 = vpow.pop %v2122
        %v2124 = vld [vmem:[#allocation4] sm:$0xff]
        %v2125 = vld [vmem:[#allocation4 + $0x8] sm:$0xff]
        %v2126 = vld [vmem:[#allocation4 + $0x10] sm:$0xff]
        %v2127 = vld [vmem:[#allocation4 + $0x18] sm:$0xff]
        %v2128 = vld [vmem:[#allocation4 + $0x20] sm:$0xff]
        %v2129 = vld [vmem:[#allocation4 + $0x28] sm:$0xff]
        %v2130 = vld [vmem:[#allocation4 + $0x30] sm:$0xff]
        %v2131 = vld [vmem:[#allocation4 + $0x38] sm:$0xff]
        %v2132 = vld [vmem:[#allocation4 + $0x40] sm:$0xff]
        %v2133 = vld [vmem:[#allocation4 + $0x48] sm:$0xff]
        %v2134 = vld [vmem:[#allocation4 + $0x50] sm:$0xff]
        %v2135 = vld [vmem:[#allocation4 + $0x58] sm:$0xff]
        %v2136 = vld [vmem:[#allocation4 + $0x60] sm:$0xff]
        %v2137 = vld [vmem:[#allocation4 + $0x68] sm:$0xff]
        %v2138 = vld [vmem:[#allocation4 + $0x70] sm:$0xff]
        %v2139 = vld [vmem:[#allocation4 + $0x78] sm:$0xff]
        %v2140 = vld [vmem:[#allocation4 + $0x80] sm:$0xff]
        %v2141 = vld [vmem:[#allocation4 + $0x88] sm:$0xff]
        %v2142 = vld [vmem:[#allocation4 + $0x90] sm:$0xff]
        %v2143 = vld [vmem:[#allocation4 + $0x98] sm:$0xff]
        %v2144 = vld [vmem:[#allocation4 + $0xa0] sm:$0xff]
        %v2145 = vld [vmem:[#allocation4 + $0xa8] sm:$0xff]
        %v2146 = vld [vmem:[#allocation4 + $0xb0] sm:$0xff]
        %v2147 = vld [vmem:[#allocation4 + $0xb8] sm:$0xff]
        %v2148 = vld [vmem:[#allocation4 + $0xc0] sm:$0xff]
        %v2149 = vld [vmem:[#allocation4 + $0xc8] sm:$0xff]
        %v2150 = vld [vmem:[#allocation4 + $0xd0] sm:$0xff]
        %v2151 = vld [vmem:[#allocation4 + $0xd8] sm:$0xff]
        %v2152 = vld [vmem:[#allocation4 + $0xe0] sm:$0xff]
        %v2153 = vld [vmem:[#allocation4 + $0xe8] sm:$0xff]
        %v2154 = vld [vmem:[#allocation4 + $0xf0] sm:$0xff]
        %v2155 = vld [vmem:[#allocation4 + $0xf8] sm:$0xff]
        %v2156 = vmul.f32 %v1709, %v2124
        %v2157 = vmul.f32 %v1711, %v2125
        %v2158 = vmul.f32 %v1713, %v2126
        %v2159 = vmul.f32 %v1715, %v2127
        %v2160 = vmul.f32 %v1717, %v2128
        %v2161 = vmul.f32 %v1719, %v2129
        %v2162 = vmul.f32 %v1721, %v2130
        %v2163 = vmul.f32 %v1723, %v2131
        %v2164 = vmul.f32 %v1725, %v2132
        %v2165 = vmul.f32 %v1727, %v2133
        %v2166 = vmul.f32 %v1729, %v2134
        %v2167 = vmul.f32 %v1731, %v2135
        %v2168 = vmul.f32 %v1733, %v2136
        %v2169 = vmul.f32 %v1735, %v2137
        %v2170 = vmul.f32 %v1737, %v2138
        %v2171 = vmul.f32 %v1739, %v2139
        %v2172 = vmul.f32 %v1741, %v2140
        %v2173 = vmul.f32 %v1743, %v2141
        %v2174 = vmul.f32 %v1745, %v2142
        %v2175 = vmul.f32 %v1747, %v2143
        %v2176 = vmul.f32 %v1749, %v2144
        %v2177 = vmul.f32 %v1751, %v2145
        %v2178 = vmul.f32 %v1753, %v2146
        %v2179 = vmul.f32 %v1755, %v2147
        %v2180 = vmul.f32 %v1757, %v2148
        %v2181 = vmul.f32 %v1759, %v2149
        %v2182 = vmul.f32 %v1761, %v2150
        %v2183 = vmul.f32 %v1763, %v2151
        %v2184 = vmul.f32 %v1765, %v2152
        %v2185 = vmul.f32 %v1767, %v2153
        %v2186 = vmul.f32 %v1769, %v2154
        %v2187 = vmul.f32 %v1771, %v2155
        %v2188 = vadd.f32 %v1997, %v1999
        %2189 = vadd.xlane.f32.xlu0 %v2188
        %v2190 = vpop.xlane.xlu0 %2189
        %v2191 = vadd.f32 %v2001, %v2003
        %2192 = vadd.xlane.f32.xlu0 %v2191
        %v2193 = vpop.xlane.xlu0 %2192
        %v2194 = vadd.f32 %v2005, %v2007
        %2195 = vadd.xlane.f32.xlu0 %v2194
        %v2196 = vpop.xlane.xlu0 %2195
        %v2197 = vadd.f32 %v2009, %v2011
        %2198 = vadd.xlane.f32.xlu0 %v2197
        %v2199 = vpop.xlane.xlu0 %2198
        %v2200 = vadd.f32 %v2013, %v2015
        %2201 = vadd.xlane.f32.xlu0 %v2200
        %v2202 = vpop.xlane.xlu0 %2201
        %v2203 = vadd.f32 %v2017, %v2019
        %2204 = vadd.xlane.f32.xlu0 %v2203
        %v2205 = vpop.xlane.xlu0 %2204
        %v2206 = vadd.f32 %v2021, %v2023
        %2207 = vadd.xlane.f32.xlu0 %v2206
        %v2208 = vpop.xlane.xlu0 %2207
        %v2209 = vadd.f32 %v2025, %v2027
        %2210 = vadd.xlane.f32.xlu0 %v2209
        %v2211 = vpop.xlane.xlu0 %2210
        %v2212 = vadd.f32 %v2029, %v2031
        %2213 = vadd.xlane.f32.xlu0 %v2212
        %v2214 = vpop.xlane.xlu0 %2213
        %v2215 = vadd.f32 %v2033, %v2035
        %2216 = vadd.xlane.f32.xlu0 %v2215
        %v2217 = vpop.xlane.xlu0 %2216
        %v2218 = vadd.f32 %v2037, %v2039
        %2219 = vadd.xlane.f32.xlu0 %v2218
        %v2220 = vpop.xlane.xlu0 %2219
        %v2221 = vadd.f32 %v2041, %v2043
        %2222 = vadd.xlane.f32.xlu0 %v2221
        %v2223 = vpop.xlane.xlu0 %2222
        %v2224 = vadd.f32 %v2045, %v2047
        %2225 = vadd.xlane.f32.xlu0 %v2224
        %v2226 = vpop.xlane.xlu0 %2225
        %v2227 = vadd.f32 %v2049, %v2051
        %2228 = vadd.xlane.f32.xlu0 %v2227
        %v2229 = vpop.xlane.xlu0 %2228
        %v2230 = vadd.f32 %v2053, %v2055
        %2231 = vadd.xlane.f32.xlu0 %v2230
        %v2232 = vpop.xlane.xlu0 %2231
        %v2233 = vadd.f32 %v2057, %v2059
        %2234 = vadd.xlane.f32.xlu0 %v2233
        %v2235 = vpop.xlane.xlu0 %2234
        %v2236 = vadd.f32 %v2061, %v2063
        %2237 = vadd.xlane.f32.xlu0 %v2236
        %v2238 = vpop.xlane.xlu0 %2237
        %v2239 = vadd.f32 %v2065, %v2067
        %2240 = vadd.xlane.f32.xlu0 %v2239
        %v2241 = vpop.xlane.xlu0 %2240
        %v2242 = vadd.f32 %v2069, %v2071
        %2243 = vadd.xlane.f32.xlu0 %v2242
        %v2244 = vpop.xlane.xlu0 %2243
        %v2245 = vadd.f32 %v2073, %v2075
        %2246 = vadd.xlane.f32.xlu0 %v2245
        %v2247 = vpop.xlane.xlu0 %2246
        %v2248 = vadd.f32 %v2077, %v2079
        %2249 = vadd.xlane.f32.xlu0 %v2248
        %v2250 = vpop.xlane.xlu0 %2249
        %v2251 = vadd.f32 %v2081, %v2083
        %2252 = vadd.xlane.f32.xlu0 %v2251
        %v2253 = vpop.xlane.xlu0 %2252
        %v2254 = vadd.f32 %v2085, %v2087
        %2255 = vadd.xlane.f32.xlu0 %v2254
        %v2256 = vpop.xlane.xlu0 %2255
        %v2257 = vadd.f32 %v2089, %v2091
        %2258 = vadd.xlane.f32.xlu0 %v2257
        %v2259 = vpop.xlane.xlu0 %2258
        %v2260 = vadd.f32 %v2093, %v2095
        %2261 = vadd.xlane.f32.xlu0 %v2260
        %v2262 = vpop.xlane.xlu0 %2261
        %v2263 = vadd.f32 %v2097, %v2099
        %2264 = vadd.xlane.f32.xlu0 %v2263
        %v2265 = vpop.xlane.xlu0 %2264
        %v2266 = vadd.f32 %v2101, %v2103
        %2267 = vadd.xlane.f32.xlu0 %v2266
        %v2268 = vpop.xlane.xlu0 %2267
        %v2269 = vadd.f32 %v2105, %v2107
        %2270 = vadd.xlane.f32.xlu0 %v2269
        %v2271 = vpop.xlane.xlu0 %2270
        %v2272 = vadd.f32 %v2109, %v2111
        %2273 = vadd.xlane.f32.xlu0 %v2272
        %v2274 = vpop.xlane.xlu0 %2273
        %v2275 = vadd.f32 %v2113, %v2115
        %2276 = vadd.xlane.f32.xlu0 %v2275
        %v2277 = vpop.xlane.xlu0 %2276
        %v2278 = vadd.f32 %v2117, %v2119
        %2279 = vadd.xlane.f32.xlu0 %v2278
        %v2280 = vpop.xlane.xlu0 %2279
        %v2281 = vadd.f32 %v2121, %v2123
        %2282 = vadd.xlane.f32.xlu0 %v2281
        %v2283 = vpop.xlane.xlu0 %2282
        %v2284 = vadd.f32 %v2156, %v2190
        %v2285 = vadd.f32 %v2157, %v2193
        %v2286 = vadd.f32 %v2158, %v2196
        %v2287 = vadd.f32 %v2159, %v2199
        %v2288 = vadd.f32 %v2160, %v2202
        %v2289 = vadd.f32 %v2161, %v2205
        %v2290 = vadd.f32 %v2162, %v2208
        %v2291 = vadd.f32 %v2163, %v2211
        %v2292 = vadd.f32 %v2164, %v2214
        %v2293 = vadd.f32 %v2165, %v2217
        %v2294 = vadd.f32 %v2166, %v2220
        %v2295 = vadd.f32 %v2167, %v2223
        %v2296 = vadd.f32 %v2168, %v2226
        %v2297 = vadd.f32 %v2169, %v2229
        %v2298 = vadd.f32 %v2170, %v2232
        %v2299 = vadd.f32 %v2171, %v2235
        %v2300 = vadd.f32 %v2172, %v2238
        %v2301 = vadd.f32 %v2173, %v2241
        %v2302 = vadd.f32 %v2174, %v2244
        %v2303 = vadd.f32 %v2175, %v2247
        %v2304 = vadd.f32 %v2176, %v2250
        %v2305 = vadd.f32 %v2177, %v2253
        %v2306 = vadd.f32 %v2178, %v2256
        %v2307 = vadd.f32 %v2179, %v2259
        %v2308 = vadd.f32 %v2180, %v2262
        %v2309 = vadd.f32 %v2181, %v2265
        %v2310 = vadd.f32 %v2182, %v2268
        %v2311 = vadd.f32 %v2183, %v2271
        %v2312 = vadd.f32 %v2184, %v2274
        %v2313 = vadd.f32 %v2185, %v2277
        %v2314 = vadd.f32 %v2186, %v2280
        %v2315 = vadd.f32 %v2187, %v2283
        %vm2316 = vcmask 7168
        %2317 = vst.msk [vmem:[#allocation4] sm:$0xff] %vm2316, %v2284
        %2318 = vst.msk [vmem:[#allocation4 + $0x8] sm:$0xff] %vm2316, %v2285
        %2319 = vst.msk [vmem:[#allocation4 + $0x10] sm:$0xff] %vm2316, %v2286
        %2320 = vst.msk [vmem:[#allocation4 + $0x18] sm:$0xff] %vm2316, %v2287
        %2321 = vst.msk [vmem:[#allocation4 + $0x20] sm:$0xff] %vm2316, %v2288
        %2322 = vst.msk [vmem:[#allocation4 + $0x28] sm:$0xff] %vm2316, %v2289
        %2323 = vst.msk [vmem:[#allocation4 + $0x30] sm:$0xff] %vm2316, %v2290
        %2324 = vst.msk [vmem:[#allocation4 + $0x38] sm:$0xff] %vm2316, %v2291
        %2325 = vst.msk [vmem:[#allocation4 + $0x40] sm:$0xff] %vm2316, %v2292
        %2326 = vst.msk [vmem:[#allocation4 + $0x48] sm:$0xff] %vm2316, %v2293
        %2327 = vst.msk [vmem:[#allocation4 + $0x50] sm:$0xff] %vm2316, %v2294
        %2328 = vst.msk [vmem:[#allocation4 + $0x58] sm:$0xff] %vm2316, %v2295
        %2329 = vst.msk [vmem:[#allocation4 + $0x60] sm:$0xff] %vm2316, %v2296
        %2330 = vst.msk [vmem:[#allocation4 + $0x68] sm:$0xff] %vm2316, %v2297
        %2331 = vst.msk [vmem:[#allocation4 + $0x70] sm:$0xff] %vm2316, %v2298
        %2332 = vst.msk [vmem:[#allocation4 + $0x78] sm:$0xff] %vm2316, %v2299
        %2333 = vst.msk [vmem:[#allocation4 + $0x80] sm:$0xff] %vm2316, %v2300
        %2334 = vst.msk [vmem:[#allocation4 + $0x88] sm:$0xff] %vm2316, %v2301
        %2335 = vst.msk [vmem:[#allocation4 + $0x90] sm:$0xff] %vm2316, %v2302
        %2336 = vst.msk [vmem:[#allocation4 + $0x98] sm:$0xff] %vm2316, %v2303
        %2337 = vst.msk [vmem:[#allocation4 + $0xa0] sm:$0xff] %vm2316, %v2304
        %2338 = vst.msk [vmem:[#allocation4 + $0xa8] sm:$0xff] %vm2316, %v2305
        %2339 = vst.msk [vmem:[#allocation4 + $0xb0] sm:$0xff] %vm2316, %v2306
        %2340 = vst.msk [vmem:[#allocation4 + $0xb8] sm:$0xff] %vm2316, %v2307
        %2341 = vst.msk [vmem:[#allocation4 + $0xc0] sm:$0xff] %vm2316, %v2308
        %2342 = vst.msk [vmem:[#allocation4 + $0xc8] sm:$0xff] %vm2316, %v2309
        %2343 = vst.msk [vmem:[#allocation4 + $0xd0] sm:$0xff] %vm2316, %v2310
        %2344 = vst.msk [vmem:[#allocation4 + $0xd8] sm:$0xff] %vm2316, %v2311
        %2345 = vst.msk [vmem:[#allocation4 + $0xe0] sm:$0xff] %vm2316, %v2312
        %2346 = vst.msk [vmem:[#allocation4 + $0xe8] sm:$0xff] %vm2316, %v2313
        %2347 = vst.msk [vmem:[#allocation4 + $0xf0] sm:$0xff] %vm2316, %v2314
        %2348 = vst.msk [vmem:[#allocation4 + $0xf8] sm:$0xff] %vm2316, %v2315
        %v2349 = vpack.c.bf16 %v2001, %v1997
        %v2350 = vpack.c.bf16 %v2003, %v1999
        %v2351 = vpack.c.bf16 %v2009, %v2005
        %v2352 = vpack.c.bf16 %v2011, %v2007
        %v2353 = vpack.c.bf16 %v2017, %v2013
        %v2354 = vpack.c.bf16 %v2019, %v2015
        %v2355 = vpack.c.bf16 %v2025, %v2021
        %v2356 = vpack.c.bf16 %v2027, %v2023
        %v2357 = vpack.c.bf16 %v2033, %v2029
        %v2358 = vpack.c.bf16 %v2035, %v2031
        %v2359 = vpack.c.bf16 %v2041, %v2037
        %v2360 = vpack.c.bf16 %v2043, %v2039
        %v2361 = vpack.c.bf16 %v2049, %v2045
        %v2362 = vpack.c.bf16 %v2051, %v2047
        %v2363 = vpack.c.bf16 %v2057, %v2053
        %v2364 = vpack.c.bf16 %v2059, %v2055
        %v2365 = vpack.c.bf16 %v2065, %v2061
        %v2366 = vpack.c.bf16 %v2067, %v2063
        %v2367 = vpack.c.bf16 %v2073, %v2069
        %v2368 = vpack.c.bf16 %v2075, %v2071
        %v2369 = vpack.c.bf16 %v2081, %v2077
        %v2370 = vpack.c.bf16 %v2083, %v2079
        %v2371 = vpack.c.bf16 %v2089, %v2085
        %v2372 = vpack.c.bf16 %v2091, %v2087
        %v2373 = vpack.c.bf16 %v2097, %v2093
        %v2374 = vpack.c.bf16 %v2099, %v2095
        %v2375 = vpack.c.bf16 %v2105, %v2101
        %v2376 = vpack.c.bf16 %v2107, %v2103
        %v2377 = vpack.c.bf16 %v2113, %v2109
        %v2378 = vpack.c.bf16 %v2115, %v2111
        %v2379 = vpack.c.bf16 %v2121, %v2117
        %v2380 = vpack.c.bf16 %v2123, %v2119
        %v2413 = vunpack.c.l.b16 %v1098
        %v2414 = vunpack.c.l.b16 %v1099
        %v2415 = vunpack.c.l.b16 %v1100
        %v2416 = vunpack.c.l.b16 %v1101
        %v2417 = vunpack.c.l.b16 %v1102
        %v2418 = vunpack.c.l.b16 %v1103
        %v2419 = vunpack.c.l.b16 %v1104
        %v2420 = vunpack.c.l.b16 %v1105
        %v2421 = vunpack.c.l.b16 %v1106
        %v2422 = vunpack.c.l.b16 %v1107
        %v2423 = vunpack.c.l.b16 %v1108
        %v2424 = vunpack.c.l.b16 %v1109
        %v2425 = vunpack.c.l.b16 %v1110
        %v2426 = vunpack.c.l.b16 %v1111
        %v2427 = vunpack.c.l.b16 %v1112
        %v2428 = vunpack.c.l.b16 %v1113
        %v2429 = vunpack.c.l.b16 %v1114
        %v2430 = vunpack.c.l.b16 %v1115
        %v2431 = vunpack.c.l.b16 %v1116
        %v2432 = vunpack.c.l.b16 %v1117
        %v2433 = vunpack.c.l.b16 %v1118
        %v2434 = vunpack.c.l.b16 %v1119
        %v2435 = vunpack.c.l.b16 %v1120
        %v2436 = vunpack.c.l.b16 %v1121
        %v2437 = vunpack.c.l.b16 %v1122
        %v2438 = vunpack.c.l.b16 %v1123
        %v2439 = vunpack.c.l.b16 %v1124
        %v2440 = vunpack.c.l.b16 %v1125
        %v2441 = vunpack.c.l.b16 %v1126
        %v2442 = vunpack.c.l.b16 %v1127
        %v2443 = vunpack.c.l.b16 %v1128
        %v2444 = vunpack.c.l.b16 %v1129
        %v2445 = vpack.c.b16 %v2414, %v2413
        %v2446 = vpack.c.b16 %v2416, %v2415
        %v2447 = vpack.c.b16 %v2418, %v2417
        %v2448 = vpack.c.b16 %v2420, %v2419
        %v2449 = vpack.c.b16 %v2422, %v2421
        %v2450 = vpack.c.b16 %v2424, %v2423
        %v2451 = vpack.c.b16 %v2426, %v2425
        %v2452 = vpack.c.b16 %v2428, %v2427
        %v2453 = vpack.c.b16 %v2430, %v2429
        %v2454 = vpack.c.b16 %v2432, %v2431
        %v2455 = vpack.c.b16 %v2434, %v2433
        %v2456 = vpack.c.b16 %v2436, %v2435
        %v2457 = vpack.c.b16 %v2438, %v2437
        %v2458 = vpack.c.b16 %v2440, %v2439
        %v2459 = vpack.c.b16 %v2442, %v2441
        %v2460 = vpack.c.b16 %v2444, %v2443
        %2477 = vmatprep.subr.bf16.mxu0 0
        %2478 = vmatpush1.bf16.msra.mxu0 %v2445
        %2479 = vmatprep.subr.bf16.mxu0 0
        %2480 = vmatpush1.bf16.msra.mxu0 %v2446
        %2481 = vmatprep.subr.bf16.mxu0 0
        %2482 = vmatpush1.bf16.msra.mxu0 %v2447
        %2483 = vmatprep.subr.bf16.mxu0 0
        %2484 = vmatpush1.bf16.msra.mxu0 %v2448
        %2485 = vmatprep.subr.bf16.mxu0 0
        %2486 = vmatpush1.bf16.msra.mxu0 %v2449
        %2487 = vmatprep.subr.bf16.mxu0 0
        %2488 = vmatpush1.bf16.msra.mxu0 %v2450
        %2489 = vmatprep.subr.bf16.mxu0 0
        %2490 = vmatpush1.bf16.msra.mxu0 %v2451
        %2491 = vmatprep.subr.bf16.mxu0 0
        %2492 = vmatpush1.bf16.msra.mxu0 %v2452
        %2493 = vmatprep.subr.bf16.mxu0 0
        %2494 = vmatpush1.bf16.msra.mxu0 %v2453
        %2495 = vmatprep.subr.bf16.mxu0 0
        %2496 = vmatpush1.bf16.msra.mxu0 %v2454
        %2497 = vmatprep.subr.bf16.mxu0 0
        %2498 = vmatpush1.bf16.msra.mxu0 %v2455
        %2499 = vmatprep.subr.bf16.mxu0 0
        %2500 = vmatpush1.bf16.msra.mxu0 %v2456
        %2501 = vmatprep.subr.bf16.mxu0 0
        %2502 = vmatpush1.bf16.msra.mxu0 %v2457
        %2503 = vmatprep.subr.bf16.mxu0 0
        %2504 = vmatpush1.bf16.msra.mxu0 %v2458
        %2505 = vmatprep.subr.bf16.mxu0 0
        %2506 = vmatpush1.bf16.msra.mxu0 %v2459
        %2507 = vmatprep.subr.bf16.mxu0 0
        %2508 = vmatpush1.bf16.msra.mxu0 %v2460
        %2509 = vmatprep.mubr.bf16.mxu0 %v2350
        %2510 = vmatmul.mubr.bf16.gmra.mrb[0].mxu0 %v2349
        %v2511 = vpop.f32.mrb[0].mxu0
        %v2512 = vadd.f32 0.0, %v2511
        %v2513 = vpop.f32.mrb[0].mxu0
        %v2514 = vpop.f32.mrb[0].mxu0
        %v2515 = vadd.f32 0.0, %v2514
        %v2516 = vpop.f32.mrb[0].mxu0
        %2517 = vmatprep.mubr.bf16.mxu0 %v2352
        %2518 = vmatmul.mubr.bf16.gmra.mrb[0].mxu0 %v2351
        %v2519 = vpop.f32.mrb[0].mxu0
        %v2520 = vadd.f32 0.0, %v2519
        %v2521 = vpop.f32.mrb[0].mxu0
        %v2522 = vpop.f32.mrb[0].mxu0
        %v2523 = vadd.f32 0.0, %v2522
        %v2524 = vpop.f32.mrb[0].mxu0
        %2525 = vmatprep.mubr.bf16.mxu0 %v2354
        %2526 = vmatmul.mubr.bf16.gmra.mrb[0].mxu0 %v2353
        %v2527 = vpop.f32.mrb[0].mxu0
        %v2528 = vadd.f32 0.0, %v2527
        %v2529 = vpop.f32.mrb[0].mxu0
        %v2530 = vpop.f32.mrb[0].mxu0
        %v2531 = vadd.f32 0.0, %v2530
        %v2532 = vpop.f32.mrb[0].mxu0
        %2533 = vmatprep.mubr.bf16.mxu0 %v2356
        %2534 = vmatmul.mubr.bf16.gmra.mrb[0].mxu0 %v2355
        %v2535 = vpop.f32.mrb[0].mxu0
        %v2536 = vadd.f32 0.0, %v2535
        %v2537 = vpop.f32.mrb[0].mxu0
        %v2538 = vpop.f32.mrb[0].mxu0
        %v2539 = vadd.f32 0.0, %v2538
        %v2540 = vpop.f32.mrb[0].mxu0
        %2541 = vmatprep.mubr.bf16.mxu0 %v2358
        %2542 = vmatmul.mubr.bf16.gmra.mrb[0].mxu0 %v2357
        %v2543 = vpop.f32.mrb[0].mxu0
        %v2544 = vadd.f32 0.0, %v2543
        %v2545 = vpop.f32.mrb[0].mxu0
        %v2546 = vpop.f32.mrb[0].mxu0
        %v2547 = vadd.f32 0.0, %v2546
        %v2548 = vpop.f32.mrb[0].mxu0
        %2549 = vmatprep.mubr.bf16.mxu0 %v2360
        %2550 = vmatmul.mubr.bf16.gmra.mrb[0].mxu0 %v2359
        %v2551 = vpop.f32.mrb[0].mxu0
        %v2552 = vadd.f32 0.0, %v2551
        %v2553 = vpop.f32.mrb[0].mxu0
        %v2554 = vpop.f32.mrb[0].mxu0
        %v2555 = vadd.f32 0.0, %v2554
        %v2556 = vpop.f32.mrb[0].mxu0
        %2557 = vmatprep.mubr.bf16.mxu0 %v2362
        %2558 = vmatmul.mubr.bf16.gmra.mrb[0].mxu0 %v2361
        %v2559 = vpop.f32.mrb[0].mxu0
        %v2560 = vadd.f32 0.0, %v2559
        %v2561 = vpop.f32.mrb[0].mxu0
        %v2562 = vpop.f32.mrb[0].mxu0
        %v2563 = vadd.f32 0.0, %v2562
        %v2564 = vpop.f32.mrb[0].mxu0
        %2565 = vmatprep.mubr.bf16.mxu0 %v2364
        %2566 = vmatmul.mubr.bf16.gmra.mrb[0].mxu0 %v2363
        %v2567 = vpop.f32.mrb[0].mxu0
        %v2568 = vadd.f32 0.0, %v2567
        %v2569 = vpop.f32.mrb[0].mxu0
        %v2570 = vpop.f32.mrb[0].mxu0
        %v2571 = vadd.f32 0.0, %v2570
        %v2572 = vpop.f32.mrb[0].mxu0
        %2573 = vmatprep.mubr.bf16.mxu0 %v2366
        %2574 = vmatmul.mubr.bf16.gmra.mrb[0].mxu0 %v2365
        %v2575 = vpop.f32.mrb[0].mxu0
        %v2576 = vadd.f32 0.0, %v2575
        %v2577 = vpop.f32.mrb[0].mxu0
        %v2578 = vpop.f32.mrb[0].mxu0
        %v2579 = vadd.f32 0.0, %v2578
        %v2580 = vpop.f32.mrb[0].mxu0
        %2581 = vmatprep.mubr.bf16.mxu0 %v2368
        %2582 = vmatmul.mubr.bf16.gmra.mrb[0].mxu0 %v2367
        %v2583 = vpop.f32.mrb[0].mxu0
        %v2584 = vadd.f32 0.0, %v2583
        %v2585 = vpop.f32.mrb[0].mxu0
        %v2586 = vpop.f32.mrb[0].mxu0
        %v2587 = vadd.f32 0.0, %v2586
        %v2588 = vpop.f32.mrb[0].mxu0
        %2589 = vmatprep.mubr.bf16.mxu0 %v2370
        %2590 = vmatmul.mubr.bf16.gmra.mrb[0].mxu0 %v2369
        %v2591 = vpop.f32.mrb[0].mxu0
        %v2592 = vadd.f32 0.0, %v2591
        %v2593 = vpop.f32.mrb[0].mxu0
        %v2594 = vpop.f32.mrb[0].mxu0
        %v2595 = vadd.f32 0.0, %v2594
        %v2596 = vpop.f32.mrb[0].mxu0
        %2597 = vmatprep.mubr.bf16.mxu0 %v2372
        %2598 = vmatmul.mubr.bf16.gmra.mrb[0].mxu0 %v2371
        %v2599 = vpop.f32.mrb[0].mxu0
        %v2600 = vadd.f32 0.0, %v2599
        %v2601 = vpop.f32.mrb[0].mxu0
        %v2602 = vpop.f32.mrb[0].mxu0
        %v2603 = vadd.f32 0.0, %v2602
        %v2604 = vpop.f32.mrb[0].mxu0
        %2605 = vmatprep.mubr.bf16.mxu0 %v2374
        %2606 = vmatmul.mubr.bf16.gmra.mrb[0].mxu0 %v2373
        %v2607 = vpop.f32.mrb[0].mxu0
        %v2608 = vadd.f32 0.0, %v2607
        %v2609 = vpop.f32.mrb[0].mxu0
        %v2610 = vpop.f32.mrb[0].mxu0
        %v2611 = vadd.f32 0.0, %v2610
        %v2612 = vpop.f32.mrb[0].mxu0
        %2613 = vmatprep.mubr.bf16.mxu0 %v2376
        %2614 = vmatmul.mubr.bf16.gmra.mrb[0].mxu0 %v2375
        %v2615 = vpop.f32.mrb[0].mxu0
        %v2616 = vadd.f32 0.0, %v2615
        %v2617 = vpop.f32.mrb[0].mxu0
        %v2618 = vpop.f32.mrb[0].mxu0
        %v2619 = vadd.f32 0.0, %v2618
        %v2620 = vpop.f32.mrb[0].mxu0
        %2621 = vmatprep.mubr.bf16.mxu0 %v2378
        %2622 = vmatmul.mubr.bf16.gmra.mrb[0].mxu0 %v2377
        %v2623 = vpop.f32.mrb[0].mxu0
        %v2624 = vadd.f32 0.0, %v2623
        %v2625 = vpop.f32.mrb[0].mxu0
        %v2626 = vpop.f32.mrb[0].mxu0
        %v2627 = vadd.f32 0.0, %v2626
        %v2628 = vpop.f32.mrb[0].mxu0
        %2629 = vmatprep.mubr.bf16.mxu0 %v2380
        %2630 = vmatmul.mubr.bf16.gmra.mrb[0].mxu0 %v2379
        %v2631 = vpop.f32.mrb[0].mxu0
        %v2632 = vadd.f32 0.0, %v2631
        %v2633 = vpop.f32.mrb[0].mxu0
        %v2634 = vpop.f32.mrb[0].mxu0
        %v2635 = vadd.f32 0.0, %v2634
        %v2636 = vpop.f32.mrb[0].mxu0
        %2637 = vdwg.mxu0
        %v2638 = vld [vmem:[#allocation5] sm:$0xff]
        %v2639 = vld [vmem:[#allocation5 + $0x8] sm:$0xff]
        %v2640 = vld [vmem:[#allocation5 + $0x10] sm:$0xff]
        %v2641 = vld [vmem:[#allocation5 + $0x18] sm:$0xff]
        %v2642 = vld [vmem:[#allocation5 + $0x20] sm:$0xff]
        %v2643 = vld [vmem:[#allocation5 + $0x28] sm:$0xff]
        %v2644 = vld [vmem:[#allocation5 + $0x30] sm:$0xff]
        %v2645 = vld [vmem:[#allocation5 + $0x38] sm:$0xff]
        %v2646 = vld [vmem:[#allocation5 + $0x40] sm:$0xff]
        %v2647 = vld [vmem:[#allocation5 + $0x48] sm:$0xff]
        %v2648 = vld [vmem:[#allocation5 + $0x50] sm:$0xff]
        %v2649 = vld [vmem:[#allocation5 + $0x58] sm:$0xff]
        %v2650 = vld [vmem:[#allocation5 + $0x60] sm:$0xff]
        %v2651 = vld [vmem:[#allocation5 + $0x68] sm:$0xff]
        %v2652 = vld [vmem:[#allocation5 + $0x70] sm:$0xff]
        %v2653 = vld [vmem:[#allocation5 + $0x78] sm:$0xff]
        %v2654 = vld [vmem:[#allocation5 + $0x80] sm:$0xff]
        %v2655 = vld [vmem:[#allocation5 + $0x88] sm:$0xff]
        %v2656 = vld [vmem:[#allocation5 + $0x90] sm:$0xff]
        %v2657 = vld [vmem:[#allocation5 + $0x98] sm:$0xff]
        %v2658 = vld [vmem:[#allocation5 + $0xa0] sm:$0xff]
        %v2659 = vld [vmem:[#allocation5 + $0xa8] sm:$0xff]
        %v2660 = vld [vmem:[#allocation5 + $0xb0] sm:$0xff]
        %v2661 = vld [vmem:[#allocation5 + $0xb8] sm:$0xff]
        %v2662 = vld [vmem:[#allocation5 + $0xc0] sm:$0xff]
        %v2663 = vld [vmem:[#allocation5 + $0xc8] sm:$0xff]
        %v2664 = vld [vmem:[#allocation5 + $0xd0] sm:$0xff]
        %v2665 = vld [vmem:[#allocation5 + $0xd8] sm:$0xff]
        %v2666 = vld [vmem:[#allocation5 + $0xe0] sm:$0xff]
        %v2667 = vld [vmem:[#allocation5 + $0xe8] sm:$0xff]
        %v2668 = vld [vmem:[#allocation5 + $0xf0] sm:$0xff]
        %v2669 = vld [vmem:[#allocation5 + $0xf8] sm:$0xff]
        %2671 = vset.pattern.permute.xlu0 0
        %2672 = vperm.xlu0 %2671, %v1709
        %v2673 = vpop.permute.xlu0 %2672
        %2676 = vset.pattern.permute.xlu0 0
        %2677 = vperm.xlu0 %2676, %v1711
        %v2678 = vpop.permute.xlu0 %2677
        %2681 = vset.pattern.permute.xlu0 0
        %2682 = vperm.xlu0 %2681, %v1713
        %v2683 = vpop.permute.xlu0 %2682
        %2686 = vset.pattern.permute.xlu0 0
        %2687 = vperm.xlu0 %2686, %v1715
        %v2688 = vpop.permute.xlu0 %2687
        %2691 = vset.pattern.permute.xlu0 0
        %2692 = vperm.xlu0 %2691, %v1717
        %v2693 = vpop.permute.xlu0 %2692
        %2696 = vset.pattern.permute.xlu0 0
        %2697 = vperm.xlu0 %2696, %v1719
        %v2698 = vpop.permute.xlu0 %2697
        %2701 = vset.pattern.permute.xlu0 0
        %2702 = vperm.xlu0 %2701, %v1721
        %v2703 = vpop.permute.xlu0 %2702
        %2706 = vset.pattern.permute.xlu0 0
        %2707 = vperm.xlu0 %2706, %v1723
        %v2708 = vpop.permute.xlu0 %2707
        %2711 = vset.pattern.permute.xlu0 0
        %2712 = vperm.xlu0 %2711, %v1725
        %v2713 = vpop.permute.xlu0 %2712
        %2716 = vset.pattern.permute.xlu0 0
        %2717 = vperm.xlu0 %2716, %v1727
        %v2718 = vpop.permute.xlu0 %2717
        %2721 = vset.pattern.permute.xlu0 0
        %2722 = vperm.xlu0 %2721, %v1729
        %v2723 = vpop.permute.xlu0 %2722
        %2726 = vset.pattern.permute.xlu0 0
        %2727 = vperm.xlu0 %2726, %v1731
        %v2728 = vpop.permute.xlu0 %2727
        %2731 = vset.pattern.permute.xlu0 0
        %2732 = vperm.xlu0 %2731, %v1733
        %v2733 = vpop.permute.xlu0 %2732
        %2736 = vset.pattern.permute.xlu0 0
        %2737 = vperm.xlu0 %2736, %v1735
        %v2738 = vpop.permute.xlu0 %2737
        %2741 = vset.pattern.permute.xlu0 0
        %2742 = vperm.xlu0 %2741, %v1737
        %v2743 = vpop.permute.xlu0 %2742
        %2746 = vset.pattern.permute.xlu0 0
        %2747 = vperm.xlu0 %2746, %v1739
        %v2748 = vpop.permute.xlu0 %2747
        %2751 = vset.pattern.permute.xlu0 0
        %2752 = vperm.xlu0 %2751, %v1741
        %v2753 = vpop.permute.xlu0 %2752
        %2756 = vset.pattern.permute.xlu0 0
        %2757 = vperm.xlu0 %2756, %v1743
        %v2758 = vpop.permute.xlu0 %2757
        %2761 = vset.pattern.permute.xlu0 0
        %2762 = vperm.xlu0 %2761, %v1745
        %v2763 = vpop.permute.xlu0 %2762
        %2766 = vset.pattern.permute.xlu0 0
        %2767 = vperm.xlu0 %2766, %v1747
        %v2768 = vpop.permute.xlu0 %2767
        %2771 = vset.pattern.permute.xlu0 0
        %2772 = vperm.xlu0 %2771, %v1749
        %v2773 = vpop.permute.xlu0 %2772
        %2776 = vset.pattern.permute.xlu0 0
        %2777 = vperm.xlu0 %2776, %v1751
        %v2778 = vpop.permute.xlu0 %2777
        %2781 = vset.pattern.permute.xlu0 0
        %2782 = vperm.xlu0 %2781, %v1753
        %v2783 = vpop.permute.xlu0 %2782
        %2786 = vset.pattern.permute.xlu0 0
        %2787 = vperm.xlu0 %2786, %v1755
        %v2788 = vpop.permute.xlu0 %2787
        %2791 = vset.pattern.permute.xlu0 0
        %2792 = vperm.xlu0 %2791, %v1757
        %v2793 = vpop.permute.xlu0 %2792
        %2796 = vset.pattern.permute.xlu0 0
        %2797 = vperm.xlu0 %2796, %v1759
        %v2798 = vpop.permute.xlu0 %2797
        %2801 = vset.pattern.permute.xlu0 0
        %2802 = vperm.xlu0 %2801, %v1761
        %v2803 = vpop.permute.xlu0 %2802
        %2806 = vset.pattern.permute.xlu0 0
        %2807 = vperm.xlu0 %2806, %v1763
        %v2808 = vpop.permute.xlu0 %2807
        %2811 = vset.pattern.permute.xlu0 0
        %2812 = vperm.xlu0 %2811, %v1765
        %v2813 = vpop.permute.xlu0 %2812
        %2816 = vset.pattern.permute.xlu0 0
        %2817 = vperm.xlu0 %2816, %v1767
        %v2818 = vpop.permute.xlu0 %2817
        %2821 = vset.pattern.permute.xlu0 0
        %2822 = vperm.xlu0 %2821, %v1769
        %v2823 = vpop.permute.xlu0 %2822
        %2826 = vset.pattern.permute.xlu0 0
        %2827 = vperm.xlu0 %2826, %v1771
        %v2828 = vpop.permute.xlu0 %2827
        %v2830 = vmul.f32 %v2673, %v2638
        %v2831 = vmul.f32 %v2678, %v2639
        %v2832 = vmul.f32 %v2683, %v2640
        %v2833 = vmul.f32 %v2688, %v2641
        %v2834 = vmul.f32 %v2693, %v2642
        %v2835 = vmul.f32 %v2698, %v2643
        %v2836 = vmul.f32 %v2703, %v2644
        %v2837 = vmul.f32 %v2708, %v2645
        %v2838 = vmul.f32 %v2713, %v2646
        %v2839 = vmul.f32 %v2718, %v2647
        %v2840 = vmul.f32 %v2723, %v2648
        %v2841 = vmul.f32 %v2728, %v2649
        %v2842 = vmul.f32 %v2733, %v2650
        %v2843 = vmul.f32 %v2738, %v2651
        %v2844 = vmul.f32 %v2743, %v2652
        %v2845 = vmul.f32 %v2748, %v2653
        %v2846 = vmul.f32 %v2753, %v2654
        %v2847 = vmul.f32 %v2758, %v2655
        %v2848 = vmul.f32 %v2763, %v2656
        %v2849 = vmul.f32 %v2768, %v2657
        %v2850 = vmul.f32 %v2773, %v2658
        %v2851 = vmul.f32 %v2778, %v2659
        %v2852 = vmul.f32 %v2783, %v2660
        %v2853 = vmul.f32 %v2788, %v2661
        %v2854 = vmul.f32 %v2793, %v2662
        %v2855 = vmul.f32 %v2798, %v2663
        %v2856 = vmul.f32 %v2803, %v2664
        %v2857 = vmul.f32 %v2808, %v2665
        %v2858 = vmul.f32 %v2813, %v2666
        %v2859 = vmul.f32 %v2818, %v2667
        %v2860 = vmul.f32 %v2823, %v2668
        %v2861 = vmul.f32 %v2828, %v2669
        %v2862 = vadd.f32 %v2830, %v2512
        %v2863 = vadd.f32 %v2831, %v2515
        %v2864 = vadd.f32 %v2832, %v2520
        %v2865 = vadd.f32 %v2833, %v2523
        %v2866 = vadd.f32 %v2834, %v2528
        %v2867 = vadd.f32 %v2835, %v2531
        %v2868 = vadd.f32 %v2836, %v2536
        %v2869 = vadd.f32 %v2837, %v2539
        %v2870 = vadd.f32 %v2838, %v2544
        %v2871 = vadd.f32 %v2839, %v2547
        %v2872 = vadd.f32 %v2840, %v2552
        %v2873 = vadd.f32 %v2841, %v2555
        %v2874 = vadd.f32 %v2842, %v2560
        %v2875 = vadd.f32 %v2843, %v2563
        %v2876 = vadd.f32 %v2844, %v2568
        %v2877 = vadd.f32 %v2845, %v2571
        %v2878 = vadd.f32 %v2846, %v2576
        %v2879 = vadd.f32 %v2847, %v2579
        %v2880 = vadd.f32 %v2848, %v2584
        %v2881 = vadd.f32 %v2849, %v2587
        %v2882 = vadd.f32 %v2850, %v2592
        %v2883 = vadd.f32 %v2851, %v2595
        %v2884 = vadd.f32 %v2852, %v2600
        %v2885 = vadd.f32 %v2853, %v2603
        %v2886 = vadd.f32 %v2854, %v2608
        %v2887 = vadd.f32 %v2855, %v2611
        %v2888 = vadd.f32 %v2856, %v2616
        %v2889 = vadd.f32 %v2857, %v2619
        %v2890 = vadd.f32 %v2858, %v2624
        %v2891 = vadd.f32 %v2859, %v2627
        %v2892 = vadd.f32 %v2860, %v2632
        %v2893 = vadd.f32 %v2861, %v2635
        %2894 = vst.msk [vmem:[#allocation5] sm:$0xff] %vm1226, %v2862
        %2895 = vst.msk [vmem:[#allocation5 + $0x8] sm:$0xff] %vm1226, %v2863
        %2896 = vst.msk [vmem:[#allocation5 + $0x10] sm:$0xff] %vm1226, %v2864
        %2897 = vst.msk [vmem:[#allocation5 + $0x18] sm:$0xff] %vm1226, %v2865
        %2898 = vst.msk [vmem:[#allocation5 + $0x20] sm:$0xff] %vm1226, %v2866
        %2899 = vst.msk [vmem:[#allocation5 + $0x28] sm:$0xff] %vm1226, %v2867
        %2900 = vst.msk [vmem:[#allocation5 + $0x30] sm:$0xff] %vm1226, %v2868
        %2901 = vst.msk [vmem:[#allocation5 + $0x38] sm:$0xff] %vm1226, %v2869
        %2902 = vst.msk [vmem:[#allocation5 + $0x40] sm:$0xff] %vm1226, %v2870
        %2903 = vst.msk [vmem:[#allocation5 + $0x48] sm:$0xff] %vm1226, %v2871
        %2904 = vst.msk [vmem:[#allocation5 + $0x50] sm:$0xff] %vm1226, %v2872
        %2905 = vst.msk [vmem:[#allocation5 + $0x58] sm:$0xff] %vm1226, %v2873
        %2906 = vst.msk [vmem:[#allocation5 + $0x60] sm:$0xff] %vm1226, %v2874
        %2907 = vst.msk [vmem:[#allocation5 + $0x68] sm:$0xff] %vm1226, %v2875
        %2908 = vst.msk [vmem:[#allocation5 + $0x70] sm:$0xff] %vm1226, %v2876
        %2909 = vst.msk [vmem:[#allocation5 + $0x78] sm:$0xff] %vm1226, %v2877
        %2910 = vst.msk [vmem:[#allocation5 + $0x80] sm:$0xff] %vm1226, %v2878
        %2911 = vst.msk [vmem:[#allocation5 + $0x88] sm:$0xff] %vm1226, %v2879
        %2912 = vst.msk [vmem:[#allocation5 + $0x90] sm:$0xff] %vm1226, %v2880
        %2913 = vst.msk [vmem:[#allocation5 + $0x98] sm:$0xff] %vm1226, %v2881
        %2914 = vst.msk [vmem:[#allocation5 + $0xa0] sm:$0xff] %vm1226, %v2882
        %2915 = vst.msk [vmem:[#allocation5 + $0xa8] sm:$0xff] %vm1226, %v2883
        %2916 = vst.msk [vmem:[#allocation5 + $0xb0] sm:$0xff] %vm1226, %v2884
        %2917 = vst.msk [vmem:[#allocation5 + $0xb8] sm:$0xff] %vm1226, %v2885
        %2918 = vst.msk [vmem:[#allocation5 + $0xc0] sm:$0xff] %vm1226, %v2886
        %2919 = vst.msk [vmem:[#allocation5 + $0xc8] sm:$0xff] %vm1226, %v2887
        %2920 = vst.msk [vmem:[#allocation5 + $0xd0] sm:$0xff] %vm1226, %v2888
        %2921 = vst.msk [vmem:[#allocation5 + $0xd8] sm:$0xff] %vm1226, %v2889
        %2922 = vst.msk [vmem:[#allocation5 + $0xe0] sm:$0xff] %vm1226, %v2890
        %2923 = vst.msk [vmem:[#allocation5 + $0xe8] sm:$0xff] %vm1226, %v2891
        %2924 = vst.msk [vmem:[#allocation5 + $0xf0] sm:$0xff] %vm1226, %v2892
        %2925 = vst.msk [vmem:[#allocation5 + $0xf8] sm:$0xff] %vm1226, %v2893
        %2926 = vst.msk [vmem:[#allocation3] sm:$0xff] %vm2316, %v1644
        %2927 = vst.msk [vmem:[#allocation3 + $0x8] sm:$0xff] %vm2316, %v1645
        %2928 = vst.msk [vmem:[#allocation3 + $0x10] sm:$0xff] %vm2316, %v1646
        %2929 = vst.msk [vmem:[#allocation3 + $0x18] sm:$0xff] %vm2316, %v1647
        %2930 = vst.msk [vmem:[#allocation3 + $0x20] sm:$0xff] %vm2316, %v1648
        %2931 = vst.msk [vmem:[#allocation3 + $0x28] sm:$0xff] %vm2316, %v1649
        %2932 = vst.msk [vmem:[#allocation3 + $0x30] sm:$0xff] %vm2316, %v1650
        %2933 = vst.msk [vmem:[#allocation3 + $0x38] sm:$0xff] %vm2316, %v1651
        %2934 = vst.msk [vmem:[#allocation3 + $0x40] sm:$0xff] %vm2316, %v1652
        %2935 = vst.msk [vmem:[#allocation3 + $0x48] sm:$0xff] %vm2316, %v1653
        %2936 = vst.msk [vmem:[#allocation3 + $0x50] sm:$0xff] %vm2316, %v1654
        %2937 = vst.msk [vmem:[#allocation3 + $0x58] sm:$0xff] %vm2316, %v1655
        %2938 = vst.msk [vmem:[#allocation3 + $0x60] sm:$0xff] %vm2316, %v1656
        %2939 = vst.msk [vmem:[#allocation3 + $0x68] sm:$0xff] %vm2316, %v1657
        %2940 = vst.msk [vmem:[#allocation3 + $0x70] sm:$0xff] %vm2316, %v1658
        %2941 = vst.msk [vmem:[#allocation3 + $0x78] sm:$0xff] %vm2316, %v1659
        %2942 = vst.msk [vmem:[#allocation3 + $0x80] sm:$0xff] %vm2316, %v1660
        %2943 = vst.msk [vmem:[#allocation3 + $0x88] sm:$0xff] %vm2316, %v1661
        %2944 = vst.msk [vmem:[#allocation3 + $0x90] sm:$0xff] %vm2316, %v1662
        %2945 = vst.msk [vmem:[#allocation3 + $0x98] sm:$0xff] %vm2316, %v1663
        %2946 = vst.msk [vmem:[#allocation3 + $0xa0] sm:$0xff] %vm2316, %v1664
        %2947 = vst.msk [vmem:[#allocation3 + $0xa8] sm:$0xff] %vm2316, %v1665
        %2948 = vst.msk [vmem:[#allocation3 + $0xb0] sm:$0xff] %vm2316, %v1666
        %2949 = vst.msk [vmem:[#allocation3 + $0xb8] sm:$0xff] %vm2316, %v1667
        %2950 = vst.msk [vmem:[#allocation3 + $0xc0] sm:$0xff] %vm2316, %v1668
        %2951 = vst.msk [vmem:[#allocation3 + $0xc8] sm:$0xff] %vm2316, %v1669
        %2952 = vst.msk [vmem:[#allocation3 + $0xd0] sm:$0xff] %vm2316, %v1670
        %2953 = vst.msk [vmem:[#allocation3 + $0xd8] sm:$0xff] %vm2316, %v1671
        %2954 = vst.msk [vmem:[#allocation3 + $0xe0] sm:$0xff] %vm2316, %v1672
        %2955 = vst.msk [vmem:[#allocation3 + $0xe8] sm:$0xff] %vm2316, %v1673
        %2956 = vst.msk [vmem:[#allocation3 + $0xf0] sm:$0xff] %vm2316, %v1674
        %2957 = vst.msk [vmem:[#allocation3 + $0xf8] sm:$0xff] %vm2316, %v1675
        %s2958 = scalar_lea.vmem [#allocation2], 128
        %v2959 = vld [vmem:[%s2958] sm:$0xff]
        %v2960 = vld [vmem:[%s2958 + $0x8] sm:$0xff]
        %v2961 = vld [vmem:[%s2958 + $0x10] sm:$0xff]
        %v2962 = vld [vmem:[%s2958 + $0x18] sm:$0xff]
        %v2963 = vld [vmem:[%s2958 + $0x20] sm:$0xff]
        %v2964 = vld [vmem:[%s2958 + $0x28] sm:$0xff]
        %v2965 = vld [vmem:[%s2958 + $0x30] sm:$0xff]
        %v2966 = vld [vmem:[%s2958 + $0x38] sm:$0xff]
        %v2967 = vld [vmem:[%s2958 + $0x40] sm:$0xff]
        %v2968 = vld [vmem:[%s2958 + $0x48] sm:$0xff]
        %v2969 = vld [vmem:[%s2958 + $0x50] sm:$0xff]
        %v2970 = vld [vmem:[%s2958 + $0x58] sm:$0xff]
        %v2971 = vld [vmem:[%s2958 + $0x60] sm:$0xff]
        %v2972 = vld [vmem:[%s2958 + $0x68] sm:$0xff]
        %v2973 = vld [vmem:[%s2958 + $0x70] sm:$0xff]
        %v2974 = vld [vmem:[%s2958 + $0x78] sm:$0xff]
        %2975 = vrot.lane.b32.xlu0 %v1210, 96
        %v2976 = vpop.permute.xlu0 %2975
        %2977 = vrot.lane.b32.xlu0 %v1211, 96
        %v2978 = vpop.permute.xlu0 %2977
        %2979 = vrot.lane.b32.xlu0 %v1212, 96
        %v2980 = vpop.permute.xlu0 %2979
        %2981 = vrot.lane.b32.xlu0 %v1213, 96
        %v2982 = vpop.permute.xlu0 %2981
        %2983 = vrot.lane.b32.xlu0 %v1214, 96
        %v2984 = vpop.permute.xlu0 %2983
        %2985 = vrot.lane.b32.xlu0 %v1215, 96
        %v2986 = vpop.permute.xlu0 %2985
        %2987 = vrot.lane.b32.xlu0 %v1216, 96
        %v2988 = vpop.permute.xlu0 %2987
        %2989 = vrot.lane.b32.xlu0 %v1217, 96
        %v2990 = vpop.permute.xlu0 %2989
        %2991 = vrot.lane.b32.xlu0 %v1218, 96
        %v2992 = vpop.permute.xlu0 %2991
        %2993 = vrot.lane.b32.xlu0 %v1219, 96
        %v2994 = vpop.permute.xlu0 %2993
        %2995 = vrot.lane.b32.xlu0 %v1220, 96
        %v2996 = vpop.permute.xlu0 %2995
        %2997 = vrot.lane.b32.xlu0 %v1221, 96
        %v2998 = vpop.permute.xlu0 %2997
        %2999 = vrot.lane.b32.xlu0 %v1222, 96
        %v3000 = vpop.permute.xlu0 %2999
        %3001 = vrot.lane.b32.xlu0 %v1223, 96
        %v3002 = vpop.permute.xlu0 %3001
        %3003 = vrot.lane.b32.xlu0 %v1224, 96
        %v3004 = vpop.permute.xlu0 %3003
        %3005 = vrot.lane.b32.xlu0 %v1225, 96
        %v3006 = vpop.permute.xlu0 %3005
        %v3008 = vsel %vm1226, %v2959, 0
        %v3011 = vsel %vm1226, %v2960, 0
        %v3014 = vsel %vm1226, %v2961, 0
        %v3017 = vsel %vm1226, %v2962, 0
        %v3020 = vsel %vm1226, %v2963, 0
        %v3023 = vsel %vm1226, %v2964, 0
        %v3026 = vsel %vm1226, %v2965, 0
        %v3029 = vsel %vm1226, %v2966, 0
        %v3032 = vsel %vm1226, %v2967, 0
        %v3035 = vsel %vm1226, %v2968, 0
        %v3038 = vsel %vm1226, %v2969, 0
        %v3041 = vsel %vm1226, %v2970, 0
        %v3044 = vsel %vm1226, %v2971, 0
        %v3047 = vsel %vm1226, %v2972, 0
        %v3050 = vsel %vm1226, %v2973, 0
        %v3053 = vsel %vm1226, %v2974, 0
        %v3056 = vsel %vm1226, %v2976, 0
        %v3059 = vsel %vm1226, %v2978, 0
        %v3062 = vsel %vm1226, %v2980, 0
        %v3065 = vsel %vm1226, %v2982, 0
        %v3068 = vsel %vm1226, %v2984, 0
        %v3071 = vsel %vm1226, %v2986, 0
        %v3074 = vsel %vm1226, %v2988, 0
        %v3077 = vsel %vm1226, %v2990, 0
        %v3080 = vsel %vm1226, %v2992, 0
        %v3083 = vsel %vm1226, %v2994, 0
        %v3086 = vsel %vm1226, %v2996, 0
        %v3089 = vsel %vm1226, %v2998, 0
        %v3092 = vsel %vm1226, %v3000, 0
        %v3095 = vsel %vm1226, %v3002, 0
        %v3098 = vsel %vm1226, %v3004, 0
        %v3101 = vsel %vm1226, %v3006, 0
        %3103 = vmatprep.subr.bf16.mxu0 0
        %3104 = vmatpush1.bf16.xpose.msra.mxu0 %v3056
        %3105 = vmatprep.subr.bf16.mxu0 0
        %3106 = vmatpush1.bf16.xpose.msra.mxu0 %v3059
        %3107 = vmatprep.subr.bf16.mxu0 0
        %3108 = vmatpush1.bf16.xpose.msra.mxu0 %v3062
        %3109 = vmatprep.subr.bf16.mxu0 0
        %3110 = vmatpush1.bf16.xpose.msra.mxu0 %v3065
        %3111 = vmatprep.subr.bf16.mxu0 0
        %3112 = vmatpush1.bf16.xpose.msra.mxu0 %v3068
        %3113 = vmatprep.subr.bf16.mxu0 0
        %3114 = vmatpush1.bf16.xpose.msra.mxu0 %v3071
        %3115 = vmatprep.subr.bf16.mxu0 0
        %3116 = vmatpush1.bf16.xpose.msra.mxu0 %v3074
        %3117 = vmatprep.subr.bf16.mxu0 0
        %3118 = vmatpush1.bf16.xpose.msra.mxu0 %v3077
        %3119 = vmatprep.subr.bf16.mxu0 0
        %3120 = vmatpush1.bf16.xpose.msra.mxu0 %v3080
        %3121 = vmatprep.subr.bf16.mxu0 0
        %3122 = vmatpush1.bf16.xpose.msra.mxu0 %v3083
        %3123 = vmatprep.subr.bf16.mxu0 0
        %3124 = vmatpush1.bf16.xpose.msra.mxu0 %v3086
        %3125 = vmatprep.subr.bf16.mxu0 0
        %3126 = vmatpush1.bf16.xpose.msra.mxu0 %v3089
        %3127 = vmatprep.subr.bf16.mxu0 0
        %3128 = vmatpush1.bf16.xpose.msra.mxu0 %v3092
        %3129 = vmatprep.subr.bf16.mxu0 0
        %3130 = vmatpush1.bf16.xpose.msra.mxu0 %v3095
        %3131 = vmatprep.subr.bf16.mxu0 0
        %3132 = vmatpush1.bf16.xpose.msra.mxu0 %v3098
        %3133 = vmatprep.subr.bf16.mxu0 0
        %3134 = vmatpush1.bf16.xpose.msra.mxu0 %v3101
        %3135 = vmatprep.mubr.bf16.mxu0 0
        %3136 = vmatmul.mubr.bf16.gmra.mrb[0].mxu0 %v3008
        %v3137 = vpop.f32.mrb[0].mxu0
        %v3138 = vadd.f32 0.0, %v3137
        %v3139 = vpop.f32.mrb[0].mxu0
        %v3140 = vadd.f32 0.0, %v3139
        %v3141 = vpop.f32.mrb[0].mxu0
        %v3142 = vadd.f32 0.0, %v3141
        %v3143 = vpop.f32.mrb[0].mxu0
        %v3144 = vadd.f32 0.0, %v3143
        %3145 = vmatprep.mubr.bf16.mxu0 0
        %3146 = vmatmul.mubr.bf16.gmra.mrb[0].mxu0 %v3011
        %v3147 = vpop.f32.mrb[0].mxu0
        %v3148 = vadd.f32 0.0, %v3147
        %v3149 = vpop.f32.mrb[0].mxu0
        %v3150 = vadd.f32 0.0, %v3149
        %v3151 = vpop.f32.mrb[0].mxu0
        %v3152 = vadd.f32 0.0, %v3151
        %v3153 = vpop.f32.mrb[0].mxu0
        %v3154 = vadd.f32 0.0, %v3153
        %3155 = vmatprep.mubr.bf16.mxu0 0
        %3156 = vmatmul.mubr.bf16.gmra.mrb[0].mxu0 %v3014
        %v3157 = vpop.f32.mrb[0].mxu0
        %v3158 = vadd.f32 0.0, %v3157
        %v3159 = vpop.f32.mrb[0].mxu0
        %v3160 = vadd.f32 0.0, %v3159
        %v3161 = vpop.f32.mrb[0].mxu0
        %v3162 = vadd.f32 0.0, %v3161
        %v3163 = vpop.f32.mrb[0].mxu0
        %v3164 = vadd.f32 0.0, %v3163
        %3165 = vmatprep.mubr.bf16.mxu0 0
        %3166 = vmatmul.mubr.bf16.gmra.mrb[0].mxu0 %v3017
        %v3167 = vpop.f32.mrb[0].mxu0
        %v3168 = vadd.f32 0.0, %v3167
        %v3169 = vpop.f32.mrb[0].mxu0
        %v3170 = vadd.f32 0.0, %v3169
        %v3171 = vpop.f32.mrb[0].mxu0
        %v3172 = vadd.f32 0.0, %v3171
        %v3173 = vpop.f32.mrb[0].mxu0
        %v3174 = vadd.f32 0.0, %v3173
        %3175 = vmatprep.mubr.bf16.mxu0 0
        %3176 = vmatmul.mubr.bf16.gmra.mrb[0].mxu0 %v3020
        %v3177 = vpop.f32.mrb[0].mxu0
        %v3178 = vadd.f32 0.0, %v3177
        %v3179 = vpop.f32.mrb[0].mxu0
        %v3180 = vadd.f32 0.0, %v3179
        %v3181 = vpop.f32.mrb[0].mxu0
        %v3182 = vadd.f32 0.0, %v3181
        %v3183 = vpop.f32.mrb[0].mxu0
        %v3184 = vadd.f32 0.0, %v3183
        %3185 = vmatprep.mubr.bf16.mxu0 0
        %3186 = vmatmul.mubr.bf16.gmra.mrb[0].mxu0 %v3023
        %v3187 = vpop.f32.mrb[0].mxu0
        %v3188 = vadd.f32 0.0, %v3187
        %v3189 = vpop.f32.mrb[0].mxu0
        %v3190 = vadd.f32 0.0, %v3189
        %v3191 = vpop.f32.mrb[0].mxu0
        %v3192 = vadd.f32 0.0, %v3191
        %v3193 = vpop.f32.mrb[0].mxu0
        %v3194 = vadd.f32 0.0, %v3193
        %3195 = vmatprep.mubr.bf16.mxu0 0
        %3196 = vmatmul.mubr.bf16.gmra.mrb[0].mxu0 %v3026
        %v3197 = vpop.f32.mrb[0].mxu0
        %v3198 = vadd.f32 0.0, %v3197
        %v3199 = vpop.f32.mrb[0].mxu0
        %v3200 = vadd.f32 0.0, %v3199
        %v3201 = vpop.f32.mrb[0].mxu0
        %v3202 = vadd.f32 0.0, %v3201
        %v3203 = vpop.f32.mrb[0].mxu0
        %v3204 = vadd.f32 0.0, %v3203
        %3205 = vmatprep.mubr.bf16.mxu0 0
        %3206 = vmatmul.mubr.bf16.gmra.mrb[0].mxu0 %v3029
        %v3207 = vpop.f32.mrb[0].mxu0
        %v3208 = vadd.f32 0.0, %v3207
        %v3209 = vpop.f32.mrb[0].mxu0
        %v3210 = vadd.f32 0.0, %v3209
        %v3211 = vpop.f32.mrb[0].mxu0
        %v3212 = vadd.f32 0.0, %v3211
        %v3213 = vpop.f32.mrb[0].mxu0
        %v3214 = vadd.f32 0.0, %v3213
        %3215 = vmatprep.mubr.bf16.mxu0 0
        %3216 = vmatmul.mubr.bf16.gmra.mrb[0].mxu0 %v3032
        %v3217 = vpop.f32.mrb[0].mxu0
        %v3218 = vadd.f32 0.0, %v3217
        %v3219 = vpop.f32.mrb[0].mxu0
        %v3220 = vadd.f32 0.0, %v3219
        %v3221 = vpop.f32.mrb[0].mxu0
        %v3222 = vadd.f32 0.0, %v3221
        %v3223 = vpop.f32.mrb[0].mxu0
        %v3224 = vadd.f32 0.0, %v3223
        %3225 = vmatprep.mubr.bf16.mxu0 0
        %3226 = vmatmul.mubr.bf16.gmra.mrb[0].mxu0 %v3035
        %v3227 = vpop.f32.mrb[0].mxu0
        %v3228 = vadd.f32 0.0, %v3227
        %v3229 = vpop.f32.mrb[0].mxu0
        %v3230 = vadd.f32 0.0, %v3229
        %v3231 = vpop.f32.mrb[0].mxu0
        %v3232 = vadd.f32 0.0, %v3231
        %v3233 = vpop.f32.mrb[0].mxu0
        %v3234 = vadd.f32 0.0, %v3233
        %3235 = vmatprep.mubr.bf16.mxu0 0
        %3236 = vmatmul.mubr.bf16.gmra.mrb[0].mxu0 %v3038
        %v3237 = vpop.f32.mrb[0].mxu0
        %v3238 = vadd.f32 0.0, %v3237
        %v3239 = vpop.f32.mrb[0].mxu0
        %v3240 = vadd.f32 0.0, %v3239
        %v3241 = vpop.f32.mrb[0].mxu0
        %v3242 = vadd.f32 0.0, %v3241
        %v3243 = vpop.f32.mrb[0].mxu0
        %v3244 = vadd.f32 0.0, %v3243
        %3245 = vmatprep.mubr.bf16.mxu0 0
        %3246 = vmatmul.mubr.bf16.gmra.mrb[0].mxu0 %v3041
        %v3247 = vpop.f32.mrb[0].mxu0
        %v3248 = vadd.f32 0.0, %v3247
        %v3249 = vpop.f32.mrb[0].mxu0
        %v3250 = vadd.f32 0.0, %v3249
        %v3251 = vpop.f32.mrb[0].mxu0
        %v3252 = vadd.f32 0.0, %v3251
        %v3253 = vpop.f32.mrb[0].mxu0
        %v3254 = vadd.f32 0.0, %v3253
        %3255 = vmatprep.mubr.bf16.mxu0 0
        %3256 = vmatmul.mubr.bf16.gmra.mrb[0].mxu0 %v3044
        %v3257 = vpop.f32.mrb[0].mxu0
        %v3258 = vadd.f32 0.0, %v3257
        %v3259 = vpop.f32.mrb[0].mxu0
        %v3260 = vadd.f32 0.0, %v3259
        %v3261 = vpop.f32.mrb[0].mxu0
        %v3262 = vadd.f32 0.0, %v3261
        %v3263 = vpop.f32.mrb[0].mxu0
        %v3264 = vadd.f32 0.0, %v3263
        %3265 = vmatprep.mubr.bf16.mxu0 0
        %3266 = vmatmul.mubr.bf16.gmra.mrb[0].mxu0 %v3047
        %v3267 = vpop.f32.mrb[0].mxu0
        %v3268 = vadd.f32 0.0, %v3267
        %v3269 = vpop.f32.mrb[0].mxu0
        %v3270 = vadd.f32 0.0, %v3269
        %v3271 = vpop.f32.mrb[0].mxu0
        %v3272 = vadd.f32 0.0, %v3271
        %v3273 = vpop.f32.mrb[0].mxu0
        %v3274 = vadd.f32 0.0, %v3273
        %3275 = vmatprep.mubr.bf16.mxu0 0
        %3276 = vmatmul.mubr.bf16.gmra.mrb[0].mxu0 %v3050
        %v3277 = vpop.f32.mrb[0].mxu0
        %v3278 = vadd.f32 0.0, %v3277
        %v3279 = vpop.f32.mrb[0].mxu0
        %v3280 = vadd.f32 0.0, %v3279
        %v3281 = vpop.f32.mrb[0].mxu0
        %v3282 = vadd.f32 0.0, %v3281
        %v3283 = vpop.f32.mrb[0].mxu0
        %v3284 = vadd.f32 0.0, %v3283
        %3285 = vmatprep.mubr.bf16.mxu0 0
        %3286 = vmatmul.mubr.bf16.gmra.mrb[0].mxu0 %v3053
        %v3287 = vpop.f32.mrb[0].mxu0
        %v3288 = vadd.f32 0.0, %v3287
        %v3289 = vpop.f32.mrb[0].mxu0
        %v3290 = vadd.f32 0.0, %v3289
        %v3291 = vpop.f32.mrb[0].mxu0
        %v3292 = vadd.f32 0.0, %v3291
        %v3293 = vpop.f32.mrb[0].mxu0
        %v3294 = vadd.f32 0.0, %v3293
        %3295 = vdwg.mxu0
        %s3296 = scalar_lea.vmem [#allocation3], 256
        %v3297 = vld [vmem:[%s3296] sm:$0xff]
        %v3298 = vld [vmem:[%s3296 + $0x8] sm:$0xff]
        %v3299 = vld [vmem:[%s3296 + $0x10] sm:$0xff]
        %v3300 = vld [vmem:[%s3296 + $0x18] sm:$0xff]
        %v3301 = vld [vmem:[%s3296 + $0x20] sm:$0xff]
        %v3302 = vld [vmem:[%s3296 + $0x28] sm:$0xff]
        %v3303 = vld [vmem:[%s3296 + $0x30] sm:$0xff]
        %v3304 = vld [vmem:[%s3296 + $0x38] sm:$0xff]
        %v3305 = vld [vmem:[%s3296 + $0x40] sm:$0xff]
        %v3306 = vld [vmem:[%s3296 + $0x48] sm:$0xff]
        %v3307 = vld [vmem:[%s3296 + $0x50] sm:$0xff]
        %v3308 = vld [vmem:[%s3296 + $0x58] sm:$0xff]
        %v3309 = vld [vmem:[%s3296 + $0x60] sm:$0xff]
        %v3310 = vld [vmem:[%s3296 + $0x68] sm:$0xff]
        %v3311 = vld [vmem:[%s3296 + $0x70] sm:$0xff]
        %v3312 = vld [vmem:[%s3296 + $0x78] sm:$0xff]
        %v3313 = vld [vmem:[%s3296 + $0x80] sm:$0xff]
        %v3314 = vld [vmem:[%s3296 + $0x88] sm:$0xff]
        %v3315 = vld [vmem:[%s3296 + $0x90] sm:$0xff]
        %v3316 = vld [vmem:[%s3296 + $0x98] sm:$0xff]
        %v3317 = vld [vmem:[%s3296 + $0xa0] sm:$0xff]
        %v3318 = vld [vmem:[%s3296 + $0xa8] sm:$0xff]
        %v3319 = vld [vmem:[%s3296 + $0xb0] sm:$0xff]
        %v3320 = vld [vmem:[%s3296 + $0xb8] sm:$0xff]
        %v3321 = vld [vmem:[%s3296 + $0xc0] sm:$0xff]
        %v3322 = vld [vmem:[%s3296 + $0xc8] sm:$0xff]
        %v3323 = vld [vmem:[%s3296 + $0xd0] sm:$0xff]
        %v3324 = vld [vmem:[%s3296 + $0xd8] sm:$0xff]
        %v3325 = vld [vmem:[%s3296 + $0xe0] sm:$0xff]
        %v3326 = vld [vmem:[%s3296 + $0xe8] sm:$0xff]
        %v3327 = vld [vmem:[%s3296 + $0xf0] sm:$0xff]
        %v3328 = vld [vmem:[%s3296 + $0xf8] sm:$0xff]
        %v3329 = vmax.f32 %v3138, %v3140
        %3330 = vmax.xlane.f32.xlu0 %v3329
        %v3331 = vpop.xlane.xlu0 %3330
        %v3332 = vmax.f32 %v3142, %v3144
        %3333 = vmax.xlane.f32.xlu0 %v3332
        %v3334 = vpop.xlane.xlu0 %3333
        %v3335 = vmax.f32 %v3148, %v3150
        %3336 = vmax.xlane.f32.xlu0 %v3335
        %v3337 = vpop.xlane.xlu0 %3336
        %v3338 = vmax.f32 %v3152, %v3154
        %3339 = vmax.xlane.f32.xlu0 %v3338
        %v3340 = vpop.xlane.xlu0 %3339
        %v3341 = vmax.f32 %v3158, %v3160
        %3342 = vmax.xlane.f32.xlu0 %v3341
        %v3343 = vpop.xlane.xlu0 %3342
        %v3344 = vmax.f32 %v3162, %v3164
        %3345 = vmax.xlane.f32.xlu0 %v3344
        %v3346 = vpop.xlane.xlu0 %3345
        %v3347 = vmax.f32 %v3168, %v3170
        %3348 = vmax.xlane.f32.xlu0 %v3347
        %v3349 = vpop.xlane.xlu0 %3348
        %v3350 = vmax.f32 %v3172, %v3174
        %3351 = vmax.xlane.f32.xlu0 %v3350
        %v3352 = vpop.xlane.xlu0 %3351
        %v3353 = vmax.f32 %v3178, %v3180
        %3354 = vmax.xlane.f32.xlu0 %v3353
        %v3355 = vpop.xlane.xlu0 %3354
        %v3356 = vmax.f32 %v3182, %v3184
        %3357 = vmax.xlane.f32.xlu0 %v3356
        %v3358 = vpop.xlane.xlu0 %3357
        %v3359 = vmax.f32 %v3188, %v3190
        %3360 = vmax.xlane.f32.xlu0 %v3359
        %v3361 = vpop.xlane.xlu0 %3360
        %v3362 = vmax.f32 %v3192, %v3194
        %3363 = vmax.xlane.f32.xlu0 %v3362
        %v3364 = vpop.xlane.xlu0 %3363
        %v3365 = vmax.f32 %v3198, %v3200
        %3366 = vmax.xlane.f32.xlu0 %v3365
        %v3367 = vpop.xlane.xlu0 %3366
        %v3368 = vmax.f32 %v3202, %v3204
        %3369 = vmax.xlane.f32.xlu0 %v3368
        %v3370 = vpop.xlane.xlu0 %3369
        %v3371 = vmax.f32 %v3208, %v3210
        %3372 = vmax.xlane.f32.xlu0 %v3371
        %v3373 = vpop.xlane.xlu0 %3372
        %v3374 = vmax.f32 %v3212, %v3214
        %3375 = vmax.xlane.f32.xlu0 %v3374
        %v3376 = vpop.xlane.xlu0 %3375
        %v3377 = vmax.f32 %v3218, %v3220
        %3378 = vmax.xlane.f32.xlu0 %v3377
        %v3379 = vpop.xlane.xlu0 %3378
        %v3380 = vmax.f32 %v3222, %v3224
        %3381 = vmax.xlane.f32.xlu0 %v3380
        %v3382 = vpop.xlane.xlu0 %3381
        %v3383 = vmax.f32 %v3228, %v3230
        %3384 = vmax.xlane.f32.xlu0 %v3383
        %v3385 = vpop.xlane.xlu0 %3384
        %v3386 = vmax.f32 %v3232, %v3234
        %3387 = vmax.xlane.f32.xlu0 %v3386
        %v3388 = vpop.xlane.xlu0 %3387
        %v3389 = vmax.f32 %v3238, %v3240
        %3390 = vmax.xlane.f32.xlu0 %v3389
        %v3391 = vpop.xlane.xlu0 %3390
        %v3392 = vmax.f32 %v3242, %v3244
        %3393 = vmax.xlane.f32.xlu0 %v3392
        %v3394 = vpop.xlane.xlu0 %3393
        %v3395 = vmax.f32 %v3248, %v3250
        %3396 = vmax.xlane.f32.xlu0 %v3395
        %v3397 = vpop.xlane.xlu0 %3396
        %v3398 = vmax.f32 %v3252, %v3254
        %3399 = vmax.xlane.f32.xlu0 %v3398
        %v3400 = vpop.xlane.xlu0 %3399
        %v3401 = vmax.f32 %v3258, %v3260
        %3402 = vmax.xlane.f32.xlu0 %v3401
        %v3403 = vpop.xlane.xlu0 %3402
        %v3404 = vmax.f32 %v3262, %v3264
        %3405 = vmax.xlane.f32.xlu0 %v3404
        %v3406 = vpop.xlane.xlu0 %3405
        %v3407 = vmax.f32 %v3268, %v3270
        %3408 = vmax.xlane.f32.xlu0 %v3407
        %v3409 = vpop.xlane.xlu0 %3408
        %v3410 = vmax.f32 %v3272, %v3274
        %3411 = vmax.xlane.f32.xlu0 %v3410
        %v3412 = vpop.xlane.xlu0 %3411
        %v3413 = vmax.f32 %v3278, %v3280
        %3414 = vmax.xlane.f32.xlu0 %v3413
        %v3415 = vpop.xlane.xlu0 %3414
        %v3416 = vmax.f32 %v3282, %v3284
        %3417 = vmax.xlane.f32.xlu0 %v3416
        %v3418 = vpop.xlane.xlu0 %3417
        %v3419 = vmax.f32 %v3288, %v3290
        %3420 = vmax.xlane.f32.xlu0 %v3419
        %v3421 = vpop.xlane.xlu0 %3420
        %v3422 = vmax.f32 %v3292, %v3294
        %3423 = vmax.xlane.f32.xlu0 %v3422
        %v3424 = vpop.xlane.xlu0 %3423
        %v3425 = vmax.f32 %v3297, %v3331
        %v3426 = vmax.f32 %v3298, %v3334
        %v3427 = vmax.f32 %v3299, %v3337
        %v3428 = vmax.f32 %v3300, %v3340
        %v3429 = vmax.f32 %v3301, %v3343
        %v3430 = vmax.f32 %v3302, %v3346
        %v3431 = vmax.f32 %v3303, %v3349
        %v3432 = vmax.f32 %v3304, %v3352
        %v3433 = vmax.f32 %v3305, %v3355
        %v3434 = vmax.f32 %v3306, %v3358
        %v3435 = vmax.f32 %v3307, %v3361
        %v3436 = vmax.f32 %v3308, %v3364
        %v3437 = vmax.f32 %v3309, %v3367
        %v3438 = vmax.f32 %v3310, %v3370
        %v3439 = vmax.f32 %v3311, %v3373
        %v3440 = vmax.f32 %v3312, %v3376
        %v3441 = vmax.f32 %v3313, %v3379
        %v3442 = vmax.f32 %v3314, %v3382
        %v3443 = vmax.f32 %v3315, %v3385
        %v3444 = vmax.f32 %v3316, %v3388
        %v3445 = vmax.f32 %v3317, %v3391
        %v3446 = vmax.f32 %v3318, %v3394
        %v3447 = vmax.f32 %v3319, %v3397
        %v3448 = vmax.f32 %v3320, %v3400
        %v3449 = vmax.f32 %v3321, %v3403
        %v3450 = vmax.f32 %v3322, %v3406
        %v3451 = vmax.f32 %v3323, %v3409
        %v3452 = vmax.f32 %v3324, %v3412
        %v3453 = vmax.f32 %v3325, %v3415
        %v3454 = vmax.f32 %v3326, %v3418
        %v3455 = vmax.f32 %v3327, %v3421
        %v3456 = vmax.f32 %v3328, %v3424
        %v3457 = vsub.f32 %v3297, %v3425
        %v3458 = vsub.f32 %v3298, %v3426
        %v3459 = vsub.f32 %v3299, %v3427
        %v3460 = vsub.f32 %v3300, %v3428
        %v3461 = vsub.f32 %v3301, %v3429
        %v3462 = vsub.f32 %v3302, %v3430
        %v3463 = vsub.f32 %v3303, %v3431
        %v3464 = vsub.f32 %v3304, %v3432
        %v3465 = vsub.f32 %v3305, %v3433
        %v3466 = vsub.f32 %v3306, %v3434
        %v3467 = vsub.f32 %v3307, %v3435
        %v3468 = vsub.f32 %v3308, %v3436
        %v3469 = vsub.f32 %v3309, %v3437
        %v3470 = vsub.f32 %v3310, %v3438
        %v3471 = vsub.f32 %v3311, %v3439
        %v3472 = vsub.f32 %v3312, %v3440
        %v3473 = vsub.f32 %v3313, %v3441
        %v3474 = vsub.f32 %v3314, %v3442
        %v3475 = vsub.f32 %v3315, %v3443
        %v3476 = vsub.f32 %v3316, %v3444
        %v3477 = vsub.f32 %v3317, %v3445
        %v3478 = vsub.f32 %v3318, %v3446
        %v3479 = vsub.f32 %v3319, %v3447
        %v3480 = vsub.f32 %v3320, %v3448
        %v3481 = vsub.f32 %v3321, %v3449
        %v3482 = vsub.f32 %v3322, %v3450
        %v3483 = vsub.f32 %v3323, %v3451
        %v3484 = vsub.f32 %v3324, %v3452
        %v3485 = vsub.f32 %v3325, %v3453
        %v3486 = vsub.f32 %v3326, %v3454
        %v3487 = vsub.f32 %v3327, %v3455
        %v3488 = vsub.f32 %v3328, %v3456
        %v3489 = vmul.f32 %v3457, 1.442695
        %v3490 = vpow.pop %v3489
        %v3491 = vmul.f32 %v3458, 1.442695
        %v3492 = vpow.pop %v3491
        %v3493 = vmul.f32 %v3459, 1.442695
        %v3494 = vpow.pop %v3493
        %v3495 = vmul.f32 %v3460, 1.442695
        %v3496 = vpow.pop %v3495
        %v3497 = vmul.f32 %v3461, 1.442695
        %v3498 = vpow.pop %v3497
        %v3499 = vmul.f32 %v3462, 1.442695
        %v3500 = vpow.pop %v3499
        %v3501 = vmul.f32 %v3463, 1.442695
        %v3502 = vpow.pop %v3501
        %v3503 = vmul.f32 %v3464, 1.442695
        %v3504 = vpow.pop %v3503
        %v3505 = vmul.f32 %v3465, 1.442695
        %v3506 = vpow.pop %v3505
        %v3507 = vmul.f32 %v3466, 1.442695
        %v3508 = vpow.pop %v3507
        %v3509 = vmul.f32 %v3467, 1.442695
        %v3510 = vpow.pop %v3509
        %v3511 = vmul.f32 %v3468, 1.442695
        %v3512 = vpow.pop %v3511
        %v3513 = vmul.f32 %v3469, 1.442695
        %v3514 = vpow.pop %v3513
        %v3515 = vmul.f32 %v3470, 1.442695
        %v3516 = vpow.pop %v3515
        %v3517 = vmul.f32 %v3471, 1.442695
        %v3518 = vpow.pop %v3517
        %v3519 = vmul.f32 %v3472, 1.442695
        %v3520 = vpow.pop %v3519
        %v3521 = vmul.f32 %v3473, 1.442695
        %v3522 = vpow.pop %v3521
        %v3523 = vmul.f32 %v3474, 1.442695
        %v3524 = vpow.pop %v3523
        %v3525 = vmul.f32 %v3475, 1.442695
        %v3526 = vpow.pop %v3525
        %v3527 = vmul.f32 %v3476, 1.442695
        %v3528 = vpow.pop %v3527
        %v3529 = vmul.f32 %v3477, 1.442695
        %v3530 = vpow.pop %v3529
        %v3531 = vmul.f32 %v3478, 1.442695
        %v3532 = vpow.pop %v3531
        %v3533 = vmul.f32 %v3479, 1.442695
        %v3534 = vpow.pop %v3533
        %v3535 = vmul.f32 %v3480, 1.442695
        %v3536 = vpow.pop %v3535
        %v3537 = vmul.f32 %v3481, 1.442695
        %v3538 = vpow.pop %v3537
        %v3539 = vmul.f32 %v3482, 1.442695
        %v3540 = vpow.pop %v3539
        %v3541 = vmul.f32 %v3483, 1.442695
        %v3542 = vpow.pop %v3541
        %v3543 = vmul.f32 %v3484, 1.442695
        %v3544 = vpow.pop %v3543
        %v3545 = vmul.f32 %v3485, 1.442695
        %v3546 = vpow.pop %v3545
        %v3547 = vmul.f32 %v3486, 1.442695
        %v3548 = vpow.pop %v3547
        %v3549 = vmul.f32 %v3487, 1.442695
        %v3550 = vpow.pop %v3549
        %v3551 = vmul.f32 %v3488, 1.442695
        %v3552 = vpow.pop %v3551
        %3554 = vset.pattern.permute.xlu0 0
        %3555 = vperm.xlu0 %3554, %v3425
        %v3556 = vpop.permute.xlu0 %3555
        %3559 = vset.pattern.permute.xlu0 0
        %3560 = vperm.xlu0 %3559, %v3426
        %v3561 = vpop.permute.xlu0 %3560
        %3564 = vset.pattern.permute.xlu0 0
        %3565 = vperm.xlu0 %3564, %v3427
        %v3566 = vpop.permute.xlu0 %3565
        %3569 = vset.pattern.permute.xlu0 0
        %3570 = vperm.xlu0 %3569, %v3428
        %v3571 = vpop.permute.xlu0 %3570
        %3574 = vset.pattern.permute.xlu0 0
        %3575 = vperm.xlu0 %3574, %v3429
        %v3576 = vpop.permute.xlu0 %3575
        %3579 = vset.pattern.permute.xlu0 0
        %3580 = vperm.xlu0 %3579, %v3430
        %v3581 = vpop.permute.xlu0 %3580
        %3584 = vset.pattern.permute.xlu0 0
        %3585 = vperm.xlu0 %3584, %v3431
        %v3586 = vpop.permute.xlu0 %3585
        %3589 = vset.pattern.permute.xlu0 0
        %3590 = vperm.xlu0 %3589, %v3432
        %v3591 = vpop.permute.xlu0 %3590
        %3594 = vset.pattern.permute.xlu0 0
        %3595 = vperm.xlu0 %3594, %v3433
        %v3596 = vpop.permute.xlu0 %3595
        %3599 = vset.pattern.permute.xlu0 0
        %3600 = vperm.xlu0 %3599, %v3434
        %v3601 = vpop.permute.xlu0 %3600
        %3604 = vset.pattern.permute.xlu0 0
        %3605 = vperm.xlu0 %3604, %v3435
        %v3606 = vpop.permute.xlu0 %3605
        %3609 = vset.pattern.permute.xlu0 0
        %3610 = vperm.xlu0 %3609, %v3436
        %v3611 = vpop.permute.xlu0 %3610
        %3614 = vset.pattern.permute.xlu0 0
        %3615 = vperm.xlu0 %3614, %v3437
        %v3616 = vpop.permute.xlu0 %3615
        %3619 = vset.pattern.permute.xlu0 0
        %3620 = vperm.xlu0 %3619, %v3438
        %v3621 = vpop.permute.xlu0 %3620
        %3624 = vset.pattern.permute.xlu0 0
        %3625 = vperm.xlu0 %3624, %v3439
        %v3626 = vpop.permute.xlu0 %3625
        %3629 = vset.pattern.permute.xlu0 0
        %3630 = vperm.xlu0 %3629, %v3440
        %v3631 = vpop.permute.xlu0 %3630
        %3634 = vset.pattern.permute.xlu0 0
        %3635 = vperm.xlu0 %3634, %v3441
        %v3636 = vpop.permute.xlu0 %3635
        %3639 = vset.pattern.permute.xlu0 0
        %3640 = vperm.xlu0 %3639, %v3442
        %v3641 = vpop.permute.xlu0 %3640
        %3644 = vset.pattern.permute.xlu0 0
        %3645 = vperm.xlu0 %3644, %v3443
        %v3646 = vpop.permute.xlu0 %3645
        %3649 = vset.pattern.permute.xlu0 0
        %3650 = vperm.xlu0 %3649, %v3444
        %v3651 = vpop.permute.xlu0 %3650
        %3654 = vset.pattern.permute.xlu0 0
        %3655 = vperm.xlu0 %3654, %v3445
        %v3656 = vpop.permute.xlu0 %3655
        %3659 = vset.pattern.permute.xlu0 0
        %3660 = vperm.xlu0 %3659, %v3446
        %v3661 = vpop.permute.xlu0 %3660
        %3664 = vset.pattern.permute.xlu0 0
        %3665 = vperm.xlu0 %3664, %v3447
        %v3666 = vpop.permute.xlu0 %3665
        %3669 = vset.pattern.permute.xlu0 0
        %3670 = vperm.xlu0 %3669, %v3448
        %v3671 = vpop.permute.xlu0 %3670
        %3674 = vset.pattern.permute.xlu0 0
        %3675 = vperm.xlu0 %3674, %v3449
        %v3676 = vpop.permute.xlu0 %3675
        %3679 = vset.pattern.permute.xlu0 0
        %3680 = vperm.xlu0 %3679, %v3450
        %v3681 = vpop.permute.xlu0 %3680
        %3684 = vset.pattern.permute.xlu0 0
        %3685 = vperm.xlu0 %3684, %v3451
        %v3686 = vpop.permute.xlu0 %3685
        %3689 = vset.pattern.permute.xlu0 0
        %3690 = vperm.xlu0 %3689, %v3452
        %v3691 = vpop.permute.xlu0 %3690
        %3694 = vset.pattern.permute.xlu0 0
        %3695 = vperm.xlu0 %3694, %v3453
        %v3696 = vpop.permute.xlu0 %3695
        %3699 = vset.pattern.permute.xlu0 0
        %3700 = vperm.xlu0 %3699, %v3454
        %v3701 = vpop.permute.xlu0 %3700
        %3704 = vset.pattern.permute.xlu0 0
        %3705 = vperm.xlu0 %3704, %v3455
        %v3706 = vpop.permute.xlu0 %3705
        %3709 = vset.pattern.permute.xlu0 0
        %3710 = vperm.xlu0 %3709, %v3456
        %v3711 = vpop.permute.xlu0 %3710
        %v3713 = vsub.f32 %v3138, %v3556
        %v3714 = vsub.f32 %v3140, %v3556
        %v3715 = vsub.f32 %v3142, %v3561
        %v3716 = vsub.f32 %v3144, %v3561
        %v3717 = vsub.f32 %v3148, %v3566
        %v3718 = vsub.f32 %v3150, %v3566
        %v3719 = vsub.f32 %v3152, %v3571
        %v3720 = vsub.f32 %v3154, %v3571
        %v3721 = vsub.f32 %v3158, %v3576
        %v3722 = vsub.f32 %v3160, %v3576
        %v3723 = vsub.f32 %v3162, %v3581
        %v3724 = vsub.f32 %v3164, %v3581
        %v3725 = vsub.f32 %v3168, %v3586
        %v3726 = vsub.f32 %v3170, %v3586
        %v3727 = vsub.f32 %v3172, %v3591
        %v3728 = vsub.f32 %v3174, %v3591
        %v3729 = vsub.f32 %v3178, %v3596
        %v3730 = vsub.f32 %v3180, %v3596
        %v3731 = vsub.f32 %v3182, %v3601
        %v3732 = vsub.f32 %v3184, %v3601
        %v3733 = vsub.f32 %v3188, %v3606
        %v3734 = vsub.f32 %v3190, %v3606
        %v3735 = vsub.f32 %v3192, %v3611
        %v3736 = vsub.f32 %v3194, %v3611
        %v3737 = vsub.f32 %v3198, %v3616
        %v3738 = vsub.f32 %v3200, %v3616
        %v3739 = vsub.f32 %v3202, %v3621
        %v3740 = vsub.f32 %v3204, %v3621
        %v3741 = vsub.f32 %v3208, %v3626
        %v3742 = vsub.f32 %v3210, %v3626
        %v3743 = vsub.f32 %v3212, %v3631
        %v3744 = vsub.f32 %v3214, %v3631
        %v3745 = vsub.f32 %v3218, %v3636
        %v3746 = vsub.f32 %v3220, %v3636
        %v3747 = vsub.f32 %v3222, %v3641
        %v3748 = vsub.f32 %v3224, %v3641
        %v3749 = vsub.f32 %v3228, %v3646
        %v3750 = vsub.f32 %v3230, %v3646
        %v3751 = vsub.f32 %v3232, %v3651
        %v3752 = vsub.f32 %v3234, %v3651
        %v3753 = vsub.f32 %v3238, %v3656
        %v3754 = vsub.f32 %v3240, %v3656
        %v3755 = vsub.f32 %v3242, %v3661
        %v3756 = vsub.f32 %v3244, %v3661
        %v3757 = vsub.f32 %v3248, %v3666
        %v3758 = vsub.f32 %v3250, %v3666
        %v3759 = vsub.f32 %v3252, %v3671
        %v3760 = vsub.f32 %v3254, %v3671
        %v3761 = vsub.f32 %v3258, %v3676
        %v3762 = vsub.f32 %v3260, %v3676
        %v3763 = vsub.f32 %v3262, %v3681
        %v3764 = vsub.f32 %v3264, %v3681
        %v3765 = vsub.f32 %v3268, %v3686
        %v3766 = vsub.f32 %v3270, %v3686
        %v3767 = vsub.f32 %v3272, %v3691
        %v3768 = vsub.f32 %v3274, %v3691
        %v3769 = vsub.f32 %v3278, %v3696
        %v3770 = vsub.f32 %v3280, %v3696
        %v3771 = vsub.f32 %v3282, %v3701
        %v3772 = vsub.f32 %v3284, %v3701
        %v3773 = vsub.f32 %v3288, %v3706
        %v3774 = vsub.f32 %v3290, %v3706
        %v3775 = vsub.f32 %v3292, %v3711
        %v3776 = vsub.f32 %v3294, %v3711
        %v3777 = vmul.f32 %v3713, 1.442695
        %v3778 = vpow.pop %v3777
        %v3779 = vmul.f32 %v3714, 1.442695
        %v3780 = vpow.pop %v3779
        %v3781 = vmul.f32 %v3715, 1.442695
        %v3782 = vpow.pop %v3781
        %v3783 = vmul.f32 %v3716, 1.442695
        %v3784 = vpow.pop %v3783
        %v3785 = vmul.f32 %v3717, 1.442695
        %v3786 = vpow.pop %v3785
        %v3787 = vmul.f32 %v3718, 1.442695
        %v3788 = vpow.pop %v3787
        %v3789 = vmul.f32 %v3719, 1.442695
        %v3790 = vpow.pop %v3789
        %v3791 = vmul.f32 %v3720, 1.442695
        %v3792 = vpow.pop %v3791
        %v3793 = vmul.f32 %v3721, 1.442695
        %v3794 = vpow.pop %v3793
        %v3795 = vmul.f32 %v3722, 1.442695
        %v3796 = vpow.pop %v3795
        %v3797 = vmul.f32 %v3723, 1.442695
        %v3798 = vpow.pop %v3797
        %v3799 = vmul.f32 %v3724, 1.442695
        %v3800 = vpow.pop %v3799
        %v3801 = vmul.f32 %v3725, 1.442695
        %v3802 = vpow.pop %v3801
        %v3803 = vmul.f32 %v3726, 1.442695
        %v3804 = vpow.pop %v3803
        %v3805 = vmul.f32 %v3727, 1.442695
        %v3806 = vpow.pop %v3805
        %v3807 = vmul.f32 %v3728, 1.442695
        %v3808 = vpow.pop %v3807
        %v3809 = vmul.f32 %v3729, 1.442695
        %v3810 = vpow.pop %v3809
        %v3811 = vmul.f32 %v3730, 1.442695
        %v3812 = vpow.pop %v3811
        %v3813 = vmul.f32 %v3731, 1.442695
        %v3814 = vpow.pop %v3813
        %v3815 = vmul.f32 %v3732, 1.442695
        %v3816 = vpow.pop %v3815
        %v3817 = vmul.f32 %v3733, 1.442695
        %v3818 = vpow.pop %v3817
        %v3819 = vmul.f32 %v3734, 1.442695
        %v3820 = vpow.pop %v3819
        %v3821 = vmul.f32 %v3735, 1.442695
        %v3822 = vpow.pop %v3821
        %v3823 = vmul.f32 %v3736, 1.442695
        %v3824 = vpow.pop %v3823
        %v3825 = vmul.f32 %v3737, 1.442695
        %v3826 = vpow.pop %v3825
        %v3827 = vmul.f32 %v3738, 1.442695
        %v3828 = vpow.pop %v3827
        %v3829 = vmul.f32 %v3739, 1.442695
        %v3830 = vpow.pop %v3829
        %v3831 = vmul.f32 %v3740, 1.442695
        %v3832 = vpow.pop %v3831
        %v3833 = vmul.f32 %v3741, 1.442695
        %v3834 = vpow.pop %v3833
        %v3835 = vmul.f32 %v3742, 1.442695
        %v3836 = vpow.pop %v3835
        %v3837 = vmul.f32 %v3743, 1.442695
        %v3838 = vpow.pop %v3837
        %v3839 = vmul.f32 %v3744, 1.442695
        %v3840 = vpow.pop %v3839
        %v3841 = vmul.f32 %v3745, 1.442695
        %v3842 = vpow.pop %v3841
        %v3843 = vmul.f32 %v3746, 1.442695
        %v3844 = vpow.pop %v3843
        %v3845 = vmul.f32 %v3747, 1.442695
        %v3846 = vpow.pop %v3845
        %v3847 = vmul.f32 %v3748, 1.442695
        %v3848 = vpow.pop %v3847
        %v3849 = vmul.f32 %v3749, 1.442695
        %v3850 = vpow.pop %v3849
        %v3851 = vmul.f32 %v3750, 1.442695
        %v3852 = vpow.pop %v3851
        %v3853 = vmul.f32 %v3751, 1.442695
        %v3854 = vpow.pop %v3853
        %v3855 = vmul.f32 %v3752, 1.442695
        %v3856 = vpow.pop %v3855
        %v3857 = vmul.f32 %v3753, 1.442695
        %v3858 = vpow.pop %v3857
        %v3859 = vmul.f32 %v3754, 1.442695
        %v3860 = vpow.pop %v3859
        %v3861 = vmul.f32 %v3755, 1.442695
        %v3862 = vpow.pop %v3861
        %v3863 = vmul.f32 %v3756, 1.442695
        %v3864 = vpow.pop %v3863
        %v3865 = vmul.f32 %v3757, 1.442695
        %v3866 = vpow.pop %v3865
        %v3867 = vmul.f32 %v3758, 1.442695
        %v3868 = vpow.pop %v3867
        %v3869 = vmul.f32 %v3759, 1.442695
        %v3870 = vpow.pop %v3869
        %v3871 = vmul.f32 %v3760, 1.442695
        %v3872 = vpow.pop %v3871
        %v3873 = vmul.f32 %v3761, 1.442695
        %v3874 = vpow.pop %v3873
        %v3875 = vmul.f32 %v3762, 1.442695
        %v3876 = vpow.pop %v3875
        %v3877 = vmul.f32 %v3763, 1.442695
        %v3878 = vpow.pop %v3877
        %v3879 = vmul.f32 %v3764, 1.442695
        %v3880 = vpow.pop %v3879
        %v3881 = vmul.f32 %v3765, 1.442695
        %v3882 = vpow.pop %v3881
        %v3883 = vmul.f32 %v3766, 1.442695
        %v3884 = vpow.pop %v3883
        %v3885 = vmul.f32 %v3767, 1.442695
        %v3886 = vpow.pop %v3885
        %v3887 = vmul.f32 %v3768, 1.442695
        %v3888 = vpow.pop %v3887
        %v3889 = vmul.f32 %v3769, 1.442695
        %v3890 = vpow.pop %v3889
        %v3891 = vmul.f32 %v3770, 1.442695
        %v3892 = vpow.pop %v3891
        %v3893 = vmul.f32 %v3771, 1.442695
        %v3894 = vpow.pop %v3893
        %v3895 = vmul.f32 %v3772, 1.442695
        %v3896 = vpow.pop %v3895
        %v3897 = vmul.f32 %v3773, 1.442695
        %v3898 = vpow.pop %v3897
        %v3899 = vmul.f32 %v3774, 1.442695
        %v3900 = vpow.pop %v3899
        %v3901 = vmul.f32 %v3775, 1.442695
        %v3902 = vpow.pop %v3901
        %v3903 = vmul.f32 %v3776, 1.442695
        %v3904 = vpow.pop %v3903
        %s3905 = scalar_lea.vmem [#allocation4], 256
        %v3906 = vld [vmem:[%s3905] sm:$0xff]
        %v3907 = vld [vmem:[%s3905 + $0x8] sm:$0xff]
        %v3908 = vld [vmem:[%s3905 + $0x10] sm:$0xff]
        %v3909 = vld [vmem:[%s3905 + $0x18] sm:$0xff]
        %v3910 = vld [vmem:[%s3905 + $0x20] sm:$0xff]
        %v3911 = vld [vmem:[%s3905 + $0x28] sm:$0xff]
        %v3912 = vld [vmem:[%s3905 + $0x30] sm:$0xff]
        %v3913 = vld [vmem:[%s3905 + $0x38] sm:$0xff]
        %v3914 = vld [vmem:[%s3905 + $0x40] sm:$0xff]
        %v3915 = vld [vmem:[%s3905 + $0x48] sm:$0xff]
        %v3916 = vld [vmem:[%s3905 + $0x50] sm:$0xff]
        %v3917 = vld [vmem:[%s3905 + $0x58] sm:$0xff]
        %v3918 = vld [vmem:[%s3905 + $0x60] sm:$0xff]
        %v3919 = vld [vmem:[%s3905 + $0x68] sm:$0xff]
        %v3920 = vld [vmem:[%s3905 + $0x70] sm:$0xff]
        %v3921 = vld [vmem:[%s3905 + $0x78] sm:$0xff]
        %v3922 = vld [vmem:[%s3905 + $0x80] sm:$0xff]
        %v3923 = vld [vmem:[%s3905 + $0x88] sm:$0xff]
        %v3924 = vld [vmem:[%s3905 + $0x90] sm:$0xff]
        %v3925 = vld [vmem:[%s3905 + $0x98] sm:$0xff]
        %v3926 = vld [vmem:[%s3905 + $0xa0] sm:$0xff]
        %v3927 = vld [vmem:[%s3905 + $0xa8] sm:$0xff]
        %v3928 = vld [vmem:[%s3905 + $0xb0] sm:$0xff]
        %v3929 = vld [vmem:[%s3905 + $0xb8] sm:$0xff]
        %v3930 = vld [vmem:[%s3905 + $0xc0] sm:$0xff]
        %v3931 = vld [vmem:[%s3905 + $0xc8] sm:$0xff]
        %v3932 = vld [vmem:[%s3905 + $0xd0] sm:$0xff]
        %v3933 = vld [vmem:[%s3905 + $0xd8] sm:$0xff]
        %v3934 = vld [vmem:[%s3905 + $0xe0] sm:$0xff]
        %v3935 = vld [vmem:[%s3905 + $0xe8] sm:$0xff]
        %v3936 = vld [vmem:[%s3905 + $0xf0] sm:$0xff]
        %v3937 = vld [vmem:[%s3905 + $0xf8] sm:$0xff]
        %v3938 = vmul.f32 %v3490, %v3906
        %v3939 = vmul.f32 %v3492, %v3907
        %v3940 = vmul.f32 %v3494, %v3908
        %v3941 = vmul.f32 %v3496, %v3909
        %v3942 = vmul.f32 %v3498, %v3910
        %v3943 = vmul.f32 %v3500, %v3911
        %v3944 = vmul.f32 %v3502, %v3912
        %v3945 = vmul.f32 %v3504, %v3913
        %v3946 = vmul.f32 %v3506, %v3914
        %v3947 = vmul.f32 %v3508, %v3915
        %v3948 = vmul.f32 %v3510, %v3916
        %v3949 = vmul.f32 %v3512, %v3917
        %v3950 = vmul.f32 %v3514, %v3918
        %v3951 = vmul.f32 %v3516, %v3919
        %v3952 = vmul.f32 %v3518, %v3920
        %v3953 = vmul.f32 %v3520, %v3921
        %v3954 = vmul.f32 %v3522, %v3922
        %v3955 = vmul.f32 %v3524, %v3923
        %v3956 = vmul.f32 %v3526, %v3924
        %v3957 = vmul.f32 %v3528, %v3925
        %v3958 = vmul.f32 %v3530, %v3926
        %v3959 = vmul.f32 %v3532, %v3927
        %v3960 = vmul.f32 %v3534, %v3928
        %v3961 = vmul.f32 %v3536, %v3929
        %v3962 = vmul.f32 %v3538, %v3930
        %v3963 = vmul.f32 %v3540, %v3931
        %v3964 = vmul.f32 %v3542, %v3932
        %v3965 = vmul.f32 %v3544, %v3933
        %v3966 = vmul.f32 %v3546, %v3934
        %v3967 = vmul.f32 %v3548, %v3935
        %v3968 = vmul.f32 %v3550, %v3936
        %v3969 = vmul.f32 %v3552, %v3937
        %v3970 = vadd.f32 %v3778, %v3780
        %3971 = vadd.xlane.f32.xlu0 %v3970
        %v3972 = vpop.xlane.xlu0 %3971
        %v3973 = vadd.f32 %v3782, %v3784
        %3974 = vadd.xlane.f32.xlu0 %v3973
        %v3975 = vpop.xlane.xlu0 %3974
        %v3976 = vadd.f32 %v3786, %v3788
        %3977 = vadd.xlane.f32.xlu0 %v3976
        %v3978 = vpop.xlane.xlu0 %3977
        %v3979 = vadd.f32 %v3790, %v3792
        %3980 = vadd.xlane.f32.xlu0 %v3979
        %v3981 = vpop.xlane.xlu0 %3980
        %v3982 = vadd.f32 %v3794, %v3796
        %3983 = vadd.xlane.f32.xlu0 %v3982
        %v3984 = vpop.xlane.xlu0 %3983
        %v3985 = vadd.f32 %v3798, %v3800
        %3986 = vadd.xlane.f32.xlu0 %v3985
        %v3987 = vpop.xlane.xlu0 %3986
        %v3988 = vadd.f32 %v3802, %v3804
        %3989 = vadd.xlane.f32.xlu0 %v3988
        %v3990 = vpop.xlane.xlu0 %3989
        %v3991 = vadd.f32 %v3806, %v3808
        %3992 = vadd.xlane.f32.xlu0 %v3991
        %v3993 = vpop.xlane.xlu0 %3992
        %v3994 = vadd.f32 %v3810, %v3812
        %3995 = vadd.xlane.f32.xlu0 %v3994
        %v3996 = vpop.xlane.xlu0 %3995
        %v3997 = vadd.f32 %v3814, %v3816
        %3998 = vadd.xlane.f32.xlu0 %v3997
        %v3999 = vpop.xlane.xlu0 %3998
        %v4000 = vadd.f32 %v3818, %v3820
        %4001 = vadd.xlane.f32.xlu0 %v4000
        %v4002 = vpop.xlane.xlu0 %4001
        %v4003 = vadd.f32 %v3822, %v3824
        %4004 = vadd.xlane.f32.xlu0 %v4003
        %v4005 = vpop.xlane.xlu0 %4004
        %v4006 = vadd.f32 %v3826, %v3828
        %4007 = vadd.xlane.f32.xlu0 %v4006
        %v4008 = vpop.xlane.xlu0 %4007
        %v4009 = vadd.f32 %v3830, %v3832
        %4010 = vadd.xlane.f32.xlu0 %v4009
        %v4011 = vpop.xlane.xlu0 %4010
        %v4012 = vadd.f32 %v3834, %v3836
        %4013 = vadd.xlane.f32.xlu0 %v4012
        %v4014 = vpop.xlane.xlu0 %4013
        %v4015 = vadd.f32 %v3838, %v3840
        %4016 = vadd.xlane.f32.xlu0 %v4015
        %v4017 = vpop.xlane.xlu0 %4016
        %v4018 = vadd.f32 %v3842, %v3844
        %4019 = vadd.xlane.f32.xlu0 %v4018
        %v4020 = vpop.xlane.xlu0 %4019
        %v4021 = vadd.f32 %v3846, %v3848
        %4022 = vadd.xlane.f32.xlu0 %v4021
        %v4023 = vpop.xlane.xlu0 %4022
        %v4024 = vadd.f32 %v3850, %v3852
        %4025 = vadd.xlane.f32.xlu0 %v4024
        %v4026 = vpop.xlane.xlu0 %4025
        %v4027 = vadd.f32 %v3854, %v3856
        %4028 = vadd.xlane.f32.xlu0 %v4027
        %v4029 = vpop.xlane.xlu0 %4028
        %v4030 = vadd.f32 %v3858, %v3860
        %4031 = vadd.xlane.f32.xlu0 %v4030
        %v4032 = vpop.xlane.xlu0 %4031
        %v4033 = vadd.f32 %v3862, %v3864
        %4034 = vadd.xlane.f32.xlu0 %v4033
        %v4035 = vpop.xlane.xlu0 %4034
        %v4036 = vadd.f32 %v3866, %v3868
        %4037 = vadd.xlane.f32.xlu0 %v4036
        %v4038 = vpop.xlane.xlu0 %4037
        %v4039 = vadd.f32 %v3870, %v3872
        %4040 = vadd.xlane.f32.xlu0 %v4039
        %v4041 = vpop.xlane.xlu0 %4040
        %v4042 = vadd.f32 %v3874, %v3876
        %4043 = vadd.xlane.f32.xlu0 %v4042
        %v4044 = vpop.xlane.xlu0 %4043
        %v4045 = vadd.f32 %v3878, %v3880
        %4046 = vadd.xlane.f32.xlu0 %v4045
        %v4047 = vpop.xlane.xlu0 %4046
        %v4048 = vadd.f32 %v3882, %v3884
        %4049 = vadd.xlane.f32.xlu0 %v4048
        %v4050 = vpop.xlane.xlu0 %4049
        %v4051 = vadd.f32 %v3886, %v3888
        %4052 = vadd.xlane.f32.xlu0 %v4051
        %v4053 = vpop.xlane.xlu0 %4052
        %v4054 = vadd.f32 %v3890, %v3892
        %4055 = vadd.xlane.f32.xlu0 %v4054
        %v4056 = vpop.xlane.xlu0 %4055
        %v4057 = vadd.f32 %v3894, %v3896
        %4058 = vadd.xlane.f32.xlu0 %v4057
        %v4059 = vpop.xlane.xlu0 %4058
        %v4060 = vadd.f32 %v3898, %v3900
        %4061 = vadd.xlane.f32.xlu0 %v4060
        %v4062 = vpop.xlane.xlu0 %4061
        %v4063 = vadd.f32 %v3902, %v3904
        %4064 = vadd.xlane.f32.xlu0 %v4063
        %v4065 = vpop.xlane.xlu0 %4064
        %v4066 = vadd.f32 %v3938, %v3972
        %v4067 = vadd.f32 %v3939, %v3975
        %v4068 = vadd.f32 %v3940, %v3978
        %v4069 = vadd.f32 %v3941, %v3981
        %v4070 = vadd.f32 %v3942, %v3984
        %v4071 = vadd.f32 %v3943, %v3987
        %v4072 = vadd.f32 %v3944, %v3990
        %v4073 = vadd.f32 %v3945, %v3993
        %v4074 = vadd.f32 %v3946, %v3996
        %v4075 = vadd.f32 %v3947, %v3999
        %v4076 = vadd.f32 %v3948, %v4002
        %v4077 = vadd.f32 %v3949, %v4005
        %v4078 = vadd.f32 %v3950, %v4008
        %v4079 = vadd.f32 %v3951, %v4011
        %v4080 = vadd.f32 %v3952, %v4014
        %v4081 = vadd.f32 %v3953, %v4017
        %v4082 = vadd.f32 %v3954, %v4020
        %v4083 = vadd.f32 %v3955, %v4023
        %v4084 = vadd.f32 %v3956, %v4026
        %v4085 = vadd.f32 %v3957, %v4029
        %v4086 = vadd.f32 %v3958, %v4032
        %v4087 = vadd.f32 %v3959, %v4035
        %v4088 = vadd.f32 %v3960, %v4038
        %v4089 = vadd.f32 %v3961, %v4041
        %v4090 = vadd.f32 %v3962, %v4044
        %v4091 = vadd.f32 %v3963, %v4047
        %v4092 = vadd.f32 %v3964, %v4050
        %v4093 = vadd.f32 %v3965, %v4053
        %v4094 = vadd.f32 %v3966, %v4056
        %v4095 = vadd.f32 %v3967, %v4059
        %v4096 = vadd.f32 %v3968, %v4062
        %v4097 = vadd.f32 %v3969, %v4065
        %4098 = vst.msk [vmem:[%s3905] sm:$0xff] %vm2316, %v4066
        %4099 = vst.msk [vmem:[%s3905 + $0x8] sm:$0xff] %vm2316, %v4067
        %4100 = vst.msk [vmem:[%s3905 + $0x10] sm:$0xff] %vm2316, %v4068
        %4101 = vst.msk [vmem:[%s3905 + $0x18] sm:$0xff] %vm2316, %v4069
        %4102 = vst.msk [vmem:[%s3905 + $0x20] sm:$0xff] %vm2316, %v4070
        %4103 = vst.msk [vmem:[%s3905 + $0x28] sm:$0xff] %vm2316, %v4071
        %4104 = vst.msk [vmem:[%s3905 + $0x30] sm:$0xff] %vm2316, %v4072
        %4105 = vst.msk [vmem:[%s3905 + $0x38] sm:$0xff] %vm2316, %v4073
        %4106 = vst.msk [vmem:[%s3905 + $0x40] sm:$0xff] %vm2316, %v4074
        %4107 = vst.msk [vmem:[%s3905 + $0x48] sm:$0xff] %vm2316, %v4075
        %4108 = vst.msk [vmem:[%s3905 + $0x50] sm:$0xff] %vm2316, %v4076
        %4109 = vst.msk [vmem:[%s3905 + $0x58] sm:$0xff] %vm2316, %v4077
        %4110 = vst.msk [vmem:[%s3905 + $0x60] sm:$0xff] %vm2316, %v4078
        %4111 = vst.msk [vmem:[%s3905 + $0x68] sm:$0xff] %vm2316, %v4079
        %4112 = vst.msk [vmem:[%s3905 + $0x70] sm:$0xff] %vm2316, %v4080
        %4113 = vst.msk [vmem:[%s3905 + $0x78] sm:$0xff] %vm2316, %v4081
        %4114 = vst.msk [vmem:[%s3905 + $0x80] sm:$0xff] %vm2316, %v4082
        %4115 = vst.msk [vmem:[%s3905 + $0x88] sm:$0xff] %vm2316, %v4083
        %4116 = vst.msk [vmem:[%s3905 + $0x90] sm:$0xff] %vm2316, %v4084
        %4117 = vst.msk [vmem:[%s3905 + $0x98] sm:$0xff] %vm2316, %v4085
        %4118 = vst.msk [vmem:[%s3905 + $0xa0] sm:$0xff] %vm2316, %v4086
        %4119 = vst.msk [vmem:[%s3905 + $0xa8] sm:$0xff] %vm2316, %v4087
        %4120 = vst.msk [vmem:[%s3905 + $0xb0] sm:$0xff] %vm2316, %v4088
        %4121 = vst.msk [vmem:[%s3905 + $0xb8] sm:$0xff] %vm2316, %v4089
        %4122 = vst.msk [vmem:[%s3905 + $0xc0] sm:$0xff] %vm2316, %v4090
        %4123 = vst.msk [vmem:[%s3905 + $0xc8] sm:$0xff] %vm2316, %v4091
        %4124 = vst.msk [vmem:[%s3905 + $0xd0] sm:$0xff] %vm2316, %v4092
        %4125 = vst.msk [vmem:[%s3905 + $0xd8] sm:$0xff] %vm2316, %v4093
        %4126 = vst.msk [vmem:[%s3905 + $0xe0] sm:$0xff] %vm2316, %v4094
        %4127 = vst.msk [vmem:[%s3905 + $0xe8] sm:$0xff] %vm2316, %v4095
        %4128 = vst.msk [vmem:[%s3905 + $0xf0] sm:$0xff] %vm2316, %v4096
        %4129 = vst.msk [vmem:[%s3905 + $0xf8] sm:$0xff] %vm2316, %v4097
        %v4130 = vpack.c.bf16 %v3782, %v3778
        %v4131 = vpack.c.bf16 %v3784, %v3780
        %v4132 = vpack.c.bf16 %v3790, %v3786
        %v4133 = vpack.c.bf16 %v3792, %v3788
        %v4134 = vpack.c.bf16 %v3798, %v3794
        %v4135 = vpack.c.bf16 %v3800, %v3796
        %v4136 = vpack.c.bf16 %v3806, %v3802
        %v4137 = vpack.c.bf16 %v3808, %v3804
        %v4138 = vpack.c.bf16 %v3814, %v3810
        %v4139 = vpack.c.bf16 %v3816, %v3812
        %v4140 = vpack.c.bf16 %v3822, %v3818
        %v4141 = vpack.c.bf16 %v3824, %v3820
        %v4142 = vpack.c.bf16 %v3830, %v3826
        %v4143 = vpack.c.bf16 %v3832, %v3828
        %v4144 = vpack.c.bf16 %v3838, %v3834
        %v4145 = vpack.c.bf16 %v3840, %v3836
        %v4146 = vpack.c.bf16 %v3846, %v3842
        %v4147 = vpack.c.bf16 %v3848, %v3844
        %v4148 = vpack.c.bf16 %v3854, %v3850
        %v4149 = vpack.c.bf16 %v3856, %v3852
        %v4150 = vpack.c.bf16 %v3862, %v3858
        %v4151 = vpack.c.bf16 %v3864, %v3860
        %v4152 = vpack.c.bf16 %v3870, %v3866
        %v4153 = vpack.c.bf16 %v3872, %v3868
        %v4154 = vpack.c.bf16 %v3878, %v3874
        %v4155 = vpack.c.bf16 %v3880, %v3876
        %v4156 = vpack.c.bf16 %v3886, %v3882
        %v4157 = vpack.c.bf16 %v3888, %v3884
        %v4158 = vpack.c.bf16 %v3894, %v3890
        %v4159 = vpack.c.bf16 %v3896, %v3892
        %v4160 = vpack.c.bf16 %v3902, %v3898
        %v4161 = vpack.c.bf16 %v3904, %v3900
        %4162 = vrot.lane.b32.xlu0 %v2445, 96
        %v4163 = vpop.permute.xlu0 %4162
        %4164 = vrot.lane.b32.xlu0 %v2446, 96
        %v4165 = vpop.permute.xlu0 %4164
        %4166 = vrot.lane.b32.xlu0 %v2447, 96
        %v4167 = vpop.permute.xlu0 %4166
        %4168 = vrot.lane.b32.xlu0 %v2448, 96
        %v4169 = vpop.permute.xlu0 %4168
        %4170 = vrot.lane.b32.xlu0 %v2449, 96
        %v4171 = vpop.permute.xlu0 %4170
        %4172 = vrot.lane.b32.xlu0 %v2450, 96
        %v4173 = vpop.permute.xlu0 %4172
        %4174 = vrot.lane.b32.xlu0 %v2451, 96
        %v4175 = vpop.permute.xlu0 %4174
        %4176 = vrot.lane.b32.xlu0 %v2452, 96
        %v4177 = vpop.permute.xlu0 %4176
        %4178 = vrot.lane.b32.xlu0 %v2453, 96
        %v4179 = vpop.permute.xlu0 %4178
        %4180 = vrot.lane.b32.xlu0 %v2454, 96
        %v4181 = vpop.permute.xlu0 %4180
        %4182 = vrot.lane.b32.xlu0 %v2455, 96
        %v4183 = vpop.permute.xlu0 %4182
        %4184 = vrot.lane.b32.xlu0 %v2456, 96
        %v4185 = vpop.permute.xlu0 %4184
        %4186 = vrot.lane.b32.xlu0 %v2457, 96
        %v4187 = vpop.permute.xlu0 %4186
        %4188 = vrot.lane.b32.xlu0 %v2458, 96
        %v4189 = vpop.permute.xlu0 %4188
        %4190 = vrot.lane.b32.xlu0 %v2459, 96
        %v4191 = vpop.permute.xlu0 %4190
        %4192 = vrot.lane.b32.xlu0 %v2460, 96
        %v4193 = vpop.permute.xlu0 %4192
        %4210 = vmatprep.subr.bf16.mxu0 0
        %4211 = vmatpush1.bf16.msra.mxu0 %v4163
        %4212 = vmatprep.subr.bf16.mxu0 0
        %4213 = vmatpush1.bf16.msra.mxu0 %v4165
        %4214 = vmatprep.subr.bf16.mxu0 0
        %4215 = vmatpush1.bf16.msra.mxu0 %v4167
        %4216 = vmatprep.subr.bf16.mxu0 0
        %4217 = vmatpush1.bf16.msra.mxu0 %v4169
        %4218 = vmatprep.subr.bf16.mxu0 0
        %4219 = vmatpush1.bf16.msra.mxu0 %v4171
        %4220 = vmatprep.subr.bf16.mxu0 0
        %4221 = vmatpush1.bf16.msra.mxu0 %v4173
        %4222 = vmatprep.subr.bf16.mxu0 0
        %4223 = vmatpush1.bf16.msra.mxu0 %v4175
        %4224 = vmatprep.subr.bf16.mxu0 0
        %4225 = vmatpush1.bf16.msra.mxu0 %v4177
        %4226 = vmatprep.subr.bf16.mxu0 0
        %4227 = vmatpush1.bf16.msra.mxu0 %v4179
        %4228 = vmatprep.subr.bf16.mxu0 0
        %4229 = vmatpush1.bf16.msra.mxu0 %v4181
        %4230 = vmatprep.subr.bf16.mxu0 0
        %4231 = vmatpush1.bf16.msra.mxu0 %v4183
        %4232 = vmatprep.subr.bf16.mxu0 0
        %4233 = vmatpush1.bf16.msra.mxu0 %v4185
        %4234 = vmatprep.subr.bf16.mxu0 0
        %4235 = vmatpush1.bf16.msra.mxu0 %v4187
        %4236 = vmatprep.subr.bf16.mxu0 0
        %4237 = vmatpush1.bf16.msra.mxu0 %v4189
        %4238 = vmatprep.subr.bf16.mxu0 0
        %4239 = vmatpush1.bf16.msra.mxu0 %v4191
        %4240 = vmatprep.subr.bf16.mxu0 0
        %4241 = vmatpush1.bf16.msra.mxu0 %v4193
        %4242 = vmatprep.mubr.bf16.mxu0 %v4131
        %4243 = vmatmul.mubr.bf16.gmra.mrb[0].mxu0 %v4130
        %v4244 = vpop.f32.mrb[0].mxu0
        %v4245 = vadd.f32 0.0, %v4244
        %v4246 = vpop.f32.mrb[0].mxu0
        %v4247 = vpop.f32.mrb[0].mxu0
        %v4248 = vadd.f32 0.0, %v4247
        %v4249 = vpop.f32.mrb[0].mxu0
        %4250 = vmatprep.mubr.bf16.mxu0 %v4133
        %4251 = vmatmul.mubr.bf16.gmra.mrb[0].mxu0 %v4132
        %v4252 = vpop.f32.mrb[0].mxu0
        %v4253 = vadd.f32 0.0, %v4252
        %v4254 = vpop.f32.mrb[0].mxu0
        %v4255 = vpop.f32.mrb[0].mxu0
        %v4256 = vadd.f32 0.0, %v4255
        %v4257 = vpop.f32.mrb[0].mxu0
        %4258 = vmatprep.mubr.bf16.mxu0 %v4135
        %4259 = vmatmul.mubr.bf16.gmra.mrb[0].mxu0 %v4134
        %v4260 = vpop.f32.mrb[0].mxu0
        %v4261 = vadd.f32 0.0, %v4260
        %v4262 = vpop.f32.mrb[0].mxu0
        %v4263 = vpop.f32.mrb[0].mxu0
        %v4264 = vadd.f32 0.0, %v4263
        %v4265 = vpop.f32.mrb[0].mxu0
        %4266 = vmatprep.mubr.bf16.mxu0 %v4137
        %4267 = vmatmul.mubr.bf16.gmra.mrb[0].mxu0 %v4136
        %v4268 = vpop.f32.mrb[0].mxu0
        %v4269 = vadd.f32 0.0, %v4268
        %v4270 = vpop.f32.mrb[0].mxu0
        %v4271 = vpop.f32.mrb[0].mxu0
        %v4272 = vadd.f32 0.0, %v4271
        %v4273 = vpop.f32.mrb[0].mxu0
        %4274 = vmatprep.mubr.bf16.mxu0 %v4139
        %4275 = vmatmul.mubr.bf16.gmra.mrb[0].mxu0 %v4138
        %v4276 = vpop.f32.mrb[0].mxu0
        %v4277 = vadd.f32 0.0, %v4276
        %v4278 = vpop.f32.mrb[0].mxu0
        %v4279 = vpop.f32.mrb[0].mxu0
        %v4280 = vadd.f32 0.0, %v4279
        %v4281 = vpop.f32.mrb[0].mxu0
        %4282 = vmatprep.mubr.bf16.mxu0 %v4141
        %4283 = vmatmul.mubr.bf16.gmra.mrb[0].mxu0 %v4140
        %v4284 = vpop.f32.mrb[0].mxu0
        %v4285 = vadd.f32 0.0, %v4284
        %v4286 = vpop.f32.mrb[0].mxu0
        %v4287 = vpop.f32.mrb[0].mxu0
        %v4288 = vadd.f32 0.0, %v4287
        %v4289 = vpop.f32.mrb[0].mxu0
        %4290 = vmatprep.mubr.bf16.mxu0 %v4143
        %4291 = vmatmul.mubr.bf16.gmra.mrb[0].mxu0 %v4142
        %v4292 = vpop.f32.mrb[0].mxu0
        %v4293 = vadd.f32 0.0, %v4292
        %v4294 = vpop.f32.mrb[0].mxu0
        %v4295 = vpop.f32.mrb[0].mxu0
        %v4296 = vadd.f32 0.0, %v4295
        %v4297 = vpop.f32.mrb[0].mxu0
        %4298 = vmatprep.mubr.bf16.mxu0 %v4145
        %4299 = vmatmul.mubr.bf16.gmra.mrb[0].mxu0 %v4144
        %v4300 = vpop.f32.mrb[0].mxu0
        %v4301 = vadd.f32 0.0, %v4300
        %v4302 = vpop.f32.mrb[0].mxu0
        %v4303 = vpop.f32.mrb[0].mxu0
        %v4304 = vadd.f32 0.0, %v4303
        %v4305 = vpop.f32.mrb[0].mxu0
        %4306 = vmatprep.mubr.bf16.mxu0 %v4147
        %4307 = vmatmul.mubr.bf16.gmra.mrb[0].mxu0 %v4146
        %v4308 = vpop.f32.mrb[0].mxu0
        %v4309 = vadd.f32 0.0, %v4308
        %v4310 = vpop.f32.mrb[0].mxu0
        %v4311 = vpop.f32.mrb[0].mxu0
        %v4312 = vadd.f32 0.0, %v4311
        %v4313 = vpop.f32.mrb[0].mxu0
        %4314 = vmatprep.mubr.bf16.mxu0 %v4149
        %4315 = vmatmul.mubr.bf16.gmra.mrb[0].mxu0 %v4148
        %v4316 = vpop.f32.mrb[0].mxu0
        %v4317 = vadd.f32 0.0, %v4316
        %v4318 = vpop.f32.mrb[0].mxu0
        %v4319 = vpop.f32.mrb[0].mxu0
        %v4320 = vadd.f32 0.0, %v4319
        %v4321 = vpop.f32.mrb[0].mxu0
        %4322 = vmatprep.mubr.bf16.mxu0 %v4151
        %4323 = vmatmul.mubr.bf16.gmra.mrb[0].mxu0 %v4150
        %v4324 = vpop.f32.mrb[0].mxu0
        %v4325 = vadd.f32 0.0, %v4324
        %v4326 = vpop.f32.mrb[0].mxu0
        %v4327 = vpop.f32.mrb[0].mxu0
        %v4328 = vadd.f32 0.0, %v4327
        %v4329 = vpop.f32.mrb[0].mxu0
        %4330 = vmatprep.mubr.bf16.mxu0 %v4153
        %4331 = vmatmul.mubr.bf16.gmra.mrb[0].mxu0 %v4152
        %v4332 = vpop.f32.mrb[0].mxu0
        %v4333 = vadd.f32 0.0, %v4332
        %v4334 = vpop.f32.mrb[0].mxu0
        %v4335 = vpop.f32.mrb[0].mxu0
        %v4336 = vadd.f32 0.0, %v4335
        %v4337 = vpop.f32.mrb[0].mxu0
        %4338 = vmatprep.mubr.bf16.mxu0 %v4155
        %4339 = vmatmul.mubr.bf16.gmra.mrb[0].mxu0 %v4154
        %v4340 = vpop.f32.mrb[0].mxu0
        %v4341 = vadd.f32 0.0, %v4340
        %v4342 = vpop.f32.mrb[0].mxu0
        %v4343 = vpop.f32.mrb[0].mxu0
        %v4344 = vadd.f32 0.0, %v4343
        %v4345 = vpop.f32.mrb[0].mxu0
        %4346 = vmatprep.mubr.bf16.mxu0 %v4157
        %4347 = vmatmul.mubr.bf16.gmra.mrb[0].mxu0 %v4156
        %v4348 = vpop.f32.mrb[0].mxu0
        %v4349 = vadd.f32 0.0, %v4348
        %v4350 = vpop.f32.mrb[0].mxu0
        %v4351 = vpop.f32.mrb[0].mxu0
        %v4352 = vadd.f32 0.0, %v4351
        %v4353 = vpop.f32.mrb[0].mxu0
        %4354 = vmatprep.mubr.bf16.mxu0 %v4159
        %4355 = vmatmul.mubr.bf16.gmra.mrb[0].mxu0 %v4158
        %v4356 = vpop.f32.mrb[0].mxu0
        %v4357 = vadd.f32 0.0, %v4356
        %v4358 = vpop.f32.mrb[0].mxu0
        %v4359 = vpop.f32.mrb[0].mxu0
        %v4360 = vadd.f32 0.0, %v4359
        %v4361 = vpop.f32.mrb[0].mxu0
        %4362 = vmatprep.mubr.bf16.mxu0 %v4161
        %4363 = vmatmul.mubr.bf16.gmra.mrb[0].mxu0 %v4160
        %v4364 = vpop.f32.mrb[0].mxu0
        %v4365 = vadd.f32 0.0, %v4364
        %v4366 = vpop.f32.mrb[0].mxu0
        %v4367 = vpop.f32.mrb[0].mxu0
        %v4368 = vadd.f32 0.0, %v4367
        %v4369 = vpop.f32.mrb[0].mxu0
        %4370 = vdwg.mxu0
        %s4371 = scalar_lea.vmem [#allocation5], 256
        %v4372 = vld [vmem:[%s4371] sm:$0xff]
        %v4373 = vld [vmem:[%s4371 + $0x8] sm:$0xff]
        %v4374 = vld [vmem:[%s4371 + $0x10] sm:$0xff]
        %v4375 = vld [vmem:[%s4371 + $0x18] sm:$0xff]
        %v4376 = vld [vmem:[%s4371 + $0x20] sm:$0xff]
        %v4377 = vld [vmem:[%s4371 + $0x28] sm:$0xff]
        %v4378 = vld [vmem:[%s4371 + $0x30] sm:$0xff]
        %v4379 = vld [vmem:[%s4371 + $0x38] sm:$0xff]
        %v4380 = vld [vmem:[%s4371 + $0x40] sm:$0xff]
        %v4381 = vld [vmem:[%s4371 + $0x48] sm:$0xff]
        %v4382 = vld [vmem:[%s4371 + $0x50] sm:$0xff]
        %v4383 = vld [vmem:[%s4371 + $0x58] sm:$0xff]
        %v4384 = vld [vmem:[%s4371 + $0x60] sm:$0xff]
        %v4385 = vld [vmem:[%s4371 + $0x68] sm:$0xff]
        %v4386 = vld [vmem:[%s4371 + $0x70] sm:$0xff]
        %v4387 = vld [vmem:[%s4371 + $0x78] sm:$0xff]
        %v4388 = vld [vmem:[%s4371 + $0x80] sm:$0xff]
        %v4389 = vld [vmem:[%s4371 + $0x88] sm:$0xff]
        %v4390 = vld [vmem:[%s4371 + $0x90] sm:$0xff]
        %v4391 = vld [vmem:[%s4371 + $0x98] sm:$0xff]
        %v4392 = vld [vmem:[%s4371 + $0xa0] sm:$0xff]
        %v4393 = vld [vmem:[%s4371 + $0xa8] sm:$0xff]
        %v4394 = vld [vmem:[%s4371 + $0xb0] sm:$0xff]
        %v4395 = vld [vmem:[%s4371 + $0xb8] sm:$0xff]
        %v4396 = vld [vmem:[%s4371 + $0xc0] sm:$0xff]
        %v4397 = vld [vmem:[%s4371 + $0xc8] sm:$0xff]
        %v4398 = vld [vmem:[%s4371 + $0xd0] sm:$0xff]
        %v4399 = vld [vmem:[%s4371 + $0xd8] sm:$0xff]
        %v4400 = vld [vmem:[%s4371 + $0xe0] sm:$0xff]
        %v4401 = vld [vmem:[%s4371 + $0xe8] sm:$0xff]
        %v4402 = vld [vmem:[%s4371 + $0xf0] sm:$0xff]
        %v4403 = vld [vmem:[%s4371 + $0xf8] sm:$0xff]
        %4405 = vset.pattern.permute.xlu0 0
        %4406 = vperm.xlu0 %4405, %v3490
        %v4407 = vpop.permute.xlu0 %4406
        %4410 = vset.pattern.permute.xlu0 0
        %4411 = vperm.xlu0 %4410, %v3492
        %v4412 = vpop.permute.xlu0 %4411
        %4415 = vset.pattern.permute.xlu0 0
        %4416 = vperm.xlu0 %4415, %v3494
        %v4417 = vpop.permute.xlu0 %4416
        %4420 = vset.pattern.permute.xlu0 0
        %4421 = vperm.xlu0 %4420, %v3496
        %v4422 = vpop.permute.xlu0 %4421
        %4425 = vset.pattern.permute.xlu0 0
        %4426 = vperm.xlu0 %4425, %v3498
        %v4427 = vpop.permute.xlu0 %4426
        %4430 = vset.pattern.permute.xlu0 0
        %4431 = vperm.xlu0 %4430, %v3500
        %v4432 = vpop.permute.xlu0 %4431
        %4435 = vset.pattern.permute.xlu0 0
        %4436 = vperm.xlu0 %4435, %v3502
        %v4437 = vpop.permute.xlu0 %4436
        %4440 = vset.pattern.permute.xlu0 0
        %4441 = vperm.xlu0 %4440, %v3504
        %v4442 = vpop.permute.xlu0 %4441
        %4445 = vset.pattern.permute.xlu0 0
        %4446 = vperm.xlu0 %4445, %v3506
        %v4447 = vpop.permute.xlu0 %4446
        %4450 = vset.pattern.permute.xlu0 0
        %4451 = vperm.xlu0 %4450, %v3508
        %v4452 = vpop.permute.xlu0 %4451
        %4455 = vset.pattern.permute.xlu0 0
        %4456 = vperm.xlu0 %4455, %v3510
        %v4457 = vpop.permute.xlu0 %4456
        %4460 = vset.pattern.permute.xlu0 0
        %4461 = vperm.xlu0 %4460, %v3512
        %v4462 = vpop.permute.xlu0 %4461
        %4465 = vset.pattern.permute.xlu0 0
        %4466 = vperm.xlu0 %4465, %v3514
        %v4467 = vpop.permute.xlu0 %4466
        %4470 = vset.pattern.permute.xlu0 0
        %4471 = vperm.xlu0 %4470, %v3516
        %v4472 = vpop.permute.xlu0 %4471
        %4475 = vset.pattern.permute.xlu0 0
        %4476 = vperm.xlu0 %4475, %v3518
        %v4477 = vpop.permute.xlu0 %4476
        %4480 = vset.pattern.permute.xlu0 0
        %4481 = vperm.xlu0 %4480, %v3520
        %v4482 = vpop.permute.xlu0 %4481
        %4485 = vset.pattern.permute.xlu0 0
        %4486 = vperm.xlu0 %4485, %v3522
        %v4487 = vpop.permute.xlu0 %4486
        %4490 = vset.pattern.permute.xlu0 0
        %4491 = vperm.xlu0 %4490, %v3524
        %v4492 = vpop.permute.xlu0 %4491
        %4495 = vset.pattern.permute.xlu0 0
        %4496 = vperm.xlu0 %4495, %v3526
        %v4497 = vpop.permute.xlu0 %4496
        %4500 = vset.pattern.permute.xlu0 0
        %4501 = vperm.xlu0 %4500, %v3528
        %v4502 = vpop.permute.xlu0 %4501
        %4505 = vset.pattern.permute.xlu0 0
        %4506 = vperm.xlu0 %4505, %v3530
        %v4507 = vpop.permute.xlu0 %4506
        %4510 = vset.pattern.permute.xlu0 0
        %4511 = vperm.xlu0 %4510, %v3532
        %v4512 = vpop.permute.xlu0 %4511
        %4515 = vset.pattern.permute.xlu0 0
        %4516 = vperm.xlu0 %4515, %v3534
        %v4517 = vpop.permute.xlu0 %4516
        %4520 = vset.pattern.permute.xlu0 0
        %4521 = vperm.xlu0 %4520, %v3536
        %v4522 = vpop.permute.xlu0 %4521
        %4525 = vset.pattern.permute.xlu0 0
        %4526 = vperm.xlu0 %4525, %v3538
        %v4527 = vpop.permute.xlu0 %4526
        %4530 = vset.pattern.permute.xlu0 0
        %4531 = vperm.xlu0 %4530, %v3540
        %v4532 = vpop.permute.xlu0 %4531
        %4535 = vset.pattern.permute.xlu0 0
        %4536 = vperm.xlu0 %4535, %v3542
        %v4537 = vpop.permute.xlu0 %4536
        %4540 = vset.pattern.permute.xlu0 0
        %4541 = vperm.xlu0 %4540, %v3544
        %v4542 = vpop.permute.xlu0 %4541
        %4545 = vset.pattern.permute.xlu0 0
        %4546 = vperm.xlu0 %4545, %v3546
        %v4547 = vpop.permute.xlu0 %4546
        %4550 = vset.pattern.permute.xlu0 0
        %4551 = vperm.xlu0 %4550, %v3548
        %v4552 = vpop.permute.xlu0 %4551
        %4555 = vset.pattern.permute.xlu0 0
        %4556 = vperm.xlu0 %4555, %v3550
        %v4557 = vpop.permute.xlu0 %4556
        %4560 = vset.pattern.permute.xlu0 0
        %4561 = vperm.xlu0 %4560, %v3552
        %v4562 = vpop.permute.xlu0 %4561
        %v4564 = vmul.f32 %v4407, %v4372
        %v4565 = vmul.f32 %v4412, %v4373
        %v4566 = vmul.f32 %v4417, %v4374
        %v4567 = vmul.f32 %v4422, %v4375
        %v4568 = vmul.f32 %v4427, %v4376
        %v4569 = vmul.f32 %v4432, %v4377
        %v4570 = vmul.f32 %v4437, %v4378
        %v4571 = vmul.f32 %v4442, %v4379
        %v4572 = vmul.f32 %v4447, %v4380
        %v4573 = vmul.f32 %v4452, %v4381
        %v4574 = vmul.f32 %v4457, %v4382
        %v4575 = vmul.f32 %v4462, %v4383
        %v4576 = vmul.f32 %v4467, %v4384
        %v4577 = vmul.f32 %v4472, %v4385
        %v4578 = vmul.f32 %v4477, %v4386
        %v4579 = vmul.f32 %v4482, %v4387
        %v4580 = vmul.f32 %v4487, %v4388
        %v4581 = vmul.f32 %v4492, %v4389
        %v4582 = vmul.f32 %v4497, %v4390
        %v4583 = vmul.f32 %v4502, %v4391
        %v4584 = vmul.f32 %v4507, %v4392
        %v4585 = vmul.f32 %v4512, %v4393
        %v4586 = vmul.f32 %v4517, %v4394
        %v4587 = vmul.f32 %v4522, %v4395
        %v4588 = vmul.f32 %v4527, %v4396
        %v4589 = vmul.f32 %v4532, %v4397
        %v4590 = vmul.f32 %v4537, %v4398
        %v4591 = vmul.f32 %v4542, %v4399
        %v4592 = vmul.f32 %v4547, %v4400
        %v4593 = vmul.f32 %v4552, %v4401
        %v4594 = vmul.f32 %v4557, %v4402
        %v4595 = vmul.f32 %v4562, %v4403
        %v4596 = vadd.f32 %v4564, %v4245
        %v4597 = vadd.f32 %v4565, %v4248
        %v4598 = vadd.f32 %v4566, %v4253
        %v4599 = vadd.f32 %v4567, %v4256
        %v4600 = vadd.f32 %v4568, %v4261
        %v4601 = vadd.f32 %v4569, %v4264
        %v4602 = vadd.f32 %v4570, %v4269
        %v4603 = vadd.f32 %v4571, %v4272
        %v4604 = vadd.f32 %v4572, %v4277
        %v4605 = vadd.f32 %v4573, %v4280
        %v4606 = vadd.f32 %v4574, %v4285
        %v4607 = vadd.f32 %v4575, %v4288
        %v4608 = vadd.f32 %v4576, %v4293
        %v4609 = vadd.f32 %v4577, %v4296
        %v4610 = vadd.f32 %v4578, %v4301
        %v4611 = vadd.f32 %v4579, %v4304
        %v4612 = vadd.f32 %v4580, %v4309
        %v4613 = vadd.f32 %v4581, %v4312
        %v4614 = vadd.f32 %v4582, %v4317
        %v4615 = vadd.f32 %v4583, %v4320
        %v4616 = vadd.f32 %v4584, %v4325
        %v4617 = vadd.f32 %v4585, %v4328
        %v4618 = vadd.f32 %v4586, %v4333
        %v4619 = vadd.f32 %v4587, %v4336
        %v4620 = vadd.f32 %v4588, %v4341
        %v4621 = vadd.f32 %v4589, %v4344
        %v4622 = vadd.f32 %v4590, %v4349
        %v4623 = vadd.f32 %v4591, %v4352
        %v4624 = vadd.f32 %v4592, %v4357
        %v4625 = vadd.f32 %v4593, %v4360
        %v4626 = vadd.f32 %v4594, %v4365
        %v4627 = vadd.f32 %v4595, %v4368
        %4628 = vst.msk [vmem:[%s4371] sm:$0xff] %vm1226, %v4596
        %4629 = vst.msk [vmem:[%s4371 + $0x8] sm:$0xff] %vm1226, %v4597
        %4630 = vst.msk [vmem:[%s4371 + $0x10] sm:$0xff] %vm1226, %v4598
        %4631 = vst.msk [vmem:[%s4371 + $0x18] sm:$0xff] %vm1226, %v4599
        %4632 = vst.msk [vmem:[%s4371 + $0x20] sm:$0xff] %vm1226, %v4600
        %4633 = vst.msk [vmem:[%s4371 + $0x28] sm:$0xff] %vm1226, %v4601
        %4634 = vst.msk [vmem:[%s4371 + $0x30] sm:$0xff] %vm1226, %v4602
        %4635 = vst.msk [vmem:[%s4371 + $0x38] sm:$0xff] %vm1226, %v4603
        %4636 = vst.msk [vmem:[%s4371 + $0x40] sm:$0xff] %vm1226, %v4604
        %4637 = vst.msk [vmem:[%s4371 + $0x48] sm:$0xff] %vm1226, %v4605
        %4638 = vst.msk [vmem:[%s4371 + $0x50] sm:$0xff] %vm1226, %v4606
        %4639 = vst.msk [vmem:[%s4371 + $0x58] sm:$0xff] %vm1226, %v4607
        %4640 = vst.msk [vmem:[%s4371 + $0x60] sm:$0xff] %vm1226, %v4608
        %4641 = vst.msk [vmem:[%s4371 + $0x68] sm:$0xff] %vm1226, %v4609
        %4642 = vst.msk [vmem:[%s4371 + $0x70] sm:$0xff] %vm1226, %v4610
        %4643 = vst.msk [vmem:[%s4371 + $0x78] sm:$0xff] %vm1226, %v4611
        %4644 = vst.msk [vmem:[%s4371 + $0x80] sm:$0xff] %vm1226, %v4612
        %4645 = vst.msk [vmem:[%s4371 + $0x88] sm:$0xff] %vm1226, %v4613
        %4646 = vst.msk [vmem:[%s4371 + $0x90] sm:$0xff] %vm1226, %v4614
        %4647 = vst.msk [vmem:[%s4371 + $0x98] sm:$0xff] %vm1226, %v4615
        %4648 = vst.msk [vmem:[%s4371 + $0xa0] sm:$0xff] %vm1226, %v4616
        %4649 = vst.msk [vmem:[%s4371 + $0xa8] sm:$0xff] %vm1226, %v4617
        %4650 = vst.msk [vmem:[%s4371 + $0xb0] sm:$0xff] %vm1226, %v4618
        %4651 = vst.msk [vmem:[%s4371 + $0xb8] sm:$0xff] %vm1226, %v4619
        %4652 = vst.msk [vmem:[%s4371 + $0xc0] sm:$0xff] %vm1226, %v4620
        %4653 = vst.msk [vmem:[%s4371 + $0xc8] sm:$0xff] %vm1226, %v4621
        %4654 = vst.msk [vmem:[%s4371 + $0xd0] sm:$0xff] %vm1226, %v4622
        %4655 = vst.msk [vmem:[%s4371 + $0xd8] sm:$0xff] %vm1226, %v4623
        %4656 = vst.msk [vmem:[%s4371 + $0xe0] sm:$0xff] %vm1226, %v4624
        %4657 = vst.msk [vmem:[%s4371 + $0xe8] sm:$0xff] %vm1226, %v4625
        %4658 = vst.msk [vmem:[%s4371 + $0xf0] sm:$0xff] %vm1226, %v4626
        %4659 = vst.msk [vmem:[%s4371 + $0xf8] sm:$0xff] %vm1226, %v4627
        %4660 = vst.msk [vmem:[%s3296] sm:$0xff] %vm2316, %v3425
        %4661 = vst.msk [vmem:[%s3296 + $0x8] sm:$0xff] %vm2316, %v3426
        %4662 = vst.msk [vmem:[%s3296 + $0x10] sm:$0xff] %vm2316, %v3427
        %4663 = vst.msk [vmem:[%s3296 + $0x18] sm:$0xff] %vm2316, %v3428
        %4664 = vst.msk [vmem:[%s3296 + $0x20] sm:$0xff] %vm2316, %v3429
        %4665 = vst.msk [vmem:[%s3296 + $0x28] sm:$0xff] %vm2316, %v3430
        %4666 = vst.msk [vmem:[%s3296 + $0x30] sm:$0xff] %vm2316, %v3431
        %4667 = vst.msk [vmem:[%s3296 + $0x38] sm:$0xff] %vm2316, %v3432
        %4668 = vst.msk [vmem:[%s3296 + $0x40] sm:$0xff] %vm2316, %v3433
        %4669 = vst.msk [vmem:[%s3296 + $0x48] sm:$0xff] %vm2316, %v3434
        %4670 = vst.msk [vmem:[%s3296 + $0x50] sm:$0xff] %vm2316, %v3435
        %4671 = vst.msk [vmem:[%s3296 + $0x58] sm:$0xff] %vm2316, %v3436
        %4672 = vst.msk [vmem:[%s3296 + $0x60] sm:$0xff] %vm2316, %v3437
        %4673 = vst.msk [vmem:[%s3296 + $0x68] sm:$0xff] %vm2316, %v3438
        %4674 = vst.msk [vmem:[%s3296 + $0x70] sm:$0xff] %vm2316, %v3439
        %4675 = vst.msk [vmem:[%s3296 + $0x78] sm:$0xff] %vm2316, %v3440
        %4676 = vst.msk [vmem:[%s3296 + $0x80] sm:$0xff] %vm2316, %v3441
        %4677 = vst.msk [vmem:[%s3296 + $0x88] sm:$0xff] %vm2316, %v3442
        %4678 = vst.msk [vmem:[%s3296 + $0x90] sm:$0xff] %vm2316, %v3443
        %4679 = vst.msk [vmem:[%s3296 + $0x98] sm:$0xff] %vm2316, %v3444
        %4680 = vst.msk [vmem:[%s3296 + $0xa0] sm:$0xff] %vm2316, %v3445
        %4681 = vst.msk [vmem:[%s3296 + $0xa8] sm:$0xff] %vm2316, %v3446
        %4682 = vst.msk [vmem:[%s3296 + $0xb0] sm:$0xff] %vm2316, %v3447
        %4683 = vst.msk [vmem:[%s3296 + $0xb8] sm:$0xff] %vm2316, %v3448
        %4684 = vst.msk [vmem:[%s3296 + $0xc0] sm:$0xff] %vm2316, %v3449
        %4685 = vst.msk [vmem:[%s3296 + $0xc8] sm:$0xff] %vm2316, %v3450
        %4686 = vst.msk [vmem:[%s3296 + $0xd0] sm:$0xff] %vm2316, %v3451
        %4687 = vst.msk [vmem:[%s3296 + $0xd8] sm:$0xff] %vm2316, %v3452
        %4688 = vst.msk [vmem:[%s3296 + $0xe0] sm:$0xff] %vm2316, %v3453
        %4689 = vst.msk [vmem:[%s3296 + $0xe8] sm:$0xff] %vm2316, %v3454
        %4690 = vst.msk [vmem:[%s3296 + $0xf0] sm:$0xff] %vm2316, %v3455
        %4691 = vst.msk [vmem:[%s3296 + $0xf8] sm:$0xff] %vm2316, %v3456
        %s4692 = scalar_lea.vmem [#allocation2], 256
        %v4693 = vld [vmem:[%s4692] sm:$0xff]
        %v4694 = vld [vmem:[%s4692 + $0x8] sm:$0xff]
        %v4695 = vld [vmem:[%s4692 + $0x10] sm:$0xff]
        %v4696 = vld [vmem:[%s4692 + $0x18] sm:$0xff]
        %v4697 = vld [vmem:[%s4692 + $0x20] sm:$0xff]
        %v4698 = vld [vmem:[%s4692 + $0x28] sm:$0xff]
        %v4699 = vld [vmem:[%s4692 + $0x30] sm:$0xff]
        %v4700 = vld [vmem:[%s4692 + $0x38] sm:$0xff]
        %v4701 = vld [vmem:[%s4692 + $0x40] sm:$0xff]
        %v4702 = vld [vmem:[%s4692 + $0x48] sm:$0xff]
        %v4703 = vld [vmem:[%s4692 + $0x50] sm:$0xff]
        %v4704 = vld [vmem:[%s4692 + $0x58] sm:$0xff]
        %v4705 = vld [vmem:[%s4692 + $0x60] sm:$0xff]
        %v4706 = vld [vmem:[%s4692 + $0x68] sm:$0xff]
        %v4707 = vld [vmem:[%s4692 + $0x70] sm:$0xff]
        %v4708 = vld [vmem:[%s4692 + $0x78] sm:$0xff]
        %4709 = vrot.lane.b32.xlu0 %v1210, 64
        %v4710 = vpop.permute.xlu0 %4709
        %4711 = vrot.lane.b32.xlu0 %v1211, 64
        %v4712 = vpop.permute.xlu0 %4711
        %4713 = vrot.lane.b32.xlu0 %v1212, 64
        %v4714 = vpop.permute.xlu0 %4713
        %4715 = vrot.lane.b32.xlu0 %v1213, 64
        %v4716 = vpop.permute.xlu0 %4715
        %4717 = vrot.lane.b32.xlu0 %v1214, 64
        %v4718 = vpop.permute.xlu0 %4717
        %4719 = vrot.lane.b32.xlu0 %v1215, 64
        %v4720 = vpop.permute.xlu0 %4719
        %4721 = vrot.lane.b32.xlu0 %v1216, 64
        %v4722 = vpop.permute.xlu0 %4721
        %4723 = vrot.lane.b32.xlu0 %v1217, 64
        %v4724 = vpop.permute.xlu0 %4723
        %4725 = vrot.lane.b32.xlu0 %v1218, 64
        %v4726 = vpop.permute.xlu0 %4725
        %4727 = vrot.lane.b32.xlu0 %v1219, 64
        %v4728 = vpop.permute.xlu0 %4727
        %4729 = vrot.lane.b32.xlu0 %v1220, 64
        %v4730 = vpop.permute.xlu0 %4729
        %4731 = vrot.lane.b32.xlu0 %v1221, 64
        %v4732 = vpop.permute.xlu0 %4731
        %4733 = vrot.lane.b32.xlu0 %v1222, 64
        %v4734 = vpop.permute.xlu0 %4733
        %4735 = vrot.lane.b32.xlu0 %v1223, 64
        %v4736 = vpop.permute.xlu0 %4735
        %4737 = vrot.lane.b32.xlu0 %v1224, 64
        %v4738 = vpop.permute.xlu0 %4737
        %4739 = vrot.lane.b32.xlu0 %v1225, 64
        %v4740 = vpop.permute.xlu0 %4739
        %v4742 = vsel %vm1226, %v4693, 0
        %v4745 = vsel %vm1226, %v4694, 0
        %v4748 = vsel %vm1226, %v4695, 0
        %v4751 = vsel %vm1226, %v4696, 0
        %v4754 = vsel %vm1226, %v4697, 0
        %v4757 = vsel %vm1226, %v4698, 0
        %v4760 = vsel %vm1226, %v4699, 0
        %v4763 = vsel %vm1226, %v4700, 0
        %v4766 = vsel %vm1226, %v4701, 0
        %v4769 = vsel %vm1226, %v4702, 0
        %v4772 = vsel %vm1226, %v4703, 0
        %v4775 = vsel %vm1226, %v4704, 0
        %v4778 = vsel %vm1226, %v4705, 0
        %v4781 = vsel %vm1226, %v4706, 0
        %v4784 = vsel %vm1226, %v4707, 0
        %v4787 = vsel %vm1226, %v4708, 0
        %v4790 = vsel %vm1226, %v4710, 0
        %v4793 = vsel %vm1226, %v4712, 0
        %v4796 = vsel %vm1226, %v4714, 0
        %v4799 = vsel %vm1226, %v4716, 0
        %v4802 = vsel %vm1226, %v4718, 0
        %v4805 = vsel %vm1226, %v4720, 0
        %v4808 = vsel %vm1226, %v4722, 0
        %v4811 = vsel %vm1226, %v4724, 0
        %v4814 = vsel %vm1226, %v4726, 0
        %v4817 = vsel %vm1226, %v4728, 0
        %v4820 = vsel %vm1226, %v4730, 0
        %v4823 = vsel %vm1226, %v4732, 0
        %v4826 = vsel %vm1226, %v4734, 0
        %v4829 = vsel %vm1226, %v4736, 0
        %v4832 = vsel %vm1226, %v4738, 0
        %v4835 = vsel %vm1226, %v4740, 0
        %4837 = vmatprep.subr.bf16.mxu0 0
        %4838 = vmatpush1.bf16.xpose.msra.mxu0 %v4790
        %4839 = vmatprep.subr.bf16.mxu0 0
        %4840 = vmatpush1.bf16.xpose.msra.mxu0 %v4793
        %4841 = vmatprep.subr.bf16.mxu0 0
        %4842 = vmatpush1.bf16.xpose.msra.mxu0 %v4796
        %4843 = vmatprep.subr.bf16.mxu0 0
        %4844 = vmatpush1.bf16.xpose.msra.mxu0 %v4799
        %4845 = vmatprep.subr.bf16.mxu0 0
        %4846 = vmatpush1.bf16.xpose.msra.mxu0 %v4802
        %4847 = vmatprep.subr.bf16.mxu0 0
        %4848 = vmatpush1.bf16.xpose.msra.mxu0 %v4805
        %4849 = vmatprep.subr.bf16.mxu0 0
        %4850 = vmatpush1.bf16.xpose.msra.mxu0 %v4808
        %4851 = vmatprep.subr.bf16.mxu0 0
        %4852 = vmatpush1.bf16.xpose.msra.mxu0 %v4811
        %4853 = vmatprep.subr.bf16.mxu0 0
        %4854 = vmatpush1.bf16.xpose.msra.mxu0 %v4814
        %4855 = vmatprep.subr.bf16.mxu0 0
        %4856 = vmatpush1.bf16.xpose.msra.mxu0 %v4817
        %4857 = vmatprep.subr.bf16.mxu0 0
        %4858 = vmatpush1.bf16.xpose.msra.mxu0 %v4820
        %4859 = vmatprep.subr.bf16.mxu0 0
        %4860 = vmatpush1.bf16.xpose.msra.mxu0 %v4823
        %4861 = vmatprep.subr.bf16.mxu0 0
        %4862 = vmatpush1.bf16.xpose.msra.mxu0 %v4826
        %4863 = vmatprep.subr.bf16.mxu0 0
        %4864 = vmatpush1.bf16.xpose.msra.mxu0 %v4829
        %4865 = vmatprep.subr.bf16.mxu0 0
        %4866 = vmatpush1.bf16.xpose.msra.mxu0 %v4832
        %4867 = vmatprep.subr.bf16.mxu0 0
        %4868 = vmatpush1.bf16.xpose.msra.mxu0 %v4835
        %4869 = vmatprep.mubr.bf16.mxu0 0
        %4870 = vmatmul.mubr.bf16.gmra.mrb[0].mxu0 %v4742
        %v4871 = vpop.f32.mrb[0].mxu0
        %v4872 = vadd.f32 0.0, %v4871
        %v4873 = vpop.f32.mrb[0].mxu0
        %v4874 = vadd.f32 0.0, %v4873
        %v4875 = vpop.f32.mrb[0].mxu0
        %v4876 = vadd.f32 0.0, %v4875
        %v4877 = vpop.f32.mrb[0].mxu0
        %v4878 = vadd.f32 0.0, %v4877
        %4879 = vmatprep.mubr.bf16.mxu0 0
        %4880 = vmatmul.mubr.bf16.gmra.mrb[0].mxu0 %v4745
        %v4881 = vpop.f32.mrb[0].mxu0
        %v4882 = vadd.f32 0.0, %v4881
        %v4883 = vpop.f32.mrb[0].mxu0
        %v4884 = vadd.f32 0.0, %v4883
        %v4885 = vpop.f32.mrb[0].mxu0
        %v4886 = vadd.f32 0.0, %v4885
        %v4887 = vpop.f32.mrb[0].mxu0
        %v4888 = vadd.f32 0.0, %v4887
        %4889 = vmatprep.mubr.bf16.mxu0 0
        %4890 = vmatmul.mubr.bf16.gmra.mrb[0].mxu0 %v4748
        %v4891 = vpop.f32.mrb[0].mxu0
        %v4892 = vadd.f32 0.0, %v4891
        %v4893 = vpop.f32.mrb[0].mxu0
        %v4894 = vadd.f32 0.0, %v4893
        %v4895 = vpop.f32.mrb[0].mxu0
        %v4896 = vadd.f32 0.0, %v4895
        %v4897 = vpop.f32.mrb[0].mxu0
        %v4898 = vadd.f32 0.0, %v4897
        %4899 = vmatprep.mubr.bf16.mxu0 0
        %4900 = vmatmul.mubr.bf16.gmra.mrb[0].mxu0 %v4751
        %v4901 = vpop.f32.mrb[0].mxu0
        %v4902 = vadd.f32 0.0, %v4901
        %v4903 = vpop.f32.mrb[0].mxu0
        %v4904 = vadd.f32 0.0, %v4903
        %v4905 = vpop.f32.mrb[0].mxu0
        %v4906 = vadd.f32 0.0, %v4905
        %v4907 = vpop.f32.mrb[0].mxu0
        %v4908 = vadd.f32 0.0, %v4907
        %4909 = vmatprep.mubr.bf16.mxu0 0
        %4910 = vmatmul.mubr.bf16.gmra.mrb[0].mxu0 %v4754
        %v4911 = vpop.f32.mrb[0].mxu0
        %v4912 = vadd.f32 0.0, %v4911
        %v4913 = vpop.f32.mrb[0].mxu0
        %v4914 = vadd.f32 0.0, %v4913
        %v4915 = vpop.f32.mrb[0].mxu0
        %v4916 = vadd.f32 0.0, %v4915
        %v4917 = vpop.f32.mrb[0].mxu0
        %v4918 = vadd.f32 0.0, %v4917
        %4919 = vmatprep.mubr.bf16.mxu0 0
        %4920 = vmatmul.mubr.bf16.gmra.mrb[0].mxu0 %v4757
        %v4921 = vpop.f32.mrb[0].mxu0
        %v4922 = vadd.f32 0.0, %v4921
        %v4923 = vpop.f32.mrb[0].mxu0
        %v4924 = vadd.f32 0.0, %v4923
        %v4925 = vpop.f32.mrb[0].mxu0
        %v4926 = vadd.f32 0.0, %v4925
        %v4927 = vpop.f32.mrb[0].mxu0
        %v4928 = vadd.f32 0.0, %v4927
        %4929 = vmatprep.mubr.bf16.mxu0 0
        %4930 = vmatmul.mubr.bf16.gmra.mrb[0].mxu0 %v4760
        %v4931 = vpop.f32.mrb[0].mxu0
        %v4932 = vadd.f32 0.0, %v4931
        %v4933 = vpop.f32.mrb[0].mxu0
        %v4934 = vadd.f32 0.0, %v4933
        %v4935 = vpop.f32.mrb[0].mxu0
        %v4936 = vadd.f32 0.0, %v4935
        %v4937 = vpop.f32.mrb[0].mxu0
        %v4938 = vadd.f32 0.0, %v4937
        %4939 = vmatprep.mubr.bf16.mxu0 0
        %4940 = vmatmul.mubr.bf16.gmra.mrb[0].mxu0 %v4763
        %v4941 = vpop.f32.mrb[0].mxu0
        %v4942 = vadd.f32 0.0, %v4941
        %v4943 = vpop.f32.mrb[0].mxu0
        %v4944 = vadd.f32 0.0, %v4943
        %v4945 = vpop.f32.mrb[0].mxu0
        %v4946 = vadd.f32 0.0, %v4945
        %v4947 = vpop.f32.mrb[0].mxu0
        %v4948 = vadd.f32 0.0, %v4947
        %4949 = vmatprep.mubr.bf16.mxu0 0
        %4950 = vmatmul.mubr.bf16.gmra.mrb[0].mxu0 %v4766
        %v4951 = vpop.f32.mrb[0].mxu0
        %v4952 = vadd.f32 0.0, %v4951
        %v4953 = vpop.f32.mrb[0].mxu0
        %v4954 = vadd.f32 0.0, %v4953
        %v4955 = vpop.f32.mrb[0].mxu0
        %v4956 = vadd.f32 0.0, %v4955
        %v4957 = vpop.f32.mrb[0].mxu0
        %v4958 = vadd.f32 0.0, %v4957
        %4959 = vmatprep.mubr.bf16.mxu0 0
        %4960 = vmatmul.mubr.bf16.gmra.mrb[0].mxu0 %v4769
        %v4961 = vpop.f32.mrb[0].mxu0
        %v4962 = vadd.f32 0.0, %v4961
        %v4963 = vpop.f32.mrb[0].mxu0
        %v4964 = vadd.f32 0.0, %v4963
        %v4965 = vpop.f32.mrb[0].mxu0
        %v4966 = vadd.f32 0.0, %v4965
        %v4967 = vpop.f32.mrb[0].mxu0
        %v4968 = vadd.f32 0.0, %v4967
        %4969 = vmatprep.mubr.bf16.mxu0 0
        %4970 = vmatmul.mubr.bf16.gmra.mrb[0].mxu0 %v4772
        %v4971 = vpop.f32.mrb[0].mxu0
        %v4972 = vadd.f32 0.0, %v4971
        %v4973 = vpop.f32.mrb[0].mxu0
        %v4974 = vadd.f32 0.0, %v4973
        %v4975 = vpop.f32.mrb[0].mxu0
        %v4976 = vadd.f32 0.0, %v4975
        %v4977 = vpop.f32.mrb[0].mxu0
        %v4978 = vadd.f32 0.0, %v4977
        %4979 = vmatprep.mubr.bf16.mxu0 0
        %4980 = vmatmul.mubr.bf16.gmra.mrb[0].mxu0 %v4775
        %v4981 = vpop.f32.mrb[0].mxu0
        %v4982 = vadd.f32 0.0, %v4981
        %v4983 = vpop.f32.mrb[0].mxu0
        %v4984 = vadd.f32 0.0, %v4983
        %v4985 = vpop.f32.mrb[0].mxu0
        %v4986 = vadd.f32 0.0, %v4985
        %v4987 = vpop.f32.mrb[0].mxu0
        %v4988 = vadd.f32 0.0, %v4987
        %4989 = vmatprep.mubr.bf16.mxu0 0
        %4990 = vmatmul.mubr.bf16.gmra.mrb[0].mxu0 %v4778
        %v4991 = vpop.f32.mrb[0].mxu0
        %v4992 = vadd.f32 0.0, %v4991
        %v4993 = vpop.f32.mrb[0].mxu0
        %v4994 = vadd.f32 0.0, %v4993
        %v4995 = vpop.f32.mrb[0].mxu0
        %v4996 = vadd.f32 0.0, %v4995
        %v4997 = vpop.f32.mrb[0].mxu0
        %v4998 = vadd.f32 0.0, %v4997
        %4999 = vmatprep.mubr.bf16.mxu0 0
        %5000 = vmatmul.mubr.bf16.gmra.mrb[0].mxu0 %v4781
        %v5001 = vpop.f32.mrb[0].mxu0
        %v5002 = vadd.f32 0.0, %v5001
        %v5003 = vpop.f32.mrb[0].mxu0
        %v5004 = vadd.f32 0.0, %v5003
        %v5005 = vpop.f32.mrb[0].mxu0
        %v5006 = vadd.f32 0.0, %v5005
        %v5007 = vpop.f32.mrb[0].mxu0
        %v5008 = vadd.f32 0.0, %v5007
        %5009 = vmatprep.mubr.bf16.mxu0 0
        %5010 = vmatmul.mubr.bf16.gmra.mrb[0].mxu0 %v4784
        %v5011 = vpop.f32.mrb[0].mxu0
        %v5012 = vadd.f32 0.0, %v5011
        %v5013 = vpop.f32.mrb[0].mxu0
        %v5014 = vadd.f32 0.0, %v5013
        %v5015 = vpop.f32.mrb[0].mxu0
        %v5016 = vadd.f32 0.0, %v5015
        %v5017 = vpop.f32.mrb[0].mxu0
        %v5018 = vadd.f32 0.0, %v5017
        %5019 = vmatprep.mubr.bf16.mxu0 0
        %5020 = vmatmul.mubr.bf16.gmra.mrb[0].mxu0 %v4787
        %v5021 = vpop.f32.mrb[0].mxu0
        %v5022 = vadd.f32 0.0, %v5021
        %v5023 = vpop.f32.mrb[0].mxu0
        %v5024 = vadd.f32 0.0, %v5023
        %v5025 = vpop.f32.mrb[0].mxu0
        %v5026 = vadd.f32 0.0, %v5025
        %v5027 = vpop.f32.mrb[0].mxu0
        %v5028 = vadd.f32 0.0, %v5027
        %5029 = vdwg.mxu0
        %s5030 = scalar_lea.vmem [#allocation3], 512
        %v5031 = vld [vmem:[%s5030] sm:$0xff]
        %v5032 = vld [vmem:[%s5030 + $0x8] sm:$0xff]
        %v5033 = vld [vmem:[%s5030 + $0x10] sm:$0xff]
        %v5034 = vld [vmem:[%s5030 + $0x18] sm:$0xff]
        %v5035 = vld [vmem:[%s5030 + $0x20] sm:$0xff]
        %v5036 = vld [vmem:[%s5030 + $0x28] sm:$0xff]
        %v5037 = vld [vmem:[%s5030 + $0x30] sm:$0xff]
        %v5038 = vld [vmem:[%s5030 + $0x38] sm:$0xff]
        %v5039 = vld [vmem:[%s5030 + $0x40] sm:$0xff]
        %v5040 = vld [vmem:[%s5030 + $0x48] sm:$0xff]
        %v5041 = vld [vmem:[%s5030 + $0x50] sm:$0xff]
        %v5042 = vld [vmem:[%s5030 + $0x58] sm:$0xff]
        %v5043 = vld [vmem:[%s5030 + $0x60] sm:$0xff]
        %v5044 = vld [vmem:[%s5030 + $0x68] sm:$0xff]
        %v5045 = vld [vmem:[%s5030 + $0x70] sm:$0xff]
        %v5046 = vld [vmem:[%s5030 + $0x78] sm:$0xff]
        %v5047 = vld [vmem:[%s5030 + $0x80] sm:$0xff]
        %v5048 = vld [vmem:[%s5030 + $0x88] sm:$0xff]
        %v5049 = vld [vmem:[%s5030 + $0x90] sm:$0xff]
        %v5050 = vld [vmem:[%s5030 + $0x98] sm:$0xff]
        %v5051 = vld [vmem:[%s5030 + $0xa0] sm:$0xff]
        %v5052 = vld [vmem:[%s5030 + $0xa8] sm:$0xff]
        %v5053 = vld [vmem:[%s5030 + $0xb0] sm:$0xff]
        %v5054 = vld [vmem:[%s5030 + $0xb8] sm:$0xff]
        %v5055 = vld [vmem:[%s5030 + $0xc0] sm:$0xff]
        %v5056 = vld [vmem:[%s5030 + $0xc8] sm:$0xff]
        %v5057 = vld [vmem:[%s5030 + $0xd0] sm:$0xff]
        %v5058 = vld [vmem:[%s5030 + $0xd8] sm:$0xff]
        %v5059 = vld [vmem:[%s5030 + $0xe0] sm:$0xff]
        %v5060 = vld [vmem:[%s5030 + $0xe8] sm:$0xff]
        %v5061 = vld [vmem:[%s5030 + $0xf0] sm:$0xff]
        %v5062 = vld [vmem:[%s5030 + $0xf8] sm:$0xff]
        %v5063 = vmax.f32 %v4872, %v4874
        %5064 = vmax.xlane.f32.xlu0 %v5063
        %v5065 = vpop.xlane.xlu0 %5064
        %v5066 = vmax.f32 %v4876, %v4878
        %5067 = vmax.xlane.f32.xlu0 %v5066
        %v5068 = vpop.xlane.xlu0 %5067
        %v5069 = vmax.f32 %v4882, %v4884
        %5070 = vmax.xlane.f32.xlu0 %v5069
        %v5071 = vpop.xlane.xlu0 %5070
        %v5072 = vmax.f32 %v4886, %v4888
        %5073 = vmax.xlane.f32.xlu0 %v5072
        %v5074 = vpop.xlane.xlu0 %5073
        %v5075 = vmax.f32 %v4892, %v4894
        %5076 = vmax.xlane.f32.xlu0 %v5075
        %v5077 = vpop.xlane.xlu0 %5076
        %v5078 = vmax.f32 %v4896, %v4898
        %5079 = vmax.xlane.f32.xlu0 %v5078
        %v5080 = vpop.xlane.xlu0 %5079
        %v5081 = vmax.f32 %v4902, %v4904
        %5082 = vmax.xlane.f32.xlu0 %v5081
        %v5083 = vpop.xlane.xlu0 %5082
        %v5084 = vmax.f32 %v4906, %v4908
        %5085 = vmax.xlane.f32.xlu0 %v5084
        %v5086 = vpop.xlane.xlu0 %5085
        %v5087 = vmax.f32 %v4912, %v4914
        %5088 = vmax.xlane.f32.xlu0 %v5087
        %v5089 = vpop.xlane.xlu0 %5088
        %v5090 = vmax.f32 %v4916, %v4918
        %5091 = vmax.xlane.f32.xlu0 %v5090
        %v5092 = vpop.xlane.xlu0 %5091
        %v5093 = vmax.f32 %v4922, %v4924
        %5094 = vmax.xlane.f32.xlu0 %v5093
        %v5095 = vpop.xlane.xlu0 %5094
        %v5096 = vmax.f32 %v4926, %v4928
        %5097 = vmax.xlane.f32.xlu0 %v5096
        %v5098 = vpop.xlane.xlu0 %5097
        %v5099 = vmax.f32 %v4932, %v4934
        %5100 = vmax.xlane.f32.xlu0 %v5099
        %v5101 = vpop.xlane.xlu0 %5100
        %v5102 = vmax.f32 %v4936, %v4938
        %5103 = vmax.xlane.f32.xlu0 %v5102
        %v5104 = vpop.xlane.xlu0 %5103
        %v5105 = vmax.f32 %v4942, %v4944
        %5106 = vmax.xlane.f32.xlu0 %v5105
        %v5107 = vpop.xlane.xlu0 %5106
        %v5108 = vmax.f32 %v4946, %v4948
        %5109 = vmax.xlane.f32.xlu0 %v5108
        %v5110 = vpop.xlane.xlu0 %5109
        %v5111 = vmax.f32 %v4952, %v4954
        %5112 = vmax.xlane.f32.xlu0 %v5111
        %v5113 = vpop.xlane.xlu0 %5112
        %v5114 = vmax.f32 %v4956, %v4958
        %5115 = vmax.xlane.f32.xlu0 %v5114
        %v5116 = vpop.xlane.xlu0 %5115
        %v5117 = vmax.f32 %v4962, %v4964
        %5118 = vmax.xlane.f32.xlu0 %v5117
        %v5119 = vpop.xlane.xlu0 %5118
        %v5120 = vmax.f32 %v4966, %v4968
        %5121 = vmax.xlane.f32.xlu0 %v5120
        %v5122 = vpop.xlane.xlu0 %5121
        %v5123 = vmax.f32 %v4972, %v4974
        %5124 = vmax.xlane.f32.xlu0 %v5123
        %v5125 = vpop.xlane.xlu0 %5124
        %v5126 = vmax.f32 %v4976, %v4978
        %5127 = vmax.xlane.f32.xlu0 %v5126
        %v5128 = vpop.xlane.xlu0 %5127
        %v5129 = vmax.f32 %v4982, %v4984
        %5130 = vmax.xlane.f32.xlu0 %v5129
        %v5131 = vpop.xlane.xlu0 %5130
        %v5132 = vmax.f32 %v4986, %v4988
        %5133 = vmax.xlane.f32.xlu0 %v5132
        %v5134 = vpop.xlane.xlu0 %5133
        %v5135 = vmax.f32 %v4992, %v4994
        %5136 = vmax.xlane.f32.xlu0 %v5135
        %v5137 = vpop.xlane.xlu0 %5136
        %v5138 = vmax.f32 %v4996, %v4998
        %5139 = vmax.xlane.f32.xlu0 %v5138
        %v5140 = vpop.xlane.xlu0 %5139
        %v5141 = vmax.f32 %v5002, %v5004
        %5142 = vmax.xlane.f32.xlu0 %v5141
        %v5143 = vpop.xlane.xlu0 %5142
        %v5144 = vmax.f32 %v5006, %v5008
        %5145 = vmax.xlane.f32.xlu0 %v5144
        %v5146 = vpop.xlane.xlu0 %5145
        %v5147 = vmax.f32 %v5012, %v5014
        %5148 = vmax.xlane.f32.xlu0 %v5147
        %v5149 = vpop.xlane.xlu0 %5148
        %v5150 = vmax.f32 %v5016, %v5018
        %5151 = vmax.xlane.f32.xlu0 %v5150
        %v5152 = vpop.xlane.xlu0 %5151
        %v5153 = vmax.f32 %v5022, %v5024
        %5154 = vmax.xlane.f32.xlu0 %v5153
        %v5155 = vpop.xlane.xlu0 %5154
        %v5156 = vmax.f32 %v5026, %v5028
        %5157 = vmax.xlane.f32.xlu0 %v5156
        %v5158 = vpop.xlane.xlu0 %5157
        %v5159 = vmax.f32 %v5031, %v5065
        %v5160 = vmax.f32 %v5032, %v5068
        %v5161 = vmax.f32 %v5033, %v5071
        %v5162 = vmax.f32 %v5034, %v5074
        %v5163 = vmax.f32 %v5035, %v5077
        %v5164 = vmax.f32 %v5036, %v5080
        %v5165 = vmax.f32 %v5037, %v5083
        %v5166 = vmax.f32 %v5038, %v5086
        %v5167 = vmax.f32 %v5039, %v5089
        %v5168 = vmax.f32 %v5040, %v5092
        %v5169 = vmax.f32 %v5041, %v5095
        %v5170 = vmax.f32 %v5042, %v5098
        %v5171 = vmax.f32 %v5043, %v5101
        %v5172 = vmax.f32 %v5044, %v5104
        %v5173 = vmax.f32 %v5045, %v5107
        %v5174 = vmax.f32 %v5046, %v5110
        %v5175 = vmax.f32 %v5047, %v5113
        %v5176 = vmax.f32 %v5048, %v5116
        %v5177 = vmax.f32 %v5049, %v5119
        %v5178 = vmax.f32 %v5050, %v5122
        %v5179 = vmax.f32 %v5051, %v5125
        %v5180 = vmax.f32 %v5052, %v5128
        %v5181 = vmax.f32 %v5053, %v5131
        %v5182 = vmax.f32 %v5054, %v5134
        %v5183 = vmax.f32 %v5055, %v5137
        %v5184 = vmax.f32 %v5056, %v5140
        %v5185 = vmax.f32 %v5057, %v5143
        %v5186 = vmax.f32 %v5058, %v5146
        %v5187 = vmax.f32 %v5059, %v5149
        %v5188 = vmax.f32 %v5060, %v5152
        %v5189 = vmax.f32 %v5061, %v5155
        %v5190 = vmax.f32 %v5062, %v5158
        %v5191 = vsub.f32 %v5031, %v5159
        %v5192 = vsub.f32 %v5032, %v5160
        %v5193 = vsub.f32 %v5033, %v5161
        %v5194 = vsub.f32 %v5034, %v5162
        %v5195 = vsub.f32 %v5035, %v5163
        %v5196 = vsub.f32 %v5036, %v5164
        %v5197 = vsub.f32 %v5037, %v5165
        %v5198 = vsub.f32 %v5038, %v5166
        %v5199 = vsub.f32 %v5039, %v5167
        %v5200 = vsub.f32 %v5040, %v5168
        %v5201 = vsub.f32 %v5041, %v5169
        %v5202 = vsub.f32 %v5042, %v5170
        %v5203 = vsub.f32 %v5043, %v5171
        %v5204 = vsub.f32 %v5044, %v5172
        %v5205 = vsub.f32 %v5045, %v5173
        %v5206 = vsub.f32 %v5046, %v5174
        %v5207 = vsub.f32 %v5047, %v5175
        %v5208 = vsub.f32 %v5048, %v5176
        %v5209 = vsub.f32 %v5049, %v5177
        %v5210 = vsub.f32 %v5050, %v5178
        %v5211 = vsub.f32 %v5051, %v5179
        %v5212 = vsub.f32 %v5052, %v5180
        %v5213 = vsub.f32 %v5053, %v5181
        %v5214 = vsub.f32 %v5054, %v5182
        %v5215 = vsub.f32 %v5055, %v5183
        %v5216 = vsub.f32 %v5056, %v5184
        %v5217 = vsub.f32 %v5057, %v5185
        %v5218 = vsub.f32 %v5058, %v5186
        %v5219 = vsub.f32 %v5059, %v5187
        %v5220 = vsub.f32 %v5060, %v5188
        %v5221 = vsub.f32 %v5061, %v5189
        %v5222 = vsub.f32 %v5062, %v5190
        %v5223 = vmul.f32 %v5191, 1.442695
        %v5224 = vpow.pop %v5223
        %v5225 = vmul.f32 %v5192, 1.442695
        %v5226 = vpow.pop %v5225
        %v5227 = vmul.f32 %v5193, 1.442695
        %v5228 = vpow.pop %v5227
        %v5229 = vmul.f32 %v5194, 1.442695
        %v5230 = vpow.pop %v5229
        %v5231 = vmul.f32 %v5195, 1.442695
        %v5232 = vpow.pop %v5231
        %v5233 = vmul.f32 %v5196, 1.442695
        %v5234 = vpow.pop %v5233
        %v5235 = vmul.f32 %v5197, 1.442695
        %v5236 = vpow.pop %v5235
        %v5237 = vmul.f32 %v5198, 1.442695
        %v5238 = vpow.pop %v5237
        %v5239 = vmul.f32 %v5199, 1.442695
        %v5240 = vpow.pop %v5239
        %v5241 = vmul.f32 %v5200, 1.442695
        %v5242 = vpow.pop %v5241
        %v5243 = vmul.f32 %v5201, 1.442695
        %v5244 = vpow.pop %v5243
        %v5245 = vmul.f32 %v5202, 1.442695
        %v5246 = vpow.pop %v5245
        %v5247 = vmul.f32 %v5203, 1.442695
        %v5248 = vpow.pop %v5247
        %v5249 = vmul.f32 %v5204, 1.442695
        %v5250 = vpow.pop %v5249
        %v5251 = vmul.f32 %v5205, 1.442695
        %v5252 = vpow.pop %v5251
        %v5253 = vmul.f32 %v5206, 1.442695
        %v5254 = vpow.pop %v5253
        %v5255 = vmul.f32 %v5207, 1.442695
        %v5256 = vpow.pop %v5255
        %v5257 = vmul.f32 %v5208, 1.442695
        %v5258 = vpow.pop %v5257
        %v5259 = vmul.f32 %v5209, 1.442695
        %v5260 = vpow.pop %v5259
        %v5261 = vmul.f32 %v5210, 1.442695
        %v5262 = vpow.pop %v5261
        %v5263 = vmul.f32 %v5211, 1.442695
        %v5264 = vpow.pop %v5263
        %v5265 = vmul.f32 %v5212, 1.442695
        %v5266 = vpow.pop %v5265
        %v5267 = vmul.f32 %v5213, 1.442695
        %v5268 = vpow.pop %v5267
        %v5269 = vmul.f32 %v5214, 1.442695
        %v5270 = vpow.pop %v5269
        %v5271 = vmul.f32 %v5215, 1.442695
        %v5272 = vpow.pop %v5271
        %v5273 = vmul.f32 %v5216, 1.442695
        %v5274 = vpow.pop %v5273
        %v5275 = vmul.f32 %v5217, 1.442695
        %v5276 = vpow.pop %v5275
        %v5277 = vmul.f32 %v5218, 1.442695
        %v5278 = vpow.pop %v5277
        %v5279 = vmul.f32 %v5219, 1.442695
        %v5280 = vpow.pop %v5279
        %v5281 = vmul.f32 %v5220, 1.442695
        %v5282 = vpow.pop %v5281
        %v5283 = vmul.f32 %v5221, 1.442695
        %v5284 = vpow.pop %v5283
        %v5285 = vmul.f32 %v5222, 1.442695
        %v5286 = vpow.pop %v5285
        %5288 = vset.pattern.permute.xlu0 0
        %5289 = vperm.xlu0 %5288, %v5159
        %v5290 = vpop.permute.xlu0 %5289
        %5293 = vset.pattern.permute.xlu0 0
        %5294 = vperm.xlu0 %5293, %v5160
        %v5295 = vpop.permute.xlu0 %5294
        %5298 = vset.pattern.permute.xlu0 0
        %5299 = vperm.xlu0 %5298, %v5161
        %v5300 = vpop.permute.xlu0 %5299
        %5303 = vset.pattern.permute.xlu0 0
        %5304 = vperm.xlu0 %5303, %v5162
        %v5305 = vpop.permute.xlu0 %5304
        %5308 = vset.pattern.permute.xlu0 0
        %5309 = vperm.xlu0 %5308, %v5163
        %v5310 = vpop.permute.xlu0 %5309
        %5313 = vset.pattern.permute.xlu0 0
        %5314 = vperm.xlu0 %5313, %v5164
        %v5315 = vpop.permute.xlu0 %5314
        %5318 = vset.pattern.permute.xlu0 0
        %5319 = vperm.xlu0 %5318, %v5165
        %v5320 = vpop.permute.xlu0 %5319
        %5323 = vset.pattern.permute.xlu0 0
        %5324 = vperm.xlu0 %5323, %v5166
        %v5325 = vpop.permute.xlu0 %5324
        %5328 = vset.pattern.permute.xlu0 0
        %5329 = vperm.xlu0 %5328, %v5167
        %v5330 = vpop.permute.xlu0 %5329
        %5333 = vset.pattern.permute.xlu0 0
        %5334 = vperm.xlu0 %5333, %v5168
        %v5335 = vpop.permute.xlu0 %5334
        %5338 = vset.pattern.permute.xlu0 0
        %5339 = vperm.xlu0 %5338, %v5169
        %v5340 = vpop.permute.xlu0 %5339
        %5343 = vset.pattern.permute.xlu0 0
        %5344 = vperm.xlu0 %5343, %v5170
        %v5345 = vpop.permute.xlu0 %5344
        %5348 = vset.pattern.permute.xlu0 0
        %5349 = vperm.xlu0 %5348, %v5171
        %v5350 = vpop.permute.xlu0 %5349
        %5353 = vset.pattern.permute.xlu0 0
        %5354 = vperm.xlu0 %5353, %v5172
        %v5355 = vpop.permute.xlu0 %5354
        %5358 = vset.pattern.permute.xlu0 0
        %5359 = vperm.xlu0 %5358, %v5173
        %v5360 = vpop.permute.xlu0 %5359
        %5363 = vset.pattern.permute.xlu0 0
        %5364 = vperm.xlu0 %5363, %v5174
        %v5365 = vpop.permute.xlu0 %5364
        %5368 = vset.pattern.permute.xlu0 0
        %5369 = vperm.xlu0 %5368, %v5175
        %v5370 = vpop.permute.xlu0 %5369
        %5373 = vset.pattern.permute.xlu0 0
        %5374 = vperm.xlu0 %5373, %v5176
        %v5375 = vpop.permute.xlu0 %5374
        %5378 = vset.pattern.permute.xlu0 0
        %5379 = vperm.xlu0 %5378, %v5177
        %v5380 = vpop.permute.xlu0 %5379
        %5383 = vset.pattern.permute.xlu0 0
        %5384 = vperm.xlu0 %5383, %v5178
        %v5385 = vpop.permute.xlu0 %5384
        %5388 = vset.pattern.permute.xlu0 0
        %5389 = vperm.xlu0 %5388, %v5179
        %v5390 = vpop.permute.xlu0 %5389
        %5393 = vset.pattern.permute.xlu0 0
        %5394 = vperm.xlu0 %5393, %v5180
        %v5395 = vpop.permute.xlu0 %5394
        %5398 = vset.pattern.permute.xlu0 0
        %5399 = vperm.xlu0 %5398, %v5181
        %v5400 = vpop.permute.xlu0 %5399
        %5403 = vset.pattern.permute.xlu0 0
        %5404 = vperm.xlu0 %5403, %v5182
        %v5405 = vpop.permute.xlu0 %5404
        %5408 = vset.pattern.permute.xlu0 0
        %5409 = vperm.xlu0 %5408, %v5183
        %v5410 = vpop.permute.xlu0 %5409
        %5413 = vset.pattern.permute.xlu0 0
        %5414 = vperm.xlu0 %5413, %v5184
        %v5415 = vpop.permute.xlu0 %5414
        %5418 = vset.pattern.permute.xlu0 0
        %5419 = vperm.xlu0 %5418, %v5185
        %v5420 = vpop.permute.xlu0 %5419
        %5423 = vset.pattern.permute.xlu0 0
        %5424 = vperm.xlu0 %5423, %v5186
        %v5425 = vpop.permute.xlu0 %5424
        %5428 = vset.pattern.permute.xlu0 0
        %5429 = vperm.xlu0 %5428, %v5187
        %v5430 = vpop.permute.xlu0 %5429
        %5433 = vset.pattern.permute.xlu0 0
        %5434 = vperm.xlu0 %5433, %v5188
        %v5435 = vpop.permute.xlu0 %5434
        %5438 = vset.pattern.permute.xlu0 0
        %5439 = vperm.xlu0 %5438, %v5189
        %v5440 = vpop.permute.xlu0 %5439
        %5443 = vset.pattern.permute.xlu0 0
        %5444 = vperm.xlu0 %5443, %v5190
        %v5445 = vpop.permute.xlu0 %5444
        %v5447 = vsub.f32 %v4872, %v5290
        %v5448 = vsub.f32 %v4874, %v5290
        %v5449 = vsub.f32 %v4876, %v5295
        %v5450 = vsub.f32 %v4878, %v5295
        %v5451 = vsub.f32 %v4882, %v5300
        %v5452 = vsub.f32 %v4884, %v5300
        %v5453 = vsub.f32 %v4886, %v5305
        %v5454 = vsub.f32 %v4888, %v5305
        %v5455 = vsub.f32 %v4892, %v5310
        %v5456 = vsub.f32 %v4894, %v5310
        %v5457 = vsub.f32 %v4896, %v5315
        %v5458 = vsub.f32 %v4898, %v5315
        %v5459 = vsub.f32 %v4902, %v5320
        %v5460 = vsub.f32 %v4904, %v5320
        %v5461 = vsub.f32 %v4906, %v5325
        %v5462 = vsub.f32 %v4908, %v5325
        %v5463 = vsub.f32 %v4912, %v5330
        %v5464 = vsub.f32 %v4914, %v5330
        %v5465 = vsub.f32 %v4916, %v5335
        %v5466 = vsub.f32 %v4918, %v5335
        %v5467 = vsub.f32 %v4922, %v5340
        %v5468 = vsub.f32 %v4924, %v5340
        %v5469 = vsub.f32 %v4926, %v5345
        %v5470 = vsub.f32 %v4928, %v5345
        %v5471 = vsub.f32 %v4932, %v5350
        %v5472 = vsub.f32 %v4934, %v5350
        %v5473 = vsub.f32 %v4936, %v5355
        %v5474 = vsub.f32 %v4938, %v5355
        %v5475 = vsub.f32 %v4942, %v5360
        %v5476 = vsub.f32 %v4944, %v5360
        %v5477 = vsub.f32 %v4946, %v5365
        %v5478 = vsub.f32 %v4948, %v5365
        %v5479 = vsub.f32 %v4952, %v5370
        %v5480 = vsub.f32 %v4954, %v5370
        %v5481 = vsub.f32 %v4956, %v5375
        %v5482 = vsub.f32 %v4958, %v5375
        %v5483 = vsub.f32 %v4962, %v5380
        %v5484 = vsub.f32 %v4964, %v5380
        %v5485 = vsub.f32 %v4966, %v5385
        %v5486 = vsub.f32 %v4968, %v5385
        %v5487 = vsub.f32 %v4972, %v5390
        %v5488 = vsub.f32 %v4974, %v5390
        %v5489 = vsub.f32 %v4976, %v5395
        %v5490 = vsub.f32 %v4978, %v5395
        %v5491 = vsub.f32 %v4982, %v5400
        %v5492 = vsub.f32 %v4984, %v5400
        %v5493 = vsub.f32 %v4986, %v5405
        %v5494 = vsub.f32 %v4988, %v5405
        %v5495 = vsub.f32 %v4992, %v5410
        %v5496 = vsub.f32 %v4994, %v5410
        %v5497 = vsub.f32 %v4996, %v5415
        %v5498 = vsub.f32 %v4998, %v5415
        %v5499 = vsub.f32 %v5002, %v5420
        %v5500 = vsub.f32 %v5004, %v5420
        %v5501 = vsub.f32 %v5006, %v5425
        %v5502 = vsub.f32 %v5008, %v5425
        %v5503 = vsub.f32 %v5012, %v5430
        %v5504 = vsub.f32 %v5014, %v5430
        %v5505 = vsub.f32 %v5016, %v5435
        %v5506 = vsub.f32 %v5018, %v5435
        %v5507 = vsub.f32 %v5022, %v5440
        %v5508 = vsub.f32 %v5024, %v5440
        %v5509 = vsub.f32 %v5026, %v5445
        %v5510 = vsub.f32 %v5028, %v5445
        %v5511 = vmul.f32 %v5447, 1.442695
        %v5512 = vpow.pop %v5511
        %v5513 = vmul.f32 %v5448, 1.442695
        %v5514 = vpow.pop %v5513
        %v5515 = vmul.f32 %v5449, 1.442695
        %v5516 = vpow.pop %v5515
        %v5517 = vmul.f32 %v5450, 1.442695
        %v5518 = vpow.pop %v5517
        %v5519 = vmul.f32 %v5451, 1.442695
        %v5520 = vpow.pop %v5519
        %v5521 = vmul.f32 %v5452, 1.442695
        %v5522 = vpow.pop %v5521
        %v5523 = vmul.f32 %v5453, 1.442695
        %v5524 = vpow.pop %v5523
        %v5525 = vmul.f32 %v5454, 1.442695
        %v5526 = vpow.pop %v5525
        %v5527 = vmul.f32 %v5455, 1.442695
        %v5528 = vpow.pop %v5527
        %v5529 = vmul.f32 %v5456, 1.442695
        %v5530 = vpow.pop %v5529
        %v5531 = vmul.f32 %v5457, 1.442695
        %v5532 = vpow.pop %v5531
        %v5533 = vmul.f32 %v5458, 1.442695
        %v5534 = vpow.pop %v5533
        %v5535 = vmul.f32 %v5459, 1.442695
        %v5536 = vpow.pop %v5535
        %v5537 = vmul.f32 %v5460, 1.442695
        %v5538 = vpow.pop %v5537
        %v5539 = vmul.f32 %v5461, 1.442695
        %v5540 = vpow.pop %v5539
        %v5541 = vmul.f32 %v5462, 1.442695
        %v5542 = vpow.pop %v5541
        %v5543 = vmul.f32 %v5463, 1.442695
        %v5544 = vpow.pop %v5543
        %v5545 = vmul.f32 %v5464, 1.442695
        %v5546 = vpow.pop %v5545
        %v5547 = vmul.f32 %v5465, 1.442695
        %v5548 = vpow.pop %v5547
        %v5549 = vmul.f32 %v5466, 1.442695
        %v5550 = vpow.pop %v5549
        %v5551 = vmul.f32 %v5467, 1.442695
        %v5552 = vpow.pop %v5551
        %v5553 = vmul.f32 %v5468, 1.442695
        %v5554 = vpow.pop %v5553
        %v5555 = vmul.f32 %v5469, 1.442695
        %v5556 = vpow.pop %v5555
        %v5557 = vmul.f32 %v5470, 1.442695
        %v5558 = vpow.pop %v5557
        %v5559 = vmul.f32 %v5471, 1.442695
        %v5560 = vpow.pop %v5559
        %v5561 = vmul.f32 %v5472, 1.442695
        %v5562 = vpow.pop %v5561
        %v5563 = vmul.f32 %v5473, 1.442695
        %v5564 = vpow.pop %v5563
        %v5565 = vmul.f32 %v5474, 1.442695
        %v5566 = vpow.pop %v5565
        %v5567 = vmul.f32 %v5475, 1.442695
        %v5568 = vpow.pop %v5567
        %v5569 = vmul.f32 %v5476, 1.442695
        %v5570 = vpow.pop %v5569
        %v5571 = vmul.f32 %v5477, 1.442695
        %v5572 = vpow.pop %v5571
        %v5573 = vmul.f32 %v5478, 1.442695
        %v5574 = vpow.pop %v5573
        %v5575 = vmul.f32 %v5479, 1.442695
        %v5576 = vpow.pop %v5575
        %v5577 = vmul.f32 %v5480, 1.442695
        %v5578 = vpow.pop %v5577
        %v5579 = vmul.f32 %v5481, 1.442695
        %v5580 = vpow.pop %v5579
        %v5581 = vmul.f32 %v5482, 1.442695
        %v5582 = vpow.pop %v5581
        %v5583 = vmul.f32 %v5483, 1.442695
        %v5584 = vpow.pop %v5583
        %v5585 = vmul.f32 %v5484, 1.442695
        %v5586 = vpow.pop %v5585
        %v5587 = vmul.f32 %v5485, 1.442695
        %v5588 = vpow.pop %v5587
        %v5589 = vmul.f32 %v5486, 1.442695
        %v5590 = vpow.pop %v5589
        %v5591 = vmul.f32 %v5487, 1.442695
        %v5592 = vpow.pop %v5591
        %v5593 = vmul.f32 %v5488, 1.442695
        %v5594 = vpow.pop %v5593
        %v5595 = vmul.f32 %v5489, 1.442695
        %v5596 = vpow.pop %v5595
        %v5597 = vmul.f32 %v5490, 1.442695
        %v5598 = vpow.pop %v5597
        %v5599 = vmul.f32 %v5491, 1.442695
        %v5600 = vpow.pop %v5599
        %v5601 = vmul.f32 %v5492, 1.442695
        %v5602 = vpow.pop %v5601
        %v5603 = vmul.f32 %v5493, 1.442695
        %v5604 = vpow.pop %v5603
        %v5605 = vmul.f32 %v5494, 1.442695
        %v5606 = vpow.pop %v5605
        %v5607 = vmul.f32 %v5495, 1.442695
        %v5608 = vpow.pop %v5607
        %v5609 = vmul.f32 %v5496, 1.442695
        %v5610 = vpow.pop %v5609
        %v5611 = vmul.f32 %v5497, 1.442695
        %v5612 = vpow.pop %v5611
        %v5613 = vmul.f32 %v5498, 1.442695
        %v5614 = vpow.pop %v5613
        %v5615 = vmul.f32 %v5499, 1.442695
        %v5616 = vpow.pop %v5615
        %v5617 = vmul.f32 %v5500, 1.442695
        %v5618 = vpow.pop %v5617
        %v5619 = vmul.f32 %v5501, 1.442695
        %v5620 = vpow.pop %v5619
        %v5621 = vmul.f32 %v5502, 1.442695
        %v5622 = vpow.pop %v5621
        %v5623 = vmul.f32 %v5503, 1.442695
        %v5624 = vpow.pop %v5623
        %v5625 = vmul.f32 %v5504, 1.442695
        %v5626 = vpow.pop %v5625
        %v5627 = vmul.f32 %v5505, 1.442695
        %v5628 = vpow.pop %v5627
        %v5629 = vmul.f32 %v5506, 1.442695
        %v5630 = vpow.pop %v5629
        %v5631 = vmul.f32 %v5507, 1.442695
        %v5632 = vpow.pop %v5631
        %v5633 = vmul.f32 %v5508, 1.442695
        %v5634 = vpow.pop %v5633
        %v5635 = vmul.f32 %v5509, 1.442695
        %v5636 = vpow.pop %v5635
        %v5637 = vmul.f32 %v5510, 1.442695
        %v5638 = vpow.pop %v5637
        %s5639 = scalar_lea.vmem [#allocation4], 512
        %v5640 = vld [vmem:[%s5639] sm:$0xff]
        %v5641 = vld [vmem:[%s5639 + $0x8] sm:$0xff]
        %v5642 = vld [vmem:[%s5639 + $0x10] sm:$0xff]
        %v5643 = vld [vmem:[%s5639 + $0x18] sm:$0xff]
        %v5644 = vld [vmem:[%s5639 + $0x20] sm:$0xff]
        %v5645 = vld [vmem:[%s5639 + $0x28] sm:$0xff]
        %v5646 = vld [vmem:[%s5639 + $0x30] sm:$0xff]
        %v5647 = vld [vmem:[%s5639 + $0x38] sm:$0xff]
        %v5648 = vld [vmem:[%s5639 + $0x40] sm:$0xff]
        %v5649 = vld [vmem:[%s5639 + $0x48] sm:$0xff]
        %v5650 = vld [vmem:[%s5639 + $0x50] sm:$0xff]
        %v5651 = vld [vmem:[%s5639 + $0x58] sm:$0xff]
        %v5652 = vld [vmem:[%s5639 + $0x60] sm:$0xff]
        %v5653 = vld [vmem:[%s5639 + $0x68] sm:$0xff]
        %v5654 = vld [vmem:[%s5639 + $0x70] sm:$0xff]
        %v5655 = vld [vmem:[%s5639 + $0x78] sm:$0xff]
        %v5656 = vld [vmem:[%s5639 + $0x80] sm:$0xff]
        %v5657 = vld [vmem:[%s5639 + $0x88] sm:$0xff]
        %v5658 = vld [vmem:[%s5639 + $0x90] sm:$0xff]
        %v5659 = vld [vmem:[%s5639 + $0x98] sm:$0xff]
        %v5660 = vld [vmem:[%s5639 + $0xa0] sm:$0xff]
        %v5661 = vld [vmem:[%s5639 + $0xa8] sm:$0xff]
        %v5662 = vld [vmem:[%s5639 + $0xb0] sm:$0xff]
        %v5663 = vld [vmem:[%s5639 + $0xb8] sm:$0xff]
        %v5664 = vld [vmem:[%s5639 + $0xc0] sm:$0xff]
        %v5665 = vld [vmem:[%s5639 + $0xc8] sm:$0xff]
        %v5666 = vld [vmem:[%s5639 + $0xd0] sm:$0xff]
        %v5667 = vld [vmem:[%s5639 + $0xd8] sm:$0xff]
        %v5668 = vld [vmem:[%s5639 + $0xe0] sm:$0xff]
        %v5669 = vld [vmem:[%s5639 + $0xe8] sm:$0xff]
        %v5670 = vld [vmem:[%s5639 + $0xf0] sm:$0xff]
        %v5671 = vld [vmem:[%s5639 + $0xf8] sm:$0xff]
        %v5672 = vmul.f32 %v5224, %v5640
        %v5673 = vmul.f32 %v5226, %v5641
        %v5674 = vmul.f32 %v5228, %v5642
        %v5675 = vmul.f32 %v5230, %v5643
        %v5676 = vmul.f32 %v5232, %v5644
        %v5677 = vmul.f32 %v5234, %v5645
        %v5678 = vmul.f32 %v5236, %v5646
        %v5679 = vmul.f32 %v5238, %v5647
        %v5680 = vmul.f32 %v5240, %v5648
        %v5681 = vmul.f32 %v5242, %v5649
        %v5682 = vmul.f32 %v5244, %v5650
        %v5683 = vmul.f32 %v5246, %v5651
        %v5684 = vmul.f32 %v5248, %v5652
        %v5685 = vmul.f32 %v5250, %v5653
        %v5686 = vmul.f32 %v5252, %v5654
        %v5687 = vmul.f32 %v5254, %v5655
        %v5688 = vmul.f32 %v5256, %v5656
        %v5689 = vmul.f32 %v5258, %v5657
        %v5690 = vmul.f32 %v5260, %v5658
        %v5691 = vmul.f32 %v5262, %v5659
        %v5692 = vmul.f32 %v5264, %v5660
        %v5693 = vmul.f32 %v5266, %v5661
        %v5694 = vmul.f32 %v5268, %v5662
        %v5695 = vmul.f32 %v5270, %v5663
        %v5696 = vmul.f32 %v5272, %v5664
        %v5697 = vmul.f32 %v5274, %v5665
        %v5698 = vmul.f32 %v5276, %v5666
        %v5699 = vmul.f32 %v5278, %v5667
        %v5700 = vmul.f32 %v5280, %v5668
        %v5701 = vmul.f32 %v5282, %v5669
        %v5702 = vmul.f32 %v5284, %v5670
        %v5703 = vmul.f32 %v5286, %v5671
        %v5704 = vadd.f32 %v5512, %v5514
        %5705 = vadd.xlane.f32.xlu0 %v5704
        %v5706 = vpop.xlane.xlu0 %5705
        %v5707 = vadd.f32 %v5516, %v5518
        %5708 = vadd.xlane.f32.xlu0 %v5707
        %v5709 = vpop.xlane.xlu0 %5708
        %v5710 = vadd.f32 %v5520, %v5522
        %5711 = vadd.xlane.f32.xlu0 %v5710
        %v5712 = vpop.xlane.xlu0 %5711
        %v5713 = vadd.f32 %v5524, %v5526
        %5714 = vadd.xlane.f32.xlu0 %v5713
        %v5715 = vpop.xlane.xlu0 %5714
        %v5716 = vadd.f32 %v5528, %v5530
        %5717 = vadd.xlane.f32.xlu0 %v5716
        %v5718 = vpop.xlane.xlu0 %5717
        %v5719 = vadd.f32 %v5532, %v5534
        %5720 = vadd.xlane.f32.xlu0 %v5719
        %v5721 = vpop.xlane.xlu0 %5720
        %v5722 = vadd.f32 %v5536, %v5538
        %5723 = vadd.xlane.f32.xlu0 %v5722
        %v5724 = vpop.xlane.xlu0 %5723
        %v5725 = vadd.f32 %v5540, %v5542
        %5726 = vadd.xlane.f32.xlu0 %v5725
        %v5727 = vpop.xlane.xlu0 %5726
        %v5728 = vadd.f32 %v5544, %v5546
        %5729 = vadd.xlane.f32.xlu0 %v5728
        %v5730 = vpop.xlane.xlu0 %5729
        %v5731 = vadd.f32 %v5548, %v5550
        %5732 = vadd.xlane.f32.xlu0 %v5731
        %v5733 = vpop.xlane.xlu0 %5732
        %v5734 = vadd.f32 %v5552, %v5554
        %5735 = vadd.xlane.f32.xlu0 %v5734
        %v5736 = vpop.xlane.xlu0 %5735
        %v5737 = vadd.f32 %v5556, %v5558
        %5738 = vadd.xlane.f32.xlu0 %v5737
        %v5739 = vpop.xlane.xlu0 %5738
        %v5740 = vadd.f32 %v5560, %v5562
        %5741 = vadd.xlane.f32.xlu0 %v5740
        %v5742 = vpop.xlane.xlu0 %5741
        %v5743 = vadd.f32 %v5564, %v5566
        %5744 = vadd.xlane.f32.xlu0 %v5743
        %v5745 = vpop.xlane.xlu0 %5744
        %v5746 = vadd.f32 %v5568, %v5570
        %5747 = vadd.xlane.f32.xlu0 %v5746
        %v5748 = vpop.xlane.xlu0 %5747
        %v5749 = vadd.f32 %v5572, %v5574
        %5750 = vadd.xlane.f32.xlu0 %v5749
        %v5751 = vpop.xlane.xlu0 %5750
        %v5752 = vadd.f32 %v5576, %v5578
        %5753 = vadd.xlane.f32.xlu0 %v5752
        %v5754 = vpop.xlane.xlu0 %5753
        %v5755 = vadd.f32 %v5580, %v5582
        %5756 = vadd.xlane.f32.xlu0 %v5755
        %v5757 = vpop.xlane.xlu0 %5756
        %v5758 = vadd.f32 %v5584, %v5586
        %5759 = vadd.xlane.f32.xlu0 %v5758
        %v5760 = vpop.xlane.xlu0 %5759
        %v5761 = vadd.f32 %v5588, %v5590
        %5762 = vadd.xlane.f32.xlu0 %v5761
        %v5763 = vpop.xlane.xlu0 %5762
        %v5764 = vadd.f32 %v5592, %v5594
        %5765 = vadd.xlane.f32.xlu0 %v5764
        %v5766 = vpop.xlane.xlu0 %5765
        %v5767 = vadd.f32 %v5596, %v5598
        %5768 = vadd.xlane.f32.xlu0 %v5767
        %v5769 = vpop.xlane.xlu0 %5768
        %v5770 = vadd.f32 %v5600, %v5602
        %5771 = vadd.xlane.f32.xlu0 %v5770
        %v5772 = vpop.xlane.xlu0 %5771
        %v5773 = vadd.f32 %v5604, %v5606
        %5774 = vadd.xlane.f32.xlu0 %v5773
        %v5775 = vpop.xlane.xlu0 %5774
        %v5776 = vadd.f32 %v5608, %v5610
        %5777 = vadd.xlane.f32.xlu0 %v5776
        %v5778 = vpop.xlane.xlu0 %5777
        %v5779 = vadd.f32 %v5612, %v5614
        %5780 = vadd.xlane.f32.xlu0 %v5779
        %v5781 = vpop.xlane.xlu0 %5780
        %v5782 = vadd.f32 %v5616, %v5618
        %5783 = vadd.xlane.f32.xlu0 %v5782
        %v5784 = vpop.xlane.xlu0 %5783
        %v5785 = vadd.f32 %v5620, %v5622
        %5786 = vadd.xlane.f32.xlu0 %v5785
        %v5787 = vpop.xlane.xlu0 %5786
        %v5788 = vadd.f32 %v5624, %v5626
        %5789 = vadd.xlane.f32.xlu0 %v5788
        %v5790 = vpop.xlane.xlu0 %5789
        %v5791 = vadd.f32 %v5628, %v5630
        %5792 = vadd.xlane.f32.xlu0 %v5791
        %v5793 = vpop.xlane.xlu0 %5792
        %v5794 = vadd.f32 %v5632, %v5634
        %5795 = vadd.xlane.f32.xlu0 %v5794
        %v5796 = vpop.xlane.xlu0 %5795
        %v5797 = vadd.f32 %v5636, %v5638
        %5798 = vadd.xlane.f32.xlu0 %v5797
        %v5799 = vpop.xlane.xlu0 %5798
        %v5800 = vadd.f32 %v5672, %v5706
        %v5801 = vadd.f32 %v5673, %v5709
        %v5802 = vadd.f32 %v5674, %v5712
        %v5803 = vadd.f32 %v5675, %v5715
        %v5804 = vadd.f32 %v5676, %v5718
        %v5805 = vadd.f32 %v5677, %v5721
        %v5806 = vadd.f32 %v5678, %v5724
        %v5807 = vadd.f32 %v5679, %v5727
        %v5808 = vadd.f32 %v5680, %v5730
        %v5809 = vadd.f32 %v5681, %v5733
        %v5810 = vadd.f32 %v5682, %v5736
        %v5811 = vadd.f32 %v5683, %v5739
        %v5812 = vadd.f32 %v5684, %v5742
        %v5813 = vadd.f32 %v5685, %v5745
        %v5814 = vadd.f32 %v5686, %v5748
        %v5815 = vadd.f32 %v5687, %v5751
        %v5816 = vadd.f32 %v5688, %v5754
        %v5817 = vadd.f32 %v5689, %v5757
        %v5818 = vadd.f32 %v5690, %v5760
        %v5819 = vadd.f32 %v5691, %v5763
        %v5820 = vadd.f32 %v5692, %v5766
        %v5821 = vadd.f32 %v5693, %v5769
        %v5822 = vadd.f32 %v5694, %v5772
        %v5823 = vadd.f32 %v5695, %v5775
        %v5824 = vadd.f32 %v5696, %v5778
        %v5825 = vadd.f32 %v5697, %v5781
        %v5826 = vadd.f32 %v5698, %v5784
        %v5827 = vadd.f32 %v5699, %v5787
        %v5828 = vadd.f32 %v5700, %v5790
        %v5829 = vadd.f32 %v5701, %v5793
        %v5830 = vadd.f32 %v5702, %v5796
        %v5831 = vadd.f32 %v5703, %v5799
        %5832 = vst.msk [vmem:[%s5639] sm:$0xff] %vm2316, %v5800
        %5833 = vst.msk [vmem:[%s5639 + $0x8] sm:$0xff] %vm2316, %v5801
        %5834 = vst.msk [vmem:[%s5639 + $0x10] sm:$0xff] %vm2316, %v5802
        %5835 = vst.msk [vmem:[%s5639 + $0x18] sm:$0xff] %vm2316, %v5803
        %5836 = vst.msk [vmem:[%s5639 + $0x20] sm:$0xff] %vm2316, %v5804
        %5837 = vst.msk [vmem:[%s5639 + $0x28] sm:$0xff] %vm2316, %v5805
        %5838 = vst.msk [vmem:[%s5639 + $0x30] sm:$0xff] %vm2316, %v5806
        %5839 = vst.msk [vmem:[%s5639 + $0x38] sm:$0xff] %vm2316, %v5807
        %5840 = vst.msk [vmem:[%s5639 + $0x40] sm:$0xff] %vm2316, %v5808
        %5841 = vst.msk [vmem:[%s5639 + $0x48] sm:$0xff] %vm2316, %v5809
        %5842 = vst.msk [vmem:[%s5639 + $0x50] sm:$0xff] %vm2316, %v5810
        %5843 = vst.msk [vmem:[%s5639 + $0x58] sm:$0xff] %vm2316, %v5811
        %5844 = vst.msk [vmem:[%s5639 + $0x60] sm:$0xff] %vm2316, %v5812
        %5845 = vst.msk [vmem:[%s5639 + $0x68] sm:$0xff] %vm2316, %v5813
        %5846 = vst.msk [vmem:[%s5639 + $0x70] sm:$0xff] %vm2316, %v5814
        %5847 = vst.msk [vmem:[%s5639 + $0x78] sm:$0xff] %vm2316, %v5815
        %5848 = vst.msk [vmem:[%s5639 + $0x80] sm:$0xff] %vm2316, %v5816
        %5849 = vst.msk [vmem:[%s5639 + $0x88] sm:$0xff] %vm2316, %v5817
        %5850 = vst.msk [vmem:[%s5639 + $0x90] sm:$0xff] %vm2316, %v5818
        %5851 = vst.msk [vmem:[%s5639 + $0x98] sm:$0xff] %vm2316, %v5819
        %5852 = vst.msk [vmem:[%s5639 + $0xa0] sm:$0xff] %vm2316, %v5820
        %5853 = vst.msk [vmem:[%s5639 + $0xa8] sm:$0xff] %vm2316, %v5821
        %5854 = vst.msk [vmem:[%s5639 + $0xb0] sm:$0xff] %vm2316, %v5822
        %5855 = vst.msk [vmem:[%s5639 + $0xb8] sm:$0xff] %vm2316, %v5823
        %5856 = vst.msk [vmem:[%s5639 + $0xc0] sm:$0xff] %vm2316, %v5824
        %5857 = vst.msk [vmem:[%s5639 + $0xc8] sm:$0xff] %vm2316, %v5825
        %5858 = vst.msk [vmem:[%s5639 + $0xd0] sm:$0xff] %vm2316, %v5826
        %5859 = vst.msk [vmem:[%s5639 + $0xd8] sm:$0xff] %vm2316, %v5827
        %5860 = vst.msk [vmem:[%s5639 + $0xe0] sm:$0xff] %vm2316, %v5828
        %5861 = vst.msk [vmem:[%s5639 + $0xe8] sm:$0xff] %vm2316, %v5829
        %5862 = vst.msk [vmem:[%s5639 + $0xf0] sm:$0xff] %vm2316, %v5830
        %5863 = vst.msk [vmem:[%s5639 + $0xf8] sm:$0xff] %vm2316, %v5831
        %v5864 = vpack.c.bf16 %v5516, %v5512
        %v5865 = vpack.c.bf16 %v5518, %v5514
        %v5866 = vpack.c.bf16 %v5524, %v5520
        %v5867 = vpack.c.bf16 %v5526, %v5522
        %v5868 = vpack.c.bf16 %v5532, %v5528
        %v5869 = vpack.c.bf16 %v5534, %v5530
        %v5870 = vpack.c.bf16 %v5540, %v5536
        %v5871 = vpack.c.bf16 %v5542, %v5538
        %v5872 = vpack.c.bf16 %v5548, %v5544
        %v5873 = vpack.c.bf16 %v5550, %v5546
        %v5874 = vpack.c.bf16 %v5556, %v5552
        %v5875 = vpack.c.bf16 %v5558, %v5554
        %v5876 = vpack.c.bf16 %v5564, %v5560
        %v5877 = vpack.c.bf16 %v5566, %v5562
        %v5878 = vpack.c.bf16 %v5572, %v5568
        %v5879 = vpack.c.bf16 %v5574, %v5570
        %v5880 = vpack.c.bf16 %v5580, %v5576
        %v5881 = vpack.c.bf16 %v5582, %v5578
        %v5882 = vpack.c.bf16 %v5588, %v5584
        %v5883 = vpack.c.bf16 %v5590, %v5586
        %v5884 = vpack.c.bf16 %v5596, %v5592
        %v5885 = vpack.c.bf16 %v5598, %v5594
        %v5886 = vpack.c.bf16 %v5604, %v5600
        %v5887 = vpack.c.bf16 %v5606, %v5602
        %v5888 = vpack.c.bf16 %v5612, %v5608
        %v5889 = vpack.c.bf16 %v5614, %v5610
        %v5890 = vpack.c.bf16 %v5620, %v5616
        %v5891 = vpack.c.bf16 %v5622, %v5618
        %v5892 = vpack.c.bf16 %v5628, %v5624
        %v5893 = vpack.c.bf16 %v5630, %v5626
        %v5894 = vpack.c.bf16 %v5636, %v5632
        %v5895 = vpack.c.bf16 %v5638, %v5634
        %5896 = vrot.lane.b32.xlu0 %v2445, 64
        %v5897 = vpop.permute.xlu0 %5896
        %5898 = vrot.lane.b32.xlu0 %v2446, 64
        %v5899 = vpop.permute.xlu0 %5898
        %5900 = vrot.lane.b32.xlu0 %v2447, 64
        %v5901 = vpop.permute.xlu0 %5900
        %5902 = vrot.lane.b32.xlu0 %v2448, 64
        %v5903 = vpop.permute.xlu0 %5902
        %5904 = vrot.lane.b32.xlu0 %v2449, 64
        %v5905 = vpop.permute.xlu0 %5904
        %5906 = vrot.lane.b32.xlu0 %v2450, 64
        %v5907 = vpop.permute.xlu0 %5906
        %5908 = vrot.lane.b32.xlu0 %v2451, 64
        %v5909 = vpop.permute.xlu0 %5908
        %5910 = vrot.lane.b32.xlu0 %v2452, 64
        %v5911 = vpop.permute.xlu0 %5910
        %5912 = vrot.lane.b32.xlu0 %v2453, 64
        %v5913 = vpop.permute.xlu0 %5912
        %5914 = vrot.lane.b32.xlu0 %v2454, 64
        %v5915 = vpop.permute.xlu0 %5914
        %5916 = vrot.lane.b32.xlu0 %v2455, 64
        %v5917 = vpop.permute.xlu0 %5916
        %5918 = vrot.lane.b32.xlu0 %v2456, 64
        %v5919 = vpop.permute.xlu0 %5918
        %5920 = vrot.lane.b32.xlu0 %v2457, 64
        %v5921 = vpop.permute.xlu0 %5920
        %5922 = vrot.lane.b32.xlu0 %v2458, 64
        %v5923 = vpop.permute.xlu0 %5922
        %5924 = vrot.lane.b32.xlu0 %v2459, 64
        %v5925 = vpop.permute.xlu0 %5924
        %5926 = vrot.lane.b32.xlu0 %v2460, 64
        %v5927 = vpop.permute.xlu0 %5926
        %5944 = vmatprep.subr.bf16.mxu0 0
        %5945 = vmatpush1.bf16.msra.mxu0 %v5897
        %5946 = vmatprep.subr.bf16.mxu0 0
        %5947 = vmatpush1.bf16.msra.mxu0 %v5899
        %5948 = vmatprep.subr.bf16.mxu0 0
        %5949 = vmatpush1.bf16.msra.mxu0 %v5901
        %5950 = vmatprep.subr.bf16.mxu0 0
        %5951 = vmatpush1.bf16.msra.mxu0 %v5903
        %5952 = vmatprep.subr.bf16.mxu0 0
        %5953 = vmatpush1.bf16.msra.mxu0 %v5905
        %5954 = vmatprep.subr.bf16.mxu0 0
        %5955 = vmatpush1.bf16.msra.mxu0 %v5907
        %5956 = vmatprep.subr.bf16.mxu0 0
        %5957 = vmatpush1.bf16.msra.mxu0 %v5909
        %5958 = vmatprep.subr.bf16.mxu0 0
        %5959 = vmatpush1.bf16.msra.mxu0 %v5911
        %5960 = vmatprep.subr.bf16.mxu0 0
        %5961 = vmatpush1.bf16.msra.mxu0 %v5913
        %5962 = vmatprep.subr.bf16.mxu0 0
        %5963 = vmatpush1.bf16.msra.mxu0 %v5915
        %5964 = vmatprep.subr.bf16.mxu0 0
        %5965 = vmatpush1.bf16.msra.mxu0 %v5917
        %5966 = vmatprep.subr.bf16.mxu0 0
        %5967 = vmatpush1.bf16.msra.mxu0 %v5919
        %5968 = vmatprep.subr.bf16.mxu0 0
        %5969 = vmatpush1.bf16.msra.mxu0 %v5921
        %5970 = vmatprep.subr.bf16.mxu0 0
        %5971 = vmatpush1.bf16.msra.mxu0 %v5923
        %5972 = vmatprep.subr.bf16.mxu0 0
        %5973 = vmatpush1.bf16.msra.mxu0 %v5925
        %5974 = vmatprep.subr.bf16.mxu0 0
        %5975 = vmatpush1.bf16.msra.mxu0 %v5927
        %5976 = vmatprep.mubr.bf16.mxu0 %v5865
        %5977 = vmatmul.mubr.bf16.gmra.mrb[0].mxu0 %v5864
        %v5978 = vpop.f32.mrb[0].mxu0
        %v5979 = vadd.f32 0.0, %v5978
        %v5980 = vpop.f32.mrb[0].mxu0
        %v5981 = vpop.f32.mrb[0].mxu0
        %v5982 = vadd.f32 0.0, %v5981
        %v5983 = vpop.f32.mrb[0].mxu0
        %5984 = vmatprep.mubr.bf16.mxu0 %v5867
        %5985 = vmatmul.mubr.bf16.gmra.mrb[0].mxu0 %v5866
        %v5986 = vpop.f32.mrb[0].mxu0
        %v5987 = vadd.f32 0.0, %v5986
        %v5988 = vpop.f32.mrb[0].mxu0
        %v5989 = vpop.f32.mrb[0].mxu0
        %v5990 = vadd.f32 0.0, %v5989
        %v5991 = vpop.f32.mrb[0].mxu0
        %5992 = vmatprep.mubr.bf16.mxu0 %v5869
        %5993 = vmatmul.mubr.bf16.gmra.mrb[0].mxu0 %v5868
        %v5994 = vpop.f32.mrb[0].mxu0
        %v5995 = vadd.f32 0.0, %v5994
        %v5996 = vpop.f32.mrb[0].mxu0
        %v5997 = vpop.f32.mrb[0].mxu0
        %v5998 = vadd.f32 0.0, %v5997
        %v5999 = vpop.f32.mrb[0].mxu0
        %6000 = vmatprep.mubr.bf16.mxu0 %v5871
        %6001 = vmatmul.mubr.bf16.gmra.mrb[0].mxu0 %v5870
        %v6002 = vpop.f32.mrb[0].mxu0
        %v6003 = vadd.f32 0.0, %v6002
        %v6004 = vpop.f32.mrb[0].mxu0
        %v6005 = vpop.f32.mrb[0].mxu0
        %v6006 = vadd.f32 0.0, %v6005
        %v6007 = vpop.f32.mrb[0].mxu0
        %6008 = vmatprep.mubr.bf16.mxu0 %v5873
        %6009 = vmatmul.mubr.bf16.gmra.mrb[0].mxu0 %v5872
        %v6010 = vpop.f32.mrb[0].mxu0
        %v6011 = vadd.f32 0.0, %v6010
        %v6012 = vpop.f32.mrb[0].mxu0
        %v6013 = vpop.f32.mrb[0].mxu0
        %v6014 = vadd.f32 0.0, %v6013
        %v6015 = vpop.f32.mrb[0].mxu0
        %6016 = vmatprep.mubr.bf16.mxu0 %v5875
        %6017 = vmatmul.mubr.bf16.gmra.mrb[0].mxu0 %v5874
        %v6018 = vpop.f32.mrb[0].mxu0
        %v6019 = vadd.f32 0.0, %v6018
        %v6020 = vpop.f32.mrb[0].mxu0
        %v6021 = vpop.f32.mrb[0].mxu0
        %v6022 = vadd.f32 0.0, %v6021
        %v6023 = vpop.f32.mrb[0].mxu0
        %6024 = vmatprep.mubr.bf16.mxu0 %v5877
        %6025 = vmatmul.mubr.bf16.gmra.mrb[0].mxu0 %v5876
        %v6026 = vpop.f32.mrb[0].mxu0
        %v6027 = vadd.f32 0.0, %v6026
        %v6028 = vpop.f32.mrb[0].mxu0
        %v6029 = vpop.f32.mrb[0].mxu0
        %v6030 = vadd.f32 0.0, %v6029
        %v6031 = vpop.f32.mrb[0].mxu0
        %6032 = vmatprep.mubr.bf16.mxu0 %v5879
        %6033 = vmatmul.mubr.bf16.gmra.mrb[0].mxu0 %v5878
        %v6034 = vpop.f32.mrb[0].mxu0
        %v6035 = vadd.f32 0.0, %v6034
        %v6036 = vpop.f32.mrb[0].mxu0
        %v6037 = vpop.f32.mrb[0].mxu0
        %v6038 = vadd.f32 0.0, %v6037
        %v6039 = vpop.f32.mrb[0].mxu0
        %6040 = vmatprep.mubr.bf16.mxu0 %v5881
        %6041 = vmatmul.mubr.bf16.gmra.mrb[0].mxu0 %v5880
        %v6042 = vpop.f32.mrb[0].mxu0
        %v6043 = vadd.f32 0.0, %v6042
        %v6044 = vpop.f32.mrb[0].mxu0
        %v6045 = vpop.f32.mrb[0].mxu0
        %v6046 = vadd.f32 0.0, %v6045
        %v6047 = vpop.f32.mrb[0].mxu0
        %6048 = vmatprep.mubr.bf16.mxu0 %v5883
        %6049 = vmatmul.mubr.bf16.gmra.mrb[0].mxu0 %v5882
        %v6050 = vpop.f32.mrb[0].mxu0
        %v6051 = vadd.f32 0.0, %v6050
        %v6052 = vpop.f32.mrb[0].mxu0
        %v6053 = vpop.f32.mrb[0].mxu0
        %v6054 = vadd.f32 0.0, %v6053
        %v6055 = vpop.f32.mrb[0].mxu0
        %6056 = vmatprep.mubr.bf16.mxu0 %v5885
        %6057 = vmatmul.mubr.bf16.gmra.mrb[0].mxu0 %v5884
        %v6058 = vpop.f32.mrb[0].mxu0
        %v6059 = vadd.f32 0.0, %v6058
        %v6060 = vpop.f32.mrb[0].mxu0
        %v6061 = vpop.f32.mrb[0].mxu0
        %v6062 = vadd.f32 0.0, %v6061
        %v6063 = vpop.f32.mrb[0].mxu0
        %6064 = vmatprep.mubr.bf16.mxu0 %v5887
        %6065 = vmatmul.mubr.bf16.gmra.mrb[0].mxu0 %v5886
        %v6066 = vpop.f32.mrb[0].mxu0
        %v6067 = vadd.f32 0.0, %v6066
        %v6068 = vpop.f32.mrb[0].mxu0
        %v6069 = vpop.f32.mrb[0].mxu0
        %v6070 = vadd.f32 0.0, %v6069
        %v6071 = vpop.f32.mrb[0].mxu0
        %6072 = vmatprep.mubr.bf16.mxu0 %v5889
        %6073 = vmatmul.mubr.bf16.gmra.mrb[0].mxu0 %v5888
        %v6074 = vpop.f32.mrb[0].mxu0
        %v6075 = vadd.f32 0.0, %v6074
        %v6076 = vpop.f32.mrb[0].mxu0
        %v6077 = vpop.f32.mrb[0].mxu0
        %v6078 = vadd.f32 0.0, %v6077
        %v6079 = vpop.f32.mrb[0].mxu0
        %6080 = vmatprep.mubr.bf16.mxu0 %v5891
        %6081 = vmatmul.mubr.bf16.gmra.mrb[0].mxu0 %v5890
        %v6082 = vpop.f32.mrb[0].mxu0
        %v6083 = vadd.f32 0.0, %v6082
        %v6084 = vpop.f32.mrb[0].mxu0
        %v6085 = vpop.f32.mrb[0].mxu0
        %v6086 = vadd.f32 0.0, %v6085
        %v6087 = vpop.f32.mrb[0].mxu0
        %6088 = vmatprep.mubr.bf16.mxu0 %v5893
        %6089 = vmatmul.mubr.bf16.gmra.mrb[0].mxu0 %v5892
        %v6090 = vpop.f32.mrb[0].mxu0
        %v6091 = vadd.f32 0.0, %v6090
        %v6092 = vpop.f32.mrb[0].mxu0
        %v6093 = vpop.f32.mrb[0].mxu0
        %v6094 = vadd.f32 0.0, %v6093
        %v6095 = vpop.f32.mrb[0].mxu0
        %6096 = vmatprep.mubr.bf16.mxu0 %v5895
        %6097 = vmatmul.mubr.bf16.gmra.mrb[0].mxu0 %v5894
        %v6098 = vpop.f32.mrb[0].mxu0
        %v6099 = vadd.f32 0.0, %v6098
        %v6100 = vpop.f32.mrb[0].mxu0
        %v6101 = vpop.f32.mrb[0].mxu0
        %v6102 = vadd.f32 0.0, %v6101
        %v6103 = vpop.f32.mrb[0].mxu0
        %6104 = vdwg.mxu0
        %s6105 = scalar_lea.vmem [#allocation5], 512
        %v6106 = vld [vmem:[%s6105] sm:$0xff]
        %v6107 = vld [vmem:[%s6105 + $0x8] sm:$0xff]
        %v6108 = vld [vmem:[%s6105 + $0x10] sm:$0xff]
        %v6109 = vld [vmem:[%s6105 + $0x18] sm:$0xff]
        %v6110 = vld [vmem:[%s6105 + $0x20] sm:$0xff]
        %v6111 = vld [vmem:[%s6105 + $0x28] sm:$0xff]
        %v6112 = vld [vmem:[%s6105 + $0x30] sm:$0xff]
        %v6113 = vld [vmem:[%s6105 + $0x38] sm:$0xff]
        %v6114 = vld [vmem:[%s6105 + $0x40] sm:$0xff]
        %v6115 = vld [vmem:[%s6105 + $0x48] sm:$0xff]
        %v6116 = vld [vmem:[%s6105 + $0x50] sm:$0xff]
        %v6117 = vld [vmem:[%s6105 + $0x58] sm:$0xff]
        %v6118 = vld [vmem:[%s6105 + $0x60] sm:$0xff]
        %v6119 = vld [vmem:[%s6105 + $0x68] sm:$0xff]
        %v6120 = vld [vmem:[%s6105 + $0x70] sm:$0xff]
        %v6121 = vld [vmem:[%s6105 + $0x78] sm:$0xff]
        %v6122 = vld [vmem:[%s6105 + $0x80] sm:$0xff]
        %v6123 = vld [vmem:[%s6105 + $0x88] sm:$0xff]
        %v6124 = vld [vmem:[%s6105 + $0x90] sm:$0xff]
        %v6125 = vld [vmem:[%s6105 + $0x98] sm:$0xff]
        %v6126 = vld [vmem:[%s6105 + $0xa0] sm:$0xff]
        %v6127 = vld [vmem:[%s6105 + $0xa8] sm:$0xff]
        %v6128 = vld [vmem:[%s6105 + $0xb0] sm:$0xff]
        %v6129 = vld [vmem:[%s6105 + $0xb8] sm:$0xff]
        %v6130 = vld [vmem:[%s6105 + $0xc0] sm:$0xff]
        %v6131 = vld [vmem:[%s6105 + $0xc8] sm:$0xff]
        %v6132 = vld [vmem:[%s6105 + $0xd0] sm:$0xff]
        %v6133 = vld [vmem:[%s6105 + $0xd8] sm:$0xff]
        %v6134 = vld [vmem:[%s6105 + $0xe0] sm:$0xff]
        %v6135 = vld [vmem:[%s6105 + $0xe8] sm:$0xff]
        %v6136 = vld [vmem:[%s6105 + $0xf0] sm:$0xff]
        %v6137 = vld [vmem:[%s6105 + $0xf8] sm:$0xff]
        %6139 = vset.pattern.permute.xlu0 0
        %6140 = vperm.xlu0 %6139, %v5224
        %v6141 = vpop.permute.xlu0 %6140
        %6144 = vset.pattern.permute.xlu0 0
        %6145 = vperm.xlu0 %6144, %v5226
        %v6146 = vpop.permute.xlu0 %6145
        %6149 = vset.pattern.permute.xlu0 0
        %6150 = vperm.xlu0 %6149, %v5228
        %v6151 = vpop.permute.xlu0 %6150
        %6154 = vset.pattern.permute.xlu0 0
        %6155 = vperm.xlu0 %6154, %v5230
        %v6156 = vpop.permute.xlu0 %6155
        %6159 = vset.pattern.permute.xlu0 0
        %6160 = vperm.xlu0 %6159, %v5232
        %v6161 = vpop.permute.xlu0 %6160
        %6164 = vset.pattern.permute.xlu0 0
        %6165 = vperm.xlu0 %6164, %v5234
        %v6166 = vpop.permute.xlu0 %6165
        %6169 = vset.pattern.permute.xlu0 0
        %6170 = vperm.xlu0 %6169, %v5236
        %v6171 = vpop.permute.xlu0 %6170
        %6174 = vset.pattern.permute.xlu0 0
        %6175 = vperm.xlu0 %6174, %v5238
        %v6176 = vpop.permute.xlu0 %6175
        %6179 = vset.pattern.permute.xlu0 0
        %6180 = vperm.xlu0 %6179, %v5240
        %v6181 = vpop.permute.xlu0 %6180
        %6184 = vset.pattern.permute.xlu0 0
        %6185 = vperm.xlu0 %6184, %v5242
        %v6186 = vpop.permute.xlu0 %6185
        %6189 = vset.pattern.permute.xlu0 0
        %6190 = vperm.xlu0 %6189, %v5244
        %v6191 = vpop.permute.xlu0 %6190
        %6194 = vset.pattern.permute.xlu0 0
        %6195 = vperm.xlu0 %6194, %v5246
        %v6196 = vpop.permute.xlu0 %6195
        %6199 = vset.pattern.permute.xlu0 0
        %6200 = vperm.xlu0 %6199, %v5248
        %v6201 = vpop.permute.xlu0 %6200
        %6204 = vset.pattern.permute.xlu0 0
        %6205 = vperm.xlu0 %6204, %v5250
        %v6206 = vpop.permute.xlu0 %6205
        %6209 = vset.pattern.permute.xlu0 0
        %6210 = vperm.xlu0 %6209, %v5252
        %v6211 = vpop.permute.xlu0 %6210
        %6214 = vset.pattern.permute.xlu0 0
        %6215 = vperm.xlu0 %6214, %v5254
        %v6216 = vpop.permute.xlu0 %6215
        %6219 = vset.pattern.permute.xlu0 0
        %6220 = vperm.xlu0 %6219, %v5256
        %v6221 = vpop.permute.xlu0 %6220
        %6224 = vset.pattern.permute.xlu0 0
        %6225 = vperm.xlu0 %6224, %v5258
        %v6226 = vpop.permute.xlu0 %6225
        %6229 = vset.pattern.permute.xlu0 0
        %6230 = vperm.xlu0 %6229, %v5260
        %v6231 = vpop.permute.xlu0 %6230
        %6234 = vset.pattern.permute.xlu0 0
        %6235 = vperm.xlu0 %6234, %v5262
        %v6236 = vpop.permute.xlu0 %6235
        %6239 = vset.pattern.permute.xlu0 0
        %6240 = vperm.xlu0 %6239, %v5264
        %v6241 = vpop.permute.xlu0 %6240
        %6244 = vset.pattern.permute.xlu0 0
        %6245 = vperm.xlu0 %6244, %v5266
        %v6246 = vpop.permute.xlu0 %6245
        %6249 = vset.pattern.permute.xlu0 0
        %6250 = vperm.xlu0 %6249, %v5268
        %v6251 = vpop.permute.xlu0 %6250
        %6254 = vset.pattern.permute.xlu0 0
        %6255 = vperm.xlu0 %6254, %v5270
        %v6256 = vpop.permute.xlu0 %6255
        %6259 = vset.pattern.permute.xlu0 0
        %6260 = vperm.xlu0 %6259, %v5272
        %v6261 = vpop.permute.xlu0 %6260
        %6264 = vset.pattern.permute.xlu0 0
        %6265 = vperm.xlu0 %6264, %v5274
        %v6266 = vpop.permute.xlu0 %6265
        %6269 = vset.pattern.permute.xlu0 0
        %6270 = vperm.xlu0 %6269, %v5276
        %v6271 = vpop.permute.xlu0 %6270
        %6274 = vset.pattern.permute.xlu0 0
        %6275 = vperm.xlu0 %6274, %v5278
        %v6276 = vpop.permute.xlu0 %6275
        %6279 = vset.pattern.permute.xlu0 0
        %6280 = vperm.xlu0 %6279, %v5280
        %v6281 = vpop.permute.xlu0 %6280
        %6284 = vset.pattern.permute.xlu0 0
        %6285 = vperm.xlu0 %6284, %v5282
        %v6286 = vpop.permute.xlu0 %6285
        %6289 = vset.pattern.permute.xlu0 0
        %6290 = vperm.xlu0 %6289, %v5284
        %v6291 = vpop.permute.xlu0 %6290
        %6294 = vset.pattern.permute.xlu0 0
        %6295 = vperm.xlu0 %6294, %v5286
        %v6296 = vpop.permute.xlu0 %6295
        %v6298 = vmul.f32 %v6141, %v6106
        %v6299 = vmul.f32 %v6146, %v6107
        %v6300 = vmul.f32 %v6151, %v6108
        %v6301 = vmul.f32 %v6156, %v6109
        %v6302 = vmul.f32 %v6161, %v6110
        %v6303 = vmul.f32 %v6166, %v6111
        %v6304 = vmul.f32 %v6171, %v6112
        %v6305 = vmul.f32 %v6176, %v6113
        %v6306 = vmul.f32 %v6181, %v6114
        %v6307 = vmul.f32 %v6186, %v6115
        %v6308 = vmul.f32 %v6191, %v6116
        %v6309 = vmul.f32 %v6196, %v6117
        %v6310 = vmul.f32 %v6201, %v6118
        %v6311 = vmul.f32 %v6206, %v6119
        %v6312 = vmul.f32 %v6211, %v6120
        %v6313 = vmul.f32 %v6216, %v6121
        %v6314 = vmul.f32 %v6221, %v6122
        %v6315 = vmul.f32 %v6226, %v6123
        %v6316 = vmul.f32 %v6231, %v6124
        %v6317 = vmul.f32 %v6236, %v6125
        %v6318 = vmul.f32 %v6241, %v6126
        %v6319 = vmul.f32 %v6246, %v6127
        %v6320 = vmul.f32 %v6251, %v6128
        %v6321 = vmul.f32 %v6256, %v6129
        %v6322 = vmul.f32 %v6261, %v6130
        %v6323 = vmul.f32 %v6266, %v6131
        %v6324 = vmul.f32 %v6271, %v6132
        %v6325 = vmul.f32 %v6276, %v6133
        %v6326 = vmul.f32 %v6281, %v6134
        %v6327 = vmul.f32 %v6286, %v6135
        %v6328 = vmul.f32 %v6291, %v6136
        %v6329 = vmul.f32 %v6296, %v6137
        %v6330 = vadd.f32 %v6298, %v5979
        %v6331 = vadd.f32 %v6299, %v5982
        %v6332 = vadd.f32 %v6300, %v5987
        %v6333 = vadd.f32 %v6301, %v5990
        %v6334 = vadd.f32 %v6302, %v5995
        %v6335 = vadd.f32 %v6303, %v5998
        %v6336 = vadd.f32 %v6304, %v6003
        %v6337 = vadd.f32 %v6305, %v6006
        %v6338 = vadd.f32 %v6306, %v6011
        %v6339 = vadd.f32 %v6307, %v6014
        %v6340 = vadd.f32 %v6308, %v6019
        %v6341 = vadd.f32 %v6309, %v6022
        %v6342 = vadd.f32 %v6310, %v6027
        %v6343 = vadd.f32 %v6311, %v6030
        %v6344 = vadd.f32 %v6312, %v6035
        %v6345 = vadd.f32 %v6313, %v6038
        %v6346 = vadd.f32 %v6314, %v6043
        %v6347 = vadd.f32 %v6315, %v6046
        %v6348 = vadd.f32 %v6316, %v6051
        %v6349 = vadd.f32 %v6317, %v6054
        %v6350 = vadd.f32 %v6318, %v6059
        %v6351 = vadd.f32 %v6319, %v6062
        %v6352 = vadd.f32 %v6320, %v6067
        %v6353 = vadd.f32 %v6321, %v6070
        %v6354 = vadd.f32 %v6322, %v6075
        %v6355 = vadd.f32 %v6323, %v6078
        %v6356 = vadd.f32 %v6324, %v6083
        %v6357 = vadd.f32 %v6325, %v6086
        %v6358 = vadd.f32 %v6326, %v6091
        %v6359 = vadd.f32 %v6327, %v6094
        %v6360 = vadd.f32 %v6328, %v6099
        %v6361 = vadd.f32 %v6329, %v6102
        %6362 = vst.msk [vmem:[%s6105] sm:$0xff] %vm1226, %v6330
        %6363 = vst.msk [vmem:[%s6105 + $0x8] sm:$0xff] %vm1226, %v6331
        %6364 = vst.msk [vmem:[%s6105 + $0x10] sm:$0xff] %vm1226, %v6332
        %6365 = vst.msk [vmem:[%s6105 + $0x18] sm:$0xff] %vm1226, %v6333
        %6366 = vst.msk [vmem:[%s6105 + $0x20] sm:$0xff] %vm1226, %v6334
        %6367 = vst.msk [vmem:[%s6105 + $0x28] sm:$0xff] %vm1226, %v6335
        %6368 = vst.msk [vmem:[%s6105 + $0x30] sm:$0xff] %vm1226, %v6336
        %6369 = vst.msk [vmem:[%s6105 + $0x38] sm:$0xff] %vm1226, %v6337
        %6370 = vst.msk [vmem:[%s6105 + $0x40] sm:$0xff] %vm1226, %v6338
        %6371 = vst.msk [vmem:[%s6105 + $0x48] sm:$0xff] %vm1226, %v6339
        %6372 = vst.msk [vmem:[%s6105 + $0x50] sm:$0xff] %vm1226, %v6340
        %6373 = vst.msk [vmem:[%s6105 + $0x58] sm:$0xff] %vm1226, %v6341
        %6374 = vst.msk [vmem:[%s6105 + $0x60] sm:$0xff] %vm1226, %v6342
        %6375 = vst.msk [vmem:[%s6105 + $0x68] sm:$0xff] %vm1226, %v6343
        %6376 = vst.msk [vmem:[%s6105 + $0x70] sm:$0xff] %vm1226, %v6344
        %6377 = vst.msk [vmem:[%s6105 + $0x78] sm:$0xff] %vm1226, %v6345
        %6378 = vst.msk [vmem:[%s6105 + $0x80] sm:$0xff] %vm1226, %v6346
        %6379 = vst.msk [vmem:[%s6105 + $0x88] sm:$0xff] %vm1226, %v6347
        %6380 = vst.msk [vmem:[%s6105 + $0x90] sm:$0xff] %vm1226, %v6348
        %6381 = vst.msk [vmem:[%s6105 + $0x98] sm:$0xff] %vm1226, %v6349
        %6382 = vst.msk [vmem:[%s6105 + $0xa0] sm:$0xff] %vm1226, %v6350
        %6383 = vst.msk [vmem:[%s6105 + $0xa8] sm:$0xff] %vm1226, %v6351
        %6384 = vst.msk [vmem:[%s6105 + $0xb0] sm:$0xff] %vm1226, %v6352
        %6385 = vst.msk [vmem:[%s6105 + $0xb8] sm:$0xff] %vm1226, %v6353
        %6386 = vst.msk [vmem:[%s6105 + $0xc0] sm:$0xff] %vm1226, %v6354
        %6387 = vst.msk [vmem:[%s6105 + $0xc8] sm:$0xff] %vm1226, %v6355
        %6388 = vst.msk [vmem:[%s6105 + $0xd0] sm:$0xff] %vm1226, %v6356
        %6389 = vst.msk [vmem:[%s6105 + $0xd8] sm:$0xff] %vm1226, %v6357
        %6390 = vst.msk [vmem:[%s6105 + $0xe0] sm:$0xff] %vm1226, %v6358
        %6391 = vst.msk [vmem:[%s6105 + $0xe8] sm:$0xff] %vm1226, %v6359
        %6392 = vst.msk [vmem:[%s6105 + $0xf0] sm:$0xff] %vm1226, %v6360
        %6393 = vst.msk [vmem:[%s6105 + $0xf8] sm:$0xff] %vm1226, %v6361
        %6394 = vst.msk [vmem:[%s5030] sm:$0xff] %vm2316, %v5159
        %6395 = vst.msk [vmem:[%s5030 + $0x8] sm:$0xff] %vm2316, %v5160
        %6396 = vst.msk [vmem:[%s5030 + $0x10] sm:$0xff] %vm2316, %v5161
        %6397 = vst.msk [vmem:[%s5030 + $0x18] sm:$0xff] %vm2316, %v5162
        %6398 = vst.msk [vmem:[%s5030 + $0x20] sm:$0xff] %vm2316, %v5163
        %6399 = vst.msk [vmem:[%s5030 + $0x28] sm:$0xff] %vm2316, %v5164
        %6400 = vst.msk [vmem:[%s5030 + $0x30] sm:$0xff] %vm2316, %v5165
        %6401 = vst.msk [vmem:[%s5030 + $0x38] sm:$0xff] %vm2316, %v5166
        %6402 = vst.msk [vmem:[%s5030 + $0x40] sm:$0xff] %vm2316, %v5167
        %6403 = vst.msk [vmem:[%s5030 + $0x48] sm:$0xff] %vm2316, %v5168
        %6404 = vst.msk [vmem:[%s5030 + $0x50] sm:$0xff] %vm2316, %v5169
        %6405 = vst.msk [vmem:[%s5030 + $0x58] sm:$0xff] %vm2316, %v5170
        %6406 = vst.msk [vmem:[%s5030 + $0x60] sm:$0xff] %vm2316, %v5171
        %6407 = vst.msk [vmem:[%s5030 + $0x68] sm:$0xff] %vm2316, %v5172
        %6408 = vst.msk [vmem:[%s5030 + $0x70] sm:$0xff] %vm2316, %v5173
        %6409 = vst.msk [vmem:[%s5030 + $0x78] sm:$0xff] %vm2316, %v5174
        %6410 = vst.msk [vmem:[%s5030 + $0x80] sm:$0xff] %vm2316, %v5175
        %6411 = vst.msk [vmem:[%s5030 + $0x88] sm:$0xff] %vm2316, %v5176
        %6412 = vst.msk [vmem:[%s5030 + $0x90] sm:$0xff] %vm2316, %v5177
        %6413 = vst.msk [vmem:[%s5030 + $0x98] sm:$0xff] %vm2316, %v5178
        %6414 = vst.msk [vmem:[%s5030 + $0xa0] sm:$0xff] %vm2316, %v5179
        %6415 = vst.msk [vmem:[%s5030 + $0xa8] sm:$0xff] %vm2316, %v5180
        %6416 = vst.msk [vmem:[%s5030 + $0xb0] sm:$0xff] %vm2316, %v5181
        %6417 = vst.msk [vmem:[%s5030 + $0xb8] sm:$0xff] %vm2316, %v5182
        %6418 = vst.msk [vmem:[%s5030 + $0xc0] sm:$0xff] %vm2316, %v5183
        %6419 = vst.msk [vmem:[%s5030 + $0xc8] sm:$0xff] %vm2316, %v5184
        %6420 = vst.msk [vmem:[%s5030 + $0xd0] sm:$0xff] %vm2316, %v5185
        %6421 = vst.msk [vmem:[%s5030 + $0xd8] sm:$0xff] %vm2316, %v5186
        %6422 = vst.msk [vmem:[%s5030 + $0xe0] sm:$0xff] %vm2316, %v5187
        %6423 = vst.msk [vmem:[%s5030 + $0xe8] sm:$0xff] %vm2316, %v5188
        %6424 = vst.msk [vmem:[%s5030 + $0xf0] sm:$0xff] %vm2316, %v5189
        %6425 = vst.msk [vmem:[%s5030 + $0xf8] sm:$0xff] %vm2316, %v5190
        %s6426 = scalar_lea.vmem [#allocation2], 384
        %v6427 = vld [vmem:[%s6426] sm:$0xff]
        %v6428 = vld [vmem:[%s6426 + $0x8] sm:$0xff]
        %v6429 = vld [vmem:[%s6426 + $0x10] sm:$0xff]
        %v6430 = vld [vmem:[%s6426 + $0x18] sm:$0xff]
        %v6431 = vld [vmem:[%s6426 + $0x20] sm:$0xff]
        %v6432 = vld [vmem:[%s6426 + $0x28] sm:$0xff]
        %v6433 = vld [vmem:[%s6426 + $0x30] sm:$0xff]
        %v6434 = vld [vmem:[%s6426 + $0x38] sm:$0xff]
        %v6435 = vld [vmem:[%s6426 + $0x40] sm:$0xff]
        %v6436 = vld [vmem:[%s6426 + $0x48] sm:$0xff]
        %v6437 = vld [vmem:[%s6426 + $0x50] sm:$0xff]
        %v6438 = vld [vmem:[%s6426 + $0x58] sm:$0xff]
        %v6439 = vld [vmem:[%s6426 + $0x60] sm:$0xff]
        %v6440 = vld [vmem:[%s6426 + $0x68] sm:$0xff]
        %v6441 = vld [vmem:[%s6426 + $0x70] sm:$0xff]
        %v6442 = vld [vmem:[%s6426 + $0x78] sm:$0xff]
        %6443 = vrot.lane.b32.xlu0 %v1210, 32
        %v6444 = vpop.permute.xlu0 %6443
        %6445 = vrot.lane.b32.xlu0 %v1211, 32
        %v6446 = vpop.permute.xlu0 %6445
        %6447 = vrot.lane.b32.xlu0 %v1212, 32
        %v6448 = vpop.permute.xlu0 %6447
        %6449 = vrot.lane.b32.xlu0 %v1213, 32
        %v6450 = vpop.permute.xlu0 %6449
        %6451 = vrot.lane.b32.xlu0 %v1214, 32
        %v6452 = vpop.permute.xlu0 %6451
        %6453 = vrot.lane.b32.xlu0 %v1215, 32
        %v6454 = vpop.permute.xlu0 %6453
        %6455 = vrot.lane.b32.xlu0 %v1216, 32
        %v6456 = vpop.permute.xlu0 %6455
        %6457 = vrot.lane.b32.xlu0 %v1217, 32
        %v6458 = vpop.permute.xlu0 %6457
        %6459 = vrot.lane.b32.xlu0 %v1218, 32
        %v6460 = vpop.permute.xlu0 %6459
        %6461 = vrot.lane.b32.xlu0 %v1219, 32
        %v6462 = vpop.permute.xlu0 %6461
        %6463 = vrot.lane.b32.xlu0 %v1220, 32
        %v6464 = vpop.permute.xlu0 %6463
        %6465 = vrot.lane.b32.xlu0 %v1221, 32
        %v6466 = vpop.permute.xlu0 %6465
        %6467 = vrot.lane.b32.xlu0 %v1222, 32
        %v6468 = vpop.permute.xlu0 %6467
        %6469 = vrot.lane.b32.xlu0 %v1223, 32
        %v6470 = vpop.permute.xlu0 %6469
        %6471 = vrot.lane.b32.xlu0 %v1224, 32
        %v6472 = vpop.permute.xlu0 %6471
        %6473 = vrot.lane.b32.xlu0 %v1225, 32
        %v6474 = vpop.permute.xlu0 %6473
        %v6476 = vsel %vm1226, %v6427, 0
        %v6479 = vsel %vm1226, %v6428, 0
        %v6482 = vsel %vm1226, %v6429, 0
        %v6485 = vsel %vm1226, %v6430, 0
        %v6488 = vsel %vm1226, %v6431, 0
        %v6491 = vsel %vm1226, %v6432, 0
        %v6494 = vsel %vm1226, %v6433, 0
        %v6497 = vsel %vm1226, %v6434, 0
        %v6500 = vsel %vm1226, %v6435, 0
        %v6503 = vsel %vm1226, %v6436, 0
        %v6506 = vsel %vm1226, %v6437, 0
        %v6509 = vsel %vm1226, %v6438, 0
        %v6512 = vsel %vm1226, %v6439, 0
        %v6515 = vsel %vm1226, %v6440, 0
        %v6518 = vsel %vm1226, %v6441, 0
        %v6521 = vsel %vm1226, %v6442, 0
        %v6524 = vsel %vm1226, %v6444, 0
        %v6527 = vsel %vm1226, %v6446, 0
        %v6530 = vsel %vm1226, %v6448, 0
        %v6533 = vsel %vm1226, %v6450, 0
        %v6536 = vsel %vm1226, %v6452, 0
        %v6539 = vsel %vm1226, %v6454, 0
        %v6542 = vsel %vm1226, %v6456, 0
        %v6545 = vsel %vm1226, %v6458, 0
        %v6548 = vsel %vm1226, %v6460, 0
        %v6551 = vsel %vm1226, %v6462, 0
        %v6554 = vsel %vm1226, %v6464, 0
        %v6557 = vsel %vm1226, %v6466, 0
        %v6560 = vsel %vm1226, %v6468, 0
        %v6563 = vsel %vm1226, %v6470, 0
        %v6566 = vsel %vm1226, %v6472, 0
        %v6569 = vsel %vm1226, %v6474, 0
        %6571 = vmatprep.subr.bf16.mxu0 0
        %6572 = vmatpush1.bf16.xpose.msra.mxu0 %v6524
        %6573 = vmatprep.subr.bf16.mxu0 0
        %6574 = vmatpush1.bf16.xpose.msra.mxu0 %v6527
        %6575 = vmatprep.subr.bf16.mxu0 0
        %6576 = vmatpush1.bf16.xpose.msra.mxu0 %v6530
        %6577 = vmatprep.subr.bf16.mxu0 0
        %6578 = vmatpush1.bf16.xpose.msra.mxu0 %v6533
        %6579 = vmatprep.subr.bf16.mxu0 0
        %6580 = vmatpush1.bf16.xpose.msra.mxu0 %v6536
        %6581 = vmatprep.subr.bf16.mxu0 0
        %6582 = vmatpush1.bf16.xpose.msra.mxu0 %v6539
        %6583 = vmatprep.subr.bf16.mxu0 0
        %6584 = vmatpush1.bf16.xpose.msra.mxu0 %v6542
        %6585 = vmatprep.subr.bf16.mxu0 0
        %6586 = vmatpush1.bf16.xpose.msra.mxu0 %v6545
        %6587 = vmatprep.subr.bf16.mxu0 0
        %6588 = vmatpush1.bf16.xpose.msra.mxu0 %v6548
        %6589 = vmatprep.subr.bf16.mxu0 0
        %6590 = vmatpush1.bf16.xpose.msra.mxu0 %v6551
        %6591 = vmatprep.subr.bf16.mxu0 0
        %6592 = vmatpush1.bf16.xpose.msra.mxu0 %v6554
        %6593 = vmatprep.subr.bf16.mxu0 0
        %6594 = vmatpush1.bf16.xpose.msra.mxu0 %v6557
        %6595 = vmatprep.subr.bf16.mxu0 0
        %6596 = vmatpush1.bf16.xpose.msra.mxu0 %v6560
        %6597 = vmatprep.subr.bf16.mxu0 0
        %6598 = vmatpush1.bf16.xpose.msra.mxu0 %v6563
        %6599 = vmatprep.subr.bf16.mxu0 0
        %6600 = vmatpush1.bf16.xpose.msra.mxu0 %v6566
        %6601 = vmatprep.subr.bf16.mxu0 0
        %6602 = vmatpush1.bf16.xpose.msra.mxu0 %v6569
        %6603 = vmatprep.mubr.bf16.mxu0 0
        %6604 = vmatmul.mubr.bf16.gmra.mrb[0].mxu0 %v6476
        %v6605 = vpop.f32.mrb[0].mxu0
        %v6606 = vadd.f32 0.0, %v6605
        %v6607 = vpop.f32.mrb[0].mxu0
        %v6608 = vadd.f32 0.0, %v6607
        %v6609 = vpop.f32.mrb[0].mxu0
        %v6610 = vadd.f32 0.0, %v6609
        %v6611 = vpop.f32.mrb[0].mxu0
        %v6612 = vadd.f32 0.0, %v6611
        %6613 = vmatprep.mubr.bf16.mxu0 0
        %6614 = vmatmul.mubr.bf16.gmra.mrb[0].mxu0 %v6479
        %v6615 = vpop.f32.mrb[0].mxu0
        %v6616 = vadd.f32 0.0, %v6615
        %v6617 = vpop.f32.mrb[0].mxu0
        %v6618 = vadd.f32 0.0, %v6617
        %v6619 = vpop.f32.mrb[0].mxu0
        %v6620 = vadd.f32 0.0, %v6619
        %v6621 = vpop.f32.mrb[0].mxu0
        %v6622 = vadd.f32 0.0, %v6621
        %6623 = vmatprep.mubr.bf16.mxu0 0
        %6624 = vmatmul.mubr.bf16.gmra.mrb[0].mxu0 %v6482
        %v6625 = vpop.f32.mrb[0].mxu0
        %v6626 = vadd.f32 0.0, %v6625
        %v6627 = vpop.f32.mrb[0].mxu0
        %v6628 = vadd.f32 0.0, %v6627
        %v6629 = vpop.f32.mrb[0].mxu0
        %v6630 = vadd.f32 0.0, %v6629
        %v6631 = vpop.f32.mrb[0].mxu0
        %v6632 = vadd.f32 0.0, %v6631
        %6633 = vmatprep.mubr.bf16.mxu0 0
        %6634 = vmatmul.mubr.bf16.gmra.mrb[0].mxu0 %v6485
        %v6635 = vpop.f32.mrb[0].mxu0
        %v6636 = vadd.f32 0.0, %v6635
        %v6637 = vpop.f32.mrb[0].mxu0
        %v6638 = vadd.f32 0.0, %v6637
        %v6639 = vpop.f32.mrb[0].mxu0
        %v6640 = vadd.f32 0.0, %v6639
        %v6641 = vpop.f32.mrb[0].mxu0
        %v6642 = vadd.f32 0.0, %v6641
        %6643 = vmatprep.mubr.bf16.mxu0 0
        %6644 = vmatmul.mubr.bf16.gmra.mrb[0].mxu0 %v6488
        %v6645 = vpop.f32.mrb[0].mxu0
        %v6646 = vadd.f32 0.0, %v6645
        %v6647 = vpop.f32.mrb[0].mxu0
        %v6648 = vadd.f32 0.0, %v6647
        %v6649 = vpop.f32.mrb[0].mxu0
        %v6650 = vadd.f32 0.0, %v6649
        %v6651 = vpop.f32.mrb[0].mxu0
        %v6652 = vadd.f32 0.0, %v6651
        %6653 = vmatprep.mubr.bf16.mxu0 0
        %6654 = vmatmul.mubr.bf16.gmra.mrb[0].mxu0 %v6491
        %v6655 = vpop.f32.mrb[0].mxu0
        %v6656 = vadd.f32 0.0, %v6655
        %v6657 = vpop.f32.mrb[0].mxu0
        %v6658 = vadd.f32 0.0, %v6657
        %v6659 = vpop.f32.mrb[0].mxu0
        %v6660 = vadd.f32 0.0, %v6659
        %v6661 = vpop.f32.mrb[0].mxu0
        %v6662 = vadd.f32 0.0, %v6661
        %6663 = vmatprep.mubr.bf16.mxu0 0
        %6664 = vmatmul.mubr.bf16.gmra.mrb[0].mxu0 %v6494
        %v6665 = vpop.f32.mrb[0].mxu0
        %v6666 = vadd.f32 0.0, %v6665
        %v6667 = vpop.f32.mrb[0].mxu0
        %v6668 = vadd.f32 0.0, %v6667
        %v6669 = vpop.f32.mrb[0].mxu0
        %v6670 = vadd.f32 0.0, %v6669
        %v6671 = vpop.f32.mrb[0].mxu0
        %v6672 = vadd.f32 0.0, %v6671
        %6673 = vmatprep.mubr.bf16.mxu0 0
        %6674 = vmatmul.mubr.bf16.gmra.mrb[0].mxu0 %v6497
        %v6675 = vpop.f32.mrb[0].mxu0
        %v6676 = vadd.f32 0.0, %v6675
        %v6677 = vpop.f32.mrb[0].mxu0
        %v6678 = vadd.f32 0.0, %v6677
        %v6679 = vpop.f32.mrb[0].mxu0
        %v6680 = vadd.f32 0.0, %v6679
        %v6681 = vpop.f32.mrb[0].mxu0
        %v6682 = vadd.f32 0.0, %v6681
        %6683 = vmatprep.mubr.bf16.mxu0 0
        %6684 = vmatmul.mubr.bf16.gmra.mrb[0].mxu0 %v6500
        %v6685 = vpop.f32.mrb[0].mxu0
        %v6686 = vadd.f32 0.0, %v6685
        %v6687 = vpop.f32.mrb[0].mxu0
        %v6688 = vadd.f32 0.0, %v6687
        %v6689 = vpop.f32.mrb[0].mxu0
        %v6690 = vadd.f32 0.0, %v6689
        %v6691 = vpop.f32.mrb[0].mxu0
        %v6692 = vadd.f32 0.0, %v6691
        %6693 = vmatprep.mubr.bf16.mxu0 0
        %6694 = vmatmul.mubr.bf16.gmra.mrb[0].mxu0 %v6503
        %v6695 = vpop.f32.mrb[0].mxu0
        %v6696 = vadd.f32 0.0, %v6695
        %v6697 = vpop.f32.mrb[0].mxu0
        %v6698 = vadd.f32 0.0, %v6697
        %v6699 = vpop.f32.mrb[0].mxu0
        %v6700 = vadd.f32 0.0, %v6699
        %v6701 = vpop.f32.mrb[0].mxu0
        %v6702 = vadd.f32 0.0, %v6701
        %6703 = vmatprep.mubr.bf16.mxu0 0
        %6704 = vmatmul.mubr.bf16.gmra.mrb[0].mxu0 %v6506
        %v6705 = vpop.f32.mrb[0].mxu0
        %v6706 = vadd.f32 0.0, %v6705
        %v6707 = vpop.f32.mrb[0].mxu0
        %v6708 = vadd.f32 0.0, %v6707
        %v6709 = vpop.f32.mrb[0].mxu0
        %v6710 = vadd.f32 0.0, %v6709
        %v6711 = vpop.f32.mrb[0].mxu0
        %v6712 = vadd.f32 0.0, %v6711
        %6713 = vmatprep.mubr.bf16.mxu0 0
        %6714 = vmatmul.mubr.bf16.gmra.mrb[0].mxu0 %v6509
        %v6715 = vpop.f32.mrb[0].mxu0
        %v6716 = vadd.f32 0.0, %v6715
        %v6717 = vpop.f32.mrb[0].mxu0
        %v6718 = vadd.f32 0.0, %v6717
        %v6719 = vpop.f32.mrb[0].mxu0
        %v6720 = vadd.f32 0.0, %v6719
        %v6721 = vpop.f32.mrb[0].mxu0
        %v6722 = vadd.f32 0.0, %v6721
        %6723 = vmatprep.mubr.bf16.mxu0 0
        %6724 = vmatmul.mubr.bf16.gmra.mrb[0].mxu0 %v6512
        %v6725 = vpop.f32.mrb[0].mxu0
        %v6726 = vadd.f32 0.0, %v6725
        %v6727 = vpop.f32.mrb[0].mxu0
        %v6728 = vadd.f32 0.0, %v6727
        %v6729 = vpop.f32.mrb[0].mxu0
        %v6730 = vadd.f32 0.0, %v6729
        %v6731 = vpop.f32.mrb[0].mxu0
        %v6732 = vadd.f32 0.0, %v6731
        %6733 = vmatprep.mubr.bf16.mxu0 0
        %6734 = vmatmul.mubr.bf16.gmra.mrb[0].mxu0 %v6515
        %v6735 = vpop.f32.mrb[0].mxu0
        %v6736 = vadd.f32 0.0, %v6735
        %v6737 = vpop.f32.mrb[0].mxu0
        %v6738 = vadd.f32 0.0, %v6737
        %v6739 = vpop.f32.mrb[0].mxu0
        %v6740 = vadd.f32 0.0, %v6739
        %v6741 = vpop.f32.mrb[0].mxu0
        %v6742 = vadd.f32 0.0, %v6741
        %6743 = vmatprep.mubr.bf16.mxu0 0
        %6744 = vmatmul.mubr.bf16.gmra.mrb[0].mxu0 %v6518
        %v6745 = vpop.f32.mrb[0].mxu0
        %v6746 = vadd.f32 0.0, %v6745
        %v6747 = vpop.f32.mrb[0].mxu0
        %v6748 = vadd.f32 0.0, %v6747
        %v6749 = vpop.f32.mrb[0].mxu0
        %v6750 = vadd.f32 0.0, %v6749
        %v6751 = vpop.f32.mrb[0].mxu0
        %v6752 = vadd.f32 0.0, %v6751
        %6753 = vmatprep.mubr.bf16.mxu0 0
        %6754 = vmatmul.mubr.bf16.gmra.mrb[0].mxu0 %v6521
        %v6755 = vpop.f32.mrb[0].mxu0
        %v6756 = vadd.f32 0.0, %v6755
        %v6757 = vpop.f32.mrb[0].mxu0
        %v6758 = vadd.f32 0.0, %v6757
        %v6759 = vpop.f32.mrb[0].mxu0
        %v6760 = vadd.f32 0.0, %v6759
        %v6761 = vpop.f32.mrb[0].mxu0
        %v6762 = vadd.f32 0.0, %v6761
        %6763 = vdwg.mxu0
        %s6764 = scalar_lea.vmem [#allocation3], 768
        %v6765 = vld [vmem:[%s6764] sm:$0xff]
        %v6766 = vld [vmem:[%s6764 + $0x8] sm:$0xff]
        %v6767 = vld [vmem:[%s6764 + $0x10] sm:$0xff]
        %v6768 = vld [vmem:[%s6764 + $0x18] sm:$0xff]
        %v6769 = vld [vmem:[%s6764 + $0x20] sm:$0xff]
        %v6770 = vld [vmem:[%s6764 + $0x28] sm:$0xff]
        %v6771 = vld [vmem:[%s6764 + $0x30] sm:$0xff]
        %v6772 = vld [vmem:[%s6764 + $0x38] sm:$0xff]
        %v6773 = vld [vmem:[%s6764 + $0x40] sm:$0xff]
        %v6774 = vld [vmem:[%s6764 + $0x48] sm:$0xff]
        %v6775 = vld [vmem:[%s6764 + $0x50] sm:$0xff]
        %v6776 = vld [vmem:[%s6764 + $0x58] sm:$0xff]
        %v6777 = vld [vmem:[%s6764 + $0x60] sm:$0xff]
        %v6778 = vld [vmem:[%s6764 + $0x68] sm:$0xff]
        %v6779 = vld [vmem:[%s6764 + $0x70] sm:$0xff]
        %v6780 = vld [vmem:[%s6764 + $0x78] sm:$0xff]
        %v6781 = vld [vmem:[%s6764 + $0x80] sm:$0xff]
        %v6782 = vld [vmem:[%s6764 + $0x88] sm:$0xff]
        %v6783 = vld [vmem:[%s6764 + $0x90] sm:$0xff]
        %v6784 = vld [vmem:[%s6764 + $0x98] sm:$0xff]
        %v6785 = vld [vmem:[%s6764 + $0xa0] sm:$0xff]
        %v6786 = vld [vmem:[%s6764 + $0xa8] sm:$0xff]
        %v6787 = vld [vmem:[%s6764 + $0xb0] sm:$0xff]
        %v6788 = vld [vmem:[%s6764 + $0xb8] sm:$0xff]
        %v6789 = vld [vmem:[%s6764 + $0xc0] sm:$0xff]
        %v6790 = vld [vmem:[%s6764 + $0xc8] sm:$0xff]
        %v6791 = vld [vmem:[%s6764 + $0xd0] sm:$0xff]
        %v6792 = vld [vmem:[%s6764 + $0xd8] sm:$0xff]
        %v6793 = vld [vmem:[%s6764 + $0xe0] sm:$0xff]
        %v6794 = vld [vmem:[%s6764 + $0xe8] sm:$0xff]
        %v6795 = vld [vmem:[%s6764 + $0xf0] sm:$0xff]
        %v6796 = vld [vmem:[%s6764 + $0xf8] sm:$0xff]
        %v6797 = vmax.f32 %v6606, %v6608
        %6798 = vmax.xlane.f32.xlu0 %v6797
        %v6799 = vpop.xlane.xlu0 %6798
        %v6800 = vmax.f32 %v6610, %v6612
        %6801 = vmax.xlane.f32.xlu0 %v6800
        %v6802 = vpop.xlane.xlu0 %6801
        %v6803 = vmax.f32 %v6616, %v6618
        %6804 = vmax.xlane.f32.xlu0 %v6803
        %v6805 = vpop.xlane.xlu0 %6804
        %v6806 = vmax.f32 %v6620, %v6622
        %6807 = vmax.xlane.f32.xlu0 %v6806
        %v6808 = vpop.xlane.xlu0 %6807
        %v6809 = vmax.f32 %v6626, %v6628
        %6810 = vmax.xlane.f32.xlu0 %v6809
        %v6811 = vpop.xlane.xlu0 %6810
        %v6812 = vmax.f32 %v6630, %v6632
        %6813 = vmax.xlane.f32.xlu0 %v6812
        %v6814 = vpop.xlane.xlu0 %6813
        %v6815 = vmax.f32 %v6636, %v6638
        %6816 = vmax.xlane.f32.xlu0 %v6815
        %v6817 = vpop.xlane.xlu0 %6816
        %v6818 = vmax.f32 %v6640, %v6642
        %6819 = vmax.xlane.f32.xlu0 %v6818
        %v6820 = vpop.xlane.xlu0 %6819
        %v6821 = vmax.f32 %v6646, %v6648
        %6822 = vmax.xlane.f32.xlu0 %v6821
        %v6823 = vpop.xlane.xlu0 %6822
        %v6824 = vmax.f32 %v6650, %v6652
        %6825 = vmax.xlane.f32.xlu0 %v6824
        %v6826 = vpop.xlane.xlu0 %6825
        %v6827 = vmax.f32 %v6656, %v6658
        %6828 = vmax.xlane.f32.xlu0 %v6827
        %v6829 = vpop.xlane.xlu0 %6828
        %v6830 = vmax.f32 %v6660, %v6662
        %6831 = vmax.xlane.f32.xlu0 %v6830
        %v6832 = vpop.xlane.xlu0 %6831
        %v6833 = vmax.f32 %v6666, %v6668
        %6834 = vmax.xlane.f32.xlu0 %v6833
        %v6835 = vpop.xlane.xlu0 %6834
        %v6836 = vmax.f32 %v6670, %v6672
        %6837 = vmax.xlane.f32.xlu0 %v6836
        %v6838 = vpop.xlane.xlu0 %6837
        %v6839 = vmax.f32 %v6676, %v6678
        %6840 = vmax.xlane.f32.xlu0 %v6839
        %v6841 = vpop.xlane.xlu0 %6840
        %v6842 = vmax.f32 %v6680, %v6682
        %6843 = vmax.xlane.f32.xlu0 %v6842
        %v6844 = vpop.xlane.xlu0 %6843
        %v6845 = vmax.f32 %v6686, %v6688
        %6846 = vmax.xlane.f32.xlu0 %v6845
        %v6847 = vpop.xlane.xlu0 %6846
        %v6848 = vmax.f32 %v6690, %v6692
        %6849 = vmax.xlane.f32.xlu0 %v6848
        %v6850 = vpop.xlane.xlu0 %6849
        %v6851 = vmax.f32 %v6696, %v6698
        %6852 = vmax.xlane.f32.xlu0 %v6851
        %v6853 = vpop.xlane.xlu0 %6852
        %v6854 = vmax.f32 %v6700, %v6702
        %6855 = vmax.xlane.f32.xlu0 %v6854
        %v6856 = vpop.xlane.xlu0 %6855
        %v6857 = vmax.f32 %v6706, %v6708
        %6858 = vmax.xlane.f32.xlu0 %v6857
        %v6859 = vpop.xlane.xlu0 %6858
        %v6860 = vmax.f32 %v6710, %v6712
        %6861 = vmax.xlane.f32.xlu0 %v6860
        %v6862 = vpop.xlane.xlu0 %6861
        %v6863 = vmax.f32 %v6716, %v6718
        %6864 = vmax.xlane.f32.xlu0 %v6863
        %v6865 = vpop.xlane.xlu0 %6864
        %v6866 = vmax.f32 %v6720, %v6722
        %6867 = vmax.xlane.f32.xlu0 %v6866
        %v6868 = vpop.xlane.xlu0 %6867
        %v6869 = vmax.f32 %v6726, %v6728
        %6870 = vmax.xlane.f32.xlu0 %v6869
        %v6871 = vpop.xlane.xlu0 %6870
        %v6872 = vmax.f32 %v6730, %v6732
        %6873 = vmax.xlane.f32.xlu0 %v6872
        %v6874 = vpop.xlane.xlu0 %6873
        %v6875 = vmax.f32 %v6736, %v6738
        %6876 = vmax.xlane.f32.xlu0 %v6875
        %v6877 = vpop.xlane.xlu0 %6876
        %v6878 = vmax.f32 %v6740, %v6742
        %6879 = vmax.xlane.f32.xlu0 %v6878
        %v6880 = vpop.xlane.xlu0 %6879
        %v6881 = vmax.f32 %v6746, %v6748
        %6882 = vmax.xlane.f32.xlu0 %v6881
        %v6883 = vpop.xlane.xlu0 %6882
        %v6884 = vmax.f32 %v6750, %v6752
        %6885 = vmax.xlane.f32.xlu0 %v6884
        %v6886 = vpop.xlane.xlu0 %6885
        %v6887 = vmax.f32 %v6756, %v6758
        %6888 = vmax.xlane.f32.xlu0 %v6887
        %v6889 = vpop.xlane.xlu0 %6888
        %v6890 = vmax.f32 %v6760, %v6762
        %6891 = vmax.xlane.f32.xlu0 %v6890
        %v6892 = vpop.xlane.xlu0 %6891
        %v6893 = vmax.f32 %v6765, %v6799
        %v6894 = vmax.f32 %v6766, %v6802
        %v6895 = vmax.f32 %v6767, %v6805
        %v6896 = vmax.f32 %v6768, %v6808
        %v6897 = vmax.f32 %v6769, %v6811
        %v6898 = vmax.f32 %v6770, %v6814
        %v6899 = vmax.f32 %v6771, %v6817
        %v6900 = vmax.f32 %v6772, %v6820
        %v6901 = vmax.f32 %v6773, %v6823
        %v6902 = vmax.f32 %v6774, %v6826
        %v6903 = vmax.f32 %v6775, %v6829
        %v6904 = vmax.f32 %v6776, %v6832
        %v6905 = vmax.f32 %v6777, %v6835
        %v6906 = vmax.f32 %v6778, %v6838
        %v6907 = vmax.f32 %v6779, %v6841
        %v6908 = vmax.f32 %v6780, %v6844
        %v6909 = vmax.f32 %v6781, %v6847
        %v6910 = vmax.f32 %v6782, %v6850
        %v6911 = vmax.f32 %v6783, %v6853
        %v6912 = vmax.f32 %v6784, %v6856
        %v6913 = vmax.f32 %v6785, %v6859
        %v6914 = vmax.f32 %v6786, %v6862
        %v6915 = vmax.f32 %v6787, %v6865
        %v6916 = vmax.f32 %v6788, %v6868
        %v6917 = vmax.f32 %v6789, %v6871
        %v6918 = vmax.f32 %v6790, %v6874
        %v6919 = vmax.f32 %v6791, %v6877
        %v6920 = vmax.f32 %v6792, %v6880
        %v6921 = vmax.f32 %v6793, %v6883
        %v6922 = vmax.f32 %v6794, %v6886
        %v6923 = vmax.f32 %v6795, %v6889
        %v6924 = vmax.f32 %v6796, %v6892
        %v6925 = vsub.f32 %v6765, %v6893
        %v6926 = vsub.f32 %v6766, %v6894
        %v6927 = vsub.f32 %v6767, %v6895
        %v6928 = vsub.f32 %v6768, %v6896
        %v6929 = vsub.f32 %v6769, %v6897
        %v6930 = vsub.f32 %v6770, %v6898
        %v6931 = vsub.f32 %v6771, %v6899
        %v6932 = vsub.f32 %v6772, %v6900
        %v6933 = vsub.f32 %v6773, %v6901
        %v6934 = vsub.f32 %v6774, %v6902
        %v6935 = vsub.f32 %v6775, %v6903
        %v6936 = vsub.f32 %v6776, %v6904
        %v6937 = vsub.f32 %v6777, %v6905
        %v6938 = vsub.f32 %v6778, %v6906
        %v6939 = vsub.f32 %v6779, %v6907
        %v6940 = vsub.f32 %v6780, %v6908
        %v6941 = vsub.f32 %v6781, %v6909
        %v6942 = vsub.f32 %v6782, %v6910
        %v6943 = vsub.f32 %v6783, %v6911
        %v6944 = vsub.f32 %v6784, %v6912
        %v6945 = vsub.f32 %v6785, %v6913
        %v6946 = vsub.f32 %v6786, %v6914
        %v6947 = vsub.f32 %v6787, %v6915
        %v6948 = vsub.f32 %v6788, %v6916
        %v6949 = vsub.f32 %v6789, %v6917
        %v6950 = vsub.f32 %v6790, %v6918
        %v6951 = vsub.f32 %v6791, %v6919
        %v6952 = vsub.f32 %v6792, %v6920
        %v6953 = vsub.f32 %v6793, %v6921
        %v6954 = vsub.f32 %v6794, %v6922
        %v6955 = vsub.f32 %v6795, %v6923
        %v6956 = vsub.f32 %v6796, %v6924
        %v6957 = vmul.f32 %v6925, 1.442695
        %v6958 = vpow.pop %v6957
        %v6959 = vmul.f32 %v6926, 1.442695
        %v6960 = vpow.pop %v6959
        %v6961 = vmul.f32 %v6927, 1.442695
        %v6962 = vpow.pop %v6961
        %v6963 = vmul.f32 %v6928, 1.442695
        %v6964 = vpow.pop %v6963
        %v6965 = vmul.f32 %v6929, 1.442695
        %v6966 = vpow.pop %v6965
        %v6967 = vmul.f32 %v6930, 1.442695
        %v6968 = vpow.pop %v6967
        %v6969 = vmul.f32 %v6931, 1.442695
        %v6970 = vpow.pop %v6969
        %v6971 = vmul.f32 %v6932, 1.442695
        %v6972 = vpow.pop %v6971
        %v6973 = vmul.f32 %v6933, 1.442695
        %v6974 = vpow.pop %v6973
        %v6975 = vmul.f32 %v6934, 1.442695
        %v6976 = vpow.pop %v6975
        %v6977 = vmul.f32 %v6935, 1.442695
        %v6978 = vpow.pop %v6977
        %v6979 = vmul.f32 %v6936, 1.442695
        %v6980 = vpow.pop %v6979
        %v6981 = vmul.f32 %v6937, 1.442695
        %v6982 = vpow.pop %v6981
        %v6983 = vmul.f32 %v6938, 1.442695
        %v6984 = vpow.pop %v6983
        %v6985 = vmul.f32 %v6939, 1.442695
        %v6986 = vpow.pop %v6985
        %v6987 = vmul.f32 %v6940, 1.442695
        %v6988 = vpow.pop %v6987
        %v6989 = vmul.f32 %v6941, 1.442695
        %v6990 = vpow.pop %v6989
        %v6991 = vmul.f32 %v6942, 1.442695
        %v6992 = vpow.pop %v6991
        %v6993 = vmul.f32 %v6943, 1.442695
        %v6994 = vpow.pop %v6993
        %v6995 = vmul.f32 %v6944, 1.442695
        %v6996 = vpow.pop %v6995
        %v6997 = vmul.f32 %v6945, 1.442695
        %v6998 = vpow.pop %v6997
        %v6999 = vmul.f32 %v6946, 1.442695
        %v7000 = vpow.pop %v6999
        %v7001 = vmul.f32 %v6947, 1.442695
        %v7002 = vpow.pop %v7001
        %v7003 = vmul.f32 %v6948, 1.442695
        %v7004 = vpow.pop %v7003
        %v7005 = vmul.f32 %v6949, 1.442695
        %v7006 = vpow.pop %v7005
        %v7007 = vmul.f32 %v6950, 1.442695
        %v7008 = vpow.pop %v7007
        %v7009 = vmul.f32 %v6951, 1.442695
        %v7010 = vpow.pop %v7009
        %v7011 = vmul.f32 %v6952, 1.442695
        %v7012 = vpow.pop %v7011
        %v7013 = vmul.f32 %v6953, 1.442695
        %v7014 = vpow.pop %v7013
        %v7015 = vmul.f32 %v6954, 1.442695
        %v7016 = vpow.pop %v7015
        %v7017 = vmul.f32 %v6955, 1.442695
        %v7018 = vpow.pop %v7017
        %v7019 = vmul.f32 %v6956, 1.442695
        %v7020 = vpow.pop %v7019
        %7022 = vset.pattern.permute.xlu0 0
        %7023 = vperm.xlu0 %7022, %v6893
        %v7024 = vpop.permute.xlu0 %7023
        %7027 = vset.pattern.permute.xlu0 0
        %7028 = vperm.xlu0 %7027, %v6894
        %v7029 = vpop.permute.xlu0 %7028
        %7032 = vset.pattern.permute.xlu0 0
        %7033 = vperm.xlu0 %7032, %v6895
        %v7034 = vpop.permute.xlu0 %7033
        %7037 = vset.pattern.permute.xlu0 0
        %7038 = vperm.xlu0 %7037, %v6896
        %v7039 = vpop.permute.xlu0 %7038
        %7042 = vset.pattern.permute.xlu0 0
        %7043 = vperm.xlu0 %7042, %v6897
        %v7044 = vpop.permute.xlu0 %7043
        %7047 = vset.pattern.permute.xlu0 0
        %7048 = vperm.xlu0 %7047, %v6898
        %v7049 = vpop.permute.xlu0 %7048
        %7052 = vset.pattern.permute.xlu0 0
        %7053 = vperm.xlu0 %7052, %v6899
        %v7054 = vpop.permute.xlu0 %7053
        %7057 = vset.pattern.permute.xlu0 0
        %7058 = vperm.xlu0 %7057, %v6900
        %v7059 = vpop.permute.xlu0 %7058
        %7062 = vset.pattern.permute.xlu0 0
        %7063 = vperm.xlu0 %7062, %v6901
        %v7064 = vpop.permute.xlu0 %7063
        %7067 = vset.pattern.permute.xlu0 0
        %7068 = vperm.xlu0 %7067, %v6902
        %v7069 = vpop.permute.xlu0 %7068
        %7072 = vset.pattern.permute.xlu0 0
        %7073 = vperm.xlu0 %7072, %v6903
        %v7074 = vpop.permute.xlu0 %7073
        %7077 = vset.pattern.permute.xlu0 0
        %7078 = vperm.xlu0 %7077, %v6904
        %v7079 = vpop.permute.xlu0 %7078
        %7082 = vset.pattern.permute.xlu0 0
        %7083 = vperm.xlu0 %7082, %v6905
        %v7084 = vpop.permute.xlu0 %7083
        %7087 = vset.pattern.permute.xlu0 0
        %7088 = vperm.xlu0 %7087, %v6906
        %v7089 = vpop.permute.xlu0 %7088
        %7092 = vset.pattern.permute.xlu0 0
        %7093 = vperm.xlu0 %7092, %v6907
        %v7094 = vpop.permute.xlu0 %7093
        %7097 = vset.pattern.permute.xlu0 0
        %7098 = vperm.xlu0 %7097, %v6908
        %v7099 = vpop.permute.xlu0 %7098
        %7102 = vset.pattern.permute.xlu0 0
        %7103 = vperm.xlu0 %7102, %v6909
        %v7104 = vpop.permute.xlu0 %7103
        %7107 = vset.pattern.permute.xlu0 0
        %7108 = vperm.xlu0 %7107, %v6910
        %v7109 = vpop.permute.xlu0 %7108
        %7112 = vset.pattern.permute.xlu0 0
        %7113 = vperm.xlu0 %7112, %v6911
        %v7114 = vpop.permute.xlu0 %7113
        %7117 = vset.pattern.permute.xlu0 0
        %7118 = vperm.xlu0 %7117, %v6912
        %v7119 = vpop.permute.xlu0 %7118
        %7122 = vset.pattern.permute.xlu0 0
        %7123 = vperm.xlu0 %7122, %v6913
        %v7124 = vpop.permute.xlu0 %7123
        %7127 = vset.pattern.permute.xlu0 0
        %7128 = vperm.xlu0 %7127, %v6914
        %v7129 = vpop.permute.xlu0 %7128
        %7132 = vset.pattern.permute.xlu0 0
        %7133 = vperm.xlu0 %7132, %v6915
        %v7134 = vpop.permute.xlu0 %7133
        %7137 = vset.pattern.permute.xlu0 0
        %7138 = vperm.xlu0 %7137, %v6916
        %v7139 = vpop.permute.xlu0 %7138
        %7142 = vset.pattern.permute.xlu0 0
        %7143 = vperm.xlu0 %7142, %v6917
        %v7144 = vpop.permute.xlu0 %7143
        %7147 = vset.pattern.permute.xlu0 0
        %7148 = vperm.xlu0 %7147, %v6918
        %v7149 = vpop.permute.xlu0 %7148
        %7152 = vset.pattern.permute.xlu0 0
        %7153 = vperm.xlu0 %7152, %v6919
        %v7154 = vpop.permute.xlu0 %7153
        %7157 = vset.pattern.permute.xlu0 0
        %7158 = vperm.xlu0 %7157, %v6920
        %v7159 = vpop.permute.xlu0 %7158
        %7162 = vset.pattern.permute.xlu0 0
        %7163 = vperm.xlu0 %7162, %v6921
        %v7164 = vpop.permute.xlu0 %7163
        %7167 = vset.pattern.permute.xlu0 0
        %7168 = vperm.xlu0 %7167, %v6922
        %v7169 = vpop.permute.xlu0 %7168
        %7172 = vset.pattern.permute.xlu0 0
        %7173 = vperm.xlu0 %7172, %v6923
        %v7174 = vpop.permute.xlu0 %7173
        %7177 = vset.pattern.permute.xlu0 0
        %7178 = vperm.xlu0 %7177, %v6924
        %v7179 = vpop.permute.xlu0 %7178
        %v7181 = vsub.f32 %v6606, %v7024
        %v7182 = vsub.f32 %v6608, %v7024
        %v7183 = vsub.f32 %v6610, %v7029
        %v7184 = vsub.f32 %v6612, %v7029
        %v7185 = vsub.f32 %v6616, %v7034
        %v7186 = vsub.f32 %v6618, %v7034
        %v7187 = vsub.f32 %v6620, %v7039
        %v7188 = vsub.f32 %v6622, %v7039
        %v7189 = vsub.f32 %v6626, %v7044
        %v7190 = vsub.f32 %v6628, %v7044
        %v7191 = vsub.f32 %v6630, %v7049
        %v7192 = vsub.f32 %v6632, %v7049
        %v7193 = vsub.f32 %v6636, %v7054
        %v7194 = vsub.f32 %v6638, %v7054
        %v7195 = vsub.f32 %v6640, %v7059
        %v7196 = vsub.f32 %v6642, %v7059
        %v7197 = vsub.f32 %v6646, %v7064
        %v7198 = vsub.f32 %v6648, %v7064
        %v7199 = vsub.f32 %v6650, %v7069
        %v7200 = vsub.f32 %v6652, %v7069
        %v7201 = vsub.f32 %v6656, %v7074
        %v7202 = vsub.f32 %v6658, %v7074
        %v7203 = vsub.f32 %v6660, %v7079
        %v7204 = vsub.f32 %v6662, %v7079
        %v7205 = vsub.f32 %v6666, %v7084
        %v7206 = vsub.f32 %v6668, %v7084
        %v7207 = vsub.f32 %v6670, %v7089
        %v7208 = vsub.f32 %v6672, %v7089
        %v7209 = vsub.f32 %v6676, %v7094
        %v7210 = vsub.f32 %v6678, %v7094
        %v7211 = vsub.f32 %v6680, %v7099
        %v7212 = vsub.f32 %v6682, %v7099
        %v7213 = vsub.f32 %v6686, %v7104
        %v7214 = vsub.f32 %v6688, %v7104
        %v7215 = vsub.f32 %v6690, %v7109
        %v7216 = vsub.f32 %v6692, %v7109
        %v7217 = vsub.f32 %v6696, %v7114
        %v7218 = vsub.f32 %v6698, %v7114
        %v7219 = vsub.f32 %v6700, %v7119
        %v7220 = vsub.f32 %v6702, %v7119
        %v7221 = vsub.f32 %v6706, %v7124
        %v7222 = vsub.f32 %v6708, %v7124
        %v7223 = vsub.f32 %v6710, %v7129
        %v7224 = vsub.f32 %v6712, %v7129
        %v7225 = vsub.f32 %v6716, %v7134
        %v7226 = vsub.f32 %v6718, %v7134
        %v7227 = vsub.f32 %v6720, %v7139
        %v7228 = vsub.f32 %v6722, %v7139
        %v7229 = vsub.f32 %v6726, %v7144
        %v7230 = vsub.f32 %v6728, %v7144
        %v7231 = vsub.f32 %v6730, %v7149
        %v7232 = vsub.f32 %v6732, %v7149
        %v7233 = vsub.f32 %v6736, %v7154
        %v7234 = vsub.f32 %v6738, %v7154
        %v7235 = vsub.f32 %v6740, %v7159
        %v7236 = vsub.f32 %v6742, %v7159
        %v7237 = vsub.f32 %v6746, %v7164
        %v7238 = vsub.f32 %v6748, %v7164
        %v7239 = vsub.f32 %v6750, %v7169
        %v7240 = vsub.f32 %v6752, %v7169
        %v7241 = vsub.f32 %v6756, %v7174
        %v7242 = vsub.f32 %v6758, %v7174
        %v7243 = vsub.f32 %v6760, %v7179
        %v7244 = vsub.f32 %v6762, %v7179
        %v7245 = vmul.f32 %v7181, 1.442695
        %v7246 = vpow.pop %v7245
        %v7247 = vmul.f32 %v7182, 1.442695
        %v7248 = vpow.pop %v7247
        %v7249 = vmul.f32 %v7183, 1.442695
        %v7250 = vpow.pop %v7249
        %v7251 = vmul.f32 %v7184, 1.442695
        %v7252 = vpow.pop %v7251
        %v7253 = vmul.f32 %v7185, 1.442695
        %v7254 = vpow.pop %v7253
        %v7255 = vmul.f32 %v7186, 1.442695
        %v7256 = vpow.pop %v7255
        %v7257 = vmul.f32 %v7187, 1.442695
        %v7258 = vpow.pop %v7257
        %v7259 = vmul.f32 %v7188, 1.442695
        %v7260 = vpow.pop %v7259
        %v7261 = vmul.f32 %v7189, 1.442695
        %v7262 = vpow.pop %v7261
        %v7263 = vmul.f32 %v7190, 1.442695
        %v7264 = vpow.pop %v7263
        %v7265 = vmul.f32 %v7191, 1.442695
        %v7266 = vpow.pop %v7265
        %v7267 = vmul.f32 %v7192, 1.442695
        %v7268 = vpow.pop %v7267
        %v7269 = vmul.f32 %v7193, 1.442695
        %v7270 = vpow.pop %v7269
        %v7271 = vmul.f32 %v7194, 1.442695
        %v7272 = vpow.pop %v7271
        %v7273 = vmul.f32 %v7195, 1.442695
        %v7274 = vpow.pop %v7273
        %v7275 = vmul.f32 %v7196, 1.442695
        %v7276 = vpow.pop %v7275
        %v7277 = vmul.f32 %v7197, 1.442695
        %v7278 = vpow.pop %v7277
        %v7279 = vmul.f32 %v7198, 1.442695
        %v7280 = vpow.pop %v7279
        %v7281 = vmul.f32 %v7199, 1.442695
        %v7282 = vpow.pop %v7281
        %v7283 = vmul.f32 %v7200, 1.442695
        %v7284 = vpow.pop %v7283
        %v7285 = vmul.f32 %v7201, 1.442695
        %v7286 = vpow.pop %v7285
        %v7287 = vmul.f32 %v7202, 1.442695
        %v7288 = vpow.pop %v7287
        %v7289 = vmul.f32 %v7203, 1.442695
        %v7290 = vpow.pop %v7289
        %v7291 = vmul.f32 %v7204, 1.442695
        %v7292 = vpow.pop %v7291
        %v7293 = vmul.f32 %v7205, 1.442695
        %v7294 = vpow.pop %v7293
        %v7295 = vmul.f32 %v7206, 1.442695
        %v7296 = vpow.pop %v7295
        %v7297 = vmul.f32 %v7207, 1.442695
        %v7298 = vpow.pop %v7297
        %v7299 = vmul.f32 %v7208, 1.442695
        %v7300 = vpow.pop %v7299
        %v7301 = vmul.f32 %v7209, 1.442695
        %v7302 = vpow.pop %v7301
        %v7303 = vmul.f32 %v7210, 1.442695
        %v7304 = vpow.pop %v7303
        %v7305 = vmul.f32 %v7211, 1.442695
        %v7306 = vpow.pop %v7305
        %v7307 = vmul.f32 %v7212, 1.442695
        %v7308 = vpow.pop %v7307
        %v7309 = vmul.f32 %v7213, 1.442695
        %v7310 = vpow.pop %v7309
        %v7311 = vmul.f32 %v7214, 1.442695
        %v7312 = vpow.pop %v7311
        %v7313 = vmul.f32 %v7215, 1.442695
        %v7314 = vpow.pop %v7313
        %v7315 = vmul.f32 %v7216, 1.442695
        %v7316 = vpow.pop %v7315
        %v7317 = vmul.f32 %v7217, 1.442695
        %v7318 = vpow.pop %v7317
        %v7319 = vmul.f32 %v7218, 1.442695
        %v7320 = vpow.pop %v7319
        %v7321 = vmul.f32 %v7219, 1.442695
        %v7322 = vpow.pop %v7321
        %v7323 = vmul.f32 %v7220, 1.442695
        %v7324 = vpow.pop %v7323
        %v7325 = vmul.f32 %v7221, 1.442695
        %v7326 = vpow.pop %v7325
        %v7327 = vmul.f32 %v7222, 1.442695
        %v7328 = vpow.pop %v7327
        %v7329 = vmul.f32 %v7223, 1.442695
        %v7330 = vpow.pop %v7329
        %v7331 = vmul.f32 %v7224, 1.442695
        %v7332 = vpow.pop %v7331
        %v7333 = vmul.f32 %v7225, 1.442695
        %v7334 = vpow.pop %v7333
        %v7335 = vmul.f32 %v7226, 1.442695
        %v7336 = vpow.pop %v7335
        %v7337 = vmul.f32 %v7227, 1.442695
        %v7338 = vpow.pop %v7337
        %v7339 = vmul.f32 %v7228, 1.442695
        %v7340 = vpow.pop %v7339
        %v7341 = vmul.f32 %v7229, 1.442695
        %v7342 = vpow.pop %v7341
        %v7343 = vmul.f32 %v7230, 1.442695
        %v7344 = vpow.pop %v7343
        %v7345 = vmul.f32 %v7231, 1.442695
        %v7346 = vpow.pop %v7345
        %v7347 = vmul.f32 %v7232, 1.442695
        %v7348 = vpow.pop %v7347
        %v7349 = vmul.f32 %v7233, 1.442695
        %v7350 = vpow.pop %v7349
        %v7351 = vmul.f32 %v7234, 1.442695
        %v7352 = vpow.pop %v7351
        %v7353 = vmul.f32 %v7235, 1.442695
        %v7354 = vpow.pop %v7353
        %v7355 = vmul.f32 %v7236, 1.442695
        %v7356 = vpow.pop %v7355
        %v7357 = vmul.f32 %v7237, 1.442695
        %v7358 = vpow.pop %v7357
        %v7359 = vmul.f32 %v7238, 1.442695
        %v7360 = vpow.pop %v7359
        %v7361 = vmul.f32 %v7239, 1.442695
        %v7362 = vpow.pop %v7361
        %v7363 = vmul.f32 %v7240, 1.442695
        %v7364 = vpow.pop %v7363
        %v7365 = vmul.f32 %v7241, 1.442695
        %v7366 = vpow.pop %v7365
        %v7367 = vmul.f32 %v7242, 1.442695
        %v7368 = vpow.pop %v7367
        %v7369 = vmul.f32 %v7243, 1.442695
        %v7370 = vpow.pop %v7369
        %v7371 = vmul.f32 %v7244, 1.442695
        %v7372 = vpow.pop %v7371
        %s7373 = scalar_lea.vmem [#allocation4], 768
        %v7374 = vld [vmem:[%s7373] sm:$0xff]
        %v7375 = vld [vmem:[%s7373 + $0x8] sm:$0xff]
        %v7376 = vld [vmem:[%s7373 + $0x10] sm:$0xff]
        %v7377 = vld [vmem:[%s7373 + $0x18] sm:$0xff]
        %v7378 = vld [vmem:[%s7373 + $0x20] sm:$0xff]
        %v7379 = vld [vmem:[%s7373 + $0x28] sm:$0xff]
        %v7380 = vld [vmem:[%s7373 + $0x30] sm:$0xff]
        %v7381 = vld [vmem:[%s7373 + $0x38] sm:$0xff]
        %v7382 = vld [vmem:[%s7373 + $0x40] sm:$0xff]
        %v7383 = vld [vmem:[%s7373 + $0x48] sm:$0xff]
        %v7384 = vld [vmem:[%s7373 + $0x50] sm:$0xff]
        %v7385 = vld [vmem:[%s7373 + $0x58] sm:$0xff]
        %v7386 = vld [vmem:[%s7373 + $0x60] sm:$0xff]
        %v7387 = vld [vmem:[%s7373 + $0x68] sm:$0xff]
        %v7388 = vld [vmem:[%s7373 + $0x70] sm:$0xff]
        %v7389 = vld [vmem:[%s7373 + $0x78] sm:$0xff]
        %v7390 = vld [vmem:[%s7373 + $0x80] sm:$0xff]
        %v7391 = vld [vmem:[%s7373 + $0x88] sm:$0xff]
        %v7392 = vld [vmem:[%s7373 + $0x90] sm:$0xff]
        %v7393 = vld [vmem:[%s7373 + $0x98] sm:$0xff]
        %v7394 = vld [vmem:[%s7373 + $0xa0] sm:$0xff]
        %v7395 = vld [vmem:[%s7373 + $0xa8] sm:$0xff]
        %v7396 = vld [vmem:[%s7373 + $0xb0] sm:$0xff]
        %v7397 = vld [vmem:[%s7373 + $0xb8] sm:$0xff]
        %v7398 = vld [vmem:[%s7373 + $0xc0] sm:$0xff]
        %v7399 = vld [vmem:[%s7373 + $0xc8] sm:$0xff]
        %v7400 = vld [vmem:[%s7373 + $0xd0] sm:$0xff]
        %v7401 = vld [vmem:[%s7373 + $0xd8] sm:$0xff]
        %v7402 = vld [vmem:[%s7373 + $0xe0] sm:$0xff]
        %v7403 = vld [vmem:[%s7373 + $0xe8] sm:$0xff]
        %v7404 = vld [vmem:[%s7373 + $0xf0] sm:$0xff]
        %v7405 = vld [vmem:[%s7373 + $0xf8] sm:$0xff]
        %v7406 = vmul.f32 %v6958, %v7374
        %v7407 = vmul.f32 %v6960, %v7375
        %v7408 = vmul.f32 %v6962, %v7376
        %v7409 = vmul.f32 %v6964, %v7377
        %v7410 = vmul.f32 %v6966, %v7378
        %v7411 = vmul.f32 %v6968, %v7379
        %v7412 = vmul.f32 %v6970, %v7380
        %v7413 = vmul.f32 %v6972, %v7381
        %v7414 = vmul.f32 %v6974, %v7382
        %v7415 = vmul.f32 %v6976, %v7383
        %v7416 = vmul.f32 %v6978, %v7384
        %v7417 = vmul.f32 %v6980, %v7385
        %v7418 = vmul.f32 %v6982, %v7386
        %v7419 = vmul.f32 %v6984, %v7387
        %v7420 = vmul.f32 %v6986, %v7388
        %v7421 = vmul.f32 %v6988, %v7389
        %v7422 = vmul.f32 %v6990, %v7390
        %v7423 = vmul.f32 %v6992, %v7391
        %v7424 = vmul.f32 %v6994, %v7392
        %v7425 = vmul.f32 %v6996, %v7393
        %v7426 = vmul.f32 %v6998, %v7394
        %v7427 = vmul.f32 %v7000, %v7395
        %v7428 = vmul.f32 %v7002, %v7396
        %v7429 = vmul.f32 %v7004, %v7397
        %v7430 = vmul.f32 %v7006, %v7398
        %v7431 = vmul.f32 %v7008, %v7399
        %v7432 = vmul.f32 %v7010, %v7400
        %v7433 = vmul.f32 %v7012, %v7401
        %v7434 = vmul.f32 %v7014, %v7402
        %v7435 = vmul.f32 %v7016, %v7403
        %v7436 = vmul.f32 %v7018, %v7404
        %v7437 = vmul.f32 %v7020, %v7405
        %v7438 = vadd.f32 %v7246, %v7248
        %7439 = vadd.xlane.f32.xlu0 %v7438
        %v7440 = vpop.xlane.xlu0 %7439
        %v7441 = vadd.f32 %v7250, %v7252
        %7442 = vadd.xlane.f32.xlu0 %v7441
        %v7443 = vpop.xlane.xlu0 %7442
        %v7444 = vadd.f32 %v7254, %v7256
        %7445 = vadd.xlane.f32.xlu0 %v7444
        %v7446 = vpop.xlane.xlu0 %7445
        %v7447 = vadd.f32 %v7258, %v7260
        %7448 = vadd.xlane.f32.xlu0 %v7447
        %v7449 = vpop.xlane.xlu0 %7448
        %v7450 = vadd.f32 %v7262, %v7264
        %7451 = vadd.xlane.f32.xlu0 %v7450
        %v7452 = vpop.xlane.xlu0 %7451
        %v7453 = vadd.f32 %v7266, %v7268
        %7454 = vadd.xlane.f32.xlu0 %v7453
        %v7455 = vpop.xlane.xlu0 %7454
        %v7456 = vadd.f32 %v7270, %v7272
        %7457 = vadd.xlane.f32.xlu0 %v7456
        %v7458 = vpop.xlane.xlu0 %7457
        %v7459 = vadd.f32 %v7274, %v7276
        %7460 = vadd.xlane.f32.xlu0 %v7459
        %v7461 = vpop.xlane.xlu0 %7460
        %v7462 = vadd.f32 %v7278, %v7280
        %7463 = vadd.xlane.f32.xlu0 %v7462
        %v7464 = vpop.xlane.xlu0 %7463
        %v7465 = vadd.f32 %v7282, %v7284
        %7466 = vadd.xlane.f32.xlu0 %v7465
        %v7467 = vpop.xlane.xlu0 %7466
        %v7468 = vadd.f32 %v7286, %v7288
        %7469 = vadd.xlane.f32.xlu0 %v7468
        %v7470 = vpop.xlane.xlu0 %7469
        %v7471 = vadd.f32 %v7290, %v7292
        %7472 = vadd.xlane.f32.xlu0 %v7471
        %v7473 = vpop.xlane.xlu0 %7472
        %v7474 = vadd.f32 %v7294, %v7296
        %7475 = vadd.xlane.f32.xlu0 %v7474
        %v7476 = vpop.xlane.xlu0 %7475
        %v7477 = vadd.f32 %v7298, %v7300
        %7478 = vadd.xlane.f32.xlu0 %v7477
        %v7479 = vpop.xlane.xlu0 %7478
        %v7480 = vadd.f32 %v7302, %v7304
        %7481 = vadd.xlane.f32.xlu0 %v7480
        %v7482 = vpop.xlane.xlu0 %7481
        %v7483 = vadd.f32 %v7306, %v7308
        %7484 = vadd.xlane.f32.xlu0 %v7483
        %v7485 = vpop.xlane.xlu0 %7484
        %v7486 = vadd.f32 %v7310, %v7312
        %7487 = vadd.xlane.f32.xlu0 %v7486
        %v7488 = vpop.xlane.xlu0 %7487
        %v7489 = vadd.f32 %v7314, %v7316
        %7490 = vadd.xlane.f32.xlu0 %v7489
        %v7491 = vpop.xlane.xlu0 %7490
        %v7492 = vadd.f32 %v7318, %v7320
        %7493 = vadd.xlane.f32.xlu0 %v7492
        %v7494 = vpop.xlane.xlu0 %7493
        %v7495 = vadd.f32 %v7322, %v7324
        %7496 = vadd.xlane.f32.xlu0 %v7495
        %v7497 = vpop.xlane.xlu0 %7496
        %v7498 = vadd.f32 %v7326, %v7328
        %7499 = vadd.xlane.f32.xlu0 %v7498
        %v7500 = vpop.xlane.xlu0 %7499
        %v7501 = vadd.f32 %v7330, %v7332
        %7502 = vadd.xlane.f32.xlu0 %v7501
        %v7503 = vpop.xlane.xlu0 %7502
        %v7504 = vadd.f32 %v7334, %v7336
        %7505 = vadd.xlane.f32.xlu0 %v7504
        %v7506 = vpop.xlane.xlu0 %7505
        %v7507 = vadd.f32 %v7338, %v7340
        %7508 = vadd.xlane.f32.xlu0 %v7507
        %v7509 = vpop.xlane.xlu0 %7508
        %v7510 = vadd.f32 %v7342, %v7344
        %7511 = vadd.xlane.f32.xlu0 %v7510
        %v7512 = vpop.xlane.xlu0 %7511
        %v7513 = vadd.f32 %v7346, %v7348
        %7514 = vadd.xlane.f32.xlu0 %v7513
        %v7515 = vpop.xlane.xlu0 %7514
        %v7516 = vadd.f32 %v7350, %v7352
        %7517 = vadd.xlane.f32.xlu0 %v7516
        %v7518 = vpop.xlane.xlu0 %7517
        %v7519 = vadd.f32 %v7354, %v7356
        %7520 = vadd.xlane.f32.xlu0 %v7519
        %v7521 = vpop.xlane.xlu0 %7520
        %v7522 = vadd.f32 %v7358, %v7360
        %7523 = vadd.xlane.f32.xlu0 %v7522
        %v7524 = vpop.xlane.xlu0 %7523
        %v7525 = vadd.f32 %v7362, %v7364
        %7526 = vadd.xlane.f32.xlu0 %v7525
        %v7527 = vpop.xlane.xlu0 %7526
        %v7528 = vadd.f32 %v7366, %v7368
        %7529 = vadd.xlane.f32.xlu0 %v7528
        %v7530 = vpop.xlane.xlu0 %7529
        %v7531 = vadd.f32 %v7370, %v7372
        %7532 = vadd.xlane.f32.xlu0 %v7531
        %v7533 = vpop.xlane.xlu0 %7532
        %v7534 = vadd.f32 %v7406, %v7440
        %v7535 = vadd.f32 %v7407, %v7443
        %v7536 = vadd.f32 %v7408, %v7446
        %v7537 = vadd.f32 %v7409, %v7449
        %v7538 = vadd.f32 %v7410, %v7452
        %v7539 = vadd.f32 %v7411, %v7455
        %v7540 = vadd.f32 %v7412, %v7458
        %v7541 = vadd.f32 %v7413, %v7461
        %v7542 = vadd.f32 %v7414, %v7464
        %v7543 = vadd.f32 %v7415, %v7467
        %v7544 = vadd.f32 %v7416, %v7470
        %v7545 = vadd.f32 %v7417, %v7473
        %v7546 = vadd.f32 %v7418, %v7476
        %v7547 = vadd.f32 %v7419, %v7479
        %v7548 = vadd.f32 %v7420, %v7482
        %v7549 = vadd.f32 %v7421, %v7485
        %v7550 = vadd.f32 %v7422, %v7488
        %v7551 = vadd.f32 %v7423, %v7491
        %v7552 = vadd.f32 %v7424, %v7494
        %v7553 = vadd.f32 %v7425, %v7497
        %v7554 = vadd.f32 %v7426, %v7500
        %v7555 = vadd.f32 %v7427, %v7503
        %v7556 = vadd.f32 %v7428, %v7506
        %v7557 = vadd.f32 %v7429, %v7509
        %v7558 = vadd.f32 %v7430, %v7512
        %v7559 = vadd.f32 %v7431, %v7515
        %v7560 = vadd.f32 %v7432, %v7518
        %v7561 = vadd.f32 %v7433, %v7521
        %v7562 = vadd.f32 %v7434, %v7524
        %v7563 = vadd.f32 %v7435, %v7527
        %v7564 = vadd.f32 %v7436, %v7530
        %v7565 = vadd.f32 %v7437, %v7533
        %7566 = vst.msk [vmem:[%s7373] sm:$0xff] %vm2316, %v7534
        %7567 = vst.msk [vmem:[%s7373 + $0x8] sm:$0xff] %vm2316, %v7535
        %7568 = vst.msk [vmem:[%s7373 + $0x10] sm:$0xff] %vm2316, %v7536
        %7569 = vst.msk [vmem:[%s7373 + $0x18] sm:$0xff] %vm2316, %v7537
        %7570 = vst.msk [vmem:[%s7373 + $0x20] sm:$0xff] %vm2316, %v7538
        %7571 = vst.msk [vmem:[%s7373 + $0x28] sm:$0xff] %vm2316, %v7539
        %7572 = vst.msk [vmem:[%s7373 + $0x30] sm:$0xff] %vm2316, %v7540
        %7573 = vst.msk [vmem:[%s7373 + $0x38] sm:$0xff] %vm2316, %v7541
        %7574 = vst.msk [vmem:[%s7373 + $0x40] sm:$0xff] %vm2316, %v7542
        %7575 = vst.msk [vmem:[%s7373 + $0x48] sm:$0xff] %vm2316, %v7543
        %7576 = vst.msk [vmem:[%s7373 + $0x50] sm:$0xff] %vm2316, %v7544
        %7577 = vst.msk [vmem:[%s7373 + $0x58] sm:$0xff] %vm2316, %v7545
        %7578 = vst.msk [vmem:[%s7373 + $0x60] sm:$0xff] %vm2316, %v7546
        %7579 = vst.msk [vmem:[%s7373 + $0x68] sm:$0xff] %vm2316, %v7547
        %7580 = vst.msk [vmem:[%s7373 + $0x70] sm:$0xff] %vm2316, %v7548
        %7581 = vst.msk [vmem:[%s7373 + $0x78] sm:$0xff] %vm2316, %v7549
        %7582 = vst.msk [vmem:[%s7373 + $0x80] sm:$0xff] %vm2316, %v7550
        %7583 = vst.msk [vmem:[%s7373 + $0x88] sm:$0xff] %vm2316, %v7551
        %7584 = vst.msk [vmem:[%s7373 + $0x90] sm:$0xff] %vm2316, %v7552
        %7585 = vst.msk [vmem:[%s7373 + $0x98] sm:$0xff] %vm2316, %v7553
        %7586 = vst.msk [vmem:[%s7373 + $0xa0] sm:$0xff] %vm2316, %v7554
        %7587 = vst.msk [vmem:[%s7373 + $0xa8] sm:$0xff] %vm2316, %v7555
        %7588 = vst.msk [vmem:[%s7373 + $0xb0] sm:$0xff] %vm2316, %v7556
        %7589 = vst.msk [vmem:[%s7373 + $0xb8] sm:$0xff] %vm2316, %v7557
        %7590 = vst.msk [vmem:[%s7373 + $0xc0] sm:$0xff] %vm2316, %v7558
        %7591 = vst.msk [vmem:[%s7373 + $0xc8] sm:$0xff] %vm2316, %v7559
        %7592 = vst.msk [vmem:[%s7373 + $0xd0] sm:$0xff] %vm2316, %v7560
        %7593 = vst.msk [vmem:[%s7373 + $0xd8] sm:$0xff] %vm2316, %v7561
        %7594 = vst.msk [vmem:[%s7373 + $0xe0] sm:$0xff] %vm2316, %v7562
        %7595 = vst.msk [vmem:[%s7373 + $0xe8] sm:$0xff] %vm2316, %v7563
        %7596 = vst.msk [vmem:[%s7373 + $0xf0] sm:$0xff] %vm2316, %v7564
        %7597 = vst.msk [vmem:[%s7373 + $0xf8] sm:$0xff] %vm2316, %v7565
        %v7598 = vpack.c.bf16 %v7250, %v7246
        %v7599 = vpack.c.bf16 %v7252, %v7248
        %v7600 = vpack.c.bf16 %v7258, %v7254
        %v7601 = vpack.c.bf16 %v7260, %v7256
        %v7602 = vpack.c.bf16 %v7266, %v7262
        %v7603 = vpack.c.bf16 %v7268, %v7264
        %v7604 = vpack.c.bf16 %v7274, %v7270
        %v7605 = vpack.c.bf16 %v7276, %v7272
        %v7606 = vpack.c.bf16 %v7282, %v7278
        %v7607 = vpack.c.bf16 %v7284, %v7280
        %v7608 = vpack.c.bf16 %v7290, %v7286
        %v7609 = vpack.c.bf16 %v7292, %v7288
        %v7610 = vpack.c.bf16 %v7298, %v7294
        %v7611 = vpack.c.bf16 %v7300, %v7296
        %v7612 = vpack.c.bf16 %v7306, %v7302
        %v7613 = vpack.c.bf16 %v7308, %v7304
        %v7614 = vpack.c.bf16 %v7314, %v7310
        %v7615 = vpack.c.bf16 %v7316, %v7312
        %v7616 = vpack.c.bf16 %v7322, %v7318
        %v7617 = vpack.c.bf16 %v7324, %v7320
        %v7618 = vpack.c.bf16 %v7330, %v7326
        %v7619 = vpack.c.bf16 %v7332, %v7328
        %v7620 = vpack.c.bf16 %v7338, %v7334
        %v7621 = vpack.c.bf16 %v7340, %v7336
        %v7622 = vpack.c.bf16 %v7346, %v7342
        %v7623 = vpack.c.bf16 %v7348, %v7344
        %v7624 = vpack.c.bf16 %v7354, %v7350
        %v7625 = vpack.c.bf16 %v7356, %v7352
        %v7626 = vpack.c.bf16 %v7362, %v7358
        %v7627 = vpack.c.bf16 %v7364, %v7360
        %v7628 = vpack.c.bf16 %v7370, %v7366
        %v7629 = vpack.c.bf16 %v7372, %v7368
        %7630 = vrot.lane.b32.xlu0 %v2445, 32
        %v7631 = vpop.permute.xlu0 %7630
        %7632 = vrot.lane.b32.xlu0 %v2446, 32
        %v7633 = vpop.permute.xlu0 %7632
        %7634 = vrot.lane.b32.xlu0 %v2447, 32
        %v7635 = vpop.permute.xlu0 %7634
        %7636 = vrot.lane.b32.xlu0 %v2448, 32
        %v7637 = vpop.permute.xlu0 %7636
        %7638 = vrot.lane.b32.xlu0 %v2449, 32
        %v7639 = vpop.permute.xlu0 %7638
        %7640 = vrot.lane.b32.xlu0 %v2450, 32
        %v7641 = vpop.permute.xlu0 %7640
        %7642 = vrot.lane.b32.xlu0 %v2451, 32
        %v7643 = vpop.permute.xlu0 %7642
        %7644 = vrot.lane.b32.xlu0 %v2452, 32
        %v7645 = vpop.permute.xlu0 %7644
        %7646 = vrot.lane.b32.xlu0 %v2453, 32
        %v7647 = vpop.permute.xlu0 %7646
        %7648 = vrot.lane.b32.xlu0 %v2454, 32
        %v7649 = vpop.permute.xlu0 %7648
        %7650 = vrot.lane.b32.xlu0 %v2455, 32
        %v7651 = vpop.permute.xlu0 %7650
        %7652 = vrot.lane.b32.xlu0 %v2456, 32
        %v7653 = vpop.permute.xlu0 %7652
        %7654 = vrot.lane.b32.xlu0 %v2457, 32
        %v7655 = vpop.permute.xlu0 %7654
        %7656 = vrot.lane.b32.xlu0 %v2458, 32
        %v7657 = vpop.permute.xlu0 %7656
        %7658 = vrot.lane.b32.xlu0 %v2459, 32
        %v7659 = vpop.permute.xlu0 %7658
        %7660 = vrot.lane.b32.xlu0 %v2460, 32
        %v7661 = vpop.permute.xlu0 %7660
        %7678 = vmatprep.subr.bf16.mxu0 0
        %7679 = vmatpush1.bf16.msra.mxu0 %v7631
        %7680 = vmatprep.subr.bf16.mxu0 0
        %7681 = vmatpush1.bf16.msra.mxu0 %v7633
        %7682 = vmatprep.subr.bf16.mxu0 0
        %7683 = vmatpush1.bf16.msra.mxu0 %v7635
        %7684 = vmatprep.subr.bf16.mxu0 0
        %7685 = vmatpush1.bf16.msra.mxu0 %v7637
        %7686 = vmatprep.subr.bf16.mxu0 0
        %7687 = vmatpush1.bf16.msra.mxu0 %v7639
        %7688 = vmatprep.subr.bf16.mxu0 0
        %7689 = vmatpush1.bf16.msra.mxu0 %v7641
        %7690 = vmatprep.subr.bf16.mxu0 0
        %7691 = vmatpush1.bf16.msra.mxu0 %v7643
        %7692 = vmatprep.subr.bf16.mxu0 0
        %7693 = vmatpush1.bf16.msra.mxu0 %v7645
        %7694 = vmatprep.subr.bf16.mxu0 0
        %7695 = vmatpush1.bf16.msra.mxu0 %v7647
        %7696 = vmatprep.subr.bf16.mxu0 0
        %7697 = vmatpush1.bf16.msra.mxu0 %v7649
        %7698 = vmatprep.subr.bf16.mxu0 0
        %7699 = vmatpush1.bf16.msra.mxu0 %v7651
        %7700 = vmatprep.subr.bf16.mxu0 0
        %7701 = vmatpush1.bf16.msra.mxu0 %v7653
        %7702 = vmatprep.subr.bf16.mxu0 0
        %7703 = vmatpush1.bf16.msra.mxu0 %v7655
        %7704 = vmatprep.subr.bf16.mxu0 0
        %7705 = vmatpush1.bf16.msra.mxu0 %v7657
        %7706 = vmatprep.subr.bf16.mxu0 0
        %7707 = vmatpush1.bf16.msra.mxu0 %v7659
        %7708 = vmatprep.subr.bf16.mxu0 0
        %7709 = vmatpush1.bf16.msra.mxu0 %v7661
        %7710 = vmatprep.mubr.bf16.mxu0 %v7599
        %7711 = vmatmul.mubr.bf16.gmra.mrb[0].mxu0 %v7598
        %v7712 = vpop.f32.mrb[0].mxu0
        %v7713 = vadd.f32 0.0, %v7712
        %v7714 = vpop.f32.mrb[0].mxu0
        %v7715 = vpop.f32.mrb[0].mxu0
        %v7716 = vadd.f32 0.0, %v7715
        %v7717 = vpop.f32.mrb[0].mxu0
        %7718 = vmatprep.mubr.bf16.mxu0 %v7601
        %7719 = vmatmul.mubr.bf16.gmra.mrb[0].mxu0 %v7600
        %v7720 = vpop.f32.mrb[0].mxu0
        %v7721 = vadd.f32 0.0, %v7720
        %v7722 = vpop.f32.mrb[0].mxu0
        %v7723 = vpop.f32.mrb[0].mxu0
        %v7724 = vadd.f32 0.0, %v7723
        %v7725 = vpop.f32.mrb[0].mxu0
        %7726 = vmatprep.mubr.bf16.mxu0 %v7603
        %7727 = vmatmul.mubr.bf16.gmra.mrb[0].mxu0 %v7602
        %v7728 = vpop.f32.mrb[0].mxu0
        %v7729 = vadd.f32 0.0, %v7728
        %v7730 = vpop.f32.mrb[0].mxu0
        %v7731 = vpop.f32.mrb[0].mxu0
        %v7732 = vadd.f32 0.0, %v7731
        %v7733 = vpop.f32.mrb[0].mxu0
        %7734 = vmatprep.mubr.bf16.mxu0 %v7605
        %7735 = vmatmul.mubr.bf16.gmra.mrb[0].mxu0 %v7604
        %v7736 = vpop.f32.mrb[0].mxu0
        %v7737 = vadd.f32 0.0, %v7736
        %v7738 = vpop.f32.mrb[0].mxu0
        %v7739 = vpop.f32.mrb[0].mxu0
        %v7740 = vadd.f32 0.0, %v7739
        %v7741 = vpop.f32.mrb[0].mxu0
        %7742 = vmatprep.mubr.bf16.mxu0 %v7607
        %7743 = vmatmul.mubr.bf16.gmra.mrb[0].mxu0 %v7606
        %v7744 = vpop.f32.mrb[0].mxu0
        %v7745 = vadd.f32 0.0, %v7744
        %v7746 = vpop.f32.mrb[0].mxu0
        %v7747 = vpop.f32.mrb[0].mxu0
        %v7748 = vadd.f32 0.0, %v7747
        %v7749 = vpop.f32.mrb[0].mxu0
        %7750 = vmatprep.mubr.bf16.mxu0 %v7609
        %7751 = vmatmul.mubr.bf16.gmra.mrb[0].mxu0 %v7608
        %v7752 = vpop.f32.mrb[0].mxu0
        %v7753 = vadd.f32 0.0, %v7752
        %v7754 = vpop.f32.mrb[0].mxu0
        %v7755 = vpop.f32.mrb[0].mxu0
        %v7756 = vadd.f32 0.0, %v7755
        %v7757 = vpop.f32.mrb[0].mxu0
        %7758 = vmatprep.mubr.bf16.mxu0 %v7611
        %7759 = vmatmul.mubr.bf16.gmra.mrb[0].mxu0 %v7610
        %v7760 = vpop.f32.mrb[0].mxu0
        %v7761 = vadd.f32 0.0, %v7760
        %v7762 = vpop.f32.mrb[0].mxu0
        %v7763 = vpop.f32.mrb[0].mxu0
        %v7764 = vadd.f32 0.0, %v7763
        %v7765 = vpop.f32.mrb[0].mxu0
        %7766 = vmatprep.mubr.bf16.mxu0 %v7613
        %7767 = vmatmul.mubr.bf16.gmra.mrb[0].mxu0 %v7612
        %v7768 = vpop.f32.mrb[0].mxu0
        %v7769 = vadd.f32 0.0, %v7768
        %v7770 = vpop.f32.mrb[0].mxu0
        %v7771 = vpop.f32.mrb[0].mxu0
        %v7772 = vadd.f32 0.0, %v7771
        %v7773 = vpop.f32.mrb[0].mxu0
        %7774 = vmatprep.mubr.bf16.mxu0 %v7615
        %7775 = vmatmul.mubr.bf16.gmra.mrb[0].mxu0 %v7614
        %v7776 = vpop.f32.mrb[0].mxu0
        %v7777 = vadd.f32 0.0, %v7776
        %v7778 = vpop.f32.mrb[0].mxu0
        %v7779 = vpop.f32.mrb[0].mxu0
        %v7780 = vadd.f32 0.0, %v7779
        %v7781 = vpop.f32.mrb[0].mxu0
        %7782 = vmatprep.mubr.bf16.mxu0 %v7617
        %7783 = vmatmul.mubr.bf16.gmra.mrb[0].mxu0 %v7616
        %v7784 = vpop.f32.mrb[0].mxu0
        %v7785 = vadd.f32 0.0, %v7784
        %v7786 = vpop.f32.mrb[0].mxu0
        %v7787 = vpop.f32.mrb[0].mxu0
        %v7788 = vadd.f32 0.0, %v7787
        %v7789 = vpop.f32.mrb[0].mxu0
        %7790 = vmatprep.mubr.bf16.mxu0 %v7619
        %7791 = vmatmul.mubr.bf16.gmra.mrb[0].mxu0 %v7618
        %v7792 = vpop.f32.mrb[0].mxu0
        %v7793 = vadd.f32 0.0, %v7792
        %v7794 = vpop.f32.mrb[0].mxu0
        %v7795 = vpop.f32.mrb[0].mxu0
        %v7796 = vadd.f32 0.0, %v7795
        %v7797 = vpop.f32.mrb[0].mxu0
        %7798 = vmatprep.mubr.bf16.mxu0 %v7621
        %7799 = vmatmul.mubr.bf16.gmra.mrb[0].mxu0 %v7620
        %v7800 = vpop.f32.mrb[0].mxu0
        %v7801 = vadd.f32 0.0, %v7800
        %v7802 = vpop.f32.mrb[0].mxu0
        %v7803 = vpop.f32.mrb[0].mxu0
        %v7804 = vadd.f32 0.0, %v7803
        %v7805 = vpop.f32.mrb[0].mxu0
        %7806 = vmatprep.mubr.bf16.mxu0 %v7623
        %7807 = vmatmul.mubr.bf16.gmra.mrb[0].mxu0 %v7622
        %v7808 = vpop.f32.mrb[0].mxu0
        %v7809 = vadd.f32 0.0, %v7808
        %v7810 = vpop.f32.mrb[0].mxu0
        %v7811 = vpop.f32.mrb[0].mxu0
        %v7812 = vadd.f32 0.0, %v7811
        %v7813 = vpop.f32.mrb[0].mxu0
        %7814 = vmatprep.mubr.bf16.mxu0 %v7625
        %7815 = vmatmul.mubr.bf16.gmra.mrb[0].mxu0 %v7624
        %v7816 = vpop.f32.mrb[0].mxu0
        %v7817 = vadd.f32 0.0, %v7816
        %v7818 = vpop.f32.mrb[0].mxu0
        %v7819 = vpop.f32.mrb[0].mxu0
        %v7820 = vadd.f32 0.0, %v7819
        %v7821 = vpop.f32.mrb[0].mxu0
        %7822 = vmatprep.mubr.bf16.mxu0 %v7627
        %7823 = vmatmul.mubr.bf16.gmra.mrb[0].mxu0 %v7626
        %v7824 = vpop.f32.mrb[0].mxu0
        %v7825 = vadd.f32 0.0, %v7824
        %v7826 = vpop.f32.mrb[0].mxu0
        %v7827 = vpop.f32.mrb[0].mxu0
        %v7828 = vadd.f32 0.0, %v7827
        %v7829 = vpop.f32.mrb[0].mxu0
        %7830 = vmatprep.mubr.bf16.mxu0 %v7629
        %7831 = vmatmul.mubr.bf16.gmra.mrb[0].mxu0 %v7628
        %v7832 = vpop.f32.mrb[0].mxu0
        %v7833 = vadd.f32 0.0, %v7832
        %v7834 = vpop.f32.mrb[0].mxu0
        %v7835 = vpop.f32.mrb[0].mxu0
        %v7836 = vadd.f32 0.0, %v7835
        %v7837 = vpop.f32.mrb[0].mxu0
        %7838 = vdwg.mxu0
        %s7839 = scalar_lea.vmem [#allocation5], 768
        %v7840 = vld [vmem:[%s7839] sm:$0xff]
        %v7841 = vld [vmem:[%s7839 + $0x8] sm:$0xff]
        %v7842 = vld [vmem:[%s7839 + $0x10] sm:$0xff]
        %v7843 = vld [vmem:[%s7839 + $0x18] sm:$0xff]
        %v7844 = vld [vmem:[%s7839 + $0x20] sm:$0xff]
        %v7845 = vld [vmem:[%s7839 + $0x28] sm:$0xff]
        %v7846 = vld [vmem:[%s7839 + $0x30] sm:$0xff]
        %v7847 = vld [vmem:[%s7839 + $0x38] sm:$0xff]
        %v7848 = vld [vmem:[%s7839 + $0x40] sm:$0xff]
        %v7849 = vld [vmem:[%s7839 + $0x48] sm:$0xff]
        %v7850 = vld [vmem:[%s7839 + $0x50] sm:$0xff]
        %v7851 = vld [vmem:[%s7839 + $0x58] sm:$0xff]
        %v7852 = vld [vmem:[%s7839 + $0x60] sm:$0xff]
        %v7853 = vld [vmem:[%s7839 + $0x68] sm:$0xff]
        %v7854 = vld [vmem:[%s7839 + $0x70] sm:$0xff]
        %v7855 = vld [vmem:[%s7839 + $0x78] sm:$0xff]
        %v7856 = vld [vmem:[%s7839 + $0x80] sm:$0xff]
        %v7857 = vld [vmem:[%s7839 + $0x88] sm:$0xff]
        %v7858 = vld [vmem:[%s7839 + $0x90] sm:$0xff]
        %v7859 = vld [vmem:[%s7839 + $0x98] sm:$0xff]
        %v7860 = vld [vmem:[%s7839 + $0xa0] sm:$0xff]
        %v7861 = vld [vmem:[%s7839 + $0xa8] sm:$0xff]
        %v7862 = vld [vmem:[%s7839 + $0xb0] sm:$0xff]
        %v7863 = vld [vmem:[%s7839 + $0xb8] sm:$0xff]
        %v7864 = vld [vmem:[%s7839 + $0xc0] sm:$0xff]
        %v7865 = vld [vmem:[%s7839 + $0xc8] sm:$0xff]
        %v7866 = vld [vmem:[%s7839 + $0xd0] sm:$0xff]
        %v7867 = vld [vmem:[%s7839 + $0xd8] sm:$0xff]
        %v7868 = vld [vmem:[%s7839 + $0xe0] sm:$0xff]
        %v7869 = vld [vmem:[%s7839 + $0xe8] sm:$0xff]
        %v7870 = vld [vmem:[%s7839 + $0xf0] sm:$0xff]
        %v7871 = vld [vmem:[%s7839 + $0xf8] sm:$0xff]
        %7873 = vset.pattern.permute.xlu0 0
        %7874 = vperm.xlu0 %7873, %v6958
        %v7875 = vpop.permute.xlu0 %7874
        %7878 = vset.pattern.permute.xlu0 0
        %7879 = vperm.xlu0 %7878, %v6960
        %v7880 = vpop.permute.xlu0 %7879
        %7883 = vset.pattern.permute.xlu0 0
        %7884 = vperm.xlu0 %7883, %v6962
        %v7885 = vpop.permute.xlu0 %7884
        %7888 = vset.pattern.permute.xlu0 0
        %7889 = vperm.xlu0 %7888, %v6964
        %v7890 = vpop.permute.xlu0 %7889
        %7893 = vset.pattern.permute.xlu0 0
        %7894 = vperm.xlu0 %7893, %v6966
        %v7895 = vpop.permute.xlu0 %7894
        %7898 = vset.pattern.permute.xlu0 0
        %7899 = vperm.xlu0 %7898, %v6968
        %v7900 = vpop.permute.xlu0 %7899
        %7903 = vset.pattern.permute.xlu0 0
        %7904 = vperm.xlu0 %7903, %v6970
        %v7905 = vpop.permute.xlu0 %7904
        %7908 = vset.pattern.permute.xlu0 0
        %7909 = vperm.xlu0 %7908, %v6972
        %v7910 = vpop.permute.xlu0 %7909
        %7913 = vset.pattern.permute.xlu0 0
        %7914 = vperm.xlu0 %7913, %v6974
        %v7915 = vpop.permute.xlu0 %7914
        %7918 = vset.pattern.permute.xlu0 0
        %7919 = vperm.xlu0 %7918, %v6976
        %v7920 = vpop.permute.xlu0 %7919
        %7923 = vset.pattern.permute.xlu0 0
        %7924 = vperm.xlu0 %7923, %v6978
        %v7925 = vpop.permute.xlu0 %7924
        %7928 = vset.pattern.permute.xlu0 0
        %7929 = vperm.xlu0 %7928, %v6980
        %v7930 = vpop.permute.xlu0 %7929
        %7933 = vset.pattern.permute.xlu0 0
        %7934 = vperm.xlu0 %7933, %v6982
        %v7935 = vpop.permute.xlu0 %7934
        %7938 = vset.pattern.permute.xlu0 0
        %7939 = vperm.xlu0 %7938, %v6984
        %v7940 = vpop.permute.xlu0 %7939
        %7943 = vset.pattern.permute.xlu0 0
        %7944 = vperm.xlu0 %7943, %v6986
        %v7945 = vpop.permute.xlu0 %7944
        %7948 = vset.pattern.permute.xlu0 0
        %7949 = vperm.xlu0 %7948, %v6988
        %v7950 = vpop.permute.xlu0 %7949
        %7953 = vset.pattern.permute.xlu0 0
        %7954 = vperm.xlu0 %7953, %v6990
        %v7955 = vpop.permute.xlu0 %7954
        %7958 = vset.pattern.permute.xlu0 0
        %7959 = vperm.xlu0 %7958, %v6992
        %v7960 = vpop.permute.xlu0 %7959
        %7963 = vset.pattern.permute.xlu0 0
        %7964 = vperm.xlu0 %7963, %v6994
        %v7965 = vpop.permute.xlu0 %7964
        %7968 = vset.pattern.permute.xlu0 0
        %7969 = vperm.xlu0 %7968, %v6996
        %v7970 = vpop.permute.xlu0 %7969
        %7973 = vset.pattern.permute.xlu0 0
        %7974 = vperm.xlu0 %7973, %v6998
        %v7975 = vpop.permute.xlu0 %7974
        %7978 = vset.pattern.permute.xlu0 0
        %7979 = vperm.xlu0 %7978, %v7000
        %v7980 = vpop.permute.xlu0 %7979
        %7983 = vset.pattern.permute.xlu0 0
        %7984 = vperm.xlu0 %7983, %v7002
        %v7985 = vpop.permute.xlu0 %7984
        %7988 = vset.pattern.permute.xlu0 0
        %7989 = vperm.xlu0 %7988, %v7004
        %v7990 = vpop.permute.xlu0 %7989
        %7993 = vset.pattern.permute.xlu0 0
        %7994 = vperm.xlu0 %7993, %v7006
        %v7995 = vpop.permute.xlu0 %7994
        %7998 = vset.pattern.permute.xlu0 0
        %7999 = vperm.xlu0 %7998, %v7008
        %v8000 = vpop.permute.xlu0 %7999
        %8003 = vset.pattern.permute.xlu0 0
        %8004 = vperm.xlu0 %8003, %v7010
        %v8005 = vpop.permute.xlu0 %8004
        %8008 = vset.pattern.permute.xlu0 0
        %8009 = vperm.xlu0 %8008, %v7012
        %v8010 = vpop.permute.xlu0 %8009
        %8013 = vset.pattern.permute.xlu0 0
        %8014 = vperm.xlu0 %8013, %v7014
        %v8015 = vpop.permute.xlu0 %8014
        %8018 = vset.pattern.permute.xlu0 0
        %8019 = vperm.xlu0 %8018, %v7016
        %v8020 = vpop.permute.xlu0 %8019
        %8023 = vset.pattern.permute.xlu0 0
        %8024 = vperm.xlu0 %8023, %v7018
        %v8025 = vpop.permute.xlu0 %8024
        %8028 = vset.pattern.permute.xlu0 0
        %8029 = vperm.xlu0 %8028, %v7020
        %v8030 = vpop.permute.xlu0 %8029
        %v8032 = vmul.f32 %v7875, %v7840
        %v8033 = vmul.f32 %v7880, %v7841
        %v8034 = vmul.f32 %v7885, %v7842
        %v8035 = vmul.f32 %v7890, %v7843
        %v8036 = vmul.f32 %v7895, %v7844
        %v8037 = vmul.f32 %v7900, %v7845
        %v8038 = vmul.f32 %v7905, %v7846
        %v8039 = vmul.f32 %v7910, %v7847
        %v8040 = vmul.f32 %v7915, %v7848
        %v8041 = vmul.f32 %v7920, %v7849
        %v8042 = vmul.f32 %v7925, %v7850
        %v8043 = vmul.f32 %v7930, %v7851
        %v8044 = vmul.f32 %v7935, %v7852
        %v8045 = vmul.f32 %v7940, %v7853
        %v8046 = vmul.f32 %v7945, %v7854
        %v8047 = vmul.f32 %v7950, %v7855
        %v8048 = vmul.f32 %v7955, %v7856
        %v8049 = vmul.f32 %v7960, %v7857
        %v8050 = vmul.f32 %v7965, %v7858
        %v8051 = vmul.f32 %v7970, %v7859
        %v8052 = vmul.f32 %v7975, %v7860
        %v8053 = vmul.f32 %v7980, %v7861
        %v8054 = vmul.f32 %v7985, %v7862
        %v8055 = vmul.f32 %v7990, %v7863
        %v8056 = vmul.f32 %v7995, %v7864
        %v8057 = vmul.f32 %v8000, %v7865
        %v8058 = vmul.f32 %v8005, %v7866
        %v8059 = vmul.f32 %v8010, %v7867
        %v8060 = vmul.f32 %v8015, %v7868
        %v8061 = vmul.f32 %v8020, %v7869
        %v8062 = vmul.f32 %v8025, %v7870
        %v8063 = vmul.f32 %v8030, %v7871
        %v8064 = vadd.f32 %v8032, %v7713
        %v8065 = vadd.f32 %v8033, %v7716
        %v8066 = vadd.f32 %v8034, %v7721
        %v8067 = vadd.f32 %v8035, %v7724
        %v8068 = vadd.f32 %v8036, %v7729
        %v8069 = vadd.f32 %v8037, %v7732
        %v8070 = vadd.f32 %v8038, %v7737
        %v8071 = vadd.f32 %v8039, %v7740
        %v8072 = vadd.f32 %v8040, %v7745
        %v8073 = vadd.f32 %v8041, %v7748
        %v8074 = vadd.f32 %v8042, %v7753
        %v8075 = vadd.f32 %v8043, %v7756
        %v8076 = vadd.f32 %v8044, %v7761
        %v8077 = vadd.f32 %v8045, %v7764
        %v8078 = vadd.f32 %v8046, %v7769
        %v8079 = vadd.f32 %v8047, %v7772
        %v8080 = vadd.f32 %v8048, %v7777
        %v8081 = vadd.f32 %v8049, %v7780
        %v8082 = vadd.f32 %v8050, %v7785
        %v8083 = vadd.f32 %v8051, %v7788
        %v8084 = vadd.f32 %v8052, %v7793
        %v8085 = vadd.f32 %v8053, %v7796
        %v8086 = vadd.f32 %v8054, %v7801
        %v8087 = vadd.f32 %v8055, %v7804
        %v8088 = vadd.f32 %v8056, %v7809
        %v8089 = vadd.f32 %v8057, %v7812
        %v8090 = vadd.f32 %v8058, %v7817
        %v8091 = vadd.f32 %v8059, %v7820
        %v8092 = vadd.f32 %v8060, %v7825
        %v8093 = vadd.f32 %v8061, %v7828
        %v8094 = vadd.f32 %v8062, %v7833
        %v8095 = vadd.f32 %v8063, %v7836
        %8096 = vst.msk [vmem:[%s7839] sm:$0xff] %vm1226, %v8064
        %8097 = vst.msk [vmem:[%s7839 + $0x8] sm:$0xff] %vm1226, %v8065
        %8098 = vst.msk [vmem:[%s7839 + $0x10] sm:$0xff] %vm1226, %v8066
        %8099 = vst.msk [vmem:[%s7839 + $0x18] sm:$0xff] %vm1226, %v8067
        %8100 = vst.msk [vmem:[%s7839 + $0x20] sm:$0xff] %vm1226, %v8068
        %8101 = vst.msk [vmem:[%s7839 + $0x28] sm:$0xff] %vm1226, %v8069
        %8102 = vst.msk [vmem:[%s7839 + $0x30] sm:$0xff] %vm1226, %v8070
        %8103 = vst.msk [vmem:[%s7839 + $0x38] sm:$0xff] %vm1226, %v8071
        %8104 = vst.msk [vmem:[%s7839 + $0x40] sm:$0xff] %vm1226, %v8072
        %8105 = vst.msk [vmem:[%s7839 + $0x48] sm:$0xff] %vm1226, %v8073
        %8106 = vst.msk [vmem:[%s7839 + $0x50] sm:$0xff] %vm1226, %v8074
        %8107 = vst.msk [vmem:[%s7839 + $0x58] sm:$0xff] %vm1226, %v8075
        %8108 = vst.msk [vmem:[%s7839 + $0x60] sm:$0xff] %vm1226, %v8076
        %8109 = vst.msk [vmem:[%s7839 + $0x68] sm:$0xff] %vm1226, %v8077
        %8110 = vst.msk [vmem:[%s7839 + $0x70] sm:$0xff] %vm1226, %v8078
        %8111 = vst.msk [vmem:[%s7839 + $0x78] sm:$0xff] %vm1226, %v8079
        %8112 = vst.msk [vmem:[%s7839 + $0x80] sm:$0xff] %vm1226, %v8080
        %8113 = vst.msk [vmem:[%s7839 + $0x88] sm:$0xff] %vm1226, %v8081
        %8114 = vst.msk [vmem:[%s7839 + $0x90] sm:$0xff] %vm1226, %v8082
        %8115 = vst.msk [vmem:[%s7839 + $0x98] sm:$0xff] %vm1226, %v8083
        %8116 = vst.msk [vmem:[%s7839 + $0xa0] sm:$0xff] %vm1226, %v8084
        %8117 = vst.msk [vmem:[%s7839 + $0xa8] sm:$0xff] %vm1226, %v8085
        %8118 = vst.msk [vmem:[%s7839 + $0xb0] sm:$0xff] %vm1226, %v8086
        %8119 = vst.msk [vmem:[%s7839 + $0xb8] sm:$0xff] %vm1226, %v8087
        %8120 = vst.msk [vmem:[%s7839 + $0xc0] sm:$0xff] %vm1226, %v8088
        %8121 = vst.msk [vmem:[%s7839 + $0xc8] sm:$0xff] %vm1226, %v8089
        %8122 = vst.msk [vmem:[%s7839 + $0xd0] sm:$0xff] %vm1226, %v8090
        %8123 = vst.msk [vmem:[%s7839 + $0xd8] sm:$0xff] %vm1226, %v8091
        %8124 = vst.msk [vmem:[%s7839 + $0xe0] sm:$0xff] %vm1226, %v8092
        %8125 = vst.msk [vmem:[%s7839 + $0xe8] sm:$0xff] %vm1226, %v8093
        %8126 = vst.msk [vmem:[%s7839 + $0xf0] sm:$0xff] %vm1226, %v8094
        %8127 = vst.msk [vmem:[%s7839 + $0xf8] sm:$0xff] %vm1226, %v8095
        %8128 = vst.msk [vmem:[%s6764] sm:$0xff] %vm2316, %v6893
        %8129 = vst.msk [vmem:[%s6764 + $0x8] sm:$0xff] %vm2316, %v6894
        %8130 = vst.msk [vmem:[%s6764 + $0x10] sm:$0xff] %vm2316, %v6895
        %8131 = vst.msk [vmem:[%s6764 + $0x18] sm:$0xff] %vm2316, %v6896
        %8132 = vst.msk [vmem:[%s6764 + $0x20] sm:$0xff] %vm2316, %v6897
        %8133 = vst.msk [vmem:[%s6764 + $0x28] sm:$0xff] %vm2316, %v6898
        %8134 = vst.msk [vmem:[%s6764 + $0x30] sm:$0xff] %vm2316, %v6899
        %8135 = vst.msk [vmem:[%s6764 + $0x38] sm:$0xff] %vm2316, %v6900
        %8136 = vst.msk [vmem:[%s6764 + $0x40] sm:$0xff] %vm2316, %v6901
        %8137 = vst.msk [vmem:[%s6764 + $0x48] sm:$0xff] %vm2316, %v6902
        %8138 = vst.msk [vmem:[%s6764 + $0x50] sm:$0xff] %vm2316, %v6903
        %8139 = vst.msk [vmem:[%s6764 + $0x58] sm:$0xff] %vm2316, %v6904
        %8140 = vst.msk [vmem:[%s6764 + $0x60] sm:$0xff] %vm2316, %v6905
        %8141 = vst.msk [vmem:[%s6764 + $0x68] sm:$0xff] %vm2316, %v6906
        %8142 = vst.msk [vmem:[%s6764 + $0x70] sm:$0xff] %vm2316, %v6907
        %8143 = vst.msk [vmem:[%s6764 + $0x78] sm:$0xff] %vm2316, %v6908
        %8144 = vst.msk [vmem:[%s6764 + $0x80] sm:$0xff] %vm2316, %v6909
        %8145 = vst.msk [vmem:[%s6764 + $0x88] sm:$0xff] %vm2316, %v6910
        %8146 = vst.msk [vmem:[%s6764 + $0x90] sm:$0xff] %vm2316, %v6911
        %8147 = vst.msk [vmem:[%s6764 + $0x98] sm:$0xff] %vm2316, %v6912
        %8148 = vst.msk [vmem:[%s6764 + $0xa0] sm:$0xff] %vm2316, %v6913
        %8149 = vst.msk [vmem:[%s6764 + $0xa8] sm:$0xff] %vm2316, %v6914
        %8150 = vst.msk [vmem:[%s6764 + $0xb0] sm:$0xff] %vm2316, %v6915
        %8151 = vst.msk [vmem:[%s6764 + $0xb8] sm:$0xff] %vm2316, %v6916
        %8152 = vst.msk [vmem:[%s6764 + $0xc0] sm:$0xff] %vm2316, %v6917
        %8153 = vst.msk [vmem:[%s6764 + $0xc8] sm:$0xff] %vm2316, %v6918
        %8154 = vst.msk [vmem:[%s6764 + $0xd0] sm:$0xff] %vm2316, %v6919
        %8155 = vst.msk [vmem:[%s6764 + $0xd8] sm:$0xff] %vm2316, %v6920
        %8156 = vst.msk [vmem:[%s6764 + $0xe0] sm:$0xff] %vm2316, %v6921
        %8157 = vst.msk [vmem:[%s6764 + $0xe8] sm:$0xff] %vm2316, %v6922
        %8158 = vst.msk [vmem:[%s6764 + $0xf0] sm:$0xff] %vm2316, %v6923
        %8159 = vst.msk [vmem:[%s6764 + $0xf8] sm:$0xff] %vm2316, %v6924
        // Predicated region
        $region49: #{tpu_custom_call.1} parent=31 // pred_check
          %p8160 = pneg %p305
        $region50: #{tpu_custom_call.1} parent=31 // pred_check_branch
          %8162 = sbr.rel (%p8160) target = $region52
        $region51: #{tpu_custom_call.1} parent=31 // pred_region
          %v8163 = vld [vmem:[#allocation4] sm:$0xff]
          %v8164 = vld [vmem:[#allocation4 + $0x8] sm:$0xff]
          %v8165 = vld [vmem:[#allocation4 + $0x10] sm:$0xff]
          %v8166 = vld [vmem:[#allocation4 + $0x18] sm:$0xff]
          %v8167 = vld [vmem:[#allocation4 + $0x20] sm:$0xff]
          %v8168 = vld [vmem:[#allocation4 + $0x28] sm:$0xff]
          %v8169 = vld [vmem:[#allocation4 + $0x30] sm:$0xff]
          %v8170 = vld [vmem:[#allocation4 + $0x38] sm:$0xff]
          %v8171 = vld [vmem:[#allocation4 + $0x40] sm:$0xff]
          %v8172 = vld [vmem:[#allocation4 + $0x48] sm:$0xff]
          %v8173 = vld [vmem:[#allocation4 + $0x50] sm:$0xff]
          %v8174 = vld [vmem:[#allocation4 + $0x58] sm:$0xff]
          %v8175 = vld [vmem:[#allocation4 + $0x60] sm:$0xff]
          %v8176 = vld [vmem:[#allocation4 + $0x68] sm:$0xff]
          %v8177 = vld [vmem:[#allocation4 + $0x70] sm:$0xff]
          %v8178 = vld [vmem:[#allocation4 + $0x78] sm:$0xff]
          %v8179 = vld [vmem:[#allocation4 + $0x80] sm:$0xff]
          %v8180 = vld [vmem:[#allocation4 + $0x88] sm:$0xff]
          %v8181 = vld [vmem:[#allocation4 + $0x90] sm:$0xff]
          %v8182 = vld [vmem:[#allocation4 + $0x98] sm:$0xff]
          %v8183 = vld [vmem:[#allocation4 + $0xa0] sm:$0xff]
          %v8184 = vld [vmem:[#allocation4 + $0xa8] sm:$0xff]
          %v8185 = vld [vmem:[#allocation4 + $0xb0] sm:$0xff]
          %v8186 = vld [vmem:[#allocation4 + $0xb8] sm:$0xff]
          %v8187 = vld [vmem:[#allocation4 + $0xc0] sm:$0xff]
          %v8188 = vld [vmem:[#allocation4 + $0xc8] sm:$0xff]
          %v8189 = vld [vmem:[#allocation4 + $0xd0] sm:$0xff]
          %v8190 = vld [vmem:[#allocation4 + $0xd8] sm:$0xff]
          %v8191 = vld [vmem:[#allocation4 + $0xe0] sm:$0xff]
          %v8192 = vld [vmem:[#allocation4 + $0xe8] sm:$0xff]
          %v8193 = vld [vmem:[#allocation4 + $0xf0] sm:$0xff]
          %v8194 = vld [vmem:[#allocation4 + $0xf8] sm:$0xff]
          %v8195 = vrcp.pop %v8163
          %v8196 = vrcp.pop %v8164
          %v8197 = vrcp.pop %v8165
          %v8198 = vrcp.pop %v8166
          %v8199 = vrcp.pop %v8167
          %v8200 = vrcp.pop %v8168
          %v8201 = vrcp.pop %v8169
          %v8202 = vrcp.pop %v8170
          %v8203 = vrcp.pop %v8171
          %v8204 = vrcp.pop %v8172
          %v8205 = vrcp.pop %v8173
          %v8206 = vrcp.pop %v8174
          %v8207 = vrcp.pop %v8175
          %v8208 = vrcp.pop %v8176
          %v8209 = vrcp.pop %v8177
          %v8210 = vrcp.pop %v8178
          %v8211 = vrcp.pop %v8179
          %v8212 = vrcp.pop %v8180
          %v8213 = vrcp.pop %v8181
          %v8214 = vrcp.pop %v8182
          %v8215 = vrcp.pop %v8183
          %v8216 = vrcp.pop %v8184
          %v8217 = vrcp.pop %v8185
          %v8218 = vrcp.pop %v8186
          %v8219 = vrcp.pop %v8187
          %v8220 = vrcp.pop %v8188
          %v8221 = vrcp.pop %v8189
          %v8222 = vrcp.pop %v8190
          %v8223 = vrcp.pop %v8191
          %v8224 = vrcp.pop %v8192
          %v8225 = vrcp.pop %v8193
          %v8226 = vrcp.pop %v8194
          %v8227 = vld [vmem:[#allocation5] sm:$0xff]
          %v8228 = vld [vmem:[#allocation5 + $0x8] sm:$0xff]
          %v8229 = vld [vmem:[#allocation5 + $0x10] sm:$0xff]
          %v8230 = vld [vmem:[#allocation5 + $0x18] sm:$0xff]
          %v8231 = vld [vmem:[#allocation5 + $0x20] sm:$0xff]
          %v8232 = vld [vmem:[#allocation5 + $0x28] sm:$0xff]
          %v8233 = vld [vmem:[#allocation5 + $0x30] sm:$0xff]
          %v8234 = vld [vmem:[#allocation5 + $0x38] sm:$0xff]
          %v8235 = vld [vmem:[#allocation5 + $0x40] sm:$0xff]
          %v8236 = vld [vmem:[#allocation5 + $0x48] sm:$0xff]
          %v8237 = vld [vmem:[#allocation5 + $0x50] sm:$0xff]
          %v8238 = vld [vmem:[#allocation5 + $0x58] sm:$0xff]
          %v8239 = vld [vmem:[#allocation5 + $0x60] sm:$0xff]
          %v8240 = vld [vmem:[#allocation5 + $0x68] sm:$0xff]
          %v8241 = vld [vmem:[#allocation5 + $0x70] sm:$0xff]
          %v8242 = vld [vmem:[#allocation5 + $0x78] sm:$0xff]
          %v8243 = vld [vmem:[#allocation5 + $0x80] sm:$0xff]
          %v8244 = vld [vmem:[#allocation5 + $0x88] sm:$0xff]
          %v8245 = vld [vmem:[#allocation5 + $0x90] sm:$0xff]
          %v8246 = vld [vmem:[#allocation5 + $0x98] sm:$0xff]
          %v8247 = vld [vmem:[#allocation5 + $0xa0] sm:$0xff]
          %v8248 = vld [vmem:[#allocation5 + $0xa8] sm:$0xff]
          %v8249 = vld [vmem:[#allocation5 + $0xb0] sm:$0xff]
          %v8250 = vld [vmem:[#allocation5 + $0xb8] sm:$0xff]
          %v8251 = vld [vmem:[#allocation5 + $0xc0] sm:$0xff]
          %v8252 = vld [vmem:[#allocation5 + $0xc8] sm:$0xff]
          %v8253 = vld [vmem:[#allocation5 + $0xd0] sm:$0xff]
          %v8254 = vld [vmem:[#allocation5 + $0xd8] sm:$0xff]
          %v8255 = vld [vmem:[#allocation5 + $0xe0] sm:$0xff]
          %v8256 = vld [vmem:[#allocation5 + $0xe8] sm:$0xff]
          %v8257 = vld [vmem:[#allocation5 + $0xf0] sm:$0xff]
          %v8258 = vld [vmem:[#allocation5 + $0xf8] sm:$0xff]
          %8260 = vset.pattern.permute.xlu0 0
          %8261 = vperm.xlu0 %8260, %v8195
          %v8262 = vpop.permute.xlu0 %8261
          %8265 = vset.pattern.permute.xlu0 0
          %8266 = vperm.xlu0 %8265, %v8196
          %v8267 = vpop.permute.xlu0 %8266
          %8270 = vset.pattern.permute.xlu0 0
          %8271 = vperm.xlu0 %8270, %v8197
          %v8272 = vpop.permute.xlu0 %8271
          %8275 = vset.pattern.permute.xlu0 0
          %8276 = vperm.xlu0 %8275, %v8198
          %v8277 = vpop.permute.xlu0 %8276
          %8280 = vset.pattern.permute.xlu0 0
          %8281 = vperm.xlu0 %8280, %v8199
          %v8282 = vpop.permute.xlu0 %8281
          %8285 = vset.pattern.permute.xlu0 0
          %8286 = vperm.xlu0 %8285, %v8200
          %v8287 = vpop.permute.xlu0 %8286
          %8290 = vset.pattern.permute.xlu0 0
          %8291 = vperm.xlu0 %8290, %v8201
          %v8292 = vpop.permute.xlu0 %8291
          %8295 = vset.pattern.permute.xlu0 0
          %8296 = vperm.xlu0 %8295, %v8202
          %v8297 = vpop.permute.xlu0 %8296
          %8300 = vset.pattern.permute.xlu0 0
          %8301 = vperm.xlu0 %8300, %v8203
          %v8302 = vpop.permute.xlu0 %8301
          %8305 = vset.pattern.permute.xlu0 0
          %8306 = vperm.xlu0 %8305, %v8204
          %v8307 = vpop.permute.xlu0 %8306
          %8310 = vset.pattern.permute.xlu0 0
          %8311 = vperm.xlu0 %8310, %v8205
          %v8312 = vpop.permute.xlu0 %8311
          %8315 = vset.pattern.permute.xlu0 0
          %8316 = vperm.xlu0 %8315, %v8206
          %v8317 = vpop.permute.xlu0 %8316
          %8320 = vset.pattern.permute.xlu0 0
          %8321 = vperm.xlu0 %8320, %v8207
          %v8322 = vpop.permute.xlu0 %8321
          %8325 = vset.pattern.permute.xlu0 0
          %8326 = vperm.xlu0 %8325, %v8208
          %v8327 = vpop.permute.xlu0 %8326
          %8330 = vset.pattern.permute.xlu0 0
          %8331 = vperm.xlu0 %8330, %v8209
          %v8332 = vpop.permute.xlu0 %8331
          %8335 = vset.pattern.permute.xlu0 0
          %8336 = vperm.xlu0 %8335, %v8210
          %v8337 = vpop.permute.xlu0 %8336
          %8340 = vset.pattern.permute.xlu0 0
          %8341 = vperm.xlu0 %8340, %v8211
          %v8342 = vpop.permute.xlu0 %8341
          %8345 = vset.pattern.permute.xlu0 0
          %8346 = vperm.xlu0 %8345, %v8212
          %v8347 = vpop.permute.xlu0 %8346
          %8350 = vset.pattern.permute.xlu0 0
          %8351 = vperm.xlu0 %8350, %v8213
          %v8352 = vpop.permute.xlu0 %8351
          %8355 = vset.pattern.permute.xlu0 0
          %8356 = vperm.xlu0 %8355, %v8214
          %v8357 = vpop.permute.xlu0 %8356
          %8360 = vset.pattern.permute.xlu0 0
          %8361 = vperm.xlu0 %8360, %v8215
          %v8362 = vpop.permute.xlu0 %8361
          %8365 = vset.pattern.permute.xlu0 0
          %8366 = vperm.xlu0 %8365, %v8216
          %v8367 = vpop.permute.xlu0 %8366
          %8370 = vset.pattern.permute.xlu0 0
          %8371 = vperm.xlu0 %8370, %v8217
          %v8372 = vpop.permute.xlu0 %8371
          %8375 = vset.pattern.permute.xlu0 0
          %8376 = vperm.xlu0 %8375, %v8218
          %v8377 = vpop.permute.xlu0 %8376
          %8380 = vset.pattern.permute.xlu0 0
          %8381 = vperm.xlu0 %8380, %v8219
          %v8382 = vpop.permute.xlu0 %8381
          %8385 = vset.pattern.permute.xlu0 0
          %8386 = vperm.xlu0 %8385, %v8220
          %v8387 = vpop.permute.xlu0 %8386
          %8390 = vset.pattern.permute.xlu0 0
          %8391 = vperm.xlu0 %8390, %v8221
          %v8392 = vpop.permute.xlu0 %8391
          %8395 = vset.pattern.permute.xlu0 0
          %8396 = vperm.xlu0 %8395, %v8222
          %v8397 = vpop.permute.xlu0 %8396
          %8400 = vset.pattern.permute.xlu0 0
          %8401 = vperm.xlu0 %8400, %v8223
          %v8402 = vpop.permute.xlu0 %8401
          %8405 = vset.pattern.permute.xlu0 0
          %8406 = vperm.xlu0 %8405, %v8224
          %v8407 = vpop.permute.xlu0 %8406
          %8410 = vset.pattern.permute.xlu0 0
          %8411 = vperm.xlu0 %8410, %v8225
          %v8412 = vpop.permute.xlu0 %8411
          %8415 = vset.pattern.permute.xlu0 0
          %8416 = vperm.xlu0 %8415, %v8226
          %v8417 = vpop.permute.xlu0 %8416
          %v8419 = vmul.f32 %v8227, %v8262
          %v8420 = vmul.f32 %v8228, %v8267
          %v8421 = vmul.f32 %v8229, %v8272
          %v8422 = vmul.f32 %v8230, %v8277
          %v8423 = vmul.f32 %v8231, %v8282
          %v8424 = vmul.f32 %v8232, %v8287
          %v8425 = vmul.f32 %v8233, %v8292
          %v8426 = vmul.f32 %v8234, %v8297
          %v8427 = vmul.f32 %v8235, %v8302
          %v8428 = vmul.f32 %v8236, %v8307
          %v8429 = vmul.f32 %v8237, %v8312
          %v8430 = vmul.f32 %v8238, %v8317
          %v8431 = vmul.f32 %v8239, %v8322
          %v8432 = vmul.f32 %v8240, %v8327
          %v8433 = vmul.f32 %v8241, %v8332
          %v8434 = vmul.f32 %v8242, %v8337
          %v8435 = vmul.f32 %v8243, %v8342
          %v8436 = vmul.f32 %v8244, %v8347
          %v8437 = vmul.f32 %v8245, %v8352
          %v8438 = vmul.f32 %v8246, %v8357
          %v8439 = vmul.f32 %v8247, %v8362
          %v8440 = vmul.f32 %v8248, %v8367
          %v8441 = vmul.f32 %v8249, %v8372
          %v8442 = vmul.f32 %v8250, %v8377
          %v8443 = vmul.f32 %v8251, %v8382
          %v8444 = vmul.f32 %v8252, %v8387
          %v8445 = vmul.f32 %v8253, %v8392
          %v8446 = vmul.f32 %v8254, %v8397
          %v8447 = vmul.f32 %v8255, %v8402
          %v8448 = vmul.f32 %v8256, %v8407
          %v8449 = vmul.f32 %v8257, %v8412
          %v8450 = vmul.f32 %v8258, %v8417
          %v8451 = vld [vmem:[%s3905] sm:$0xff]
          %v8452 = vld [vmem:[%s3905 + $0x8] sm:$0xff]
          %v8453 = vld [vmem:[%s3905 + $0x10] sm:$0xff]
          %v8454 = vld [vmem:[%s3905 + $0x18] sm:$0xff]
          %v8455 = vld [vmem:[%s3905 + $0x20] sm:$0xff]
          %v8456 = vld [vmem:[%s3905 + $0x28] sm:$0xff]
          %v8457 = vld [vmem:[%s3905 + $0x30] sm:$0xff]
          %v8458 = vld [vmem:[%s3905 + $0x38] sm:$0xff]
          %v8459 = vld [vmem:[%s3905 + $0x40] sm:$0xff]
          %v8460 = vld [vmem:[%s3905 + $0x48] sm:$0xff]
          %v8461 = vld [vmem:[%s3905 + $0x50] sm:$0xff]
          %v8462 = vld [vmem:[%s3905 + $0x58] sm:$0xff]
          %v8463 = vld [vmem:[%s3905 + $0x60] sm:$0xff]
          %v8464 = vld [vmem:[%s3905 + $0x68] sm:$0xff]
          %v8465 = vld [vmem:[%s3905 + $0x70] sm:$0xff]
          %v8466 = vld [vmem:[%s3905 + $0x78] sm:$0xff]
          %v8467 = vld [vmem:[%s3905 + $0x80] sm:$0xff]
          %v8468 = vld [vmem:[%s3905 + $0x88] sm:$0xff]
          %v8469 = vld [vmem:[%s3905 + $0x90] sm:$0xff]
          %v8470 = vld [vmem:[%s3905 + $0x98] sm:$0xff]
          %v8471 = vld [vmem:[%s3905 + $0xa0] sm:$0xff]
          %v8472 = vld [vmem:[%s3905 + $0xa8] sm:$0xff]
          %v8473 = vld [vmem:[%s3905 + $0xb0] sm:$0xff]
          %v8474 = vld [vmem:[%s3905 + $0xb8] sm:$0xff]
          %v8475 = vld [vmem:[%s3905 + $0xc0] sm:$0xff]
          %v8476 = vld [vmem:[%s3905 + $0xc8] sm:$0xff]
          %v8477 = vld [vmem:[%s3905 + $0xd0] sm:$0xff]
          %v8478 = vld [vmem:[%s3905 + $0xd8] sm:$0xff]
          %v8479 = vld [vmem:[%s3905 + $0xe0] sm:$0xff]
          %v8480 = vld [vmem:[%s3905 + $0xe8] sm:$0xff]
          %v8481 = vld [vmem:[%s3905 + $0xf0] sm:$0xff]
          %v8482 = vld [vmem:[%s3905 + $0xf8] sm:$0xff]
          %v8483 = vrcp.pop %v8451
          %v8484 = vrcp.pop %v8452
          %v8485 = vrcp.pop %v8453
          %v8486 = vrcp.pop %v8454
          %v8487 = vrcp.pop %v8455
          %v8488 = vrcp.pop %v8456
          %v8489 = vrcp.pop %v8457
          %v8490 = vrcp.pop %v8458
          %v8491 = vrcp.pop %v8459
          %v8492 = vrcp.pop %v8460
          %v8493 = vrcp.pop %v8461
          %v8494 = vrcp.pop %v8462
          %v8495 = vrcp.pop %v8463
          %v8496 = vrcp.pop %v8464
          %v8497 = vrcp.pop %v8465
          %v8498 = vrcp.pop %v8466
          %v8499 = vrcp.pop %v8467
          %v8500 = vrcp.pop %v8468
          %v8501 = vrcp.pop %v8469
          %v8502 = vrcp.pop %v8470
          %v8503 = vrcp.pop %v8471
          %v8504 = vrcp.pop %v8472
          %v8505 = vrcp.pop %v8473
          %v8506 = vrcp.pop %v8474
          %v8507 = vrcp.pop %v8475
          %v8508 = vrcp.pop %v8476
          %v8509 = vrcp.pop %v8477
          %v8510 = vrcp.pop %v8478
          %v8511 = vrcp.pop %v8479
          %v8512 = vrcp.pop %v8480
          %v8513 = vrcp.pop %v8481
          %v8514 = vrcp.pop %v8482
          %v8515 = vld [vmem:[%s4371] sm:$0xff]
          %v8516 = vld [vmem:[%s4371 + $0x8] sm:$0xff]
          %v8517 = vld [vmem:[%s4371 + $0x10] sm:$0xff]
          %v8518 = vld [vmem:[%s4371 + $0x18] sm:$0xff]
          %v8519 = vld [vmem:[%s4371 + $0x20] sm:$0xff]
          %v8520 = vld [vmem:[%s4371 + $0x28] sm:$0xff]
          %v8521 = vld [vmem:[%s4371 + $0x30] sm:$0xff]
          %v8522 = vld [vmem:[%s4371 + $0x38] sm:$0xff]
          %v8523 = vld [vmem:[%s4371 + $0x40] sm:$0xff]
          %v8524 = vld [vmem:[%s4371 + $0x48] sm:$0xff]
          %v8525 = vld [vmem:[%s4371 + $0x50] sm:$0xff]
          %v8526 = vld [vmem:[%s4371 + $0x58] sm:$0xff]
          %v8527 = vld [vmem:[%s4371 + $0x60] sm:$0xff]
          %v8528 = vld [vmem:[%s4371 + $0x68] sm:$0xff]
          %v8529 = vld [vmem:[%s4371 + $0x70] sm:$0xff]
          %v8530 = vld [vmem:[%s4371 + $0x78] sm:$0xff]
          %v8531 = vld [vmem:[%s4371 + $0x80] sm:$0xff]
          %v8532 = vld [vmem:[%s4371 + $0x88] sm:$0xff]
          %v8533 = vld [vmem:[%s4371 + $0x90] sm:$0xff]
          %v8534 = vld [vmem:[%s4371 + $0x98] sm:$0xff]
          %v8535 = vld [vmem:[%s4371 + $0xa0] sm:$0xff]
          %v8536 = vld [vmem:[%s4371 + $0xa8] sm:$0xff]
          %v8537 = vld [vmem:[%s4371 + $0xb0] sm:$0xff]
          %v8538 = vld [vmem:[%s4371 + $0xb8] sm:$0xff]
          %v8539 = vld [vmem:[%s4371 + $0xc0] sm:$0xff]
          %v8540 = vld [vmem:[%s4371 + $0xc8] sm:$0xff]
          %v8541 = vld [vmem:[%s4371 + $0xd0] sm:$0xff]
          %v8542 = vld [vmem:[%s4371 + $0xd8] sm:$0xff]
          %v8543 = vld [vmem:[%s4371 + $0xe0] sm:$0xff]
          %v8544 = vld [vmem:[%s4371 + $0xe8] sm:$0xff]
          %v8545 = vld [vmem:[%s4371 + $0xf0] sm:$0xff]
          %v8546 = vld [vmem:[%s4371 + $0xf8] sm:$0xff]
          %8548 = vset.pattern.permute.xlu0 0
          %8549 = vperm.xlu0 %8548, %v8483
          %v8550 = vpop.permute.xlu0 %8549
          %8553 = vset.pattern.permute.xlu0 0
          %8554 = vperm.xlu0 %8553, %v8484
          %v8555 = vpop.permute.xlu0 %8554
          %8558 = vset.pattern.permute.xlu0 0
          %8559 = vperm.xlu0 %8558, %v8485
          %v8560 = vpop.permute.xlu0 %8559
          %8563 = vset.pattern.permute.xlu0 0
          %8564 = vperm.xlu0 %8563, %v8486
          %v8565 = vpop.permute.xlu0 %8564
          %8568 = vset.pattern.permute.xlu0 0
          %8569 = vperm.xlu0 %8568, %v8487
          %v8570 = vpop.permute.xlu0 %8569
          %8573 = vset.pattern.permute.xlu0 0
          %8574 = vperm.xlu0 %8573, %v8488
          %v8575 = vpop.permute.xlu0 %8574
          %8578 = vset.pattern.permute.xlu0 0
          %8579 = vperm.xlu0 %8578, %v8489
          %v8580 = vpop.permute.xlu0 %8579
          %8583 = vset.pattern.permute.xlu0 0
          %8584 = vperm.xlu0 %8583, %v8490
          %v8585 = vpop.permute.xlu0 %8584
          %8588 = vset.pattern.permute.xlu0 0
          %8589 = vperm.xlu0 %8588, %v8491
          %v8590 = vpop.permute.xlu0 %8589
          %8593 = vset.pattern.permute.xlu0 0
          %8594 = vperm.xlu0 %8593, %v8492
          %v8595 = vpop.permute.xlu0 %8594
          %8598 = vset.pattern.permute.xlu0 0
          %8599 = vperm.xlu0 %8598, %v8493
          %v8600 = vpop.permute.xlu0 %8599
          %8603 = vset.pattern.permute.xlu0 0
          %8604 = vperm.xlu0 %8603, %v8494
          %v8605 = vpop.permute.xlu0 %8604
          %8608 = vset.pattern.permute.xlu0 0
          %8609 = vperm.xlu0 %8608, %v8495
          %v8610 = vpop.permute.xlu0 %8609
          %8613 = vset.pattern.permute.xlu0 0
          %8614 = vperm.xlu0 %8613, %v8496
          %v8615 = vpop.permute.xlu0 %8614
          %8618 = vset.pattern.permute.xlu0 0
          %8619 = vperm.xlu0 %8618, %v8497
          %v8620 = vpop.permute.xlu0 %8619
          %8623 = vset.pattern.permute.xlu0 0
          %8624 = vperm.xlu0 %8623, %v8498
          %v8625 = vpop.permute.xlu0 %8624
          %8628 = vset.pattern.permute.xlu0 0
          %8629 = vperm.xlu0 %8628, %v8499
          %v8630 = vpop.permute.xlu0 %8629
          %8633 = vset.pattern.permute.xlu0 0
          %8634 = vperm.xlu0 %8633, %v8500
          %v8635 = vpop.permute.xlu0 %8634
          %8638 = vset.pattern.permute.xlu0 0
          %8639 = vperm.xlu0 %8638, %v8501
          %v8640 = vpop.permute.xlu0 %8639
          %8643 = vset.pattern.permute.xlu0 0
          %8644 = vperm.xlu0 %8643, %v8502
          %v8645 = vpop.permute.xlu0 %8644
          %8648 = vset.pattern.permute.xlu0 0
          %8649 = vperm.xlu0 %8648, %v8503
          %v8650 = vpop.permute.xlu0 %8649
          %8653 = vset.pattern.permute.xlu0 0
          %8654 = vperm.xlu0 %8653, %v8504
          %v8655 = vpop.permute.xlu0 %8654
          %8658 = vset.pattern.permute.xlu0 0
          %8659 = vperm.xlu0 %8658, %v8505
          %v8660 = vpop.permute.xlu0 %8659
          %8663 = vset.pattern.permute.xlu0 0
          %8664 = vperm.xlu0 %8663, %v8506
          %v8665 = vpop.permute.xlu0 %8664
          %8668 = vset.pattern.permute.xlu0 0
          %8669 = vperm.xlu0 %8668, %v8507
          %v8670 = vpop.permute.xlu0 %8669
          %8673 = vset.pattern.permute.xlu0 0
          %8674 = vperm.xlu0 %8673, %v8508
          %v8675 = vpop.permute.xlu0 %8674
          %8678 = vset.pattern.permute.xlu0 0
          %8679 = vperm.xlu0 %8678, %v8509
          %v8680 = vpop.permute.xlu0 %8679
          %8683 = vset.pattern.permute.xlu0 0
          %8684 = vperm.xlu0 %8683, %v8510
          %v8685 = vpop.permute.xlu0 %8684
          %8688 = vset.pattern.permute.xlu0 0
          %8689 = vperm.xlu0 %8688, %v8511
          %v8690 = vpop.permute.xlu0 %8689
          %8693 = vset.pattern.permute.xlu0 0
          %8694 = vperm.xlu0 %8693, %v8512
          %v8695 = vpop.permute.xlu0 %8694
          %8698 = vset.pattern.permute.xlu0 0
          %8699 = vperm.xlu0 %8698, %v8513
          %v8700 = vpop.permute.xlu0 %8699
          %8703 = vset.pattern.permute.xlu0 0
          %8704 = vperm.xlu0 %8703, %v8514
          %v8705 = vpop.permute.xlu0 %8704
          %v8707 = vmul.f32 %v8515, %v8550
          %v8708 = vmul.f32 %v8516, %v8555
          %v8709 = vmul.f32 %v8517, %v8560
          %v8710 = vmul.f32 %v8518, %v8565
          %v8711 = vmul.f32 %v8519, %v8570
          %v8712 = vmul.f32 %v8520, %v8575
          %v8713 = vmul.f32 %v8521, %v8580
          %v8714 = vmul.f32 %v8522, %v8585
          %v8715 = vmul.f32 %v8523, %v8590
          %v8716 = vmul.f32 %v8524, %v8595
          %v8717 = vmul.f32 %v8525, %v8600
          %v8718 = vmul.f32 %v8526, %v8605
          %v8719 = vmul.f32 %v8527, %v8610
          %v8720 = vmul.f32 %v8528, %v8615
          %v8721 = vmul.f32 %v8529, %v8620
          %v8722 = vmul.f32 %v8530, %v8625
          %v8723 = vmul.f32 %v8531, %v8630
          %v8724 = vmul.f32 %v8532, %v8635
          %v8725 = vmul.f32 %v8533, %v8640
          %v8726 = vmul.f32 %v8534, %v8645
          %v8727 = vmul.f32 %v8535, %v8650
          %v8728 = vmul.f32 %v8536, %v8655
          %v8729 = vmul.f32 %v8537, %v8660
          %v8730 = vmul.f32 %v8538, %v8665
          %v8731 = vmul.f32 %v8539, %v8670
          %v8732 = vmul.f32 %v8540, %v8675
          %v8733 = vmul.f32 %v8541, %v8680
          %v8734 = vmul.f32 %v8542, %v8685
          %v8735 = vmul.f32 %v8543, %v8690
          %v8736 = vmul.f32 %v8544, %v8695
          %v8737 = vmul.f32 %v8545, %v8700
          %v8738 = vmul.f32 %v8546, %v8705
          %v8739 = vld [vmem:[%s5639] sm:$0xff]
          %v8740 = vld [vmem:[%s5639 + $0x8] sm:$0xff]
          %v8741 = vld [vmem:[%s5639 + $0x10] sm:$0xff]
          %v8742 = vld [vmem:[%s5639 + $0x18] sm:$0xff]
          %v8743 = vld [vmem:[%s5639 + $0x20] sm:$0xff]
          %v8744 = vld [vmem:[%s5639 + $0x28] sm:$0xff]
          %v8745 = vld [vmem:[%s5639 + $0x30] sm:$0xff]
          %v8746 = vld [vmem:[%s5639 + $0x38] sm:$0xff]
          %v8747 = vld [vmem:[%s5639 + $0x40] sm:$0xff]
          %v8748 = vld [vmem:[%s5639 + $0x48] sm:$0xff]
          %v8749 = vld [vmem:[%s5639 + $0x50] sm:$0xff]
          %v8750 = vld [vmem:[%s5639 + $0x58] sm:$0xff]
          %v8751 = vld [vmem:[%s5639 + $0x60] sm:$0xff]
          %v8752 = vld [vmem:[%s5639 + $0x68] sm:$0xff]
          %v8753 = vld [vmem:[%s5639 + $0x70] sm:$0xff]
          %v8754 = vld [vmem:[%s5639 + $0x78] sm:$0xff]
          %v8755 = vld [vmem:[%s5639 + $0x80] sm:$0xff]
          %v8756 = vld [vmem:[%s5639 + $0x88] sm:$0xff]
          %v8757 = vld [vmem:[%s5639 + $0x90] sm:$0xff]
          %v8758 = vld [vmem:[%s5639 + $0x98] sm:$0xff]
          %v8759 = vld [vmem:[%s5639 + $0xa0] sm:$0xff]
          %v8760 = vld [vmem:[%s5639 + $0xa8] sm:$0xff]
          %v8761 = vld [vmem:[%s5639 + $0xb0] sm:$0xff]
          %v8762 = vld [vmem:[%s5639 + $0xb8] sm:$0xff]
          %v8763 = vld [vmem:[%s5639 + $0xc0] sm:$0xff]
          %v8764 = vld [vmem:[%s5639 + $0xc8] sm:$0xff]
          %v8765 = vld [vmem:[%s5639 + $0xd0] sm:$0xff]
          %v8766 = vld [vmem:[%s5639 + $0xd8] sm:$0xff]
          %v8767 = vld [vmem:[%s5639 + $0xe0] sm:$0xff]
          %v8768 = vld [vmem:[%s5639 + $0xe8] sm:$0xff]
          %v8769 = vld [vmem:[%s5639 + $0xf0] sm:$0xff]
          %v8770 = vld [vmem:[%s5639 + $0xf8] sm:$0xff]
          %v8771 = vrcp.pop %v8739
          %v8772 = vrcp.pop %v8740
          %v8773 = vrcp.pop %v8741
          %v8774 = vrcp.pop %v8742
          %v8775 = vrcp.pop %v8743
          %v8776 = vrcp.pop %v8744
          %v8777 = vrcp.pop %v8745
          %v8778 = vrcp.pop %v8746
          %v8779 = vrcp.pop %v8747
          %v8780 = vrcp.pop %v8748
          %v8781 = vrcp.pop %v8749
          %v8782 = vrcp.pop %v8750
          %v8783 = vrcp.pop %v8751
          %v8784 = vrcp.pop %v8752
          %v8785 = vrcp.pop %v8753
          %v8786 = vrcp.pop %v8754
          %v8787 = vrcp.pop %v8755
          %v8788 = vrcp.pop %v8756
          %v8789 = vrcp.pop %v8757
          %v8790 = vrcp.pop %v8758
          %v8791 = vrcp.pop %v8759
          %v8792 = vrcp.pop %v8760
          %v8793 = vrcp.pop %v8761
          %v8794 = vrcp.pop %v8762
          %v8795 = vrcp.pop %v8763
          %v8796 = vrcp.pop %v8764
          %v8797 = vrcp.pop %v8765
          %v8798 = vrcp.pop %v8766
          %v8799 = vrcp.pop %v8767
          %v8800 = vrcp.pop %v8768
          %v8801 = vrcp.pop %v8769
          %v8802 = vrcp.pop %v8770
          %v8803 = vld [vmem:[%s6105] sm:$0xff]
          %v8804 = vld [vmem:[%s6105 + $0x8] sm:$0xff]
          %v8805 = vld [vmem:[%s6105 + $0x10] sm:$0xff]
          %v8806 = vld [vmem:[%s6105 + $0x18] sm:$0xff]
          %v8807 = vld [vmem:[%s6105 + $0x20] sm:$0xff]
          %v8808 = vld [vmem:[%s6105 + $0x28] sm:$0xff]
          %v8809 = vld [vmem:[%s6105 + $0x30] sm:$0xff]
          %v8810 = vld [vmem:[%s6105 + $0x38] sm:$0xff]
          %v8811 = vld [vmem:[%s6105 + $0x40] sm:$0xff]
          %v8812 = vld [vmem:[%s6105 + $0x48] sm:$0xff]
          %v8813 = vld [vmem:[%s6105 + $0x50] sm:$0xff]
          %v8814 = vld [vmem:[%s6105 + $0x58] sm:$0xff]
          %v8815 = vld [vmem:[%s6105 + $0x60] sm:$0xff]
          %v8816 = vld [vmem:[%s6105 + $0x68] sm:$0xff]
          %v8817 = vld [vmem:[%s6105 + $0x70] sm:$0xff]
          %v8818 = vld [vmem:[%s6105 + $0x78] sm:$0xff]
          %v8819 = vld [vmem:[%s6105 + $0x80] sm:$0xff]
          %v8820 = vld [vmem:[%s6105 + $0x88] sm:$0xff]
          %v8821 = vld [vmem:[%s6105 + $0x90] sm:$0xff]
          %v8822 = vld [vmem:[%s6105 + $0x98] sm:$0xff]
          %v8823 = vld [vmem:[%s6105 + $0xa0] sm:$0xff]
          %v8824 = vld [vmem:[%s6105 + $0xa8] sm:$0xff]
          %v8825 = vld [vmem:[%s6105 + $0xb0] sm:$0xff]
          %v8826 = vld [vmem:[%s6105 + $0xb8] sm:$0xff]
          %v8827 = vld [vmem:[%s6105 + $0xc0] sm:$0xff]
          %v8828 = vld [vmem:[%s6105 + $0xc8] sm:$0xff]
          %v8829 = vld [vmem:[%s6105 + $0xd0] sm:$0xff]
          %v8830 = vld [vmem:[%s6105 + $0xd8] sm:$0xff]
          %v8831 = vld [vmem:[%s6105 + $0xe0] sm:$0xff]
          %v8832 = vld [vmem:[%s6105 + $0xe8] sm:$0xff]
          %v8833 = vld [vmem:[%s6105 + $0xf0] sm:$0xff]
          %v8834 = vld [vmem:[%s6105 + $0xf8] sm:$0xff]
          %8836 = vset.pattern.permute.xlu0 0
          %8837 = vperm.xlu0 %8836, %v8771
          %v8838 = vpop.permute.xlu0 %8837
          %8841 = vset.pattern.permute.xlu0 0
          %8842 = vperm.xlu0 %8841, %v8772
          %v8843 = vpop.permute.xlu0 %8842
          %8846 = vset.pattern.permute.xlu0 0
          %8847 = vperm.xlu0 %8846, %v8773
          %v8848 = vpop.permute.xlu0 %8847
          %8851 = vset.pattern.permute.xlu0 0
          %8852 = vperm.xlu0 %8851, %v8774
          %v8853 = vpop.permute.xlu0 %8852
          %8856 = vset.pattern.permute.xlu0 0
          %8857 = vperm.xlu0 %8856, %v8775
          %v8858 = vpop.permute.xlu0 %8857
          %8861 = vset.pattern.permute.xlu0 0
          %8862 = vperm.xlu0 %8861, %v8776
          %v8863 = vpop.permute.xlu0 %8862
          %8866 = vset.pattern.permute.xlu0 0
          %8867 = vperm.xlu0 %8866, %v8777
          %v8868 = vpop.permute.xlu0 %8867
          %8871 = vset.pattern.permute.xlu0 0
          %8872 = vperm.xlu0 %8871, %v8778
          %v8873 = vpop.permute.xlu0 %8872
          %8876 = vset.pattern.permute.xlu0 0
          %8877 = vperm.xlu0 %8876, %v8779
          %v8878 = vpop.permute.xlu0 %8877
          %8881 = vset.pattern.permute.xlu0 0
          %8882 = vperm.xlu0 %8881, %v8780
          %v8883 = vpop.permute.xlu0 %8882
          %8886 = vset.pattern.permute.xlu0 0
          %8887 = vperm.xlu0 %8886, %v8781
          %v8888 = vpop.permute.xlu0 %8887
          %8891 = vset.pattern.permute.xlu0 0
          %8892 = vperm.xlu0 %8891, %v8782
          %v8893 = vpop.permute.xlu0 %8892
          %8896 = vset.pattern.permute.xlu0 0
          %8897 = vperm.xlu0 %8896, %v8783
          %v8898 = vpop.permute.xlu0 %8897
          %8901 = vset.pattern.permute.xlu0 0
          %8902 = vperm.xlu0 %8901, %v8784
          %v8903 = vpop.permute.xlu0 %8902
          %8906 = vset.pattern.permute.xlu0 0
          %8907 = vperm.xlu0 %8906, %v8785
          %v8908 = vpop.permute.xlu0 %8907
          %8911 = vset.pattern.permute.xlu0 0
          %8912 = vperm.xlu0 %8911, %v8786
          %v8913 = vpop.permute.xlu0 %8912
          %8916 = vset.pattern.permute.xlu0 0
          %8917 = vperm.xlu0 %8916, %v8787
          %v8918 = vpop.permute.xlu0 %8917
          %8921 = vset.pattern.permute.xlu0 0
          %8922 = vperm.xlu0 %8921, %v8788
          %v8923 = vpop.permute.xlu0 %8922
          %8926 = vset.pattern.permute.xlu0 0
          %8927 = vperm.xlu0 %8926, %v8789
          %v8928 = vpop.permute.xlu0 %8927
          %8931 = vset.pattern.permute.xlu0 0
          %8932 = vperm.xlu0 %8931, %v8790
          %v8933 = vpop.permute.xlu0 %8932
          %8936 = vset.pattern.permute.xlu0 0
          %8937 = vperm.xlu0 %8936, %v8791
          %v8938 = vpop.permute.xlu0 %8937
          %8941 = vset.pattern.permute.xlu0 0
          %8942 = vperm.xlu0 %8941, %v8792
          %v8943 = vpop.permute.xlu0 %8942
          %8946 = vset.pattern.permute.xlu0 0
          %8947 = vperm.xlu0 %8946, %v8793
          %v8948 = vpop.permute.xlu0 %8947
          %8951 = vset.pattern.permute.xlu0 0
          %8952 = vperm.xlu0 %8951, %v8794
          %v8953 = vpop.permute.xlu0 %8952
          %8956 = vset.pattern.permute.xlu0 0
          %8957 = vperm.xlu0 %8956, %v8795
          %v8958 = vpop.permute.xlu0 %8957
          %8961 = vset.pattern.permute.xlu0 0
          %8962 = vperm.xlu0 %8961, %v8796
          %v8963 = vpop.permute.xlu0 %8962
          %8966 = vset.pattern.permute.xlu0 0
          %8967 = vperm.xlu0 %8966, %v8797
          %v8968 = vpop.permute.xlu0 %8967
          %8971 = vset.pattern.permute.xlu0 0
          %8972 = vperm.xlu0 %8971, %v8798
          %v8973 = vpop.permute.xlu0 %8972
          %8976 = vset.pattern.permute.xlu0 0
          %8977 = vperm.xlu0 %8976, %v8799
          %v8978 = vpop.permute.xlu0 %8977
          %8981 = vset.pattern.permute.xlu0 0
          %8982 = vperm.xlu0 %8981, %v8800
          %v8983 = vpop.permute.xlu0 %8982
          %8986 = vset.pattern.permute.xlu0 0
          %8987 = vperm.xlu0 %8986, %v8801
          %v8988 = vpop.permute.xlu0 %8987
          %8991 = vset.pattern.permute.xlu0 0
          %8992 = vperm.xlu0 %8991, %v8802
          %v8993 = vpop.permute.xlu0 %8992
          %v8995 = vmul.f32 %v8803, %v8838
          %v8996 = vmul.f32 %v8804, %v8843
          %v8997 = vmul.f32 %v8805, %v8848
          %v8998 = vmul.f32 %v8806, %v8853
          %v8999 = vmul.f32 %v8807, %v8858
          %v9000 = vmul.f32 %v8808, %v8863
          %v9001 = vmul.f32 %v8809, %v8868
          %v9002 = vmul.f32 %v8810, %v8873
          %v9003 = vmul.f32 %v8811, %v8878
          %v9004 = vmul.f32 %v8812, %v8883
          %v9005 = vmul.f32 %v8813, %v8888
          %v9006 = vmul.f32 %v8814, %v8893
          %v9007 = vmul.f32 %v8815, %v8898
          %v9008 = vmul.f32 %v8816, %v8903
          %v9009 = vmul.f32 %v8817, %v8908
          %v9010 = vmul.f32 %v8818, %v8913
          %v9011 = vmul.f32 %v8819, %v8918
          %v9012 = vmul.f32 %v8820, %v8923
          %v9013 = vmul.f32 %v8821, %v8928
          %v9014 = vmul.f32 %v8822, %v8933
          %v9015 = vmul.f32 %v8823, %v8938
          %v9016 = vmul.f32 %v8824, %v8943
          %v9017 = vmul.f32 %v8825, %v8948
          %v9018 = vmul.f32 %v8826, %v8953
          %v9019 = vmul.f32 %v8827, %v8958
          %v9020 = vmul.f32 %v8828, %v8963
          %v9021 = vmul.f32 %v8829, %v8968
          %v9022 = vmul.f32 %v8830, %v8973
          %v9023 = vmul.f32 %v8831, %v8978
          %v9024 = vmul.f32 %v8832, %v8983
          %v9025 = vmul.f32 %v8833, %v8988
          %v9026 = vmul.f32 %v8834, %v8993
          %v9027 = vld [vmem:[%s7373] sm:$0xff]
          %v9028 = vld [vmem:[%s7373 + $0x8] sm:$0xff]
          %v9029 = vld [vmem:[%s7373 + $0x10] sm:$0xff]
          %v9030 = vld [vmem:[%s7373 + $0x18] sm:$0xff]
          %v9031 = vld [vmem:[%s7373 + $0x20] sm:$0xff]
          %v9032 = vld [vmem:[%s7373 + $0x28] sm:$0xff]
          %v9033 = vld [vmem:[%s7373 + $0x30] sm:$0xff]
          %v9034 = vld [vmem:[%s7373 + $0x38] sm:$0xff]
          %v9035 = vld [vmem:[%s7373 + $0x40] sm:$0xff]
          %v9036 = vld [vmem:[%s7373 + $0x48] sm:$0xff]
          %v9037 = vld [vmem:[%s7373 + $0x50] sm:$0xff]
          %v9038 = vld [vmem:[%s7373 + $0x58] sm:$0xff]
          %v9039 = vld [vmem:[%s7373 + $0x60] sm:$0xff]
          %v9040 = vld [vmem:[%s7373 + $0x68] sm:$0xff]
          %v9041 = vld [vmem:[%s7373 + $0x70] sm:$0xff]
          %v9042 = vld [vmem:[%s7373 + $0x78] sm:$0xff]
          %v9043 = vld [vmem:[%s7373 + $0x80] sm:$0xff]
          %v9044 = vld [vmem:[%s7373 + $0x88] sm:$0xff]
          %v9045 = vld [vmem:[%s7373 + $0x90] sm:$0xff]
          %v9046 = vld [vmem:[%s7373 + $0x98] sm:$0xff]
          %v9047 = vld [vmem:[%s7373 + $0xa0] sm:$0xff]
          %v9048 = vld [vmem:[%s7373 + $0xa8] sm:$0xff]
          %v9049 = vld [vmem:[%s7373 + $0xb0] sm:$0xff]
          %v9050 = vld [vmem:[%s7373 + $0xb8] sm:$0xff]
          %v9051 = vld [vmem:[%s7373 + $0xc0] sm:$0xff]
          %v9052 = vld [vmem:[%s7373 + $0xc8] sm:$0xff]
          %v9053 = vld [vmem:[%s7373 + $0xd0] sm:$0xff]
          %v9054 = vld [vmem:[%s7373 + $0xd8] sm:$0xff]
          %v9055 = vld [vmem:[%s7373 + $0xe0] sm:$0xff]
          %v9056 = vld [vmem:[%s7373 + $0xe8] sm:$0xff]
          %v9057 = vld [vmem:[%s7373 + $0xf0] sm:$0xff]
          %v9058 = vld [vmem:[%s7373 + $0xf8] sm:$0xff]
          %v9059 = vrcp.pop %v9027
          %v9060 = vrcp.pop %v9028
          %v9061 = vrcp.pop %v9029
          %v9062 = vrcp.pop %v9030
          %v9063 = vrcp.pop %v9031
          %v9064 = vrcp.pop %v9032
          %v9065 = vrcp.pop %v9033
          %v9066 = vrcp.pop %v9034
          %v9067 = vrcp.pop %v9035
          %v9068 = vrcp.pop %v9036
          %v9069 = vrcp.pop %v9037
          %v9070 = vrcp.pop %v9038
          %v9071 = vrcp.pop %v9039
          %v9072 = vrcp.pop %v9040
          %v9073 = vrcp.pop %v9041
          %v9074 = vrcp.pop %v9042
          %v9075 = vrcp.pop %v9043
          %v9076 = vrcp.pop %v9044
          %v9077 = vrcp.pop %v9045
          %v9078 = vrcp.pop %v9046
          %v9079 = vrcp.pop %v9047
          %v9080 = vrcp.pop %v9048
          %v9081 = vrcp.pop %v9049
          %v9082 = vrcp.pop %v9050
          %v9083 = vrcp.pop %v9051
          %v9084 = vrcp.pop %v9052
          %v9085 = vrcp.pop %v9053
          %v9086 = vrcp.pop %v9054
          %v9087 = vrcp.pop %v9055
          %v9088 = vrcp.pop %v9056
          %v9089 = vrcp.pop %v9057
          %v9090 = vrcp.pop %v9058
          %v9091 = vld [vmem:[%s7839] sm:$0xff]
          %v9092 = vld [vmem:[%s7839 + $0x8] sm:$0xff]
          %v9093 = vld [vmem:[%s7839 + $0x10] sm:$0xff]
          %v9094 = vld [vmem:[%s7839 + $0x18] sm:$0xff]
          %v9095 = vld [vmem:[%s7839 + $0x20] sm:$0xff]
          %v9096 = vld [vmem:[%s7839 + $0x28] sm:$0xff]
          %v9097 = vld [vmem:[%s7839 + $0x30] sm:$0xff]
          %v9098 = vld [vmem:[%s7839 + $0x38] sm:$0xff]
          %v9099 = vld [vmem:[%s7839 + $0x40] sm:$0xff]
          %v9100 = vld [vmem:[%s7839 + $0x48] sm:$0xff]
          %v9101 = vld [vmem:[%s7839 + $0x50] sm:$0xff]
          %v9102 = vld [vmem:[%s7839 + $0x58] sm:$0xff]
          %v9103 = vld [vmem:[%s7839 + $0x60] sm:$0xff]
          %v9104 = vld [vmem:[%s7839 + $0x68] sm:$0xff]
          %v9105 = vld [vmem:[%s7839 + $0x70] sm:$0xff]
          %v9106 = vld [vmem:[%s7839 + $0x78] sm:$0xff]
          %v9107 = vld [vmem:[%s7839 + $0x80] sm:$0xff]
          %v9108 = vld [vmem:[%s7839 + $0x88] sm:$0xff]
          %v9109 = vld [vmem:[%s7839 + $0x90] sm:$0xff]
          %v9110 = vld [vmem:[%s7839 + $0x98] sm:$0xff]
          %v9111 = vld [vmem:[%s7839 + $0xa0] sm:$0xff]
          %v9112 = vld [vmem:[%s7839 + $0xa8] sm:$0xff]
          %v9113 = vld [vmem:[%s7839 + $0xb0] sm:$0xff]
          %v9114 = vld [vmem:[%s7839 + $0xb8] sm:$0xff]
          %v9115 = vld [vmem:[%s7839 + $0xc0] sm:$0xff]
          %v9116 = vld [vmem:[%s7839 + $0xc8] sm:$0xff]
          %v9117 = vld [vmem:[%s7839 + $0xd0] sm:$0xff]
          %v9118 = vld [vmem:[%s7839 + $0xd8] sm:$0xff]
          %v9119 = vld [vmem:[%s7839 + $0xe0] sm:$0xff]
          %v9120 = vld [vmem:[%s7839 + $0xe8] sm:$0xff]
          %v9121 = vld [vmem:[%s7839 + $0xf0] sm:$0xff]
          %v9122 = vld [vmem:[%s7839 + $0xf8] sm:$0xff]
          %9124 = vset.pattern.permute.xlu0 0
          %9125 = vperm.xlu0 %9124, %v9059
          %v9126 = vpop.permute.xlu0 %9125
          %9129 = vset.pattern.permute.xlu0 0
          %9130 = vperm.xlu0 %9129, %v9060
          %v9131 = vpop.permute.xlu0 %9130
          %9134 = vset.pattern.permute.xlu0 0
          %9135 = vperm.xlu0 %9134, %v9061
          %v9136 = vpop.permute.xlu0 %9135
          %9139 = vset.pattern.permute.xlu0 0
          %9140 = vperm.xlu0 %9139, %v9062
          %v9141 = vpop.permute.xlu0 %9140
          %9144 = vset.pattern.permute.xlu0 0
          %9145 = vperm.xlu0 %9144, %v9063
          %v9146 = vpop.permute.xlu0 %9145
          %9149 = vset.pattern.permute.xlu0 0
          %9150 = vperm.xlu0 %9149, %v9064
          %v9151 = vpop.permute.xlu0 %9150
          %9154 = vset.pattern.permute.xlu0 0
          %9155 = vperm.xlu0 %9154, %v9065
          %v9156 = vpop.permute.xlu0 %9155
          %9159 = vset.pattern.permute.xlu0 0
          %9160 = vperm.xlu0 %9159, %v9066
          %v9161 = vpop.permute.xlu0 %9160
          %9164 = vset.pattern.permute.xlu0 0
          %9165 = vperm.xlu0 %9164, %v9067
          %v9166 = vpop.permute.xlu0 %9165
          %9169 = vset.pattern.permute.xlu0 0
          %9170 = vperm.xlu0 %9169, %v9068
          %v9171 = vpop.permute.xlu0 %9170
          %9174 = vset.pattern.permute.xlu0 0
          %9175 = vperm.xlu0 %9174, %v9069
          %v9176 = vpop.permute.xlu0 %9175
          %9179 = vset.pattern.permute.xlu0 0
          %9180 = vperm.xlu0 %9179, %v9070
          %v9181 = vpop.permute.xlu0 %9180
          %9184 = vset.pattern.permute.xlu0 0
          %9185 = vperm.xlu0 %9184, %v9071
          %v9186 = vpop.permute.xlu0 %9185
          %9189 = vset.pattern.permute.xlu0 0
          %9190 = vperm.xlu0 %9189, %v9072
          %v9191 = vpop.permute.xlu0 %9190
          %9194 = vset.pattern.permute.xlu0 0
          %9195 = vperm.xlu0 %9194, %v9073
          %v9196 = vpop.permute.xlu0 %9195
          %9199 = vset.pattern.permute.xlu0 0
          %9200 = vperm.xlu0 %9199, %v9074
          %v9201 = vpop.permute.xlu0 %9200
          %9204 = vset.pattern.permute.xlu0 0
          %9205 = vperm.xlu0 %9204, %v9075
          %v9206 = vpop.permute.xlu0 %9205
          %9209 = vset.pattern.permute.xlu0 0
          %9210 = vperm.xlu0 %9209, %v9076
          %v9211 = vpop.permute.xlu0 %9210
          %9214 = vset.pattern.permute.xlu0 0
          %9215 = vperm.xlu0 %9214, %v9077
          %v9216 = vpop.permute.xlu0 %9215
          %9219 = vset.pattern.permute.xlu0 0
          %9220 = vperm.xlu0 %9219, %v9078
          %v9221 = vpop.permute.xlu0 %9220
          %9224 = vset.pattern.permute.xlu0 0
          %9225 = vperm.xlu0 %9224, %v9079
          %v9226 = vpop.permute.xlu0 %9225
          %9229 = vset.pattern.permute.xlu0 0
          %9230 = vperm.xlu0 %9229, %v9080
          %v9231 = vpop.permute.xlu0 %9230
          %9234 = vset.pattern.permute.xlu0 0
          %9235 = vperm.xlu0 %9234, %v9081
          %v9236 = vpop.permute.xlu0 %9235
          %9239 = vset.pattern.permute.xlu0 0
          %9240 = vperm.xlu0 %9239, %v9082
          %v9241 = vpop.permute.xlu0 %9240
          %9244 = vset.pattern.permute.xlu0 0
          %9245 = vperm.xlu0 %9244, %v9083
          %v9246 = vpop.permute.xlu0 %9245
          %9249 = vset.pattern.permute.xlu0 0
          %9250 = vperm.xlu0 %9249, %v9084
          %v9251 = vpop.permute.xlu0 %9250
          %9254 = vset.pattern.permute.xlu0 0
          %9255 = vperm.xlu0 %9254, %v9085
          %v9256 = vpop.permute.xlu0 %9255
          %9259 = vset.pattern.permute.xlu0 0
          %9260 = vperm.xlu0 %9259, %v9086
          %v9261 = vpop.permute.xlu0 %9260
          %9264 = vset.pattern.permute.xlu0 0
          %9265 = vperm.xlu0 %9264, %v9087
          %v9266 = vpop.permute.xlu0 %9265
          %9269 = vset.pattern.permute.xlu0 0
          %9270 = vperm.xlu0 %9269, %v9088
          %v9271 = vpop.permute.xlu0 %9270
          %9274 = vset.pattern.permute.xlu0 0
          %9275 = vperm.xlu0 %9274, %v9089
          %v9276 = vpop.permute.xlu0 %9275
          %9279 = vset.pattern.permute.xlu0 0
          %9280 = vperm.xlu0 %9279, %v9090
          %v9281 = vpop.permute.xlu0 %9280
          %v9283 = vmul.f32 %v9091, %v9126
          %v9284 = vmul.f32 %v9092, %v9131
          %v9285 = vmul.f32 %v9093, %v9136
          %v9286 = vmul.f32 %v9094, %v9141
          %v9287 = vmul.f32 %v9095, %v9146
          %v9288 = vmul.f32 %v9096, %v9151
          %v9289 = vmul.f32 %v9097, %v9156
          %v9290 = vmul.f32 %v9098, %v9161
          %v9291 = vmul.f32 %v9099, %v9166
          %v9292 = vmul.f32 %v9100, %v9171
          %v9293 = vmul.f32 %v9101, %v9176
          %v9294 = vmul.f32 %v9102, %v9181
          %v9295 = vmul.f32 %v9103, %v9186
          %v9296 = vmul.f32 %v9104, %v9191
          %v9297 = vmul.f32 %v9105, %v9196
          %v9298 = vmul.f32 %v9106, %v9201
          %v9299 = vmul.f32 %v9107, %v9206
          %v9300 = vmul.f32 %v9108, %v9211
          %v9301 = vmul.f32 %v9109, %v9216
          %v9302 = vmul.f32 %v9110, %v9221
          %v9303 = vmul.f32 %v9111, %v9226
          %v9304 = vmul.f32 %v9112, %v9231
          %v9305 = vmul.f32 %v9113, %v9236
          %v9306 = vmul.f32 %v9114, %v9241
          %v9307 = vmul.f32 %v9115, %v9246
          %v9308 = vmul.f32 %v9116, %v9251
          %v9309 = vmul.f32 %v9117, %v9256
          %v9310 = vmul.f32 %v9118, %v9261
          %v9311 = vmul.f32 %v9119, %v9266
          %v9312 = vmul.f32 %v9120, %v9271
          %v9313 = vmul.f32 %v9121, %v9276
          %v9314 = vmul.f32 %v9122, %v9281
          %9347 = vrot.lane.b32.xlu0 %v8707, 32
          %v9348 = vpop.permute.xlu0 %9347
          %9349 = vrot.lane.b32.xlu0 %v8708, 32
          %v9350 = vpop.permute.xlu0 %9349
          %9351 = vrot.lane.b32.xlu0 %v8709, 32
          %v9352 = vpop.permute.xlu0 %9351
          %9353 = vrot.lane.b32.xlu0 %v8710, 32
          %v9354 = vpop.permute.xlu0 %9353
          %9355 = vrot.lane.b32.xlu0 %v8711, 32
          %v9356 = vpop.permute.xlu0 %9355
          %9357 = vrot.lane.b32.xlu0 %v8712, 32
          %v9358 = vpop.permute.xlu0 %9357
          %9359 = vrot.lane.b32.xlu0 %v8713, 32
          %v9360 = vpop.permute.xlu0 %9359
          %9361 = vrot.lane.b32.xlu0 %v8714, 32
          %v9362 = vpop.permute.xlu0 %9361
          %9363 = vrot.lane.b32.xlu0 %v8715, 32
          %v9364 = vpop.permute.xlu0 %9363
          %9365 = vrot.lane.b32.xlu0 %v8716, 32
          %v9366 = vpop.permute.xlu0 %9365
          %9367 = vrot.lane.b32.xlu0 %v8717, 32
          %v9368 = vpop.permute.xlu0 %9367
          %9369 = vrot.lane.b32.xlu0 %v8718, 32
          %v9370 = vpop.permute.xlu0 %9369
          %9371 = vrot.lane.b32.xlu0 %v8719, 32
          %v9372 = vpop.permute.xlu0 %9371
          %9373 = vrot.lane.b32.xlu0 %v8720, 32
          %v9374 = vpop.permute.xlu0 %9373
          %9375 = vrot.lane.b32.xlu0 %v8721, 32
          %v9376 = vpop.permute.xlu0 %9375
          %9377 = vrot.lane.b32.xlu0 %v8722, 32
          %v9378 = vpop.permute.xlu0 %9377
          %9379 = vrot.lane.b32.xlu0 %v8723, 32
          %v9380 = vpop.permute.xlu0 %9379
          %9381 = vrot.lane.b32.xlu0 %v8724, 32
          %v9382 = vpop.permute.xlu0 %9381
          %9383 = vrot.lane.b32.xlu0 %v8725, 32
          %v9384 = vpop.permute.xlu0 %9383
          %9385 = vrot.lane.b32.xlu0 %v8726, 32
          %v9386 = vpop.permute.xlu0 %9385
          %9387 = vrot.lane.b32.xlu0 %v8727, 32
          %v9388 = vpop.permute.xlu0 %9387
          %9389 = vrot.lane.b32.xlu0 %v8728, 32
          %v9390 = vpop.permute.xlu0 %9389
          %9391 = vrot.lane.b32.xlu0 %v8729, 32
          %v9392 = vpop.permute.xlu0 %9391
          %9393 = vrot.lane.b32.xlu0 %v8730, 32
          %v9394 = vpop.permute.xlu0 %9393
          %9395 = vrot.lane.b32.xlu0 %v8731, 32
          %v9396 = vpop.permute.xlu0 %9395
          %9397 = vrot.lane.b32.xlu0 %v8732, 32
          %v9398 = vpop.permute.xlu0 %9397
          %9399 = vrot.lane.b32.xlu0 %v8733, 32
          %v9400 = vpop.permute.xlu0 %9399
          %9401 = vrot.lane.b32.xlu0 %v8734, 32
          %v9402 = vpop.permute.xlu0 %9401
          %9403 = vrot.lane.b32.xlu0 %v8735, 32
          %v9404 = vpop.permute.xlu0 %9403
          %9405 = vrot.lane.b32.xlu0 %v8736, 32
          %v9406 = vpop.permute.xlu0 %9405
          %9407 = vrot.lane.b32.xlu0 %v8737, 32
          %v9408 = vpop.permute.xlu0 %9407
          %9409 = vrot.lane.b32.xlu0 %v8738, 32
          %v9410 = vpop.permute.xlu0 %9409
          %9475 = vrot.lane.b32.xlu0 %v8995, 64
          %v9476 = vpop.permute.xlu0 %9475
          %9477 = vrot.lane.b32.xlu0 %v8996, 64
          %v9478 = vpop.permute.xlu0 %9477
          %9479 = vrot.lane.b32.xlu0 %v8997, 64
          %v9480 = vpop.permute.xlu0 %9479
          %9481 = vrot.lane.b32.xlu0 %v8998, 64
          %v9482 = vpop.permute.xlu0 %9481
          %9483 = vrot.lane.b32.xlu0 %v8999, 64
          %v9484 = vpop.permute.xlu0 %9483
          %9485 = vrot.lane.b32.xlu0 %v9000, 64
          %v9486 = vpop.permute.xlu0 %9485
          %9487 = vrot.lane.b32.xlu0 %v9001, 64
          %v9488 = vpop.permute.xlu0 %9487
          %9489 = vrot.lane.b32.xlu0 %v9002, 64
          %v9490 = vpop.permute.xlu0 %9489
          %9491 = vrot.lane.b32.xlu0 %v9003, 64
          %v9492 = vpop.permute.xlu0 %9491
          %9493 = vrot.lane.b32.xlu0 %v9004, 64
          %v9494 = vpop.permute.xlu0 %9493
          %9495 = vrot.lane.b32.xlu0 %v9005, 64
          %v9496 = vpop.permute.xlu0 %9495
          %9497 = vrot.lane.b32.xlu0 %v9006, 64
          %v9498 = vpop.permute.xlu0 %9497
          %9499 = vrot.lane.b32.xlu0 %v9007, 64
          %v9500 = vpop.permute.xlu0 %9499
          %9501 = vrot.lane.b32.xlu0 %v9008, 64
          %v9502 = vpop.permute.xlu0 %9501
          %9503 = vrot.lane.b32.xlu0 %v9009, 64
          %v9504 = vpop.permute.xlu0 %9503
          %9505 = vrot.lane.b32.xlu0 %v9010, 64
          %v9506 = vpop.permute.xlu0 %9505
          %9507 = vrot.lane.b32.xlu0 %v9011, 64
          %v9508 = vpop.permute.xlu0 %9507
          %9509 = vrot.lane.b32.xlu0 %v9012, 64
          %v9510 = vpop.permute.xlu0 %9509
          %9511 = vrot.lane.b32.xlu0 %v9013, 64
          %v9512 = vpop.permute.xlu0 %9511
          %9513 = vrot.lane.b32.xlu0 %v9014, 64
          %v9514 = vpop.permute.xlu0 %9513
          %9515 = vrot.lane.b32.xlu0 %v9015, 64
          %v9516 = vpop.permute.xlu0 %9515
          %9517 = vrot.lane.b32.xlu0 %v9016, 64
          %v9518 = vpop.permute.xlu0 %9517
          %9519 = vrot.lane.b32.xlu0 %v9017, 64
          %v9520 = vpop.permute.xlu0 %9519
          %9521 = vrot.lane.b32.xlu0 %v9018, 64
          %v9522 = vpop.permute.xlu0 %9521
          %9523 = vrot.lane.b32.xlu0 %v9019, 64
          %v9524 = vpop.permute.xlu0 %9523
          %9525 = vrot.lane.b32.xlu0 %v9020, 64
          %v9526 = vpop.permute.xlu0 %9525
          %9527 = vrot.lane.b32.xlu0 %v9021, 64
          %v9528 = vpop.permute.xlu0 %9527
          %9529 = vrot.lane.b32.xlu0 %v9022, 64
          %v9530 = vpop.permute.xlu0 %9529
          %9531 = vrot.lane.b32.xlu0 %v9023, 64
          %v9532 = vpop.permute.xlu0 %9531
          %9533 = vrot.lane.b32.xlu0 %v9024, 64
          %v9534 = vpop.permute.xlu0 %9533
          %9535 = vrot.lane.b32.xlu0 %v9025, 64
          %v9536 = vpop.permute.xlu0 %9535
          %9537 = vrot.lane.b32.xlu0 %v9026, 64
          %v9538 = vpop.permute.xlu0 %9537
          %9603 = vrot.lane.b32.xlu0 %v9283, 96
          %v9604 = vpop.permute.xlu0 %9603
          %9605 = vrot.lane.b32.xlu0 %v9284, 96
          %v9606 = vpop.permute.xlu0 %9605
          %9607 = vrot.lane.b32.xlu0 %v9285, 96
          %v9608 = vpop.permute.xlu0 %9607
          %9609 = vrot.lane.b32.xlu0 %v9286, 96
          %v9610 = vpop.permute.xlu0 %9609
          %9611 = vrot.lane.b32.xlu0 %v9287, 96
          %v9612 = vpop.permute.xlu0 %9611
          %9613 = vrot.lane.b32.xlu0 %v9288, 96
          %v9614 = vpop.permute.xlu0 %9613
          %9615 = vrot.lane.b32.xlu0 %v9289, 96
          %v9616 = vpop.permute.xlu0 %9615
          %9617 = vrot.lane.b32.xlu0 %v9290, 96
          %v9618 = vpop.permute.xlu0 %9617
          %9619 = vrot.lane.b32.xlu0 %v9291, 96
          %v9620 = vpop.permute.xlu0 %9619
          %9621 = vrot.lane.b32.xlu0 %v9292, 96
          %v9622 = vpop.permute.xlu0 %9621
          %9623 = vrot.lane.b32.xlu0 %v9293, 96
          %v9624 = vpop.permute.xlu0 %9623
          %9625 = vrot.lane.b32.xlu0 %v9294, 96
          %v9626 = vpop.permute.xlu0 %9625
          %9627 = vrot.lane.b32.xlu0 %v9295, 96
          %v9628 = vpop.permute.xlu0 %9627
          %9629 = vrot.lane.b32.xlu0 %v9296, 96
          %v9630 = vpop.permute.xlu0 %9629
          %9631 = vrot.lane.b32.xlu0 %v9297, 96
          %v9632 = vpop.permute.xlu0 %9631
          %9633 = vrot.lane.b32.xlu0 %v9298, 96
          %v9634 = vpop.permute.xlu0 %9633
          %9635 = vrot.lane.b32.xlu0 %v9299, 96
          %v9636 = vpop.permute.xlu0 %9635
          %9637 = vrot.lane.b32.xlu0 %v9300, 96
          %v9638 = vpop.permute.xlu0 %9637
          %9639 = vrot.lane.b32.xlu0 %v9301, 96
          %v9640 = vpop.permute.xlu0 %9639
          %9641 = vrot.lane.b32.xlu0 %v9302, 96
          %v9642 = vpop.permute.xlu0 %9641
          %9643 = vrot.lane.b32.xlu0 %v9303, 96
          %v9644 = vpop.permute.xlu0 %9643
          %9645 = vrot.lane.b32.xlu0 %v9304, 96
          %v9646 = vpop.permute.xlu0 %9645
          %9647 = vrot.lane.b32.xlu0 %v9305, 96
          %v9648 = vpop.permute.xlu0 %9647
          %9649 = vrot.lane.b32.xlu0 %v9306, 96
          %v9650 = vpop.permute.xlu0 %9649
          %9651 = vrot.lane.b32.xlu0 %v9307, 96
          %v9652 = vpop.permute.xlu0 %9651
          %9653 = vrot.lane.b32.xlu0 %v9308, 96
          %v9654 = vpop.permute.xlu0 %9653
          %9655 = vrot.lane.b32.xlu0 %v9309, 96
          %v9656 = vpop.permute.xlu0 %9655
          %9657 = vrot.lane.b32.xlu0 %v9310, 96
          %v9658 = vpop.permute.xlu0 %9657
          %9659 = vrot.lane.b32.xlu0 %v9311, 96
          %v9660 = vpop.permute.xlu0 %9659
          %9661 = vrot.lane.b32.xlu0 %v9312, 96
          %v9662 = vpop.permute.xlu0 %9661
          %9663 = vrot.lane.b32.xlu0 %v9313, 96
          %v9664 = vpop.permute.xlu0 %9663
          %9665 = vrot.lane.b32.xlu0 %v9314, 96
          %v9666 = vpop.permute.xlu0 %9665
          %v9699 = vsel %vm1226, %v8419, %v9348
          %v9700 = vsel %vm1226, %v8420, %v9350
          %v9701 = vsel %vm1226, %v8421, %v9352
          %v9702 = vsel %vm1226, %v8422, %v9354
          %v9703 = vsel %vm1226, %v8423, %v9356
          %v9704 = vsel %vm1226, %v8424, %v9358
          %v9705 = vsel %vm1226, %v8425, %v9360
          %v9706 = vsel %vm1226, %v8426, %v9362
          %v9707 = vsel %vm1226, %v8427, %v9364
          %v9708 = vsel %vm1226, %v8428, %v9366
          %v9709 = vsel %vm1226, %v8429, %v9368
          %v9710 = vsel %vm1226, %v8430, %v9370
          %v9711 = vsel %vm1226, %v8431, %v9372
          %v9712 = vsel %vm1226, %v8432, %v9374
          %v9713 = vsel %vm1226, %v8433, %v9376
          %v9714 = vsel %vm1226, %v8434, %v9378
          %v9715 = vsel %vm1226, %v8435, %v9380
          %v9716 = vsel %vm1226, %v8436, %v9382
          %v9717 = vsel %vm1226, %v8437, %v9384
          %v9718 = vsel %vm1226, %v8438, %v9386
          %v9719 = vsel %vm1226, %v8439, %v9388
          %v9720 = vsel %vm1226, %v8440, %v9390
          %v9721 = vsel %vm1226, %v8441, %v9392
          %v9722 = vsel %vm1226, %v8442, %v9394
          %v9723 = vsel %vm1226, %v8443, %v9396
          %v9724 = vsel %vm1226, %v8444, %v9398
          %v9725 = vsel %vm1226, %v8445, %v9400
          %v9726 = vsel %vm1226, %v8446, %v9402
          %v9727 = vsel %vm1226, %v8447, %v9404
          %v9728 = vsel %vm1226, %v8448, %v9406
          %v9729 = vsel %vm1226, %v8449, %v9408
          %v9730 = vsel %vm1226, %v8450, %v9410
          %vm9731 = vcmask 523264
          %v9732 = vsel %vm9731, %v9699, %v9476
          %v9733 = vsel %vm9731, %v9700, %v9478
          %v9734 = vsel %vm9731, %v9701, %v9480
          %v9735 = vsel %vm9731, %v9702, %v9482
          %v9736 = vsel %vm9731, %v9703, %v9484
          %v9737 = vsel %vm9731, %v9704, %v9486
          %v9738 = vsel %vm9731, %v9705, %v9488
          %v9739 = vsel %vm9731, %v9706, %v9490
          %v9740 = vsel %vm9731, %v9707, %v9492
          %v9741 = vsel %vm9731, %v9708, %v9494
          %v9742 = vsel %vm9731, %v9709, %v9496
          %v9743 = vsel %vm9731, %v9710, %v9498
          %v9744 = vsel %vm9731, %v9711, %v9500
          %v9745 = vsel %vm9731, %v9712, %v9502
          %v9746 = vsel %vm9731, %v9713, %v9504
          %v9747 = vsel %vm9731, %v9714, %v9506
          %v9748 = vsel %vm9731, %v9715, %v9508
          %v9749 = vsel %vm9731, %v9716, %v9510
          %v9750 = vsel %vm9731, %v9717, %v9512
          %v9751 = vsel %vm9731, %v9718, %v9514
          %v9752 = vsel %vm9731, %v9719, %v9516
          %v9753 = vsel %vm9731, %v9720, %v9518
          %v9754 = vsel %vm9731, %v9721, %v9520
          %v9755 = vsel %vm9731, %v9722, %v9522
          %v9756 = vsel %vm9731, %v9723, %v9524
          %v9757 = vsel %vm9731, %v9724, %v9526
          %v9758 = vsel %vm9731, %v9725, %v9528
          %v9759 = vsel %vm9731, %v9726, %v9530
          %v9760 = vsel %vm9731, %v9727, %v9532
          %v9761 = vsel %vm9731, %v9728, %v9534
          %v9762 = vsel %vm9731, %v9729, %v9536
          %v9763 = vsel %vm9731, %v9730, %v9538
          %vm9764 = vcmask 785408
          %v9765 = vsel %vm9764, %v9732, %v9604
          %v9766 = vsel %vm9764, %v9733, %v9606
          %v9767 = vsel %vm9764, %v9734, %v9608
          %v9768 = vsel %vm9764, %v9735, %v9610
          %v9769 = vsel %vm9764, %v9736, %v9612
          %v9770 = vsel %vm9764, %v9737, %v9614
          %v9771 = vsel %vm9764, %v9738, %v9616
          %v9772 = vsel %vm9764, %v9739, %v9618
          %v9773 = vsel %vm9764, %v9740, %v9620
          %v9774 = vsel %vm9764, %v9741, %v9622
          %v9775 = vsel %vm9764, %v9742, %v9624
          %v9776 = vsel %vm9764, %v9743, %v9626
          %v9777 = vsel %vm9764, %v9744, %v9628
          %v9778 = vsel %vm9764, %v9745, %v9630
          %v9779 = vsel %vm9764, %v9746, %v9632
          %v9780 = vsel %vm9764, %v9747, %v9634
          %v9781 = vsel %vm9764, %v9748, %v9636
          %v9782 = vsel %vm9764, %v9749, %v9638
          %v9783 = vsel %vm9764, %v9750, %v9640
          %v9784 = vsel %vm9764, %v9751, %v9642
          %v9785 = vsel %vm9764, %v9752, %v9644
          %v9786 = vsel %vm9764, %v9753, %v9646
          %v9787 = vsel %vm9764, %v9754, %v9648
          %v9788 = vsel %vm9764, %v9755, %v9650
          %v9789 = vsel %vm9764, %v9756, %v9652
          %v9790 = vsel %vm9764, %v9757, %v9654
          %v9791 = vsel %vm9764, %v9758, %v9656
          %v9792 = vsel %vm9764, %v9759, %v9658
          %v9793 = vsel %vm9764, %v9760, %v9660
          %v9794 = vsel %vm9764, %v9761, %v9662
          %v9795 = vsel %vm9764, %v9762, %v9664
          %v9796 = vsel %vm9764, %v9763, %v9666
          %9797 = vst [vmem:[%s298] sm:$0xff] %v9765
          %9798 = vst [vmem:[%s298 + $0x8] sm:$0xff] %v9766
          %9799 = vst [vmem:[%s298 + $0x10] sm:$0xff] %v9767
          %9800 = vst [vmem:[%s298 + $0x18] sm:$0xff] %v9768
          %9801 = vst [vmem:[%s298 + $0x20] sm:$0xff] %v9769
          %9802 = vst [vmem:[%s298 + $0x28] sm:$0xff] %v9770
          %9803 = vst [vmem:[%s298 + $0x30] sm:$0xff] %v9771
          %9804 = vst [vmem:[%s298 + $0x38] sm:$0xff] %v9772
          %9805 = vst [vmem:[%s298 + $0x40] sm:$0xff] %v9773
          %9806 = vst [vmem:[%s298 + $0x48] sm:$0xff] %v9774
          %9807 = vst [vmem:[%s298 + $0x50] sm:$0xff] %v9775
          %9808 = vst [vmem:[%s298 + $0x58] sm:$0xff] %v9776
          %9809 = vst [vmem:[%s298 + $0x60] sm:$0xff] %v9777
          %9810 = vst [vmem:[%s298 + $0x68] sm:$0xff] %v9778
          %9811 = vst [vmem:[%s298 + $0x70] sm:$0xff] %v9779
          %9812 = vst [vmem:[%s298 + $0x78] sm:$0xff] %v9780
          %9813 = vst [vmem:[%s298 + $0x80] sm:$0xff] %v9781
          %9814 = vst [vmem:[%s298 + $0x88] sm:$0xff] %v9782
          %9815 = vst [vmem:[%s298 + $0x90] sm:$0xff] %v9783
          %9816 = vst [vmem:[%s298 + $0x98] sm:$0xff] %v9784
          %9817 = vst [vmem:[%s298 + $0xa0] sm:$0xff] %v9785
          %9818 = vst [vmem:[%s298 + $0xa8] sm:$0xff] %v9786
          %9819 = vst [vmem:[%s298 + $0xb0] sm:$0xff] %v9787
          %9820 = vst [vmem:[%s298 + $0xb8] sm:$0xff] %v9788
          %9821 = vst [vmem:[%s298 + $0xc0] sm:$0xff] %v9789
          %9822 = vst [vmem:[%s298 + $0xc8] sm:$0xff] %v9790
          %9823 = vst [vmem:[%s298 + $0xd0] sm:$0xff] %v9791
          %9824 = vst [vmem:[%s298 + $0xd8] sm:$0xff] %v9792
          %9825 = vst [vmem:[%s298 + $0xe0] sm:$0xff] %v9793
          %9826 = vst [vmem:[%s298 + $0xe8] sm:$0xff] %v9794
          %9827 = vst [vmem:[%s298 + $0xf0] sm:$0xff] %v9795
          %9828 = vst [vmem:[%s298 + $0xf8] sm:$0xff] %v9796
        $region52: #{tpu_custom_call.1} parent=31 // pred_fallthru
          _
        %s9829 = sand.u32 %s136, 1
        %s9830 = scalar_lea.sflag [#allocation8], %s9829
        %s9831 = sand.u32 %s136, 1
        %s9832 = smul.addr %s9831, 256
        %s9833 = scalar_lea.vmem [#allocation12], %s9832
        // Predicated region
        $region53: #{tpu_custom_call.1} parent=31 // pred_check
          %p9834 = pneg %p146
        $region54: #{tpu_custom_call.1} parent=31 // pred_check_branch
          %9836 = sbr.rel (%p9834) target = $region56
        $region55: #{tpu_custom_call.1} parent=31 // pred_region
          %s9837 = smul.u32 32, %s29
          %s9839 = ssub.s32 4096, 4096
          %9840 = vsyncadd %s9830, %s9839
          %s9841 = smul.addr %s28, 32
          %s9842 = sadd.s32 %s9837, %s9841
          %s9843 = smul.addr %s9842, 128
          %s9844 = scalar_lea.hbm %s3, %s9843
          %s9845 = sshll.u32 %s9833, 4
          %s9846 = int_to_ptr.vmem [resolvable:$true] %s9845
          %9851 = dma.vmem_to_hbm [thread:$0]  %s9846, 4096, %s9844, %s9830, 128, 128, 8
        $region56: #{tpu_custom_call.1} parent=31 // pred_fallthru
          _
      $region32: #{tpu_custom_call.1} parent=5 // pred_fallthru
        _
      %p9852 = scmp.le.s32.totalorder 2, %s18
      // Predicated region
      $region57: #{tpu_custom_call.1} parent=5 // pred_check
        %p9853 = pneg %p9852
      $region58: #{tpu_custom_call.1} parent=5 // pred_check_branch
        %9855 = sbr.rel (%p9853) target = $region60
      $region59: #{tpu_custom_call.1} parent=5 // pred_region
        %s9856 = ssub.s32 %s18, 2
        // Predicated region
        $region61: #{tpu_custom_call.1} parent=59 // pred_check
          %p9857 = pneg %p152
        $region62: #{tpu_custom_call.1} parent=59 // pred_check_branch
          %9859 = sbr.rel (%p9857) target = $region64
        $region63: #{tpu_custom_call.1} parent=59 // pred_region
          %s9860 = sand.u32 %s137, 1
          %s9861 = scalar_lea.sflag [#allocation8], %s9860
          %s9862 = sand.u32 %s137, 1
          %s9863 = smul.addr %s9862, 256
          %s9864 = scalar_lea.vmem [#allocation12], %s9863
          %9865 = dma.done %s9861, 4096
        $region64: #{tpu_custom_call.1} parent=59 // pred_fallthru
          _
      $region60: #{tpu_custom_call.1} parent=5 // pred_fallthru
        _
    $region6: #{tpu_custom_call.1} parent=1 // loop_footer
      %s22 = sadd.s32 1, %s18
    $region7: #{tpu_custom_call.1} parent=1 // loop_footer_branch
      %17 = sbr.rel target = $region3
    $region8: #{tpu_custom_call.1} parent=1 // loop_exit
      _
    %9866 = vsyncpa [#allocation7], 1
    %s9867 = scalar_lea.sflag [#allocation7], 1
    %9868 = vsyncpa %s9867, 1
    %9869 = vsyncpa [#allocation10], 1
    %s9870 = scalar_lea.sflag [#allocation10], 1
    %9871 = vsyncpa %s9870, 1
    %9872 = vsyncpa [#allocation8], 1
    %s9873 = scalar_lea.sflag [#allocation8], 1
    %9874 = vsyncpa %s9873, 1

</llo_original>
